<compile_context>
chip_gen: v7x
topology: tpu7x:2x2x1
jax: 0.10.0
libtpu: 0.0.40
codegen_flags: <defaults>
</compile_context>

<pallas_src>
import math

import jax
import jax.numpy as jnp
from jax import lax
from jax.experimental import pallas as pl
from jax.experimental.pallas import tpu as pltpu

# ----------------------------- model config -----------------------------------
B = 2            # batch
N = 8            # target sequence length
M = 16           # memory (encoder) sequence length
C = 128          # embed_dim (d_model) -> lane-dense
H = 4            # num_heads
DH = C // H      # head dim = 32
F = 128          # dff (FFN hidden)
L = 2            # depth (number of decoder layers; module default is 4)
EPS = 1e-6       # LayerNorm eps used by DecoderLayer
SCALE = 1.0 / math.sqrt(DH)

# bf16 MXU operands (f32 accumulation).  Set to jnp.float32 for full-f32 matmuls.
MXU_DTYPE = jnp.bfloat16


def _mm(a, b):
    """2D/3D matmul with MXU-dtype operands and f32 accumulation."""
    return jnp.dot(a.astype(MXU_DTYPE), b.astype(MXU_DTYPE),
                   preferred_element_type=jnp.float32)


def _bmm(eq, a, b):
    """Batched (single batch dim) einsum with MXU-dtype operands, f32 accum."""
    return jnp.einsum(eq, a.astype(MXU_DTYPE), b.astype(MXU_DTYPE),
                      preferred_element_type=jnp.float32)


# ------------------------------- Pallas kernel ---------------------------------
def decoder_kernel(x_ref, mem_ref, la_ref, pad_ref,
                   wqkv_ref, bqkv_ref, wo_ref, bo_ref,
                   swq_ref, sbq_ref, swkv_ref, sbkv_ref, swo_ref, sbo_ref,
                   w1_ref, b1_ref, w2_ref, b2_ref,
                   ln1w_ref, ln1b_ref, ln2w_ref, ln2b_ref, ln3w_ref, ln3b_ref,
                   out_ref):
    x = x_ref[...]                       # (B*N, C) f32
    mem = mem_ref[...]                   # (B*M, C) f32
    # additive masks (1 -> -1e9, 0 -> 0), hoisted out of the layer loop
    neg_la = la_ref[...] * (-1e9)        # (B, N, N)
    neg_pad = pad_ref[...] * (-1e9)      # (B, N, M)

    def layernorm(v, w, b):
        mu = jnp.mean(v, axis=-1, keepdims=True)
        var = jnp.mean(v * v, axis=-1, keepdims=True) - mu * mu   # one-pass
        return (v - mu) * lax.rsqrt(var + EPS) * w + b

    def split_heads(t):                  # (rows, C) -> (H, rows, DH)
        return jnp.stack([t[:, h * DH:(h + 1) * DH] for h in range(H)], axis=0)

    def attention(q2d, k2d, v2d, neg_mask, wo_l):
        # q2d: (Nq, C); 1/sqrt(d_k) already folded into the q projection.
        qh, kh, vh = split_heads(q2d), split_heads(k2d), split_heads(v2d)
        scores = _bmm('hqd,hkd->hqk', qh, kh) + neg_mask[None, :, :]
        scores = scores - jnp.max(scores, axis=-1, keepdims=True)
        p = jnp.exp(scores)
        p = p * pl.reciprocal(jnp.sum(p, axis=-1, keepdims=True), approx=True)
        ctx = _bmm('hqk,hkd->hqd', p, vh)                     # (H, Nq, DH)
        # head merge + output projection: batched over heads, summed on the VPU
        proj = _bmm('hqd,hdc->hqc', ctx, wo_l)                # (H, Nq, C)
        out = proj[0]
        for hh in range(1, H):
            out = out + proj[hh]
        return out                                            # (Nq, C)

    for l in range(L):                   # static unroll over decoder layers
        # ------------------------- self attention -------------------------
        qkv = _mm(x, wqkv_ref[l]) + bqkv_ref[l]               # (B*N, 3C)
        wo_l = wo_ref[l]                                      # (H, DH, C)
        outs = []
        for b in range(B):
            r0, r1 = b * N, (b + 1) * N
            outs.append(attention(qkv[r0:r1, 0:C],
                                  qkv[r0:r1, C:2 * C],
                                  qkv[r0:r1, 2 * C:3 * C],
                                  neg_la[b], wo_l))
        attn_out = jnp.concatenate(outs, axis=0) + bo_ref[l]
        x = layernorm(x + attn_out, ln1w_ref[l], ln1b_ref[l])

        # ------------------------- cross attention ------------------------
        q_all = _mm(x, swq_ref[l]) + sbq_ref[l]               # (B*N, C)
        kv_all = _mm(mem, swkv_ref[l]) + sbkv_ref[l]          # (B*M, 2C)
        swo_l = swo_ref[l]
        outs = []
        for b in range(B):
            q0, q1 = b * N, (b + 1) * N
            k0, k1 = b * M, (b + 1) * M
            outs.append(attention(q_all[q0:q1],
                                  kv_all[k0:k1, 0:C],
                                  kv_all[k0:k1, C:2 * C],
                                  neg_pad[b], swo_l))
        src_out = jnp.concatenate(outs, axis=0) + sbo_ref[l]
        x = layernorm(x + src_out, ln2w_ref[l], ln2b_ref[l])

        # -------------------------- feed forward --------------------------
        h = jnp.maximum(_mm(x, w1_ref[l]) + b1_ref[l], 0.0)
        ffn = _mm(h, w2_ref[l]) + b2_ref[l]
        x = layernorm(x + ffn, ln3w_ref[l], ln3b_ref[l])
        # TODO(synk): nn.Dropout(p=0.1) after each sub-layer is identity in eval
        # mode; training-mode stochastic dropout is not implemented.

    out_ref[...] = x.astype(out_ref.dtype)


# ---------------------------------- wrapper -------------------------------------
def decoder_forward(x, memory, look_ahead_mask, trg_padding_mask, params):
    # present lane-dense (rows, 128) slabs to the kernel
    x2 = x.reshape(B * N, C)
    mem2 = memory.reshape(B * M, C)
    inputs = (x2, mem2, look_ahead_mask, trg_padding_mask) + tuple(params)

    def full_spec(shape):
        nd = len(shape)

        def imap(i):
            return (0,) * nd

        return pl.BlockSpec(shape, imap)

    out = pl.pallas_call(
        decoder_kernel,
        out_shape=jax.ShapeDtypeStruct((B * N, C), jnp.float32),
        grid=(1,),                                    # single fused grid step
        in_specs=[full_spec(a.shape) for a in inputs],
        out_specs=pl.BlockSpec((B * N, C), lambda i: (0, 0)),
        compiler_params=pltpu.CompilerParams(
            dimension_semantics=("arbitrary",)),
    )(*inputs)
    return out.reshape(B, N, C)


# ----------------------------- pure-JAX reference --------------------------------
def decoder_reference(x, memory, look_ahead_mask, trg_padding_mask, layers):
    def ln(v, w, b):
        mu = jnp.mean(v, axis=-1, keepdims=True)
        var = jnp.mean((v - mu) ** 2, axis=-1, keepdims=True)
        return (v - mu) / jnp.sqrt(var + EPS) * w + b

    def mha(xq, xkv, p, mask):
        wq, bq, wk, bk, wv, bv, wd, bd = p
        nb, nq, _ = xq.shape
        nk = xkv.shape[1]
        q = (_mm(xq, wq) + bq).reshape(nb, nq, H, DH).transpose(0, 2, 1, 3)
        k = (_mm(xkv, wk) + bk).reshape(nb, nk, H, DH).transpose(0, 2, 1, 3)
        v = (_mm(xkv, wv) + bv).reshape(nb, nk, H, DH).transpose(0, 2, 1, 3)
        scores = jnp.einsum('bhqd,bhkd->bhqk', q.astype(MXU_DTYPE),
                            k.astype(MXU_DTYPE),
                            preferred_element_type=jnp.float32) / math.sqrt(DH)
        if mask is not None:
            scores = scores + mask[:, None, :, :] * (-1e9)
        probs = jax.nn.softmax(scores, axis=-1)
        ctx = jnp.einsum('bhqk,bhkd->bhqd', probs.astype(MXU_DTYPE),
                         v.astype(MXU_DTYPE),
                         preferred_element_type=jnp.float32)
        ctx = ctx.transpose(0, 2, 1, 3).reshape(nb, nq, C)
        return _mm(ctx, wd) + bd

    for lp in layers:
        x = ln(x + mha(x, x, lp['self'], look_ahead_mask), lp['ln1w'], lp['ln1b'])
        x = ln(x + mha(x, memory, lp['src'], trg_padding_mask),
               lp['ln2w'], lp['ln2b'])
        hmid = jnp.maximum(_mm(x, lp['w1']) + lp['b1'], 0.0)
        x = ln(x + _mm(hmid, lp['w2']) + lp['b2'], lp['ln3w'], lp['ln3b'])
    return x


# ------------------------------------- main --------------------------------------
if __name__ == "__main__":
    key = jax.random.PRNGKey(0)
    keys = iter(jax.random.split(key, 128))

    def nrm(shape, s):
        return (s * jax.random.normal(next(keys), shape)).astype(jnp.float32)

    # inputs
    x = nrm((B, N, C), 1.0)
    memory = nrm((B, M, C), 1.0)

    # masks: 1.0 = masked (module adds mask * -1e9 to the scores)
    causal = jnp.triu(jnp.ones((N, N), jnp.float32), k=1)
    look_ahead_mask = jnp.tile(causal[None], (B, 1, 1))              # (B, N, N)
    mem_valid_len = jnp.array([13, 9], dtype=jnp.int32)
    key_pad = (jnp.arange(M)[None, :] >= mem_valid_len[:, None]).astype(jnp.float32)
    trg_padding_mask = jnp.tile(key_pad[:, None, :], (1, N, 1))      # (B, N, M)

    # per-layer base parameters (weights stored as (in, out) = torch weight.T)
    def make_mha_params():
        return (nrm((C, C), 0.05), nrm((C,), 0.02),   # wq, bq
                nrm((C, C), 0.05), nrm((C,), 0.02),   # wk, bk
                nrm((C, C), 0.05), nrm((C,), 0.02),   # wv, bv
                nrm((C, C), 0.05), nrm((C,), 0.02))   # wd, bd

    layers = []
    for _ in range(L):
        layers.append(dict(
            self=make_mha_params(),
            src=make_mha_params(),
            w1=nrm((C, F), 0.05), b1=nrm((F,), 0.02),
            w2=nrm((F, C), 0.05), b2=nrm((C,), 0.02),
            ln1w=1.0 + nrm((C,), 0.05), ln1b=nrm((C,), 0.05),
            ln2w=1.0 + nrm((C,), 0.05), ln2b=nrm((C,), 0.05),
            ln3w=1.0 + nrm((C,), 0.05), ln3b=nrm((C,), 0.05)))

    # ------- build kernel params: stack over layers, fuse qkv / kv, fold scale ----
    def stack(fn):
        return jnp.stack([fn(lp) for lp in layers], axis=0)

    wqkv = stack(lambda lp: jnp.concatenate(
        [lp['self'][0] * SCALE, lp['self'][2], lp['self'][4]], axis=1))   # (L,C,3C)
    bqkv = stack(lambda lp: jnp.concatenate(
        [lp['self'][1] * SCALE, lp['self'][3], lp['self'][5]]).reshape(1, 3 * C))
    wo = stack(lambda lp: lp['self'][6].reshape(H, DH, C))                # (L,H,DH,C)
    bo = stack(lambda lp: lp['self'][7].reshape(1, C))

    swq = stack(lambda lp: lp['src'][0] * SCALE)                          # (L,C,C)
    sbq = stack(lambda lp: (lp['src'][1] * SCALE).reshape(1, C))
    swkv = stack(lambda lp: jnp.concatenate(
        [lp['src'][2], lp['src'][4]], axis=1))                            # (L,C,2C)
    sbkv = stack(lambda lp: jnp.concatenate(
        [lp['src'][3], lp['src'][5]]).reshape(1, 2 * C))
    swo = stack(lambda lp: lp['src'][6].reshape(H, DH, C))
    sbo = stack(lambda lp: lp['src'][7].reshape(1, C))

    w1 = stack(lambda lp: lp['w1']); b1 = stack(lambda lp: lp['b1'].reshape(1, F))
    w2 = stack(lambda lp: lp['w2']); b2 = stack(lambda lp: lp['b2'].reshape(1, C))

    ln1w = stack(lambda lp: lp['ln1w'].reshape(1, C))
    ln1b = stack(lambda lp: lp['ln1b'].reshape(1, C))
    ln2w = stack(lambda lp: lp['ln2w'].reshape(1, C))
    ln2b = stack(lambda lp: lp['ln2b'].reshape(1, C))
    ln3w = stack(lambda lp: lp['ln3w'].reshape(1, C))
    ln3b = stack(lambda lp: lp['ln3b'].reshape(1, C))

    params = (wqkv, bqkv, wo, bo,
              swq, sbq, swkv, sbkv, swo, sbo,
              w1, b1, w2, b2,
              ln1w, ln1b, ln2w, ln2b, ln3w, ln3b)

    out = decoder_forward(x, memory, look_ahead_mask, trg_padding_mask, params)
    out = jax.block_until_ready(out)

    ref = decoder_reference(x, memory, look_ahead_mask, trg_padding_mask, layers)
    ref = jax.block_until_ready(ref)

    assert out.shape == (B, N, C)
    max_err = jnp.max(jnp.abs(out - ref))
    assert jnp.allclose(out, ref, atol=5e-3, rtol=5e-3), f"max abs err {max_err}"

    print("KERNEL_OK")
</pallas_src>

<mosaic_0001>
module attributes {stable_mosaic.version = 11 : i64} {
  func.func @decoder_kernel(%arg0: i32, %arg1: memref<16x128xf32, #tpu.memory_space<vmem>>, %arg2: memref<32x128xf32, #tpu.memory_space<vmem>>, %arg3: memref<2x8x8xf32, #tpu.memory_space<vmem>>, %arg4: memref<2x8x16xf32, #tpu.memory_space<vmem>>, %arg5: memref<2x128x384xf32, #tpu.memory_space<vmem>>, %arg6: memref<2x1x384xf32, #tpu.memory_space<vmem>>, %arg7: memref<2x4x32x128xf32, #tpu.memory_space<vmem>>, %arg8: memref<2x1x128xf32, #tpu.memory_space<vmem>>, %arg9: memref<2x128x128xf32, #tpu.memory_space<vmem>>, %arg10: memref<2x1x128xf32, #tpu.memory_space<vmem>>, %arg11: memref<2x128x256xf32, #tpu.memory_space<vmem>>, %arg12: memref<2x1x256xf32, #tpu.memory_space<vmem>>, %arg13: memref<2x4x32x128xf32, #tpu.memory_space<vmem>>, %arg14: memref<2x1x128xf32, #tpu.memory_space<vmem>>, %arg15: memref<2x128x128xf32, #tpu.memory_space<vmem>>, %arg16: memref<2x1x128xf32, #tpu.memory_space<vmem>>, %arg17: memref<2x128x128xf32, #tpu.memory_space<vmem>>, %arg18: memref<2x1x128xf32, #tpu.memory_space<vmem>>, %arg19: memref<2x1x128xf32, #tpu.memory_space<vmem>>, %arg20: memref<2x1x128xf32, #tpu.memory_space<vmem>>, %arg21: memref<2x1x128xf32, #tpu.memory_space<vmem>>, %arg22: memref<2x1x128xf32, #tpu.memory_space<vmem>>, %arg23: memref<2x1x128xf32, #tpu.memory_space<vmem>>, %arg24: memref<2x1x128xf32, #tpu.memory_space<vmem>>, %arg25: memref<16x128xf32, #tpu.memory_space<vmem>>) attributes {dimension_semantics = [#tpu.dimension_semantics<arbitrary>], iteration_bounds = array<i64: 1>, scalar_prefetch = 0 : i64, scratch_operands = 0 : i64, tpu.core_type = #tpu.core_type<tc>, window_params = [{pipeline_mode = #tpu.pipeline_mode<synchronous>, transform_indices = @transform_0, window_bounds = array<i64: 16, 128>}, {pipeline_mode = #tpu.pipeline_mode<synchronous>, transform_indices = @transform_1, window_bounds = array<i64: 32, 128>}, {pipeline_mode = #tpu.pipeline_mode<synchronous>, transform_indices = @transform_2, window_bounds = array<i64: 2, 8, 8>}, {pipeline_mode = #tpu.pipeline_mode<synchronous>, transform_indices = @transform_3, window_bounds = array<i64: 2, 8, 16>}, {pipeline_mode = #tpu.pipeline_mode<synchronous>, transform_indices = @transform_4, window_bounds = array<i64: 2, 128, 384>}, {pipeline_mode = #tpu.pipeline_mode<synchronous>, transform_indices = @transform_5, window_bounds = array<i64: 2, 1, 384>}, {pipeline_mode = #tpu.pipeline_mode<synchronous>, transform_indices = @transform_6, window_bounds = array<i64: 2, 4, 32, 128>}, {pipeline_mode = #tpu.pipeline_mode<synchronous>, transform_indices = @transform_7, window_bounds = array<i64: 2, 1, 128>}, {pipeline_mode = #tpu.pipeline_mode<synchronous>, transform_indices = @transform_8, window_bounds = array<i64: 2, 128, 128>}, {pipeline_mode = #tpu.pipeline_mode<synchronous>, transform_indices = @transform_9, window_bounds = array<i64: 2, 1, 128>}, {pipeline_mode = #tpu.pipeline_mode<synchronous>, transform_indices = @transform_10, window_bounds = array<i64: 2, 128, 256>}, {pipeline_mode = #tpu.pipeline_mode<synchronous>, transform_indices = @transform_11, window_bounds = array<i64: 2, 1, 256>}, {pipeline_mode = #tpu.pipeline_mode<synchronous>, transform_indices = @transform_12, window_bounds = array<i64: 2, 4, 32, 128>}, {pipeline_mode = #tpu.pipeline_mode<synchronous>, transform_indices = @transform_13, window_bounds = array<i64: 2, 1, 128>}, {pipeline_mode = #tpu.pipeline_mode<synchronous>, transform_indices = @transform_14, window_bounds = array<i64: 2, 128, 128>}, {pipeline_mode = #tpu.pipeline_mode<synchronous>, transform_indices = @transform_15, window_bounds = array<i64: 2, 1, 128>}, {pipeline_mode = #tpu.pipeline_mode<synchronous>, transform_indices = @transform_16, window_bounds = array<i64: 2, 128, 128>}, {pipeline_mode = #tpu.pipeline_mode<synchronous>, transform_indices = @transform_17, window_bounds = array<i64: 2, 1, 128>}, {pipeline_mode = #tpu.pipeline_mode<synchronous>, transform_indices = @transform_18, window_bounds = array<i64: 2, 1, 128>}, {pipeline_mode = #tpu.pipeline_mode<synchronous>, transform_indices = @transform_19, window_bounds = array<i64: 2, 1, 128>}, {pipeline_mode = #tpu.pipeline_mode<synchronous>, transform_indices = @transform_20, window_bounds = array<i64: 2, 1, 128>}, {pipeline_mode = #tpu.pipeline_mode<synchronous>, transform_indices = @transform_21, window_bounds = array<i64: 2, 1, 128>}, {pipeline_mode = #tpu.pipeline_mode<synchronous>, transform_indices = @transform_22, window_bounds = array<i64: 2, 1, 128>}, {pipeline_mode = #tpu.pipeline_mode<synchronous>, transform_indices = @transform_23, window_bounds = array<i64: 2, 1, 128>}, {pipeline_mode = #tpu.pipeline_mode<synchronous>, transform_indices = @transform_24, window_bounds = array<i64: 16, 128>}]} {
    %c0 = arith.constant 0 : index
    %c0_0 = arith.constant 0 : index
    %0 = vector.load %arg1[%c0, %c0_0] : memref<16x128xf32, #tpu.memory_space<vmem>>, vector<16x128xf32>
    %c0_1 = arith.constant 0 : index
    %c0_2 = arith.constant 0 : index
    %1 = vector.load %arg2[%c0_1, %c0_2] : memref<32x128xf32, #tpu.memory_space<vmem>>, vector<32x128xf32>
    %c0_3 = arith.constant 0 : index
    %c0_4 = arith.constant 0 : index
    %c0_5 = arith.constant 0 : index
    %2 = vector.load %arg3[%c0_3, %c0_4, %c0_5] : memref<2x8x8xf32, #tpu.memory_space<vmem>>, vector<2x8x8xf32>
    %cst = arith.constant -1.000000e+09 : f32
    %3 = vector.broadcast %cst : f32 to vector<2x8x8xf32>
    %4 = arith.mulf %2, %3 : vector<2x8x8xf32>
    %c0_6 = arith.constant 0 : index
    %c0_7 = arith.constant 0 : index
    %c0_8 = arith.constant 0 : index
    %5 = vector.load %arg4[%c0_6, %c0_7, %c0_8] : memref<2x8x16xf32, #tpu.memory_space<vmem>>, vector<2x8x16xf32>
    %cst_9 = arith.constant -1.000000e+09 : f32
    %6 = vector.broadcast %cst_9 : f32 to vector<2x8x16xf32>
    %7 = arith.mulf %5, %6 : vector<2x8x16xf32>
    %c0_10 = arith.constant 0 : index
    %c0_11 = arith.constant 0 : index
    %c0_12 = arith.constant 0 : index
    %8 = vector.load %arg5[%c0_10, %c0_11, %c0_12] : memref<2x128x384xf32, #tpu.memory_space<vmem>>, vector<1x128x384xf32>
    %9 = vector.shape_cast %8 : vector<1x128x384xf32> to vector<128x384xf32>
    %10 = arith.truncf %0 : vector<16x128xf32> to vector<16x128xbf16>
    %11 = arith.truncf %9 : vector<128x384xf32> to vector<128x384xbf16>
    %cst_13 = arith.constant dense<0.000000e+00> : vector<16x384xf32>
    %12 = tpu.matmul %10, %11, %cst_13 {dimension_numbers = #tpu.dot_dimension_numbers<[1], [0], [0], [1], [0, 0, 1, 1], [], []>} : vector<16x128xbf16>, vector<128x384xbf16>, vector<16x384xf32> -> vector<16x384xf32>
    %c0_14 = arith.constant 0 : index
    %c0_15 = arith.constant 0 : index
    %c0_16 = arith.constant 0 : index
    %13 = vector.load %arg6[%c0_14, %c0_15, %c0_16] : memref<2x1x384xf32, #tpu.memory_space<vmem>>, vector<1x1x384xf32>
    %14 = vector.shape_cast %13 : vector<1x1x384xf32> to vector<1x384xf32>
    %15 = vector.broadcast %14 : vector<1x384xf32> to vector<16x384xf32>
    %16 = arith.addf %12, %15 : vector<16x384xf32>
    %c0_17 = arith.constant 0 : index
    %c0_18 = arith.constant 0 : index
    %c0_19 = arith.constant 0 : index
    %c0_20 = arith.constant 0 : index
    %17 = vector.load %arg7[%c0_17, %c0_18, %c0_19, %c0_20] : memref<2x4x32x128xf32, #tpu.memory_space<vmem>>, vector<1x4x32x128xf32>
    %18 = vector.shape_cast %17 : vector<1x4x32x128xf32> to vector<4x32x128xf32>
    %19 = vector.extract_strided_slice %16 {offsets = [0, 0], sizes = [8, 128], strides = [1, 1]} : vector<16x384xf32> to vector<8x128xf32>
    %20 = vector.extract_strided_slice %16 {offsets = [0, 128], sizes = [8, 128], strides = [1, 1]} : vector<16x384xf32> to vector<8x128xf32>
    %21 = vector.extract_strided_slice %16 {offsets = [0, 256], sizes = [8, 128], strides = [1, 1]} : vector<16x384xf32> to vector<8x128xf32>
    %22 = vector.extract_strided_slice %4 {offsets = [0, 0, 0], sizes = [1, 8, 8], strides = [1, 1, 1]} : vector<2x8x8xf32> to vector<1x8x8xf32>
    %23 = vector.shape_cast %22 : vector<1x8x8xf32> to vector<8x8xf32>
    %24 = vector.extract_strided_slice %19 {offsets = [0, 0], sizes = [8, 32], strides = [1, 1]} : vector<8x128xf32> to vector<8x32xf32>
    %25 = vector.extract_strided_slice %19 {offsets = [0, 32], sizes = [8, 32], strides = [1, 1]} : vector<8x128xf32> to vector<8x32xf32>
    %26 = vector.extract_strided_slice %19 {offsets = [0, 64], sizes = [8, 32], strides = [1, 1]} : vector<8x128xf32> to vector<8x32xf32>
    %27 = vector.extract_strided_slice %19 {offsets = [0, 96], sizes = [8, 32], strides = [1, 1]} : vector<8x128xf32> to vector<8x32xf32>
    %28 = vector.shape_cast %24 : vector<8x32xf32> to vector<1x8x32xf32>
    %29 = vector.shape_cast %25 : vector<8x32xf32> to vector<1x8x32xf32>
    %30 = vector.shape_cast %26 : vector<8x32xf32> to vector<1x8x32xf32>
    %31 = vector.shape_cast %27 : vector<8x32xf32> to vector<1x8x32xf32>
    %32 = tpu.concatenate %28, %29, %30, %31 in 0 : vector<1x8x32xf32>, vector<1x8x32xf32>, vector<1x8x32xf32>, vector<1x8x32xf32> -> vector<4x8x32xf32>
    %33 = vector.extract_strided_slice %20 {offsets = [0, 0], sizes = [8, 32], strides = [1, 1]} : vector<8x128xf32> to vector<8x32xf32>
    %34 = vector.extract_strided_slice %20 {offsets = [0, 32], sizes = [8, 32], strides = [1, 1]} : vector<8x128xf32> to vector<8x32xf32>
    %35 = vector.extract_strided_slice %20 {offsets = [0, 64], sizes = [8, 32], strides = [1, 1]} : vector<8x128xf32> to vector<8x32xf32>
    %36 = vector.extract_strided_slice %20 {offsets = [0, 96], sizes = [8, 32], strides = [1, 1]} : vector<8x128xf32> to vector<8x32xf32>
    %37 = vector.shape_cast %33 : vector<8x32xf32> to vector<1x8x32xf32>
    %38 = vector.shape_cast %34 : vector<8x32xf32> to vector<1x8x32xf32>
    %39 = vector.shape_cast %35 : vector<8x32xf32> to vector<1x8x32xf32>
    %40 = vector.shape_cast %36 : vector<8x32xf32> to vector<1x8x32xf32>
    %41 = tpu.concatenate %37, %38, %39, %40 in 0 : vector<1x8x32xf32>, vector<1x8x32xf32>, vector<1x8x32xf32>, vector<1x8x32xf32> -> vector<4x8x32xf32>
    %42 = vector.extract_strided_slice %21 {offsets = [0, 0], sizes = [8, 32], strides = [1, 1]} : vector<8x128xf32> to vector<8x32xf32>
    %43 = vector.extract_strided_slice %21 {offsets = [0, 32], sizes = [8, 32], strides = [1, 1]} : vector<8x128xf32> to vector<8x32xf32>
    %44 = vector.extract_strided_slice %21 {offsets = [0, 64], sizes = [8, 32], strides = [1, 1]} : vector<8x128xf32> to vector<8x32xf32>
    %45 = vector.extract_strided_slice %21 {offsets = [0, 96], sizes = [8, 32], strides = [1, 1]} : vector<8x128xf32> to vector<8x32xf32>
    %46 = vector.shape_cast %42 : vector<8x32xf32> to vector<1x8x32xf32>
    %47 = vector.shape_cast %43 : vector<8x32xf32> to vector<1x8x32xf32>
    %48 = vector.shape_cast %44 : vector<8x32xf32> to vector<1x8x32xf32>
    %49 = vector.shape_cast %45 : vector<8x32xf32> to vector<1x8x32xf32>
    %50 = tpu.concatenate %46, %47, %48, %49 in 0 : vector<1x8x32xf32>, vector<1x8x32xf32>, vector<1x8x32xf32>, vector<1x8x32xf32> -> vector<4x8x32xf32>
    %51 = arith.truncf %32 : vector<4x8x32xf32> to vector<4x8x32xbf16>
    %52 = arith.truncf %41 : vector<4x8x32xf32> to vector<4x8x32xbf16>
    "tpu.trace_start"() <{level = 10 : i32, message = "hqd,hkd->hqk"}> : () -> ()
    %cst_21 = arith.constant dense<0.000000e+00> : vector<4x8x8xf32>
    %53 = tpu.matmul %51, %52, %cst_21 {dimension_numbers = #tpu.dot_dimension_numbers<[2], [2], [1], [1], [0, 0, 0, 1, 1, 1], [0], [0]>} : vector<4x8x32xbf16>, vector<4x8x32xbf16>, vector<4x8x8xf32> -> vector<4x8x8xf32>
    "tpu.trace_stop"() : () -> ()
    %54 = vector.shape_cast %23 : vector<8x8xf32> to vector<1x8x8xf32>
    %55 = vector.broadcast %54 : vector<1x8x8xf32> to vector<4x8x8xf32>
    %56 = arith.addf %53, %55 : vector<4x8x8xf32>
    %cst_22 = arith.constant dense<0xFF800000> : vector<4x8xf32>
    %57 = vector.multi_reduction <maximumf>, %56, %cst_22 [2] : vector<4x8x8xf32> to vector<4x8xf32>
    %58 = vector.shape_cast %57 : vector<4x8xf32> to vector<4x8x1xf32>
    %59 = vector.broadcast %58 : vector<4x8x1xf32> to vector<4x8x8xf32>
    %60 = arith.subf %56, %59 : vector<4x8x8xf32>
    %61 = math.exp %60 : vector<4x8x8xf32>
    %cst_23 = arith.constant dense<0.000000e+00> : vector<4x8xf32>
    %62 = vector.multi_reduction <add>, %61, %cst_23 [2] : vector<4x8x8xf32> to vector<4x8xf32>
    %63 = vector.shape_cast %62 : vector<4x8xf32> to vector<4x8x1xf32>
    %64 = tpu.reciprocal %63 {approx = true} : vector<4x8x1xf32> -> vector<4x8x1xf32>
    %65 = vector.broadcast %64 : vector<4x8x1xf32> to vector<4x8x8xf32>
    %66 = arith.mulf %61, %65 : vector<4x8x8xf32>
    %67 = arith.truncf %66 : vector<4x8x8xf32> to vector<4x8x8xbf16>
    %68 = arith.truncf %50 : vector<4x8x32xf32> to vector<4x8x32xbf16>
    "tpu.trace_start"() <{level = 10 : i32, message = "hqk,hkd->hqd"}> : () -> ()
    %cst_24 = arith.constant dense<0.000000e+00> : vector<4x8x32xf32>
    %69 = tpu.matmul %67, %68, %cst_24 {dimension_numbers = #tpu.dot_dimension_numbers<[2], [1], [1], [2], [0, 0, 0, 1, 1, 2], [0], [0]>} : vector<4x8x8xbf16>, vector<4x8x32xbf16>, vector<4x8x32xf32> -> vector<4x8x32xf32>
    "tpu.trace_stop"() : () -> ()
    %70 = arith.truncf %69 : vector<4x8x32xf32> to vector<4x8x32xbf16>
    %71 = arith.truncf %18 : vector<4x32x128xf32> to vector<4x32x128xbf16>
    "tpu.trace_start"() <{level = 10 : i32, message = "hqd,hdc->hqc"}> : () -> ()
    %cst_25 = arith.constant dense<0.000000e+00> : vector<4x8x128xf32>
    %72 = tpu.matmul %70, %71, %cst_25 {dimension_numbers = #tpu.dot_dimension_numbers<[2], [1], [1], [2], [0, 0, 0, 1, 1, 2], [0], [0]>} : vector<4x8x32xbf16>, vector<4x32x128xbf16>, vector<4x8x128xf32> -> vector<4x8x128xf32>
    "tpu.trace_stop"() : () -> ()
    %73 = vector.extract_strided_slice %72 {offsets = [0, 0, 0], sizes = [1, 8, 128], strides = [1, 1, 1]} : vector<4x8x128xf32> to vector<1x8x128xf32>
    %74 = vector.shape_cast %73 : vector<1x8x128xf32> to vector<8x128xf32>
    %75 = vector.extract_strided_slice %72 {offsets = [1, 0, 0], sizes = [1, 8, 128], strides = [1, 1, 1]} : vector<4x8x128xf32> to vector<1x8x128xf32>
    %76 = vector.shape_cast %75 : vector<1x8x128xf32> to vector<8x128xf32>
    %77 = arith.addf %74, %76 : vector<8x128xf32>
    %78 = vector.extract_strided_slice %72 {offsets = [2, 0, 0], sizes = [1, 8, 128], strides = [1, 1, 1]} : vector<4x8x128xf32> to vector<1x8x128xf32>
    %79 = vector.shape_cast %78 : vector<1x8x128xf32> to vector<8x128xf32>
    %80 = arith.addf %77, %79 : vector<8x128xf32>
    %81 = vector.extract_strided_slice %72 {offsets = [3, 0, 0], sizes = [1, 8, 128], strides = [1, 1, 1]} : vector<4x8x128xf32> to vector<1x8x128xf32>
    %82 = vector.shape_cast %81 : vector<1x8x128xf32> to vector<8x128xf32>
    %83 = arith.addf %80, %82 : vector<8x128xf32>
    %84 = vector.extract_strided_slice %16 {offsets = [8, 0], sizes = [8, 128], strides = [1, 1]} : vector<16x384xf32> to vector<8x128xf32>
    %85 = vector.extract_strided_slice %16 {offsets = [8, 128], sizes = [8, 128], strides = [1, 1]} : vector<16x384xf32> to vector<8x128xf32>
    %86 = vector.extract_strided_slice %16 {offsets = [8, 256], sizes = [8, 128], strides = [1, 1]} : vector<16x384xf32> to vector<8x128xf32>
    %87 = vector.extract_strided_slice %4 {offsets = [1, 0, 0], sizes = [1, 8, 8], strides = [1, 1, 1]} : vector<2x8x8xf32> to vector<1x8x8xf32>
    %88 = vector.shape_cast %87 : vector<1x8x8xf32> to vector<8x8xf32>
    %89 = vector.extract_strided_slice %84 {offsets = [0, 0], sizes = [8, 32], strides = [1, 1]} : vector<8x128xf32> to vector<8x32xf32>
    %90 = vector.extract_strided_slice %84 {offsets = [0, 32], sizes = [8, 32], strides = [1, 1]} : vector<8x128xf32> to vector<8x32xf32>
    %91 = vector.extract_strided_slice %84 {offsets = [0, 64], sizes = [8, 32], strides = [1, 1]} : vector<8x128xf32> to vector<8x32xf32>
    %92 = vector.extract_strided_slice %84 {offsets = [0, 96], sizes = [8, 32], strides = [1, 1]} : vector<8x128xf32> to vector<8x32xf32>
    %93 = vector.shape_cast %89 : vector<8x32xf32> to vector<1x8x32xf32>
    %94 = vector.shape_cast %90 : vector<8x32xf32> to vector<1x8x32xf32>
    %95 = vector.shape_cast %91 : vector<8x32xf32> to vector<1x8x32xf32>
    %96 = vector.shape_cast %92 : vector<8x32xf32> to vector<1x8x32xf32>
    %97 = tpu.concatenate %93, %94, %95, %96 in 0 : vector<1x8x32xf32>, vector<1x8x32xf32>, vector<1x8x32xf32>, vector<1x8x32xf32> -> vector<4x8x32xf32>
    %98 = vector.extract_strided_slice %85 {offsets = [0, 0], sizes = [8, 32], strides = [1, 1]} : vector<8x128xf32> to vector<8x32xf32>
    %99 = vector.extract_strided_slice %85 {offsets = [0, 32], sizes = [8, 32], strides = [1, 1]} : vector<8x128xf32> to vector<8x32xf32>
    %100 = vector.extract_strided_slice %85 {offsets = [0, 64], sizes = [8, 32], strides = [1, 1]} : vector<8x128xf32> to vector<8x32xf32>
    %101 = vector.extract_strided_slice %85 {offsets = [0, 96], sizes = [8, 32], strides = [1, 1]} : vector<8x128xf32> to vector<8x32xf32>
    %102 = vector.shape_cast %98 : vector<8x32xf32> to vector<1x8x32xf32>
    %103 = vector.shape_cast %99 : vector<8x32xf32> to vector<1x8x32xf32>
    %104 = vector.shape_cast %100 : vector<8x32xf32> to vector<1x8x32xf32>
    %105 = vector.shape_cast %101 : vector<8x32xf32> to vector<1x8x32xf32>
    %106 = tpu.concatenate %102, %103, %104, %105 in 0 : vector<1x8x32xf32>, vector<1x8x32xf32>, vector<1x8x32xf32>, vector<1x8x32xf32> -> vector<4x8x32xf32>
    %107 = vector.extract_strided_slice %86 {offsets = [0, 0], sizes = [8, 32], strides = [1, 1]} : vector<8x128xf32> to vector<8x32xf32>
    %108 = vector.extract_strided_slice %86 {offsets = [0, 32], sizes = [8, 32], strides = [1, 1]} : vector<8x128xf32> to vector<8x32xf32>
    %109 = vector.extract_strided_slice %86 {offsets = [0, 64], sizes = [8, 32], strides = [1, 1]} : vector<8x128xf32> to vector<8x32xf32>
    %110 = vector.extract_strided_slice %86 {offsets = [0, 96], sizes = [8, 32], strides = [1, 1]} : vector<8x128xf32> to vector<8x32xf32>
    %111 = vector.shape_cast %107 : vector<8x32xf32> to vector<1x8x32xf32>
    %112 = vector.shape_cast %108 : vector<8x32xf32> to vector<1x8x32xf32>
    %113 = vector.shape_cast %109 : vector<8x32xf32> to vector<1x8x32xf32>
    %114 = vector.shape_cast %110 : vector<8x32xf32> to vector<1x8x32xf32>
    %115 = tpu.concatenate %111, %112, %113, %114 in 0 : vector<1x8x32xf32>, vector<1x8x32xf32>, vector<1x8x32xf32>, vector<1x8x32xf32> -> vector<4x8x32xf32>
    %116 = arith.truncf %97 : vector<4x8x32xf32> to vector<4x8x32xbf16>
    %117 = arith.truncf %106 : vector<4x8x32xf32> to vector<4x8x32xbf16>
    "tpu.trace_start"() <{level = 10 : i32, message = "hqd,hkd->hqk"}> : () -> ()
    %cst_26 = arith.constant dense<0.000000e+00> : vector<4x8x8xf32>
    %118 = tpu.matmul %116, %117, %cst_26 {dimension_numbers = #tpu.dot_dimension_numbers<[2], [2], [1], [1], [0, 0, 0, 1, 1, 1], [0], [0]>} : vector<4x8x32xbf16>, vector<4x8x32xbf16>, vector<4x8x8xf32> -> vector<4x8x8xf32>
    "tpu.trace_stop"() : () -> ()
    %119 = vector.shape_cast %88 : vector<8x8xf32> to vector<1x8x8xf32>
    %120 = vector.broadcast %119 : vector<1x8x8xf32> to vector<4x8x8xf32>
    %121 = arith.addf %118, %120 : vector<4x8x8xf32>
    %cst_27 = arith.constant dense<0xFF800000> : vector<4x8xf32>
    %122 = vector.multi_reduction <maximumf>, %121, %cst_27 [2] : vector<4x8x8xf32> to vector<4x8xf32>
    %123 = vector.shape_cast %122 : vector<4x8xf32> to vector<4x8x1xf32>
    %124 = vector.broadcast %123 : vector<4x8x1xf32> to vector<4x8x8xf32>
    %125 = arith.subf %121, %124 : vector<4x8x8xf32>
    %126 = math.exp %125 : vector<4x8x8xf32>
    %cst_28 = arith.constant dense<0.000000e+00> : vector<4x8xf32>
    %127 = vector.multi_reduction <add>, %126, %cst_28 [2] : vector<4x8x8xf32> to vector<4x8xf32>
    %128 = vector.shape_cast %127 : vector<4x8xf32> to vector<4x8x1xf32>
    %129 = tpu.reciprocal %128 {approx = true} : vector<4x8x1xf32> -> vector<4x8x1xf32>
    %130 = vector.broadcast %129 : vector<4x8x1xf32> to vector<4x8x8xf32>
    %131 = arith.mulf %126, %130 : vector<4x8x8xf32>
    %132 = arith.truncf %131 : vector<4x8x8xf32> to vector<4x8x8xbf16>
    %133 = arith.truncf %115 : vector<4x8x32xf32> to vector<4x8x32xbf16>
    "tpu.trace_start"() <{level = 10 : i32, message = "hqk,hkd->hqd"}> : () -> ()
    %cst_29 = arith.constant dense<0.000000e+00> : vector<4x8x32xf32>
    %134 = tpu.matmul %132, %133, %cst_29 {dimension_numbers = #tpu.dot_dimension_numbers<[2], [1], [1], [2], [0, 0, 0, 1, 1, 2], [0], [0]>} : vector<4x8x8xbf16>, vector<4x8x32xbf16>, vector<4x8x32xf32> -> vector<4x8x32xf32>
    "tpu.trace_stop"() : () -> ()
    %135 = arith.truncf %134 : vector<4x8x32xf32> to vector<4x8x32xbf16>
    %136 = arith.truncf %18 : vector<4x32x128xf32> to vector<4x32x128xbf16>
    "tpu.trace_start"() <{level = 10 : i32, message = "hqd,hdc->hqc"}> : () -> ()
    %cst_30 = arith.constant dense<0.000000e+00> : vector<4x8x128xf32>
    %137 = tpu.matmul %135, %136, %cst_30 {dimension_numbers = #tpu.dot_dimension_numbers<[2], [1], [1], [2], [0, 0, 0, 1, 1, 2], [0], [0]>} : vector<4x8x32xbf16>, vector<4x32x128xbf16>, vector<4x8x128xf32> -> vector<4x8x128xf32>
    "tpu.trace_stop"() : () -> ()
    %138 = vector.extract_strided_slice %137 {offsets = [0, 0, 0], sizes = [1, 8, 128], strides = [1, 1, 1]} : vector<4x8x128xf32> to vector<1x8x128xf32>
    %139 = vector.shape_cast %138 : vector<1x8x128xf32> to vector<8x128xf32>
    %140 = vector.extract_strided_slice %137 {offsets = [1, 0, 0], sizes = [1, 8, 128], strides = [1, 1, 1]} : vector<4x8x128xf32> to vector<1x8x128xf32>
    %141 = vector.shape_cast %140 : vector<1x8x128xf32> to vector<8x128xf32>
    %142 = arith.addf %139, %141 : vector<8x128xf32>
    %143 = vector.extract_strided_slice %137 {offsets = [2, 0, 0], sizes = [1, 8, 128], strides = [1, 1, 1]} : vector<4x8x128xf32> to vector<1x8x128xf32>
    %144 = vector.shape_cast %143 : vector<1x8x128xf32> to vector<8x128xf32>
    %145 = arith.addf %142, %144 : vector<8x128xf32>
    %146 = vector.extract_strided_slice %137 {offsets = [3, 0, 0], sizes = [1, 8, 128], strides = [1, 1, 1]} : vector<4x8x128xf32> to vector<1x8x128xf32>
    %147 = vector.shape_cast %146 : vector<1x8x128xf32> to vector<8x128xf32>
    %148 = arith.addf %145, %147 : vector<8x128xf32>
    %149 = tpu.concatenate %83, %148 in 0 : vector<8x128xf32>, vector<8x128xf32> -> vector<16x128xf32>
    %c0_31 = arith.constant 0 : index
    %c0_32 = arith.constant 0 : index
    %c0_33 = arith.constant 0 : index
    %150 = vector.load %arg8[%c0_31, %c0_32, %c0_33] : memref<2x1x128xf32, #tpu.memory_space<vmem>>, vector<1x1x128xf32>
    %151 = vector.shape_cast %150 : vector<1x1x128xf32> to vector<1x128xf32>
    %152 = vector.broadcast %151 : vector<1x128xf32> to vector<16x128xf32>
    %153 = arith.addf %149, %152 : vector<16x128xf32>
    %154 = arith.addf %0, %153 : vector<16x128xf32>
    %c0_34 = arith.constant 0 : index
    %c0_35 = arith.constant 0 : index
    %c0_36 = arith.constant 0 : index
    %155 = vector.load %arg19[%c0_34, %c0_35, %c0_36] : memref<2x1x128xf32, #tpu.memory_space<vmem>>, vector<1x1x128xf32>
    %156 = vector.shape_cast %155 : vector<1x1x128xf32> to vector<1x128xf32>
    %c0_37 = arith.constant 0 : index
    %c0_38 = arith.constant 0 : index
    %c0_39 = arith.constant 0 : index
    %157 = vector.load %arg20[%c0_37, %c0_38, %c0_39] : memref<2x1x128xf32, #tpu.memory_space<vmem>>, vector<1x1x128xf32>
    %158 = vector.shape_cast %157 : vector<1x1x128xf32> to vector<1x128xf32>
    %cst_40 = arith.constant dense<0.000000e+00> : vector<16xf32>
    %159 = vector.multi_reduction <add>, %154, %cst_40 [1] : vector<16x128xf32> to vector<16xf32>
    %160 = vector.shape_cast %159 : vector<16xf32> to vector<16x1xf32>
    %cst_41 = arith.constant 1.280000e+02 : f32
    %161 = vector.broadcast %cst_41 : f32 to vector<16x1xf32>
    %162 = arith.divf %160, %161 : vector<16x1xf32>
    %163 = arith.mulf %154, %154 : vector<16x128xf32>
    %cst_42 = arith.constant dense<0.000000e+00> : vector<16xf32>
    %164 = vector.multi_reduction <add>, %163, %cst_42 [1] : vector<16x128xf32> to vector<16xf32>
    %165 = vector.shape_cast %164 : vector<16xf32> to vector<16x1xf32>
    %cst_43 = arith.constant 1.280000e+02 : f32
    %166 = vector.broadcast %cst_43 : f32 to vector<16x1xf32>
    %167 = arith.divf %165, %166 : vector<16x1xf32>
    %168 = arith.mulf %162, %162 : vector<16x1xf32>
    %169 = arith.subf %167, %168 : vector<16x1xf32>
    %170 = vector.broadcast %162 : vector<16x1xf32> to vector<16x128xf32>
    %171 = arith.subf %154, %170 : vector<16x128xf32>
    %cst_44 = arith.constant 9.99999997E-7 : f32
    %172 = vector.broadcast %cst_44 : f32 to vector<16x1xf32>
    %173 = arith.addf %169, %172 : vector<16x1xf32>
    %174 = math.rsqrt %173 : vector<16x1xf32>
    %175 = vector.broadcast %174 : vector<16x1xf32> to vector<16x128xf32>
    %176 = arith.mulf %171, %175 : vector<16x128xf32>
    %177 = vector.broadcast %156 : vector<1x128xf32> to vector<16x128xf32>
    %178 = arith.mulf %176, %177 : vector<16x128xf32>
    %179 = vector.broadcast %158 : vector<1x128xf32> to vector<16x128xf32>
    %180 = arith.addf %178, %179 : vector<16x128xf32>
    %c0_45 = arith.constant 0 : index
    %c0_46 = arith.constant 0 : index
    %c0_47 = arith.constant 0 : index
    %181 = vector.load %arg9[%c0_45, %c0_46, %c0_47] : memref<2x128x128xf32, #tpu.memory_space<vmem>>, vector<1x128x128xf32>
    %182 = vector.shape_cast %181 : vector<1x128x128xf32> to vector<128x128xf32>
    %183 = arith.truncf %180 : vector<16x128xf32> to vector<16x128xbf16>
    %184 = arith.truncf %182 : vector<128x128xf32> to vector<128x128xbf16>
    %cst_48 = arith.constant dense<0.000000e+00> : vector<16x128xf32>
    %185 = tpu.matmul %183, %184, %cst_48 {dimension_numbers = #tpu.dot_dimension_numbers<[1], [0], [0], [1], [0, 0, 1, 1], [], []>} : vector<16x128xbf16>, vector<128x128xbf16>, vector<16x128xf32> -> vector<16x128xf32>
    %c0_49 = arith.constant 0 : index
    %c0_50 = arith.constant 0 : index
    %c0_51 = arith.constant 0 : index
    %186 = vector.load %arg10[%c0_49, %c0_50, %c0_51] : memref<2x1x128xf32, #tpu.memory_space<vmem>>, vector<1x1x128xf32>
    %187 = vector.shape_cast %186 : vector<1x1x128xf32> to vector<1x128xf32>
    %188 = vector.broadcast %187 : vector<1x128xf32> to vector<16x128xf32>
    %189 = arith.addf %185, %188 : vector<16x128xf32>
    %c0_52 = arith.constant 0 : index
    %c0_53 = arith.constant 0 : index
    %c0_54 = arith.constant 0 : index
    %190 = vector.load %arg11[%c0_52, %c0_53, %c0_54] : memref<2x128x256xf32, #tpu.memory_space<vmem>>, vector<1x128x256xf32>
    %191 = vector.shape_cast %190 : vector<1x128x256xf32> to vector<128x256xf32>
    %192 = arith.truncf %1 : vector<32x128xf32> to vector<32x128xbf16>
    %193 = arith.truncf %191 : vector<128x256xf32> to vector<128x256xbf16>
    %cst_55 = arith.constant dense<0.000000e+00> : vector<32x256xf32>
    %194 = tpu.matmul %192, %193, %cst_55 {dimension_numbers = #tpu.dot_dimension_numbers<[1], [0], [0], [1], [0, 0, 1, 1], [], []>} : vector<32x128xbf16>, vector<128x256xbf16>, vector<32x256xf32> -> vector<32x256xf32>
    %c0_56 = arith.constant 0 : index
    %c0_57 = arith.constant 0 : index
    %c0_58 = arith.constant 0 : index
    %195 = vector.load %arg12[%c0_56, %c0_57, %c0_58] : memref<2x1x256xf32, #tpu.memory_space<vmem>>, vector<1x1x256xf32>
    %196 = vector.shape_cast %195 : vector<1x1x256xf32> to vector<1x256xf32>
    %197 = vector.broadcast %196 : vector<1x256xf32> to vector<32x256xf32>
    %198 = arith.addf %194, %197 : vector<32x256xf32>
    %c0_59 = arith.constant 0 : index
    %c0_60 = arith.constant 0 : index
    %c0_61 = arith.constant 0 : index
    %c0_62 = arith.constant 0 : index
    %199 = vector.load %arg13[%c0_59, %c0_60, %c0_61, %c0_62] : memref<2x4x32x128xf32, #tpu.memory_space<vmem>>, vector<1x4x32x128xf32>
    %200 = vector.shape_cast %199 : vector<1x4x32x128xf32> to vector<4x32x128xf32>
    %201 = vector.extract_strided_slice %189 {offsets = [0, 0], sizes = [8, 128], strides = [1, 1]} : vector<16x128xf32> to vector<8x128xf32>
    %202 = vector.extract_strided_slice %198 {offsets = [0, 0], sizes = [16, 128], strides = [1, 1]} : vector<32x256xf32> to vector<16x128xf32>
    %203 = vector.extract_strided_slice %198 {offsets = [0, 128], sizes = [16, 128], strides = [1, 1]} : vector<32x256xf32> to vector<16x128xf32>
    %204 = vector.extract_strided_slice %7 {offsets = [0, 0, 0], sizes = [1, 8, 16], strides = [1, 1, 1]} : vector<2x8x16xf32> to vector<1x8x16xf32>
    %205 = vector.shape_cast %204 : vector<1x8x16xf32> to vector<8x16xf32>
    %206 = vector.extract_strided_slice %201 {offsets = [0, 0], sizes = [8, 32], strides = [1, 1]} : vector<8x128xf32> to vector<8x32xf32>
    %207 = vector.extract_strided_slice %201 {offsets = [0, 32], sizes = [8, 32], strides = [1, 1]} : vector<8x128xf32> to vector<8x32xf32>
    %208 = vector.extract_strided_slice %201 {offsets = [0, 64], sizes = [8, 32], strides = [1, 1]} : vector<8x128xf32> to vector<8x32xf32>
    %209 = vector.extract_strided_slice %201 {offsets = [0, 96], sizes = [8, 32], strides = [1, 1]} : vector<8x128xf32> to vector<8x32xf32>
    %210 = vector.shape_cast %206 : vector<8x32xf32> to vector<1x8x32xf32>
    %211 = vector.shape_cast %207 : vector<8x32xf32> to vector<1x8x32xf32>
    %212 = vector.shape_cast %208 : vector<8x32xf32> to vector<1x8x32xf32>
    %213 = vector.shape_cast %209 : vector<8x32xf32> to vector<1x8x32xf32>
    %214 = tpu.concatenate %210, %211, %212, %213 in 0 : vector<1x8x32xf32>, vector<1x8x32xf32>, vector<1x8x32xf32>, vector<1x8x32xf32> -> vector<4x8x32xf32>
    %215 = vector.extract_strided_slice %202 {offsets = [0, 0], sizes = [16, 32], strides = [1, 1]} : vector<16x128xf32> to vector<16x32xf32>
    %216 = vector.extract_strided_slice %202 {offsets = [0, 32], sizes = [16, 32], strides = [1, 1]} : vector<16x128xf32> to vector<16x32xf32>
    %217 = vector.extract_strided_slice %202 {offsets = [0, 64], sizes = [16, 32], strides = [1, 1]} : vector<16x128xf32> to vector<16x32xf32>
    %218 = vector.extract_strided_slice %202 {offsets = [0, 96], sizes = [16, 32], strides = [1, 1]} : vector<16x128xf32> to vector<16x32xf32>
    %219 = vector.shape_cast %215 : vector<16x32xf32> to vector<1x16x32xf32>
    %220 = vector.shape_cast %216 : vector<16x32xf32> to vector<1x16x32xf32>
    %221 = vector.shape_cast %217 : vector<16x32xf32> to vector<1x16x32xf32>
    %222 = vector.shape_cast %218 : vector<16x32xf32> to vector<1x16x32xf32>
    %223 = tpu.concatenate %219, %220, %221, %222 in 0 : vector<1x16x32xf32>, vector<1x16x32xf32>, vector<1x16x32xf32>, vector<1x16x32xf32> -> vector<4x16x32xf32>
    %224 = vector.extract_strided_slice %203 {offsets = [0, 0], sizes = [16, 32], strides = [1, 1]} : vector<16x128xf32> to vector<16x32xf32>
    %225 = vector.extract_strided_slice %203 {offsets = [0, 32], sizes = [16, 32], strides = [1, 1]} : vector<16x128xf32> to vector<16x32xf32>
    %226 = vector.extract_strided_slice %203 {offsets = [0, 64], sizes = [16, 32], strides = [1, 1]} : vector<16x128xf32> to vector<16x32xf32>
    %227 = vector.extract_strided_slice %203 {offsets = [0, 96], sizes = [16, 32], strides = [1, 1]} : vector<16x128xf32> to vector<16x32xf32>
    %228 = vector.shape_cast %224 : vector<16x32xf32> to vector<1x16x32xf32>
    %229 = vector.shape_cast %225 : vector<16x32xf32> to vector<1x16x32xf32>
    %230 = vector.shape_cast %226 : vector<16x32xf32> to vector<1x16x32xf32>
    %231 = vector.shape_cast %227 : vector<16x32xf32> to vector<1x16x32xf32>
    %232 = tpu.concatenate %228, %229, %230, %231 in 0 : vector<1x16x32xf32>, vector<1x16x32xf32>, vector<1x16x32xf32>, vector<1x16x32xf32> -> vector<4x16x32xf32>
    %233 = arith.truncf %214 : vector<4x8x32xf32> to vector<4x8x32xbf16>
    %234 = arith.truncf %223 : vector<4x16x32xf32> to vector<4x16x32xbf16>
    "tpu.trace_start"() <{level = 10 : i32, message = "hqd,hkd->hqk"}> : () -> ()
    %cst_63 = arith.constant dense<0.000000e+00> : vector<4x8x16xf32>
    %235 = tpu.matmul %233, %234, %cst_63 {dimension_numbers = #tpu.dot_dimension_numbers<[2], [2], [1], [1], [0, 0, 0, 1, 1, 1], [0], [0]>} : vector<4x8x32xbf16>, vector<4x16x32xbf16>, vector<4x8x16xf32> -> vector<4x8x16xf32>
    "tpu.trace_stop"() : () -> ()
    %236 = vector.shape_cast %205 : vector<8x16xf32> to vector<1x8x16xf32>
    %237 = vector.broadcast %236 : vector<1x8x16xf32> to vector<4x8x16xf32>
    %238 = arith.addf %235, %237 : vector<4x8x16xf32>
    %cst_64 = arith.constant dense<0xFF800000> : vector<4x8xf32>
    %239 = vector.multi_reduction <maximumf>, %238, %cst_64 [2] : vector<4x8x16xf32> to vector<4x8xf32>
    %240 = vector.shape_cast %239 : vector<4x8xf32> to vector<4x8x1xf32>
    %241 = vector.broadcast %240 : vector<4x8x1xf32> to vector<4x8x16xf32>
    %242 = arith.subf %238, %241 : vector<4x8x16xf32>
    %243 = math.exp %242 : vector<4x8x16xf32>
    %cst_65 = arith.constant dense<0.000000e+00> : vector<4x8xf32>
    %244 = vector.multi_reduction <add>, %243, %cst_65 [2] : vector<4x8x16xf32> to vector<4x8xf32>
    %245 = vector.shape_cast %244 : vector<4x8xf32> to vector<4x8x1xf32>
    %246 = tpu.reciprocal %245 {approx = true} : vector<4x8x1xf32> -> vector<4x8x1xf32>
    %247 = vector.broadcast %246 : vector<4x8x1xf32> to vector<4x8x16xf32>
    %248 = arith.mulf %243, %247 : vector<4x8x16xf32>
    %249 = arith.truncf %248 : vector<4x8x16xf32> to vector<4x8x16xbf16>
    %250 = arith.truncf %232 : vector<4x16x32xf32> to vector<4x16x32xbf16>
    "tpu.trace_start"() <{level = 10 : i32, message = "hqk,hkd->hqd"}> : () -> ()
    %cst_66 = arith.constant dense<0.000000e+00> : vector<4x8x32xf32>
    %251 = tpu.matmul %249, %250, %cst_66 {dimension_numbers = #tpu.dot_dimension_numbers<[2], [1], [1], [2], [0, 0, 0, 1, 1, 2], [0], [0]>} : vector<4x8x16xbf16>, vector<4x16x32xbf16>, vector<4x8x32xf32> -> vector<4x8x32xf32>
    "tpu.trace_stop"() : () -> ()
    %252 = arith.truncf %251 : vector<4x8x32xf32> to vector<4x8x32xbf16>
    %253 = arith.truncf %200 : vector<4x32x128xf32> to vector<4x32x128xbf16>
    "tpu.trace_start"() <{level = 10 : i32, message = "hqd,hdc->hqc"}> : () -> ()
    %cst_67 = arith.constant dense<0.000000e+00> : vector<4x8x128xf32>
    %254 = tpu.matmul %252, %253, %cst_67 {dimension_numbers = #tpu.dot_dimension_numbers<[2], [1], [1], [2], [0, 0, 0, 1, 1, 2], [0], [0]>} : vector<4x8x32xbf16>, vector<4x32x128xbf16>, vector<4x8x128xf32> -> vector<4x8x128xf32>
    "tpu.trace_stop"() : () -> ()
    %255 = vector.extract_strided_slice %254 {offsets = [0, 0, 0], sizes = [1, 8, 128], strides = [1, 1, 1]} : vector<4x8x128xf32> to vector<1x8x128xf32>
    %256 = vector.shape_cast %255 : vector<1x8x128xf32> to vector<8x128xf32>
    %257 = vector.extract_strided_slice %254 {offsets = [1, 0, 0], sizes = [1, 8, 128], strides = [1, 1, 1]} : vector<4x8x128xf32> to vector<1x8x128xf32>
    %258 = vector.shape_cast %257 : vector<1x8x128xf32> to vector<8x128xf32>
    %259 = arith.addf %256, %258 : vector<8x128xf32>
    %260 = vector.extract_strided_slice %254 {offsets = [2, 0, 0], sizes = [1, 8, 128], strides = [1, 1, 1]} : vector<4x8x128xf32> to vector<1x8x128xf32>
    %261 = vector.shape_cast %260 : vector<1x8x128xf32> to vector<8x128xf32>
    %262 = arith.addf %259, %261 : vector<8x128xf32>
    %263 = vector.extract_strided_slice %254 {offsets = [3, 0, 0], sizes = [1, 8, 128], strides = [1, 1, 1]} : vector<4x8x128xf32> to vector<1x8x128xf32>
    %264 = vector.shape_cast %263 : vector<1x8x128xf32> to vector<8x128xf32>
    %265 = arith.addf %262, %264 : vector<8x128xf32>
    %266 = vector.extract_strided_slice %189 {offsets = [8, 0], sizes = [8, 128], strides = [1, 1]} : vector<16x128xf32> to vector<8x128xf32>
    %267 = vector.extract_strided_slice %198 {offsets = [16, 0], sizes = [16, 128], strides = [1, 1]} : vector<32x256xf32> to vector<16x128xf32>
    %268 = vector.extract_strided_slice %198 {offsets = [16, 128], sizes = [16, 128], strides = [1, 1]} : vector<32x256xf32> to vector<16x128xf32>
    %269 = vector.extract_strided_slice %7 {offsets = [1, 0, 0], sizes = [1, 8, 16], strides = [1, 1, 1]} : vector<2x8x16xf32> to vector<1x8x16xf32>
    %270 = vector.shape_cast %269 : vector<1x8x16xf32> to vector<8x16xf32>
    %271 = vector.extract_strided_slice %266 {offsets = [0, 0], sizes = [8, 32], strides = [1, 1]} : vector<8x128xf32> to vector<8x32xf32>
    %272 = vector.extract_strided_slice %266 {offsets = [0, 32], sizes = [8, 32], strides = [1, 1]} : vector<8x128xf32> to vector<8x32xf32>
    %273 = vector.extract_strided_slice %266 {offsets = [0, 64], sizes = [8, 32], strides = [1, 1]} : vector<8x128xf32> to vector<8x32xf32>
    %274 = vector.extract_strided_slice %266 {offsets = [0, 96], sizes = [8, 32], strides = [1, 1]} : vector<8x128xf32> to vector<8x32xf32>
    %275 = vector.shape_cast %271 : vector<8x32xf32> to vector<1x8x32xf32>
    %276 = vector.shape_cast %272 : vector<8x32xf32> to vector<1x8x32xf32>
    %277 = vector.shape_cast %273 : vector<8x32xf32> to vector<1x8x32xf32>
    %278 = vector.shape_cast %274 : vector<8x32xf32> to vector<1x8x32xf32>
    %279 = tpu.concatenate %275, %276, %277, %278 in 0 : vector<1x8x32xf32>, vector<1x8x32xf32>, vector<1x8x32xf32>, vector<1x8x32xf32> -> vector<4x8x32xf32>
    %280 = vector.extract_strided_slice %267 {offsets = [0, 0], sizes = [16, 32], strides = [1, 1]} : vector<16x128xf32> to vector<16x32xf32>
    %281 = vector.extract_strided_slice %267 {offsets = [0, 32], sizes = [16, 32], strides = [1, 1]} : vector<16x128xf32> to vector<16x32xf32>
    %282 = vector.extract_strided_slice %267 {offsets = [0, 64], sizes = [16, 32], strides = [1, 1]} : vector<16x128xf32> to vector<16x32xf32>
    %283 = vector.extract_strided_slice %267 {offsets = [0, 96], sizes = [16, 32], strides = [1, 1]} : vector<16x128xf32> to vector<16x32xf32>
    %284 = vector.shape_cast %280 : vector<16x32xf32> to vector<1x16x32xf32>
    %285 = vector.shape_cast %281 : vector<16x32xf32> to vector<1x16x32xf32>
    %286 = vector.shape_cast %282 : vector<16x32xf32> to vector<1x16x32xf32>
    %287 = vector.shape_cast %283 : vector<16x32xf32> to vector<1x16x32xf32>
    %288 = tpu.concatenate %284, %285, %286, %287 in 0 : vector<1x16x32xf32>, vector<1x16x32xf32>, vector<1x16x32xf32>, vector<1x16x32xf32> -> vector<4x16x32xf32>
    %289 = vector.extract_strided_slice %268 {offsets = [0, 0], sizes = [16, 32], strides = [1, 1]} : vector<16x128xf32> to vector<16x32xf32>
    %290 = vector.extract_strided_slice %268 {offsets = [0, 32], sizes = [16, 32], strides = [1, 1]} : vector<16x128xf32> to vector<16x32xf32>
    %291 = vector.extract_strided_slice %268 {offsets = [0, 64], sizes = [16, 32], strides = [1, 1]} : vector<16x128xf32> to vector<16x32xf32>
    %292 = vector.extract_strided_slice %268 {offsets = [0, 96], sizes = [16, 32], strides = [1, 1]} : vector<16x128xf32> to vector<16x32xf32>
    %293 = vector.shape_cast %289 : vector<16x32xf32> to vector<1x16x32xf32>
    %294 = vector.shape_cast %290 : vector<16x32xf32> to vector<1x16x32xf32>
    %295 = vector.shape_cast %291 : vector<16x32xf32> to vector<1x16x32xf32>
    %296 = vector.shape_cast %292 : vector<16x32xf32> to vector<1x16x32xf32>
    %297 = tpu.concatenate %293, %294, %295, %296 in 0 : vector<1x16x32xf32>, vector<1x16x32xf32>, vector<1x16x32xf32>, vector<1x16x32xf32> -> vector<4x16x32xf32>
    %298 = arith.truncf %279 : vector<4x8x32xf32> to vector<4x8x32xbf16>
    %299 = arith.truncf %288 : vector<4x16x32xf32> to vector<4x16x32xbf16>
    "tpu.trace_start"() <{level = 10 : i32, message = "hqd,hkd->hqk"}> : () -> ()
    %cst_68 = arith.constant dense<0.000000e+00> : vector<4x8x16xf32>
    %300 = tpu.matmul %298, %299, %cst_68 {dimension_numbers = #tpu.dot_dimension_numbers<[2], [2], [1], [1], [0, 0, 0, 1, 1, 1], [0], [0]>} : vector<4x8x32xbf16>, vector<4x16x32xbf16>, vector<4x8x16xf32> -> vector<4x8x16xf32>
    "tpu.trace_stop"() : () -> ()
    %301 = vector.shape_cast %270 : vector<8x16xf32> to vector<1x8x16xf32>
    %302 = vector.broadcast %301 : vector<1x8x16xf32> to vector<4x8x16xf32>
    %303 = arith.addf %300, %302 : vector<4x8x16xf32>
    %cst_69 = arith.constant dense<0xFF800000> : vector<4x8xf32>
    %304 = vector.multi_reduction <maximumf>, %303, %cst_69 [2] : vector<4x8x16xf32> to vector<4x8xf32>
    %305 = vector.shape_cast %304 : vector<4x8xf32> to vector<4x8x1xf32>
    %306 = vector.broadcast %305 : vector<4x8x1xf32> to vector<4x8x16xf32>
    %307 = arith.subf %303, %306 : vector<4x8x16xf32>
    %308 = math.exp %307 : vector<4x8x16xf32>
    %cst_70 = arith.constant dense<0.000000e+00> : vector<4x8xf32>
    %309 = vector.multi_reduction <add>, %308, %cst_70 [2] : vector<4x8x16xf32> to vector<4x8xf32>
    %310 = vector.shape_cast %309 : vector<4x8xf32> to vector<4x8x1xf32>
    %311 = tpu.reciprocal %310 {approx = true} : vector<4x8x1xf32> -> vector<4x8x1xf32>
    %312 = vector.broadcast %311 : vector<4x8x1xf32> to vector<4x8x16xf32>
    %313 = arith.mulf %308, %312 : vector<4x8x16xf32>
    %314 = arith.truncf %313 : vector<4x8x16xf32> to vector<4x8x16xbf16>
    %315 = arith.truncf %297 : vector<4x16x32xf32> to vector<4x16x32xbf16>
    "tpu.trace_start"() <{level = 10 : i32, message = "hqk,hkd->hqd"}> : () -> ()
    %cst_71 = arith.constant dense<0.000000e+00> : vector<4x8x32xf32>
    %316 = tpu.matmul %314, %315, %cst_71 {dimension_numbers = #tpu.dot_dimension_numbers<[2], [1], [1], [2], [0, 0, 0, 1, 1, 2], [0], [0]>} : vector<4x8x16xbf16>, vector<4x16x32xbf16>, vector<4x8x32xf32> -> vector<4x8x32xf32>
    "tpu.trace_stop"() : () -> ()
    %317 = arith.truncf %316 : vector<4x8x32xf32> to vector<4x8x32xbf16>
    %318 = arith.truncf %200 : vector<4x32x128xf32> to vector<4x32x128xbf16>
    "tpu.trace_start"() <{level = 10 : i32, message = "hqd,hdc->hqc"}> : () -> ()
    %cst_72 = arith.constant dense<0.000000e+00> : vector<4x8x128xf32>
    %319 = tpu.matmul %317, %318, %cst_72 {dimension_numbers = #tpu.dot_dimension_numbers<[2], [1], [1], [2], [0, 0, 0, 1, 1, 2], [0], [0]>} : vector<4x8x32xbf16>, vector<4x32x128xbf16>, vector<4x8x128xf32> -> vector<4x8x128xf32>
    "tpu.trace_stop"() : () -> ()
    %320 = vector.extract_strided_slice %319 {offsets = [0, 0, 0], sizes = [1, 8, 128], strides = [1, 1, 1]} : vector<4x8x128xf32> to vector<1x8x128xf32>
    %321 = vector.shape_cast %320 : vector<1x8x128xf32> to vector<8x128xf32>
    %322 = vector.extract_strided_slice %319 {offsets = [1, 0, 0], sizes = [1, 8, 128], strides = [1, 1, 1]} : vector<4x8x128xf32> to vector<1x8x128xf32>
    %323 = vector.shape_cast %322 : vector<1x8x128xf32> to vector<8x128xf32>
    %324 = arith.addf %321, %323 : vector<8x128xf32>
    %325 = vector.extract_strided_slice %319 {offsets = [2, 0, 0], sizes = [1, 8, 128], strides = [1, 1, 1]} : vector<4x8x128xf32> to vector<1x8x128xf32>
    %326 = vector.shape_cast %325 : vector<1x8x128xf32> to vector<8x128xf32>
    %327 = arith.addf %324, %326 : vector<8x128xf32>
    %328 = vector.extract_strided_slice %319 {offsets = [3, 0, 0], sizes = [1, 8, 128], strides = [1, 1, 1]} : vector<4x8x128xf32> to vector<1x8x128xf32>
    %329 = vector.shape_cast %328 : vector<1x8x128xf32> to vector<8x128xf32>
    %330 = arith.addf %327, %329 : vector<8x128xf32>
    %331 = tpu.concatenate %265, %330 in 0 : vector<8x128xf32>, vector<8x128xf32> -> vector<16x128xf32>
    %c0_73 = arith.constant 0 : index
    %c0_74 = arith.constant 0 : index
    %c0_75 = arith.constant 0 : index
    %332 = vector.load %arg14[%c0_73, %c0_74, %c0_75] : memref<2x1x128xf32, #tpu.memory_space<vmem>>, vector<1x1x128xf32>
    %333 = vector.shape_cast %332 : vector<1x1x128xf32> to vector<1x128xf32>
    %334 = vector.broadcast %333 : vector<1x128xf32> to vector<16x128xf32>
    %335 = arith.addf %331, %334 : vector<16x128xf32>
    %336 = arith.addf %180, %335 : vector<16x128xf32>
    %c0_76 = arith.constant 0 : index
    %c0_77 = arith.constant 0 : index
    %c0_78 = arith.constant 0 : index
    %337 = vector.load %arg21[%c0_76, %c0_77, %c0_78] : memref<2x1x128xf32, #tpu.memory_space<vmem>>, vector<1x1x128xf32>
    %338 = vector.shape_cast %337 : vector<1x1x128xf32> to vector<1x128xf32>
    %c0_79 = arith.constant 0 : index
    %c0_80 = arith.constant 0 : index
    %c0_81 = arith.constant 0 : index
    %339 = vector.load %arg22[%c0_79, %c0_80, %c0_81] : memref<2x1x128xf32, #tpu.memory_space<vmem>>, vector<1x1x128xf32>
    %340 = vector.shape_cast %339 : vector<1x1x128xf32> to vector<1x128xf32>
    %cst_82 = arith.constant dense<0.000000e+00> : vector<16xf32>
    %341 = vector.multi_reduction <add>, %336, %cst_82 [1] : vector<16x128xf32> to vector<16xf32>
    %342 = vector.shape_cast %341 : vector<16xf32> to vector<16x1xf32>
    %cst_83 = arith.constant 1.280000e+02 : f32
    %343 = vector.broadcast %cst_83 : f32 to vector<16x1xf32>
    %344 = arith.divf %342, %343 : vector<16x1xf32>
    %345 = arith.mulf %336, %336 : vector<16x128xf32>
    %cst_84 = arith.constant dense<0.000000e+00> : vector<16xf32>
    %346 = vector.multi_reduction <add>, %345, %cst_84 [1] : vector<16x128xf32> to vector<16xf32>
    %347 = vector.shape_cast %346 : vector<16xf32> to vector<16x1xf32>
    %cst_85 = arith.constant 1.280000e+02 : f32
    %348 = vector.broadcast %cst_85 : f32 to vector<16x1xf32>
    %349 = arith.divf %347, %348 : vector<16x1xf32>
    %350 = arith.mulf %344, %344 : vector<16x1xf32>
    %351 = arith.subf %349, %350 : vector<16x1xf32>
    %352 = vector.broadcast %344 : vector<16x1xf32> to vector<16x128xf32>
    %353 = arith.subf %336, %352 : vector<16x128xf32>
    %cst_86 = arith.constant 9.99999997E-7 : f32
    %354 = vector.broadcast %cst_86 : f32 to vector<16x1xf32>
    %355 = arith.addf %351, %354 : vector<16x1xf32>
    %356 = math.rsqrt %355 : vector<16x1xf32>
    %357 = vector.broadcast %356 : vector<16x1xf32> to vector<16x128xf32>
    %358 = arith.mulf %353, %357 : vector<16x128xf32>
    %359 = vector.broadcast %338 : vector<1x128xf32> to vector<16x128xf32>
    %360 = arith.mulf %358, %359 : vector<16x128xf32>
    %361 = vector.broadcast %340 : vector<1x128xf32> to vector<16x128xf32>
    %362 = arith.addf %360, %361 : vector<16x128xf32>
    %c0_87 = arith.constant 0 : index
    %c0_88 = arith.constant 0 : index
    %c0_89 = arith.constant 0 : index
    %363 = vector.load %arg15[%c0_87, %c0_88, %c0_89] : memref<2x128x128xf32, #tpu.memory_space<vmem>>, vector<1x128x128xf32>
    %364 = vector.shape_cast %363 : vector<1x128x128xf32> to vector<128x128xf32>
    %365 = arith.truncf %362 : vector<16x128xf32> to vector<16x128xbf16>
    %366 = arith.truncf %364 : vector<128x128xf32> to vector<128x128xbf16>
    %cst_90 = arith.constant dense<0.000000e+00> : vector<16x128xf32>
    %367 = tpu.matmul %365, %366, %cst_90 {dimension_numbers = #tpu.dot_dimension_numbers<[1], [0], [0], [1], [0, 0, 1, 1], [], []>} : vector<16x128xbf16>, vector<128x128xbf16>, vector<16x128xf32> -> vector<16x128xf32>
    %c0_91 = arith.constant 0 : index
    %c0_92 = arith.constant 0 : index
    %c0_93 = arith.constant 0 : index
    %368 = vector.load %arg16[%c0_91, %c0_92, %c0_93] : memref<2x1x128xf32, #tpu.memory_space<vmem>>, vector<1x1x128xf32>
    %369 = vector.shape_cast %368 : vector<1x1x128xf32> to vector<1x128xf32>
    %370 = vector.broadcast %369 : vector<1x128xf32> to vector<16x128xf32>
    %371 = arith.addf %367, %370 : vector<16x128xf32>
    %cst_94 = arith.constant 0.000000e+00 : f32
    %372 = vector.broadcast %cst_94 : f32 to vector<16x128xf32>
    %373 = arith.maximumf %371, %372 : vector<16x128xf32>
    %c0_95 = arith.constant 0 : index
    %c0_96 = arith.constant 0 : index
    %c0_97 = arith.constant 0 : index
    %374 = vector.load %arg17[%c0_95, %c0_96, %c0_97] : memref<2x128x128xf32, #tpu.memory_space<vmem>>, vector<1x128x128xf32>
    %375 = vector.shape_cast %374 : vector<1x128x128xf32> to vector<128x128xf32>
    %376 = arith.truncf %373 : vector<16x128xf32> to vector<16x128xbf16>
    %377 = arith.truncf %375 : vector<128x128xf32> to vector<128x128xbf16>
    %cst_98 = arith.constant dense<0.000000e+00> : vector<16x128xf32>
    %378 = tpu.matmul %376, %377, %cst_98 {dimension_numbers = #tpu.dot_dimension_numbers<[1], [0], [0], [1], [0, 0, 1, 1], [], []>} : vector<16x128xbf16>, vector<128x128xbf16>, vector<16x128xf32> -> vector<16x128xf32>
    %c0_99 = arith.constant 0 : index
    %c0_100 = arith.constant 0 : index
    %c0_101 = arith.constant 0 : index
    %379 = vector.load %arg18[%c0_99, %c0_100, %c0_101] : memref<2x1x128xf32, #tpu.memory_space<vmem>>, vector<1x1x128xf32>
    %380 = vector.shape_cast %379 : vector<1x1x128xf32> to vector<1x128xf32>
    %381 = vector.broadcast %380 : vector<1x128xf32> to vector<16x128xf32>
    %382 = arith.addf %378, %381 : vector<16x128xf32>
    %383 = arith.addf %362, %382 : vector<16x128xf32>
    %c0_102 = arith.constant 0 : index
    %c0_103 = arith.constant 0 : index
    %c0_104 = arith.constant 0 : index
    %384 = vector.load %arg23[%c0_102, %c0_103, %c0_104] : memref<2x1x128xf32, #tpu.memory_space<vmem>>, vector<1x1x128xf32>
    %385 = vector.shape_cast %384 : vector<1x1x128xf32> to vector<1x128xf32>
    %c0_105 = arith.constant 0 : index
    %c0_106 = arith.constant 0 : index
    %c0_107 = arith.constant 0 : index
    %386 = vector.load %arg24[%c0_105, %c0_106, %c0_107] : memref<2x1x128xf32, #tpu.memory_space<vmem>>, vector<1x1x128xf32>
    %387 = vector.shape_cast %386 : vector<1x1x128xf32> to vector<1x128xf32>
    %cst_108 = arith.constant dense<0.000000e+00> : vector<16xf32>
    %388 = vector.multi_reduction <add>, %383, %cst_108 [1] : vector<16x128xf32> to vector<16xf32>
    %389 = vector.shape_cast %388 : vector<16xf32> to vector<16x1xf32>
    %cst_109 = arith.constant 1.280000e+02 : f32
    %390 = vector.broadcast %cst_109 : f32 to vector<16x1xf32>
    %391 = arith.divf %389, %390 : vector<16x1xf32>
    %392 = arith.mulf %383, %383 : vector<16x128xf32>
    %cst_110 = arith.constant dense<0.000000e+00> : vector<16xf32>
    %393 = vector.multi_reduction <add>, %392, %cst_110 [1] : vector<16x128xf32> to vector<16xf32>
    %394 = vector.shape_cast %393 : vector<16xf32> to vector<16x1xf32>
    %cst_111 = arith.constant 1.280000e+02 : f32
    %395 = vector.broadcast %cst_111 : f32 to vector<16x1xf32>
    %396 = arith.divf %394, %395 : vector<16x1xf32>
    %397 = arith.mulf %391, %391 : vector<16x1xf32>
    %398 = arith.subf %396, %397 : vector<16x1xf32>
    %399 = vector.broadcast %391 : vector<16x1xf32> to vector<16x128xf32>
    %400 = arith.subf %383, %399 : vector<16x128xf32>
    %cst_112 = arith.constant 9.99999997E-7 : f32
    %401 = vector.broadcast %cst_112 : f32 to vector<16x1xf32>
    %402 = arith.addf %398, %401 : vector<16x1xf32>
    %403 = math.rsqrt %402 : vector<16x1xf32>
    %404 = vector.broadcast %403 : vector<16x1xf32> to vector<16x128xf32>
    %405 = arith.mulf %400, %404 : vector<16x128xf32>
    %406 = vector.broadcast %385 : vector<1x128xf32> to vector<16x128xf32>
    %407 = arith.mulf %405, %406 : vector<16x128xf32>
    %408 = vector.broadcast %387 : vector<1x128xf32> to vector<16x128xf32>
    %409 = arith.addf %407, %408 : vector<16x128xf32>
    %c1 = arith.constant 1 : index
    %c0_113 = arith.constant 0 : index
    %c0_114 = arith.constant 0 : index
    %410 = vector.load %arg5[%c1, %c0_113, %c0_114] : memref<2x128x384xf32, #tpu.memory_space<vmem>>, vector<1x128x384xf32>
    %411 = vector.shape_cast %410 : vector<1x128x384xf32> to vector<128x384xf32>
    %412 = arith.truncf %409 : vector<16x128xf32> to vector<16x128xbf16>
    %413 = arith.truncf %411 : vector<128x384xf32> to vector<128x384xbf16>
    %cst_115 = arith.constant dense<0.000000e+00> : vector<16x384xf32>
    %414 = tpu.matmul %412, %413, %cst_115 {dimension_numbers = #tpu.dot_dimension_numbers<[1], [0], [0], [1], [0, 0, 1, 1], [], []>} : vector<16x128xbf16>, vector<128x384xbf16>, vector<16x384xf32> -> vector<16x384xf32>
    %c1_116 = arith.constant 1 : index
    %c0_117 = arith.constant 0 : index
    %c0_118 = arith.constant 0 : index
    %415 = vector.load %arg6[%c1_116, %c0_117, %c0_118] : memref<2x1x384xf32, #tpu.memory_space<vmem>>, vector<1x1x384xf32>
    %416 = vector.shape_cast %415 : vector<1x1x384xf32> to vector<1x384xf32>
    %417 = vector.broadcast %416 : vector<1x384xf32> to vector<16x384xf32>
    %418 = arith.addf %414, %417 : vector<16x384xf32>
    %c1_119 = arith.constant 1 : index
    %c0_120 = arith.constant 0 : index
    %c0_121 = arith.constant 0 : index
    %c0_122 = arith.constant 0 : index
    %419 = vector.load %arg7[%c1_119, %c0_120, %c0_121, %c0_122] : memref<2x4x32x128xf32, #tpu.memory_space<vmem>>, vector<1x4x32x128xf32>
    %420 = vector.shape_cast %419 : vector<1x4x32x128xf32> to vector<4x32x128xf32>
    %421 = vector.extract_strided_slice %418 {offsets = [0, 0], sizes = [8, 128], strides = [1, 1]} : vector<16x384xf32> to vector<8x128xf32>
    %422 = vector.extract_strided_slice %418 {offsets = [0, 128], sizes = [8, 128], strides = [1, 1]} : vector<16x384xf32> to vector<8x128xf32>
    %423 = vector.extract_strided_slice %418 {offsets = [0, 256], sizes = [8, 128], strides = [1, 1]} : vector<16x384xf32> to vector<8x128xf32>
    %424 = vector.extract_strided_slice %4 {offsets = [0, 0, 0], sizes = [1, 8, 8], strides = [1, 1, 1]} : vector<2x8x8xf32> to vector<1x8x8xf32>
    %425 = vector.shape_cast %424 : vector<1x8x8xf32> to vector<8x8xf32>
    %426 = vector.extract_strided_slice %421 {offsets = [0, 0], sizes = [8, 32], strides = [1, 1]} : vector<8x128xf32> to vector<8x32xf32>
    %427 = vector.extract_strided_slice %421 {offsets = [0, 32], sizes = [8, 32], strides = [1, 1]} : vector<8x128xf32> to vector<8x32xf32>
    %428 = vector.extract_strided_slice %421 {offsets = [0, 64], sizes = [8, 32], strides = [1, 1]} : vector<8x128xf32> to vector<8x32xf32>
    %429 = vector.extract_strided_slice %421 {offsets = [0, 96], sizes = [8, 32], strides = [1, 1]} : vector<8x128xf32> to vector<8x32xf32>
    %430 = vector.shape_cast %426 : vector<8x32xf32> to vector<1x8x32xf32>
    %431 = vector.shape_cast %427 : vector<8x32xf32> to vector<1x8x32xf32>
    %432 = vector.shape_cast %428 : vector<8x32xf32> to vector<1x8x32xf32>
    %433 = vector.shape_cast %429 : vector<8x32xf32> to vector<1x8x32xf32>
    %434 = tpu.concatenate %430, %431, %432, %433 in 0 : vector<1x8x32xf32>, vector<1x8x32xf32>, vector<1x8x32xf32>, vector<1x8x32xf32> -> vector<4x8x32xf32>
    %435 = vector.extract_strided_slice %422 {offsets = [0, 0], sizes = [8, 32], strides = [1, 1]} : vector<8x128xf32> to vector<8x32xf32>
    %436 = vector.extract_strided_slice %422 {offsets = [0, 32], sizes = [8, 32], strides = [1, 1]} : vector<8x128xf32> to vector<8x32xf32>
    %437 = vector.extract_strided_slice %422 {offsets = [0, 64], sizes = [8, 32], strides = [1, 1]} : vector<8x128xf32> to vector<8x32xf32>
    %438 = vector.extract_strided_slice %422 {offsets = [0, 96], sizes = [8, 32], strides = [1, 1]} : vector<8x128xf32> to vector<8x32xf32>
    %439 = vector.shape_cast %435 : vector<8x32xf32> to vector<1x8x32xf32>
    %440 = vector.shape_cast %436 : vector<8x32xf32> to vector<1x8x32xf32>
    %441 = vector.shape_cast %437 : vector<8x32xf32> to vector<1x8x32xf32>
    %442 = vector.shape_cast %438 : vector<8x32xf32> to vector<1x8x32xf32>
    %443 = tpu.concatenate %439, %440, %441, %442 in 0 : vector<1x8x32xf32>, vector<1x8x32xf32>, vector<1x8x32xf32>, vector<1x8x32xf32> -> vector<4x8x32xf32>
    %444 = vector.extract_strided_slice %423 {offsets = [0, 0], sizes = [8, 32], strides = [1, 1]} : vector<8x128xf32> to vector<8x32xf32>
    %445 = vector.extract_strided_slice %423 {offsets = [0, 32], sizes = [8, 32], strides = [1, 1]} : vector<8x128xf32> to vector<8x32xf32>
    %446 = vector.extract_strided_slice %423 {offsets = [0, 64], sizes = [8, 32], strides = [1, 1]} : vector<8x128xf32> to vector<8x32xf32>
    %447 = vector.extract_strided_slice %423 {offsets = [0, 96], sizes = [8, 32], strides = [1, 1]} : vector<8x128xf32> to vector<8x32xf32>
    %448 = vector.shape_cast %444 : vector<8x32xf32> to vector<1x8x32xf32>
    %449 = vector.shape_cast %445 : vector<8x32xf32> to vector<1x8x32xf32>
    %450 = vector.shape_cast %446 : vector<8x32xf32> to vector<1x8x32xf32>
    %451 = vector.shape_cast %447 : vector<8x32xf32> to vector<1x8x32xf32>
    %452 = tpu.concatenate %448, %449, %450, %451 in 0 : vector<1x8x32xf32>, vector<1x8x32xf32>, vector<1x8x32xf32>, vector<1x8x32xf32> -> vector<4x8x32xf32>
    %453 = arith.truncf %434 : vector<4x8x32xf32> to vector<4x8x32xbf16>
    %454 = arith.truncf %443 : vector<4x8x32xf32> to vector<4x8x32xbf16>
    "tpu.trace_start"() <{level = 10 : i32, message = "hqd,hkd->hqk"}> : () -> ()
    %cst_123 = arith.constant dense<0.000000e+00> : vector<4x8x8xf32>
    %455 = tpu.matmul %453, %454, %cst_123 {dimension_numbers = #tpu.dot_dimension_numbers<[2], [2], [1], [1], [0, 0, 0, 1, 1, 1], [0], [0]>} : vector<4x8x32xbf16>, vector<4x8x32xbf16>, vector<4x8x8xf32> -> vector<4x8x8xf32>
    "tpu.trace_stop"() : () -> ()
    %456 = vector.shape_cast %425 : vector<8x8xf32> to vector<1x8x8xf32>
    %457 = vector.broadcast %456 : vector<1x8x8xf32> to vector<4x8x8xf32>
    %458 = arith.addf %455, %457 : vector<4x8x8xf32>
    %cst_124 = arith.constant dense<0xFF800000> : vector<4x8xf32>
    %459 = vector.multi_reduction <maximumf>, %458, %cst_124 [2] : vector<4x8x8xf32> to vector<4x8xf32>
    %460 = vector.shape_cast %459 : vector<4x8xf32> to vector<4x8x1xf32>
    %461 = vector.broadcast %460 : vector<4x8x1xf32> to vector<4x8x8xf32>
    %462 = arith.subf %458, %461 : vector<4x8x8xf32>
    %463 = math.exp %462 : vector<4x8x8xf32>
    %cst_125 = arith.constant dense<0.000000e+00> : vector<4x8xf32>
    %464 = vector.multi_reduction <add>, %463, %cst_125 [2] : vector<4x8x8xf32> to vector<4x8xf32>
    %465 = vector.shape_cast %464 : vector<4x8xf32> to vector<4x8x1xf32>
    %466 = tpu.reciprocal %465 {approx = true} : vector<4x8x1xf32> -> vector<4x8x1xf32>
    %467 = vector.broadcast %466 : vector<4x8x1xf32> to vector<4x8x8xf32>
    %468 = arith.mulf %463, %467 : vector<4x8x8xf32>
    %469 = arith.truncf %468 : vector<4x8x8xf32> to vector<4x8x8xbf16>
    %470 = arith.truncf %452 : vector<4x8x32xf32> to vector<4x8x32xbf16>
    "tpu.trace_start"() <{level = 10 : i32, message = "hqk,hkd->hqd"}> : () -> ()
    %cst_126 = arith.constant dense<0.000000e+00> : vector<4x8x32xf32>
    %471 = tpu.matmul %469, %470, %cst_126 {dimension_numbers = #tpu.dot_dimension_numbers<[2], [1], [1], [2], [0, 0, 0, 1, 1, 2], [0], [0]>} : vector<4x8x8xbf16>, vector<4x8x32xbf16>, vector<4x8x32xf32> -> vector<4x8x32xf32>
    "tpu.trace_stop"() : () -> ()
    %472 = arith.truncf %471 : vector<4x8x32xf32> to vector<4x8x32xbf16>
    %473 = arith.truncf %420 : vector<4x32x128xf32> to vector<4x32x128xbf16>
    "tpu.trace_start"() <{level = 10 : i32, message = "hqd,hdc->hqc"}> : () -> ()
    %cst_127 = arith.constant dense<0.000000e+00> : vector<4x8x128xf32>
    %474 = tpu.matmul %472, %473, %cst_127 {dimension_numbers = #tpu.dot_dimension_numbers<[2], [1], [1], [2], [0, 0, 0, 1, 1, 2], [0], [0]>} : vector<4x8x32xbf16>, vector<4x32x128xbf16>, vector<4x8x128xf32> -> vector<4x8x128xf32>
    "tpu.trace_stop"() : () -> ()
    %475 = vector.extract_strided_slice %474 {offsets = [0, 0, 0], sizes = [1, 8, 128], strides = [1, 1, 1]} : vector<4x8x128xf32> to vector<1x8x128xf32>
    %476 = vector.shape_cast %475 : vector<1x8x128xf32> to vector<8x128xf32>
    %477 = vector.extract_strided_slice %474 {offsets = [1, 0, 0], sizes = [1, 8, 128], strides = [1, 1, 1]} : vector<4x8x128xf32> to vector<1x8x128xf32>
    %478 = vector.shape_cast %477 : vector<1x8x128xf32> to vector<8x128xf32>
    %479 = arith.addf %476, %478 : vector<8x128xf32>
    %480 = vector.extract_strided_slice %474 {offsets = [2, 0, 0], sizes = [1, 8, 128], strides = [1, 1, 1]} : vector<4x8x128xf32> to vector<1x8x128xf32>
    %481 = vector.shape_cast %480 : vector<1x8x128xf32> to vector<8x128xf32>
    %482 = arith.addf %479, %481 : vector<8x128xf32>
    %483 = vector.extract_strided_slice %474 {offsets = [3, 0, 0], sizes = [1, 8, 128], strides = [1, 1, 1]} : vector<4x8x128xf32> to vector<1x8x128xf32>
    %484 = vector.shape_cast %483 : vector<1x8x128xf32> to vector<8x128xf32>
    %485 = arith.addf %482, %484 : vector<8x128xf32>
    %486 = vector.extract_strided_slice %418 {offsets = [8, 0], sizes = [8, 128], strides = [1, 1]} : vector<16x384xf32> to vector<8x128xf32>
    %487 = vector.extract_strided_slice %418 {offsets = [8, 128], sizes = [8, 128], strides = [1, 1]} : vector<16x384xf32> to vector<8x128xf32>
    %488 = vector.extract_strided_slice %418 {offsets = [8, 256], sizes = [8, 128], strides = [1, 1]} : vector<16x384xf32> to vector<8x128xf32>
    %489 = vector.extract_strided_slice %4 {offsets = [1, 0, 0], sizes = [1, 8, 8], strides = [1, 1, 1]} : vector<2x8x8xf32> to vector<1x8x8xf32>
    %490 = vector.shape_cast %489 : vector<1x8x8xf32> to vector<8x8xf32>
    %491 = vector.extract_strided_slice %486 {offsets = [0, 0], sizes = [8, 32], strides = [1, 1]} : vector<8x128xf32> to vector<8x32xf32>
    %492 = vector.extract_strided_slice %486 {offsets = [0, 32], sizes = [8, 32], strides = [1, 1]} : vector<8x128xf32> to vector<8x32xf32>
    %493 = vector.extract_strided_slice %486 {offsets = [0, 64], sizes = [8, 32], strides = [1, 1]} : vector<8x128xf32> to vector<8x32xf32>
    %494 = vector.extract_strided_slice %486 {offsets = [0, 96], sizes = [8, 32], strides = [1, 1]} : vector<8x128xf32> to vector<8x32xf32>
    %495 = vector.shape_cast %491 : vector<8x32xf32> to vector<1x8x32xf32>
    %496 = vector.shape_cast %492 : vector<8x32xf32> to vector<1x8x32xf32>
    %497 = vector.shape_cast %493 : vector<8x32xf32> to vector<1x8x32xf32>
    %498 = vector.shape_cast %494 : vector<8x32xf32> to vector<1x8x32xf32>
    %499 = tpu.concatenate %495, %496, %497, %498 in 0 : vector<1x8x32xf32>, vector<1x8x32xf32>, vector<1x8x32xf32>, vector<1x8x32xf32> -> vector<4x8x32xf32>
    %500 = vector.extract_strided_slice %487 {offsets = [0, 0], sizes = [8, 32], strides = [1, 1]} : vector<8x128xf32> to vector<8x32xf32>
    %501 = vector.extract_strided_slice %487 {offsets = [0, 32], sizes = [8, 32], strides = [1, 1]} : vector<8x128xf32> to vector<8x32xf32>
    %502 = vector.extract_strided_slice %487 {offsets = [0, 64], sizes = [8, 32], strides = [1, 1]} : vector<8x128xf32> to vector<8x32xf32>
    %503 = vector.extract_strided_slice %487 {offsets = [0, 96], sizes = [8, 32], strides = [1, 1]} : vector<8x128xf32> to vector<8x32xf32>
    %504 = vector.shape_cast %500 : vector<8x32xf32> to vector<1x8x32xf32>
    %505 = vector.shape_cast %501 : vector<8x32xf32> to vector<1x8x32xf32>
    %506 = vector.shape_cast %502 : vector<8x32xf32> to vector<1x8x32xf32>
    %507 = vector.shape_cast %503 : vector<8x32xf32> to vector<1x8x32xf32>
    %508 = tpu.concatenate %504, %505, %506, %507 in 0 : vector<1x8x32xf32>, vector<1x8x32xf32>, vector<1x8x32xf32>, vector<1x8x32xf32> -> vector<4x8x32xf32>
    %509 = vector.extract_strided_slice %488 {offsets = [0, 0], sizes = [8, 32], strides = [1, 1]} : vector<8x128xf32> to vector<8x32xf32>
    %510 = vector.extract_strided_slice %488 {offsets = [0, 32], sizes = [8, 32], strides = [1, 1]} : vector<8x128xf32> to vector<8x32xf32>
    %511 = vector.extract_strided_slice %488 {offsets = [0, 64], sizes = [8, 32], strides = [1, 1]} : vector<8x128xf32> to vector<8x32xf32>
    %512 = vector.extract_strided_slice %488 {offsets = [0, 96], sizes = [8, 32], strides = [1, 1]} : vector<8x128xf32> to vector<8x32xf32>
    %513 = vector.shape_cast %509 : vector<8x32xf32> to vector<1x8x32xf32>
    %514 = vector.shape_cast %510 : vector<8x32xf32> to vector<1x8x32xf32>
    %515 = vector.shape_cast %511 : vector<8x32xf32> to vector<1x8x32xf32>
    %516 = vector.shape_cast %512 : vector<8x32xf32> to vector<1x8x32xf32>
    %517 = tpu.concatenate %513, %514, %515, %516 in 0 : vector<1x8x32xf32>, vector<1x8x32xf32>, vector<1x8x32xf32>, vector<1x8x32xf32> -> vector<4x8x32xf32>
    %518 = arith.truncf %499 : vector<4x8x32xf32> to vector<4x8x32xbf16>
    %519 = arith.truncf %508 : vector<4x8x32xf32> to vector<4x8x32xbf16>
    "tpu.trace_start"() <{level = 10 : i32, message = "hqd,hkd->hqk"}> : () -> ()
    %cst_128 = arith.constant dense<0.000000e+00> : vector<4x8x8xf32>
    %520 = tpu.matmul %518, %519, %cst_128 {dimension_numbers = #tpu.dot_dimension_numbers<[2], [2], [1], [1], [0, 0, 0, 1, 1, 1], [0], [0]>} : vector<4x8x32xbf16>, vector<4x8x32xbf16>, vector<4x8x8xf32> -> vector<4x8x8xf32>
    "tpu.trace_stop"() : () -> ()
    %521 = vector.shape_cast %490 : vector<8x8xf32> to vector<1x8x8xf32>
    %522 = vector.broadcast %521 : vector<1x8x8xf32> to vector<4x8x8xf32>
    %523 = arith.addf %520, %522 : vector<4x8x8xf32>
    %cst_129 = arith.constant dense<0xFF800000> : vector<4x8xf32>
    %524 = vector.multi_reduction <maximumf>, %523, %cst_129 [2] : vector<4x8x8xf32> to vector<4x8xf32>
    %525 = vector.shape_cast %524 : vector<4x8xf32> to vector<4x8x1xf32>
    %526 = vector.broadcast %525 : vector<4x8x1xf32> to vector<4x8x8xf32>
    %527 = arith.subf %523, %526 : vector<4x8x8xf32>
    %528 = math.exp %527 : vector<4x8x8xf32>
    %cst_130 = arith.constant dense<0.000000e+00> : vector<4x8xf32>
    %529 = vector.multi_reduction <add>, %528, %cst_130 [2] : vector<4x8x8xf32> to vector<4x8xf32>
    %530 = vector.shape_cast %529 : vector<4x8xf32> to vector<4x8x1xf32>
    %531 = tpu.reciprocal %530 {approx = true} : vector<4x8x1xf32> -> vector<4x8x1xf32>
    %532 = vector.broadcast %531 : vector<4x8x1xf32> to vector<4x8x8xf32>
    %533 = arith.mulf %528, %532 : vector<4x8x8xf32>
    %534 = arith.truncf %533 : vector<4x8x8xf32> to vector<4x8x8xbf16>
    %535 = arith.truncf %517 : vector<4x8x32xf32> to vector<4x8x32xbf16>
    "tpu.trace_start"() <{level = 10 : i32, message = "hqk,hkd->hqd"}> : () -> ()
    %cst_131 = arith.constant dense<0.000000e+00> : vector<4x8x32xf32>
    %536 = tpu.matmul %534, %535, %cst_131 {dimension_numbers = #tpu.dot_dimension_numbers<[2], [1], [1], [2], [0, 0, 0, 1, 1, 2], [0], [0]>} : vector<4x8x8xbf16>, vector<4x8x32xbf16>, vector<4x8x32xf32> -> vector<4x8x32xf32>
    "tpu.trace_stop"() : () -> ()
    %537 = arith.truncf %536 : vector<4x8x32xf32> to vector<4x8x32xbf16>
    %538 = arith.truncf %420 : vector<4x32x128xf32> to vector<4x32x128xbf16>
    "tpu.trace_start"() <{level = 10 : i32, message = "hqd,hdc->hqc"}> : () -> ()
    %cst_132 = arith.constant dense<0.000000e+00> : vector<4x8x128xf32>
    %539 = tpu.matmul %537, %538, %cst_132 {dimension_numbers = #tpu.dot_dimension_numbers<[2], [1], [1], [2], [0, 0, 0, 1, 1, 2], [0], [0]>} : vector<4x8x32xbf16>, vector<4x32x128xbf16>, vector<4x8x128xf32> -> vector<4x8x128xf32>
    "tpu.trace_stop"() : () -> ()
    %540 = vector.extract_strided_slice %539 {offsets = [0, 0, 0], sizes = [1, 8, 128], strides = [1, 1, 1]} : vector<4x8x128xf32> to vector<1x8x128xf32>
    %541 = vector.shape_cast %540 : vector<1x8x128xf32> to vector<8x128xf32>
    %542 = vector.extract_strided_slice %539 {offsets = [1, 0, 0], sizes = [1, 8, 128], strides = [1, 1, 1]} : vector<4x8x128xf32> to vector<1x8x128xf32>
    %543 = vector.shape_cast %542 : vector<1x8x128xf32> to vector<8x128xf32>
    %544 = arith.addf %541, %543 : vector<8x128xf32>
    %545 = vector.extract_strided_slice %539 {offsets = [2, 0, 0], sizes = [1, 8, 128], strides = [1, 1, 1]} : vector<4x8x128xf32> to vector<1x8x128xf32>
    %546 = vector.shape_cast %545 : vector<1x8x128xf32> to vector<8x128xf32>
    %547 = arith.addf %544, %546 : vector<8x128xf32>
    %548 = vector.extract_strided_slice %539 {offsets = [3, 0, 0], sizes = [1, 8, 128], strides = [1, 1, 1]} : vector<4x8x128xf32> to vector<1x8x128xf32>
    %549 = vector.shape_cast %548 : vector<1x8x128xf32> to vector<8x128xf32>
    %550 = arith.addf %547, %549 : vector<8x128xf32>
    %551 = tpu.concatenate %485, %550 in 0 : vector<8x128xf32>, vector<8x128xf32> -> vector<16x128xf32>
    %c1_133 = arith.constant 1 : index
    %c0_134 = arith.constant 0 : index
    %c0_135 = arith.constant 0 : index
    %552 = vector.load %arg8[%c1_133, %c0_134, %c0_135] : memref<2x1x128xf32, #tpu.memory_space<vmem>>, vector<1x1x128xf32>
    %553 = vector.shape_cast %552 : vector<1x1x128xf32> to vector<1x128xf32>
    %554 = vector.broadcast %553 : vector<1x128xf32> to vector<16x128xf32>
    %555 = arith.addf %551, %554 : vector<16x128xf32>
    %556 = arith.addf %409, %555 : vector<16x128xf32>
    %c1_136 = arith.constant 1 : index
    %c0_137 = arith.constant 0 : index
    %c0_138 = arith.constant 0 : index
    %557 = vector.load %arg19[%c1_136, %c0_137, %c0_138] : memref<2x1x128xf32, #tpu.memory_space<vmem>>, vector<1x1x128xf32>
    %558 = vector.shape_cast %557 : vector<1x1x128xf32> to vector<1x128xf32>
    %c1_139 = arith.constant 1 : index
    %c0_140 = arith.constant 0 : index
    %c0_141 = arith.constant 0 : index
    %559 = vector.load %arg20[%c1_139, %c0_140, %c0_141] : memref<2x1x128xf32, #tpu.memory_space<vmem>>, vector<1x1x128xf32>
    %560 = vector.shape_cast %559 : vector<1x1x128xf32> to vector<1x128xf32>
    %cst_142 = arith.constant dense<0.000000e+00> : vector<16xf32>
    %561 = vector.multi_reduction <add>, %556, %cst_142 [1] : vector<16x128xf32> to vector<16xf32>
    %562 = vector.shape_cast %561 : vector<16xf32> to vector<16x1xf32>
    %cst_143 = arith.constant 1.280000e+02 : f32
    %563 = vector.broadcast %cst_143 : f32 to vector<16x1xf32>
    %564 = arith.divf %562, %563 : vector<16x1xf32>
    %565 = arith.mulf %556, %556 : vector<16x128xf32>
    %cst_144 = arith.constant dense<0.000000e+00> : vector<16xf32>
    %566 = vector.multi_reduction <add>, %565, %cst_144 [1] : vector<16x128xf32> to vector<16xf32>
    %567 = vector.shape_cast %566 : vector<16xf32> to vector<16x1xf32>
    %cst_145 = arith.constant 1.280000e+02 : f32
    %568 = vector.broadcast %cst_145 : f32 to vector<16x1xf32>
    %569 = arith.divf %567, %568 : vector<16x1xf32>
    %570 = arith.mulf %564, %564 : vector<16x1xf32>
    %571 = arith.subf %569, %570 : vector<16x1xf32>
    %572 = vector.broadcast %564 : vector<16x1xf32> to vector<16x128xf32>
    %573 = arith.subf %556, %572 : vector<16x128xf32>
    %cst_146 = arith.constant 9.99999997E-7 : f32
    %574 = vector.broadcast %cst_146 : f32 to vector<16x1xf32>
    %575 = arith.addf %571, %574 : vector<16x1xf32>
    %576 = math.rsqrt %575 : vector<16x1xf32>
    %577 = vector.broadcast %576 : vector<16x1xf32> to vector<16x128xf32>
    %578 = arith.mulf %573, %577 : vector<16x128xf32>
    %579 = vector.broadcast %558 : vector<1x128xf32> to vector<16x128xf32>
    %580 = arith.mulf %578, %579 : vector<16x128xf32>
    %581 = vector.broadcast %560 : vector<1x128xf32> to vector<16x128xf32>
    %582 = arith.addf %580, %581 : vector<16x128xf32>
    %c1_147 = arith.constant 1 : index
    %c0_148 = arith.constant 0 : index
    %c0_149 = arith.constant 0 : index
    %583 = vector.load %arg9[%c1_147, %c0_148, %c0_149] : memref<2x128x128xf32, #tpu.memory_space<vmem>>, vector<1x128x128xf32>
    %584 = vector.shape_cast %583 : vector<1x128x128xf32> to vector<128x128xf32>
    %585 = arith.truncf %582 : vector<16x128xf32> to vector<16x128xbf16>
    %586 = arith.truncf %584 : vector<128x128xf32> to vector<128x128xbf16>
    %cst_150 = arith.constant dense<0.000000e+00> : vector<16x128xf32>
    %587 = tpu.matmul %585, %586, %cst_150 {dimension_numbers = #tpu.dot_dimension_numbers<[1], [0], [0], [1], [0, 0, 1, 1], [], []>} : vector<16x128xbf16>, vector<128x128xbf16>, vector<16x128xf32> -> vector<16x128xf32>
    %c1_151 = arith.constant 1 : index
    %c0_152 = arith.constant 0 : index
    %c0_153 = arith.constant 0 : index
    %588 = vector.load %arg10[%c1_151, %c0_152, %c0_153] : memref<2x1x128xf32, #tpu.memory_space<vmem>>, vector<1x1x128xf32>
    %589 = vector.shape_cast %588 : vector<1x1x128xf32> to vector<1x128xf32>
    %590 = vector.broadcast %589 : vector<1x128xf32> to vector<16x128xf32>
    %591 = arith.addf %587, %590 : vector<16x128xf32>
    %c1_154 = arith.constant 1 : index
    %c0_155 = arith.constant 0 : index
    %c0_156 = arith.constant 0 : index
    %592 = vector.load %arg11[%c1_154, %c0_155, %c0_156] : memref<2x128x256xf32, #tpu.memory_space<vmem>>, vector<1x128x256xf32>
    %593 = vector.shape_cast %592 : vector<1x128x256xf32> to vector<128x256xf32>
    %594 = arith.truncf %1 : vector<32x128xf32> to vector<32x128xbf16>
    %595 = arith.truncf %593 : vector<128x256xf32> to vector<128x256xbf16>
    %cst_157 = arith.constant dense<0.000000e+00> : vector<32x256xf32>
    %596 = tpu.matmul %594, %595, %cst_157 {dimension_numbers = #tpu.dot_dimension_numbers<[1], [0], [0], [1], [0, 0, 1, 1], [], []>} : vector<32x128xbf16>, vector<128x256xbf16>, vector<32x256xf32> -> vector<32x256xf32>
    %c1_158 = arith.constant 1 : index
    %c0_159 = arith.constant 0 : index
    %c0_160 = arith.constant 0 : index
    %597 = vector.load %arg12[%c1_158, %c0_159, %c0_160] : memref<2x1x256xf32, #tpu.memory_space<vmem>>, vector<1x1x256xf32>
    %598 = vector.shape_cast %597 : vector<1x1x256xf32> to vector<1x256xf32>
    %599 = vector.broadcast %598 : vector<1x256xf32> to vector<32x256xf32>
    %600 = arith.addf %596, %599 : vector<32x256xf32>
    %c1_161 = arith.constant 1 : index
    %c0_162 = arith.constant 0 : index
    %c0_163 = arith.constant 0 : index
    %c0_164 = arith.constant 0 : index
    %601 = vector.load %arg13[%c1_161, %c0_162, %c0_163, %c0_164] : memref<2x4x32x128xf32, #tpu.memory_space<vmem>>, vector<1x4x32x128xf32>
    %602 = vector.shape_cast %601 : vector<1x4x32x128xf32> to vector<4x32x128xf32>
    %603 = vector.extract_strided_slice %591 {offsets = [0, 0], sizes = [8, 128], strides = [1, 1]} : vector<16x128xf32> to vector<8x128xf32>
    %604 = vector.extract_strided_slice %600 {offsets = [0, 0], sizes = [16, 128], strides = [1, 1]} : vector<32x256xf32> to vector<16x128xf32>
    %605 = vector.extract_strided_slice %600 {offsets = [0, 128], sizes = [16, 128], strides = [1, 1]} : vector<32x256xf32> to vector<16x128xf32>
    %606 = vector.extract_strided_slice %7 {offsets = [0, 0, 0], sizes = [1, 8, 16], strides = [1, 1, 1]} : vector<2x8x16xf32> to vector<1x8x16xf32>
    %607 = vector.shape_cast %606 : vector<1x8x16xf32> to vector<8x16xf32>
    %608 = vector.extract_strided_slice %603 {offsets = [0, 0], sizes = [8, 32], strides = [1, 1]} : vector<8x128xf32> to vector<8x32xf32>
    %609 = vector.extract_strided_slice %603 {offsets = [0, 32], sizes = [8, 32], strides = [1, 1]} : vector<8x128xf32> to vector<8x32xf32>
    %610 = vector.extract_strided_slice %603 {offsets = [0, 64], sizes = [8, 32], strides = [1, 1]} : vector<8x128xf32> to vector<8x32xf32>
    %611 = vector.extract_strided_slice %603 {offsets = [0, 96], sizes = [8, 32], strides = [1, 1]} : vector<8x128xf32> to vector<8x32xf32>
    %612 = vector.shape_cast %608 : vector<8x32xf32> to vector<1x8x32xf32>
    %613 = vector.shape_cast %609 : vector<8x32xf32> to vector<1x8x32xf32>
    %614 = vector.shape_cast %610 : vector<8x32xf32> to vector<1x8x32xf32>
    %615 = vector.shape_cast %611 : vector<8x32xf32> to vector<1x8x32xf32>
    %616 = tpu.concatenate %612, %613, %614, %615 in 0 : vector<1x8x32xf32>, vector<1x8x32xf32>, vector<1x8x32xf32>, vector<1x8x32xf32> -> vector<4x8x32xf32>
    %617 = vector.extract_strided_slice %604 {offsets = [0, 0], sizes = [16, 32], strides = [1, 1]} : vector<16x128xf32> to vector<16x32xf32>
    %618 = vector.extract_strided_slice %604 {offsets = [0, 32], sizes = [16, 32], strides = [1, 1]} : vector<16x128xf32> to vector<16x32xf32>
    %619 = vector.extract_strided_slice %604 {offsets = [0, 64], sizes = [16, 32], strides = [1, 1]} : vector<16x128xf32> to vector<16x32xf32>
    %620 = vector.extract_strided_slice %604 {offsets = [0, 96], sizes = [16, 32], strides = [1, 1]} : vector<16x128xf32> to vector<16x32xf32>
    %621 = vector.shape_cast %617 : vector<16x32xf32> to vector<1x16x32xf32>
    %622 = vector.shape_cast %618 : vector<16x32xf32> to vector<1x16x32xf32>
    %623 = vector.shape_cast %619 : vector<16x32xf32> to vector<1x16x32xf32>
    %624 = vector.shape_cast %620 : vector<16x32xf32> to vector<1x16x32xf32>
    %625 = tpu.concatenate %621, %622, %623, %624 in 0 : vector<1x16x32xf32>, vector<1x16x32xf32>, vector<1x16x32xf32>, vector<1x16x32xf32> -> vector<4x16x32xf32>
    %626 = vector.extract_strided_slice %605 {offsets = [0, 0], sizes = [16, 32], strides = [1, 1]} : vector<16x128xf32> to vector<16x32xf32>
    %627 = vector.extract_strided_slice %605 {offsets = [0, 32], sizes = [16, 32], strides = [1, 1]} : vector<16x128xf32> to vector<16x32xf32>
    %628 = vector.extract_strided_slice %605 {offsets = [0, 64], sizes = [16, 32], strides = [1, 1]} : vector<16x128xf32> to vector<16x32xf32>
    %629 = vector.extract_strided_slice %605 {offsets = [0, 96], sizes = [16, 32], strides = [1, 1]} : vector<16x128xf32> to vector<16x32xf32>
    %630 = vector.shape_cast %626 : vector<16x32xf32> to vector<1x16x32xf32>
    %631 = vector.shape_cast %627 : vector<16x32xf32> to vector<1x16x32xf32>
    %632 = vector.shape_cast %628 : vector<16x32xf32> to vector<1x16x32xf32>
    %633 = vector.shape_cast %629 : vector<16x32xf32> to vector<1x16x32xf32>
    %634 = tpu.concatenate %630, %631, %632, %633 in 0 : vector<1x16x32xf32>, vector<1x16x32xf32>, vector<1x16x32xf32>, vector<1x16x32xf32> -> vector<4x16x32xf32>
    %635 = arith.truncf %616 : vector<4x8x32xf32> to vector<4x8x32xbf16>
    %636 = arith.truncf %625 : vector<4x16x32xf32> to vector<4x16x32xbf16>
    "tpu.trace_start"() <{level = 10 : i32, message = "hqd,hkd->hqk"}> : () -> ()
    %cst_165 = arith.constant dense<0.000000e+00> : vector<4x8x16xf32>
    %637 = tpu.matmul %635, %636, %cst_165 {dimension_numbers = #tpu.dot_dimension_numbers<[2], [2], [1], [1], [0, 0, 0, 1, 1, 1], [0], [0]>} : vector<4x8x32xbf16>, vector<4x16x32xbf16>, vector<4x8x16xf32> -> vector<4x8x16xf32>
    "tpu.trace_stop"() : () -> ()
    %638 = vector.shape_cast %607 : vector<8x16xf32> to vector<1x8x16xf32>
    %639 = vector.broadcast %638 : vector<1x8x16xf32> to vector<4x8x16xf32>
    %640 = arith.addf %637, %639 : vector<4x8x16xf32>
    %cst_166 = arith.constant dense<0xFF800000> : vector<4x8xf32>
    %641 = vector.multi_reduction <maximumf>, %640, %cst_166 [2] : vector<4x8x16xf32> to vector<4x8xf32>
    %642 = vector.shape_cast %641 : vector<4x8xf32> to vector<4x8x1xf32>
    %643 = vector.broadcast %642 : vector<4x8x1xf32> to vector<4x8x16xf32>
    %644 = arith.subf %640, %643 : vector<4x8x16xf32>
    %645 = math.exp %644 : vector<4x8x16xf32>
    %cst_167 = arith.constant dense<0.000000e+00> : vector<4x8xf32>
    %646 = vector.multi_reduction <add>, %645, %cst_167 [2] : vector<4x8x16xf32> to vector<4x8xf32>
    %647 = vector.shape_cast %646 : vector<4x8xf32> to vector<4x8x1xf32>
    %648 = tpu.reciprocal %647 {approx = true} : vector<4x8x1xf32> -> vector<4x8x1xf32>
    %649 = vector.broadcast %648 : vector<4x8x1xf32> to vector<4x8x16xf32>
    %650 = arith.mulf %645, %649 : vector<4x8x16xf32>
    %651 = arith.truncf %650 : vector<4x8x16xf32> to vector<4x8x16xbf16>
    %652 = arith.truncf %634 : vector<4x16x32xf32> to vector<4x16x32xbf16>
    "tpu.trace_start"() <{level = 10 : i32, message = "hqk,hkd->hqd"}> : () -> ()
    %cst_168 = arith.constant dense<0.000000e+00> : vector<4x8x32xf32>
    %653 = tpu.matmul %651, %652, %cst_168 {dimension_numbers = #tpu.dot_dimension_numbers<[2], [1], [1], [2], [0, 0, 0, 1, 1, 2], [0], [0]>} : vector<4x8x16xbf16>, vector<4x16x32xbf16>, vector<4x8x32xf32> -> vector<4x8x32xf32>
    "tpu.trace_stop"() : () -> ()
    %654 = arith.truncf %653 : vector<4x8x32xf32> to vector<4x8x32xbf16>
    %655 = arith.truncf %602 : vector<4x32x128xf32> to vector<4x32x128xbf16>
    "tpu.trace_start"() <{level = 10 : i32, message = "hqd,hdc->hqc"}> : () -> ()
    %cst_169 = arith.constant dense<0.000000e+00> : vector<4x8x128xf32>
    %656 = tpu.matmul %654, %655, %cst_169 {dimension_numbers = #tpu.dot_dimension_numbers<[2], [1], [1], [2], [0, 0, 0, 1, 1, 2], [0], [0]>} : vector<4x8x32xbf16>, vector<4x32x128xbf16>, vector<4x8x128xf32> -> vector<4x8x128xf32>
    "tpu.trace_stop"() : () -> ()
    %657 = vector.extract_strided_slice %656 {offsets = [0, 0, 0], sizes = [1, 8, 128], strides = [1, 1, 1]} : vector<4x8x128xf32> to vector<1x8x128xf32>
    %658 = vector.shape_cast %657 : vector<1x8x128xf32> to vector<8x128xf32>
    %659 = vector.extract_strided_slice %656 {offsets = [1, 0, 0], sizes = [1, 8, 128], strides = [1, 1, 1]} : vector<4x8x128xf32> to vector<1x8x128xf32>
    %660 = vector.shape_cast %659 : vector<1x8x128xf32> to vector<8x128xf32>
    %661 = arith.addf %658, %660 : vector<8x128xf32>
    %662 = vector.extract_strided_slice %656 {offsets = [2, 0, 0], sizes = [1, 8, 128], strides = [1, 1, 1]} : vector<4x8x128xf32> to vector<1x8x128xf32>
    %663 = vector.shape_cast %662 : vector<1x8x128xf32> to vector<8x128xf32>
    %664 = arith.addf %661, %663 : vector<8x128xf32>
    %665 = vector.extract_strided_slice %656 {offsets = [3, 0, 0], sizes = [1, 8, 128], strides = [1, 1, 1]} : vector<4x8x128xf32> to vector<1x8x128xf32>
    %666 = vector.shape_cast %665 : vector<1x8x128xf32> to vector<8x128xf32>
    %667 = arith.addf %664, %666 : vector<8x128xf32>
    %668 = vector.extract_strided_slice %591 {offsets = [8, 0], sizes = [8, 128], strides = [1, 1]} : vector<16x128xf32> to vector<8x128xf32>
    %669 = vector.extract_strided_slice %600 {offsets = [16, 0], sizes = [16, 128], strides = [1, 1]} : vector<32x256xf32> to vector<16x128xf32>
    %670 = vector.extract_strided_slice %600 {offsets = [16, 128], sizes = [16, 128], strides = [1, 1]} : vector<32x256xf32> to vector<16x128xf32>
    %671 = vector.extract_strided_slice %7 {offsets = [1, 0, 0], sizes = [1, 8, 16], strides = [1, 1, 1]} : vector<2x8x16xf32> to vector<1x8x16xf32>
    %672 = vector.shape_cast %671 : vector<1x8x16xf32> to vector<8x16xf32>
    %673 = vector.extract_strided_slice %668 {offsets = [0, 0], sizes = [8, 32], strides = [1, 1]} : vector<8x128xf32> to vector<8x32xf32>
    %674 = vector.extract_strided_slice %668 {offsets = [0, 32], sizes = [8, 32], strides = [1, 1]} : vector<8x128xf32> to vector<8x32xf32>
    %675 = vector.extract_strided_slice %668 {offsets = [0, 64], sizes = [8, 32], strides = [1, 1]} : vector<8x128xf32> to vector<8x32xf32>
    %676 = vector.extract_strided_slice %668 {offsets = [0, 96], sizes = [8, 32], strides = [1, 1]} : vector<8x128xf32> to vector<8x32xf32>
    %677 = vector.shape_cast %673 : vector<8x32xf32> to vector<1x8x32xf32>
    %678 = vector.shape_cast %674 : vector<8x32xf32> to vector<1x8x32xf32>
    %679 = vector.shape_cast %675 : vector<8x32xf32> to vector<1x8x32xf32>
    %680 = vector.shape_cast %676 : vector<8x32xf32> to vector<1x8x32xf32>
    %681 = tpu.concatenate %677, %678, %679, %680 in 0 : vector<1x8x32xf32>, vector<1x8x32xf32>, vector<1x8x32xf32>, vector<1x8x32xf32> -> vector<4x8x32xf32>
    %682 = vector.extract_strided_slice %669 {offsets = [0, 0], sizes = [16, 32], strides = [1, 1]} : vector<16x128xf32> to vector<16x32xf32>
    %683 = vector.extract_strided_slice %669 {offsets = [0, 32], sizes = [16, 32], strides = [1, 1]} : vector<16x128xf32> to vector<16x32xf32>
    %684 = vector.extract_strided_slice %669 {offsets = [0, 64], sizes = [16, 32], strides = [1, 1]} : vector<16x128xf32> to vector<16x32xf32>
    %685 = vector.extract_strided_slice %669 {offsets = [0, 96], sizes = [16, 32], strides = [1, 1]} : vector<16x128xf32> to vector<16x32xf32>
    %686 = vector.shape_cast %682 : vector<16x32xf32> to vector<1x16x32xf32>
    %687 = vector.shape_cast %683 : vector<16x32xf32> to vector<1x16x32xf32>
    %688 = vector.shape_cast %684 : vector<16x32xf32> to vector<1x16x32xf32>
    %689 = vector.shape_cast %685 : vector<16x32xf32> to vector<1x16x32xf32>
    %690 = tpu.concatenate %686, %687, %688, %689 in 0 : vector<1x16x32xf32>, vector<1x16x32xf32>, vector<1x16x32xf32>, vector<1x16x32xf32> -> vector<4x16x32xf32>
    %691 = vector.extract_strided_slice %670 {offsets = [0, 0], sizes = [16, 32], strides = [1, 1]} : vector<16x128xf32> to vector<16x32xf32>
    %692 = vector.extract_strided_slice %670 {offsets = [0, 32], sizes = [16, 32], strides = [1, 1]} : vector<16x128xf32> to vector<16x32xf32>
    %693 = vector.extract_strided_slice %670 {offsets = [0, 64], sizes = [16, 32], strides = [1, 1]} : vector<16x128xf32> to vector<16x32xf32>
    %694 = vector.extract_strided_slice %670 {offsets = [0, 96], sizes = [16, 32], strides = [1, 1]} : vector<16x128xf32> to vector<16x32xf32>
    %695 = vector.shape_cast %691 : vector<16x32xf32> to vector<1x16x32xf32>
    %696 = vector.shape_cast %692 : vector<16x32xf32> to vector<1x16x32xf32>
    %697 = vector.shape_cast %693 : vector<16x32xf32> to vector<1x16x32xf32>
    %698 = vector.shape_cast %694 : vector<16x32xf32> to vector<1x16x32xf32>
    %699 = tpu.concatenate %695, %696, %697, %698 in 0 : vector<1x16x32xf32>, vector<1x16x32xf32>, vector<1x16x32xf32>, vector<1x16x32xf32> -> vector<4x16x32xf32>
    %700 = arith.truncf %681 : vector<4x8x32xf32> to vector<4x8x32xbf16>
    %701 = arith.truncf %690 : vector<4x16x32xf32> to vector<4x16x32xbf16>
    "tpu.trace_start"() <{level = 10 : i32, message = "hqd,hkd->hqk"}> : () -> ()
    %cst_170 = arith.constant dense<0.000000e+00> : vector<4x8x16xf32>
    %702 = tpu.matmul %700, %701, %cst_170 {dimension_numbers = #tpu.dot_dimension_numbers<[2], [2], [1], [1], [0, 0, 0, 1, 1, 1], [0], [0]>} : vector<4x8x32xbf16>, vector<4x16x32xbf16>, vector<4x8x16xf32> -> vector<4x8x16xf32>
    "tpu.trace_stop"() : () -> ()
    %703 = vector.shape_cast %672 : vector<8x16xf32> to vector<1x8x16xf32>
    %704 = vector.broadcast %703 : vector<1x8x16xf32> to vector<4x8x16xf32>
    %705 = arith.addf %702, %704 : vector<4x8x16xf32>
    %cst_171 = arith.constant dense<0xFF800000> : vector<4x8xf32>
    %706 = vector.multi_reduction <maximumf>, %705, %cst_171 [2] : vector<4x8x16xf32> to vector<4x8xf32>
    %707 = vector.shape_cast %706 : vector<4x8xf32> to vector<4x8x1xf32>
    %708 = vector.broadcast %707 : vector<4x8x1xf32> to vector<4x8x16xf32>
    %709 = arith.subf %705, %708 : vector<4x8x16xf32>
    %710 = math.exp %709 : vector<4x8x16xf32>
    %cst_172 = arith.constant dense<0.000000e+00> : vector<4x8xf32>
    %711 = vector.multi_reduction <add>, %710, %cst_172 [2] : vector<4x8x16xf32> to vector<4x8xf32>
    %712 = vector.shape_cast %711 : vector<4x8xf32> to vector<4x8x1xf32>
    %713 = tpu.reciprocal %712 {approx = true} : vector<4x8x1xf32> -> vector<4x8x1xf32>
    %714 = vector.broadcast %713 : vector<4x8x1xf32> to vector<4x8x16xf32>
    %715 = arith.mulf %710, %714 : vector<4x8x16xf32>
    %716 = arith.truncf %715 : vector<4x8x16xf32> to vector<4x8x16xbf16>
    %717 = arith.truncf %699 : vector<4x16x32xf32> to vector<4x16x32xbf16>
    "tpu.trace_start"() <{level = 10 : i32, message = "hqk,hkd->hqd"}> : () -> ()
    %cst_173 = arith.constant dense<0.000000e+00> : vector<4x8x32xf32>
    %718 = tpu.matmul %716, %717, %cst_173 {dimension_numbers = #tpu.dot_dimension_numbers<[2], [1], [1], [2], [0, 0, 0, 1, 1, 2], [0], [0]>} : vector<4x8x16xbf16>, vector<4x16x32xbf16>, vector<4x8x32xf32> -> vector<4x8x32xf32>
    "tpu.trace_stop"() : () -> ()
    %719 = arith.truncf %718 : vector<4x8x32xf32> to vector<4x8x32xbf16>
    %720 = arith.truncf %602 : vector<4x32x128xf32> to vector<4x32x128xbf16>
    "tpu.trace_start"() <{level = 10 : i32, message = "hqd,hdc->hqc"}> : () -> ()
    %cst_174 = arith.constant dense<0.000000e+00> : vector<4x8x128xf32>
    %721 = tpu.matmul %719, %720, %cst_174 {dimension_numbers = #tpu.dot_dimension_numbers<[2], [1], [1], [2], [0, 0, 0, 1, 1, 2], [0], [0]>} : vector<4x8x32xbf16>, vector<4x32x128xbf16>, vector<4x8x128xf32> -> vector<4x8x128xf32>
    "tpu.trace_stop"() : () -> ()
    %722 = vector.extract_strided_slice %721 {offsets = [0, 0, 0], sizes = [1, 8, 128], strides = [1, 1, 1]} : vector<4x8x128xf32> to vector<1x8x128xf32>
    %723 = vector.shape_cast %722 : vector<1x8x128xf32> to vector<8x128xf32>
    %724 = vector.extract_strided_slice %721 {offsets = [1, 0, 0], sizes = [1, 8, 128], strides = [1, 1, 1]} : vector<4x8x128xf32> to vector<1x8x128xf32>
    %725 = vector.shape_cast %724 : vector<1x8x128xf32> to vector<8x128xf32>
    %726 = arith.addf %723, %725 : vector<8x128xf32>
    %727 = vector.extract_strided_slice %721 {offsets = [2, 0, 0], sizes = [1, 8, 128], strides = [1, 1, 1]} : vector<4x8x128xf32> to vector<1x8x128xf32>
    %728 = vector.shape_cast %727 : vector<1x8x128xf32> to vector<8x128xf32>
    %729 = arith.addf %726, %728 : vector<8x128xf32>
    %730 = vector.extract_strided_slice %721 {offsets = [3, 0, 0], sizes = [1, 8, 128], strides = [1, 1, 1]} : vector<4x8x128xf32> to vector<1x8x128xf32>
    %731 = vector.shape_cast %730 : vector<1x8x128xf32> to vector<8x128xf32>
    %732 = arith.addf %729, %731 : vector<8x128xf32>
    %733 = tpu.concatenate %667, %732 in 0 : vector<8x128xf32>, vector<8x128xf32> -> vector<16x128xf32>
    %c1_175 = arith.constant 1 : index
    %c0_176 = arith.constant 0 : index
    %c0_177 = arith.constant 0 : index
    %734 = vector.load %arg14[%c1_175, %c0_176, %c0_177] : memref<2x1x128xf32, #tpu.memory_space<vmem>>, vector<1x1x128xf32>
    %735 = vector.shape_cast %734 : vector<1x1x128xf32> to vector<1x128xf32>
    %736 = vector.broadcast %735 : vector<1x128xf32> to vector<16x128xf32>
    %737 = arith.addf %733, %736 : vector<16x128xf32>
    %738 = arith.addf %582, %737 : vector<16x128xf32>
    %c1_178 = arith.constant 1 : index
    %c0_179 = arith.constant 0 : index
    %c0_180 = arith.constant 0 : index
    %739 = vector.load %arg21[%c1_178, %c0_179, %c0_180] : memref<2x1x128xf32, #tpu.memory_space<vmem>>, vector<1x1x128xf32>
    %740 = vector.shape_cast %739 : vector<1x1x128xf32> to vector<1x128xf32>
    %c1_181 = arith.constant 1 : index
    %c0_182 = arith.constant 0 : index
    %c0_183 = arith.constant 0 : index
    %741 = vector.load %arg22[%c1_181, %c0_182, %c0_183] : memref<2x1x128xf32, #tpu.memory_space<vmem>>, vector<1x1x128xf32>
    %742 = vector.shape_cast %741 : vector<1x1x128xf32> to vector<1x128xf32>
    %cst_184 = arith.constant dense<0.000000e+00> : vector<16xf32>
    %743 = vector.multi_reduction <add>, %738, %cst_184 [1] : vector<16x128xf32> to vector<16xf32>
    %744 = vector.shape_cast %743 : vector<16xf32> to vector<16x1xf32>
    %cst_185 = arith.constant 1.280000e+02 : f32
    %745 = vector.broadcast %cst_185 : f32 to vector<16x1xf32>
    %746 = arith.divf %744, %745 : vector<16x1xf32>
    %747 = arith.mulf %738, %738 : vector<16x128xf32>
    %cst_186 = arith.constant dense<0.000000e+00> : vector<16xf32>
    %748 = vector.multi_reduction <add>, %747, %cst_186 [1] : vector<16x128xf32> to vector<16xf32>
    %749 = vector.shape_cast %748 : vector<16xf32> to vector<16x1xf32>
    %cst_187 = arith.constant 1.280000e+02 : f32
    %750 = vector.broadcast %cst_187 : f32 to vector<16x1xf32>
    %751 = arith.divf %749, %750 : vector<16x1xf32>
    %752 = arith.mulf %746, %746 : vector<16x1xf32>
    %753 = arith.subf %751, %752 : vector<16x1xf32>
    %754 = vector.broadcast %746 : vector<16x1xf32> to vector<16x128xf32>
    %755 = arith.subf %738, %754 : vector<16x128xf32>
    %cst_188 = arith.constant 9.99999997E-7 : f32
    %756 = vector.broadcast %cst_188 : f32 to vector<16x1xf32>
    %757 = arith.addf %753, %756 : vector<16x1xf32>
    %758 = math.rsqrt %757 : vector<16x1xf32>
    %759 = vector.broadcast %758 : vector<16x1xf32> to vector<16x128xf32>
    %760 = arith.mulf %755, %759 : vector<16x128xf32>
    %761 = vector.broadcast %740 : vector<1x128xf32> to vector<16x128xf32>
    %762 = arith.mulf %760, %761 : vector<16x128xf32>
    %763 = vector.broadcast %742 : vector<1x128xf32> to vector<16x128xf32>
    %764 = arith.addf %762, %763 : vector<16x128xf32>
    %c1_189 = arith.constant 1 : index
    %c0_190 = arith.constant 0 : index
    %c0_191 = arith.constant 0 : index
    %765 = vector.load %arg15[%c1_189, %c0_190, %c0_191] : memref<2x128x128xf32, #tpu.memory_space<vmem>>, vector<1x128x128xf32>
    %766 = vector.shape_cast %765 : vector<1x128x128xf32> to vector<128x128xf32>
    %767 = arith.truncf %764 : vector<16x128xf32> to vector<16x128xbf16>
    %768 = arith.truncf %766 : vector<128x128xf32> to vector<128x128xbf16>
    %cst_192 = arith.constant dense<0.000000e+00> : vector<16x128xf32>
    %769 = tpu.matmul %767, %768, %cst_192 {dimension_numbers = #tpu.dot_dimension_numbers<[1], [0], [0], [1], [0, 0, 1, 1], [], []>} : vector<16x128xbf16>, vector<128x128xbf16>, vector<16x128xf32> -> vector<16x128xf32>
    %c1_193 = arith.constant 1 : index
    %c0_194 = arith.constant 0 : index
    %c0_195 = arith.constant 0 : index
    %770 = vector.load %arg16[%c1_193, %c0_194, %c0_195] : memref<2x1x128xf32, #tpu.memory_space<vmem>>, vector<1x1x128xf32>
    %771 = vector.shape_cast %770 : vector<1x1x128xf32> to vector<1x128xf32>
    %772 = vector.broadcast %771 : vector<1x128xf32> to vector<16x128xf32>
    %773 = arith.addf %769, %772 : vector<16x128xf32>
    %cst_196 = arith.constant 0.000000e+00 : f32
    %774 = vector.broadcast %cst_196 : f32 to vector<16x128xf32>
    %775 = arith.maximumf %773, %774 : vector<16x128xf32>
    %c1_197 = arith.constant 1 : index
    %c0_198 = arith.constant 0 : index
    %c0_199 = arith.constant 0 : index
    %776 = vector.load %arg17[%c1_197, %c0_198, %c0_199] : memref<2x128x128xf32, #tpu.memory_space<vmem>>, vector<1x128x128xf32>
    %777 = vector.shape_cast %776 : vector<1x128x128xf32> to vector<128x128xf32>
    %778 = arith.truncf %775 : vector<16x128xf32> to vector<16x128xbf16>
    %779 = arith.truncf %777 : vector<128x128xf32> to vector<128x128xbf16>
    %cst_200 = arith.constant dense<0.000000e+00> : vector<16x128xf32>
    %780 = tpu.matmul %778, %779, %cst_200 {dimension_numbers = #tpu.dot_dimension_numbers<[1], [0], [0], [1], [0, 0, 1, 1], [], []>} : vector<16x128xbf16>, vector<128x128xbf16>, vector<16x128xf32> -> vector<16x128xf32>
    %c1_201 = arith.constant 1 : index
    %c0_202 = arith.constant 0 : index
    %c0_203 = arith.constant 0 : index
    %781 = vector.load %arg18[%c1_201, %c0_202, %c0_203] : memref<2x1x128xf32, #tpu.memory_space<vmem>>, vector<1x1x128xf32>
    %782 = vector.shape_cast %781 : vector<1x1x128xf32> to vector<1x128xf32>
    %783 = vector.broadcast %782 : vector<1x128xf32> to vector<16x128xf32>
    %784 = arith.addf %780, %783 : vector<16x128xf32>
    %785 = arith.addf %764, %784 : vector<16x128xf32>
    %c1_204 = arith.constant 1 : index
    %c0_205 = arith.constant 0 : index
    %c0_206 = arith.constant 0 : index
    %786 = vector.load %arg23[%c1_204, %c0_205, %c0_206] : memref<2x1x128xf32, #tpu.memory_space<vmem>>, vector<1x1x128xf32>
    %787 = vector.shape_cast %786 : vector<1x1x128xf32> to vector<1x128xf32>
    %c1_207 = arith.constant 1 : index
    %c0_208 = arith.constant 0 : index
    %c0_209 = arith.constant 0 : index
    %788 = vector.load %arg24[%c1_207, %c0_208, %c0_209] : memref<2x1x128xf32, #tpu.memory_space<vmem>>, vector<1x1x128xf32>
    %789 = vector.shape_cast %788 : vector<1x1x128xf32> to vector<1x128xf32>
    %cst_210 = arith.constant dense<0.000000e+00> : vector<16xf32>
    %790 = vector.multi_reduction <add>, %785, %cst_210 [1] : vector<16x128xf32> to vector<16xf32>
    %791 = vector.shape_cast %790 : vector<16xf32> to vector<16x1xf32>
    %cst_211 = arith.constant 1.280000e+02 : f32
    %792 = vector.broadcast %cst_211 : f32 to vector<16x1xf32>
    %793 = arith.divf %791, %792 : vector<16x1xf32>
    %794 = arith.mulf %785, %785 : vector<16x128xf32>
    %cst_212 = arith.constant dense<0.000000e+00> : vector<16xf32>
    %795 = vector.multi_reduction <add>, %794, %cst_212 [1] : vector<16x128xf32> to vector<16xf32>
    %796 = vector.shape_cast %795 : vector<16xf32> to vector<16x1xf32>
    %cst_213 = arith.constant 1.280000e+02 : f32
    %797 = vector.broadcast %cst_213 : f32 to vector<16x1xf32>
    %798 = arith.divf %796, %797 : vector<16x1xf32>
    %799 = arith.mulf %793, %793 : vector<16x1xf32>
    %800 = arith.subf %798, %799 : vector<16x1xf32>
    %801 = vector.broadcast %793 : vector<16x1xf32> to vector<16x128xf32>
    %802 = arith.subf %785, %801 : vector<16x128xf32>
    %cst_214 = arith.constant 9.99999997E-7 : f32
    %803 = vector.broadcast %cst_214 : f32 to vector<16x1xf32>
    %804 = arith.addf %800, %803 : vector<16x1xf32>
    %805 = math.rsqrt %804 : vector<16x1xf32>
    %806 = vector.broadcast %805 : vector<16x1xf32> to vector<16x128xf32>
    %807 = arith.mulf %802, %806 : vector<16x128xf32>
    %808 = vector.broadcast %787 : vector<1x128xf32> to vector<16x128xf32>
    %809 = arith.mulf %807, %808 : vector<16x128xf32>
    %810 = vector.broadcast %789 : vector<1x128xf32> to vector<16x128xf32>
    %811 = arith.addf %809, %810 : vector<16x128xf32>
    %c0_215 = arith.constant 0 : index
    %c0_216 = arith.constant 0 : index
    %812 = vector.load %arg25[%c0_215, %c0_216] : memref<16x128xf32, #tpu.memory_space<vmem>>, vector<16x128xf32>
    tpu.vector_store %arg25[%c0_215, %c0_216], %811 {strides = array<i32>} : memref<16x128xf32, #tpu.memory_space<vmem>>, vector<16x128xf32>,
    return
  }
  func.func @transform_0(%arg0: i32) -> (i32, i32) {
    %c0_i32 = arith.constant 0 : i32
    %c0_i32_0 = arith.constant 0 : i32
    %c0_i32_1 = arith.constant 0 : i32
    return %c0_i32, %c0_i32_0 : i32, i32
  }
  func.func @transform_1(%arg0: i32) -> (i32, i32) {
    %c0_i32 = arith.constant 0 : i32
    %c0_i32_0 = arith.constant 0 : i32
    %c0_i32_1 = arith.constant 0 : i32
    return %c0_i32, %c0_i32_0 : i32, i32
  }
  func.func @transform_2(%arg0: i32) -> (i32, i32, i32) {
    %c0_i32 = arith.constant 0 : i32
    %c0_i32_0 = arith.constant 0 : i32
    %c0_i32_1 = arith.constant 0 : i32
    %c0_i32_2 = arith.constant 0 : i32
    return %c0_i32, %c0_i32_0, %c0_i32_1 : i32, i32, i32
  }
  func.func @transform_3(%arg0: i32) -> (i32, i32, i32) {
    %c0_i32 = arith.constant 0 : i32
    %c0_i32_0 = arith.constant 0 : i32
    %c0_i32_1 = arith.constant 0 : i32
    %c0_i32_2 = arith.constant 0 : i32
    return %c0_i32, %c0_i32_0, %c0_i32_1 : i32, i32, i32
  }
  func.func @transform_4(%arg0: i32) -> (i32, i32, i32) {
    %c0_i32 = arith.constant 0 : i32
    %c0_i32_0 = arith.constant 0 : i32
    %c0_i32_1 = arith.constant 0 : i32
    %c0_i32_2 = arith.constant 0 : i32
    return %c0_i32, %c0_i32_0, %c0_i32_1 : i32, i32, i32
  }
  func.func @transform_5(%arg0: i32) -> (i32, i32, i32) {
    %c0_i32 = arith.constant 0 : i32
    %c0_i32_0 = arith.constant 0 : i32
    %c0_i32_1 = arith.constant 0 : i32
    %c0_i32_2 = arith.constant 0 : i32
    return %c0_i32, %c0_i32_0, %c0_i32_1 : i32, i32, i32
  }
  func.func @transform_6(%arg0: i32) -> (i32, i32, i32, i32) {
    %c0_i32 = arith.constant 0 : i32
    %c0_i32_0 = arith.constant 0 : i32
    %c0_i32_1 = arith.constant 0 : i32
    %c0_i32_2 = arith.constant 0 : i32
    %c0_i32_3 = arith.constant 0 : i32
    return %c0_i32, %c0_i32_0, %c0_i32_1, %c0_i32_2 : i32, i32, i32, i32
  }
  func.func @transform_7(%arg0: i32) -> (i32, i32, i32) {
    %c0_i32 = arith.constant 0 : i32
    %c0_i32_0 = arith.constant 0 : i32
    %c0_i32_1 = arith.constant 0 : i32
    %c0_i32_2 = arith.constant 0 : i32
    return %c0_i32, %c0_i32_0, %c0_i32_1 : i32, i32, i32
  }
  func.func @transform_8(%arg0: i32) -> (i32, i32, i32) {
    %c0_i32 = arith.constant 0 : i32
    %c0_i32_0 = arith.constant 0 : i32
    %c0_i32_1 = arith.constant 0 : i32
    %c0_i32_2 = arith.constant 0 : i32
    return %c0_i32, %c0_i32_0, %c0_i32_1 : i32, i32, i32
  }
  func.func @transform_9(%arg0: i32) -> (i32, i32, i32) {
    %c0_i32 = arith.constant 0 : i32
    %c0_i32_0 = arith.constant 0 : i32
    %c0_i32_1 = arith.constant 0 : i32
    %c0_i32_2 = arith.constant 0 : i32
    return %c0_i32, %c0_i32_0, %c0_i32_1 : i32, i32, i32
  }
  func.func @transform_10(%arg0: i32) -> (i32, i32, i32) {
    %c0_i32 = arith.constant 0 : i32
    %c0_i32_0 = arith.constant 0 : i32
    %c0_i32_1 = arith.constant 0 : i32
    %c0_i32_2 = arith.constant 0 : i32
    return %c0_i32, %c0_i32_0, %c0_i32_1 : i32, i32, i32
  }
  func.func @transform_11(%arg0: i32) -> (i32, i32, i32) {
    %c0_i32 = arith.constant 0 : i32
    %c0_i32_0 = arith.constant 0 : i32
    %c0_i32_1 = arith.constant 0 : i32
    %c0_i32_2 = arith.constant 0 : i32
    return %c0_i32, %c0_i32_0, %c0_i32_1 : i32, i32, i32
  }
  func.func @transform_12(%arg0: i32) -> (i32, i32, i32, i32) {
    %c0_i32 = arith.constant 0 : i32
    %c0_i32_0 = arith.constant 0 : i32
    %c0_i32_1 = arith.constant 0 : i32
    %c0_i32_2 = arith.constant 0 : i32
    %c0_i32_3 = arith.constant 0 : i32
    return %c0_i32, %c0_i32_0, %c0_i32_1, %c0_i32_2 : i32, i32, i32, i32
  }
  func.func @transform_13(%arg0: i32) -> (i32, i32, i32) {
    %c0_i32 = arith.constant 0 : i32
    %c0_i32_0 = arith.constant 0 : i32
    %c0_i32_1 = arith.constant 0 : i32
    %c0_i32_2 = arith.constant 0 : i32
    return %c0_i32, %c0_i32_0, %c0_i32_1 : i32, i32, i32
  }
  func.func @transform_14(%arg0: i32) -> (i32, i32, i32) {
    %c0_i32 = arith.constant 0 : i32
    %c0_i32_0 = arith.constant 0 : i32
    %c0_i32_1 = arith.constant 0 : i32
    %c0_i32_2 = arith.constant 0 : i32
    return %c0_i32, %c0_i32_0, %c0_i32_1 : i32, i32, i32
  }
  func.func @transform_15(%arg0: i32) -> (i32, i32, i32) {
    %c0_i32 = arith.constant 0 : i32
    %c0_i32_0 = arith.constant 0 : i32
    %c0_i32_1 = arith.constant 0 : i32
    %c0_i32_2 = arith.constant 0 : i32
    return %c0_i32, %c0_i32_0, %c0_i32_1 : i32, i32, i32
  }
  func.func @transform_16(%arg0: i32) -> (i32, i32, i32) {
    %c0_i32 = arith.constant 0 : i32
    %c0_i32_0 = arith.constant 0 : i32
    %c0_i32_1 = arith.constant 0 : i32
    %c0_i32_2 = arith.constant 0 : i32
    return %c0_i32, %c0_i32_0, %c0_i32_1 : i32, i32, i32
  }
  func.func @transform_17(%arg0: i32) -> (i32, i32, i32) {
    %c0_i32 = arith.constant 0 : i32
    %c0_i32_0 = arith.constant 0 : i32
    %c0_i32_1 = arith.constant 0 : i32
    %c0_i32_2 = arith.constant 0 : i32
    return %c0_i32, %c0_i32_0, %c0_i32_1 : i32, i32, i32
  }
  func.func @transform_18(%arg0: i32) -> (i32, i32, i32) {
    %c0_i32 = arith.constant 0 : i32
    %c0_i32_0 = arith.constant 0 : i32
    %c0_i32_1 = arith.constant 0 : i32
    %c0_i32_2 = arith.constant 0 : i32
    return %c0_i32, %c0_i32_0, %c0_i32_1 : i32, i32, i32
  }
  func.func @transform_19(%arg0: i32) -> (i32, i32, i32) {
    %c0_i32 = arith.constant 0 : i32
    %c0_i32_0 = arith.constant 0 : i32
    %c0_i32_1 = arith.constant 0 : i32
    %c0_i32_2 = arith.constant 0 : i32
    return %c0_i32, %c0_i32_0, %c0_i32_1 : i32, i32, i32
  }
  func.func @transform_20(%arg0: i32) -> (i32, i32, i32) {
    %c0_i32 = arith.constant 0 : i32
    %c0_i32_0 = arith.constant 0 : i32
    %c0_i32_1 = arith.constant 0 : i32
    %c0_i32_2 = arith.constant 0 : i32
    return %c0_i32, %c0_i32_0, %c0_i32_1 : i32, i32, i32
  }
  func.func @transform_21(%arg0: i32) -> (i32, i32, i32) {
    %c0_i32 = arith.constant 0 : i32
    %c0_i32_0 = arith.constant 0 : i32
    %c0_i32_1 = arith.constant 0 : i32
    %c0_i32_2 = arith.constant 0 : i32
    return %c0_i32, %c0_i32_0, %c0_i32_1 : i32, i32, i32
  }
  func.func @transform_22(%arg0: i32) -> (i32, i32, i32) {
    %c0_i32 = arith.constant 0 : i32
    %c0_i32_0 = arith.constant 0 : i32
    %c0_i32_1 = arith.constant 0 : i32
    %c0_i32_2 = arith.constant 0 : i32
    return %c0_i32, %c0_i32_0, %c0_i32_1 : i32, i32, i32
  }
  func.func @transform_23(%arg0: i32) -> (i32, i32, i32) {
    %c0_i32 = arith.constant 0 : i32
    %c0_i32_0 = arith.constant 0 : i32
    %c0_i32_1 = arith.constant 0 : i32
    %c0_i32_2 = arith.constant 0 : i32
    return %c0_i32, %c0_i32_0, %c0_i32_1 : i32, i32, i32
  }
  func.func @transform_24(%arg0: i32) -> (i32, i32) {
    %c0_i32 = arith.constant 0 : i32
    %c0_i32_0 = arith.constant 0 : i32
    %c0_i32_1 = arith.constant 0 : i32
    return %c0_i32, %c0_i32_0 : i32, i32
  }
}

</mosaic_0001>

<llo_original>
// kernel: tpu_custom_call.1
$region0: #{tpu_custom_call.1}
  #allocation0 [shape = 'u32[]', space=smem, size = 0x4, offset = 0x4, fixed_abs, tag = 'smem constant byte address 0x4 - core index']
  #allocation1 [shape = 'u32[144,128]{1,0:T(1,128)}', space=vmem, size = 0x12000, scoped, tag = 'internal scratch']
  %s0 = inlined_call_operand.hbm [shape: f32[16,128], index: 0, kind: input, shape index: {}]
  %s1 = inlined_call_operand.hbm [shape: f32[32,128], index: 1, kind: input, shape index: {}]
  %s2 = inlined_call_operand.hbm [shape: f32[2,8,8], index: 2, kind: input, shape index: {}]
  %s3 = inlined_call_operand.hbm [shape: f32[2,8,16], index: 3, kind: input, shape index: {}]
  %s4 = inlined_call_operand.hbm [shape: f32[2,128,384], index: 4, kind: input, shape index: {}]
  %s5 = inlined_call_operand.vmem [shape: f32[2,1,384], index: 5, kind: input, shape index: {}]
  %s6 = inlined_call_operand.hbm [shape: f32[2,4,32,128], index: 6, kind: input, shape index: {}]
  %s7 = inlined_call_operand.vmem [shape: f32[2,1,128], index: 7, kind: input, shape index: {}]
  %s8 = inlined_call_operand.hbm [shape: f32[2,128,128], index: 8, kind: input, shape index: {}]
  %s9 = inlined_call_operand.vmem [shape: f32[2,1,128], index: 9, kind: input, shape index: {}]
  %s10 = inlined_call_operand.hbm [shape: f32[2,128,256], index: 10, kind: input, shape index: {}]
  %s11 = inlined_call_operand.vmem [shape: f32[2,1,256], index: 11, kind: input, shape index: {}]
  %s12 = inlined_call_operand.hbm [shape: f32[2,4,32,128], index: 12, kind: input, shape index: {}]
  %s13 = inlined_call_operand.vmem [shape: f32[2,1,128], index: 13, kind: input, shape index: {}]
  %s14 = inlined_call_operand.hbm [shape: f32[2,128,128], index: 14, kind: input, shape index: {}]
  %s15 = inlined_call_operand.vmem [shape: f32[2,1,128], index: 15, kind: input, shape index: {}]
  %s16 = inlined_call_operand.hbm [shape: f32[2,128,128], index: 16, kind: input, shape index: {}]
  %s17 = inlined_call_operand.vmem [shape: f32[2,1,128], index: 17, kind: input, shape index: {}]
  %s18 = inlined_call_operand.vmem [shape: f32[2,1,128], index: 18, kind: input, shape index: {}]
  %s19 = inlined_call_operand.vmem [shape: f32[2,1,128], index: 19, kind: input, shape index: {}]
  %s20 = inlined_call_operand.vmem [shape: f32[2,1,128], index: 20, kind: input, shape index: {}]
  %s21 = inlined_call_operand.vmem [shape: f32[2,1,128], index: 21, kind: input, shape index: {}]
  %s22 = inlined_call_operand.vmem [shape: f32[2,1,128], index: 22, kind: input, shape index: {}]
  %s23 = inlined_call_operand.vmem [shape: f32[2,1,128], index: 23, kind: input, shape index: {}]
  %s24 = inlined_call_operand.hbm [shape: f32[16,128], index: 24, kind: output, shape index: {}]
  %s25 = sld [smem:[#allocation0]]
  $region150: #{tpu_custom_call.1} parent=0
    _
  %s27 = ssub.s32 1, %s25
  %s28 = scalar_select 0, %s27, %s25
  $region1: #{tpu_custom_call.1} parent=0
    #allocation2 [shape = 'u8[8192]{0}', space=vmem, size = 0x2000, scoped, tag = 'input window, operand 0, single buffered']
    #allocation3 [shape = 's32[1]{0}', space=sflag, size = 0x4, scoped, tag = 'scoped memory for tpu_custom_call.1']
    #allocation4 [shape = 's32[1]{0}', space=sflag, size = 0x4, scoped, tag = 'scoped memory for tpu_custom_call.1']
    #allocation5 [shape = 'u8[16384]{0}', space=vmem, size = 0x4000, scoped, tag = 'input window, operand 1, single buffered']
    #allocation6 [shape = 's32[1]{0}', space=sflag, size = 0x4, scoped, tag = 'scoped memory for tpu_custom_call.1']
    #allocation7 [shape = 'u8[8192]{0}', space=vmem, size = 0x2000, scoped, tag = 'input window, operand 2, single buffered']
    #allocation8 [shape = 'u8[8192]{0}', space=vmem, size = 0x2000, scoped, tag = 'input window, operand 3, single buffered']
    #allocation9 [shape = 's32[1]{0}', space=sflag, size = 0x4, scoped, tag = 'scoped memory for tpu_custom_call.1']
    #allocation10 [shape = 'u8[393216]{0}', space=vmem, size = 0x60000, scoped, tag = 'input window, operand 4, single buffered']
    #allocation11 [shape = 'u8[131072]{0}', space=vmem, size = 0x20000, scoped, tag = 'input window, operand 6, single buffered']
    #allocation12 [shape = 's32[1]{0}', space=sflag, size = 0x4, scoped, tag = 'scoped memory for tpu_custom_call.1']
    #allocation13 [shape = 'u8[131072]{0}', space=vmem, size = 0x20000, scoped, tag = 'input window, operand 8, single buffered']
    #allocation14 [shape = 'u8[262144]{0}', space=vmem, size = 0x40000, scoped, tag = 'input window, operand 10, single buffered']
    #allocation15 [shape = 's32[1]{0}', space=sflag, size = 0x4, scoped, tag = 'scoped memory for tpu_custom_call.1']
    #allocation16 [shape = 'u8[131072]{0}', space=vmem, size = 0x20000, scoped, tag = 'input window, operand 12, single buffered']
    #allocation17 [shape = 'u8[131072]{0}', space=vmem, size = 0x20000, scoped, tag = 'input window, operand 14, single buffered']
    #allocation18 [shape = 's32[1]{0}', space=sflag, size = 0x4, scoped, tag = 'scoped memory for tpu_custom_call.1']
    #allocation19 [shape = 'u8[131072]{0}', space=vmem, size = 0x20000, scoped, tag = 'input window, operand 16, single buffered']
    #allocation20 [shape = 'u8[8192]{0}', space=vmem, size = 0x2000, scoped, tag = 'output window, operand 0, single buffered']
    %29 = vsyncpa [#allocation3], 0
    %30 = vsyncpa [#allocation6], 0
    %31 = vsyncpa [#allocation9], 0
    %32 = vsyncpa [#allocation12], 0
    %33 = vsyncpa [#allocation15], 0
    %34 = vsyncpa [#allocation18], 0
    %35 = vsyncpa [#allocation4], 0
    // Predicated region
    $region2: #{tpu_custom_call.1} parent=1 // pred_check
      _
    $region3: #{tpu_custom_call.1} parent=1 // pred_check_branch
      %37 = sbr.rel (0) target = $region5
    $region4: #{tpu_custom_call.1} parent=1 // pred_region
      %s39 = ssub.s32 256, 256
      %40 = vsyncadd [#allocation3], %s39
      %s41 = sshll.u32 [#allocation2], 4
      %s42 = int_to_ptr.vmem [resolvable:$true] %s41
      %47 = dma.hbm_to_vmem [thread:$0]  %s0, 256, %s42, [#allocation3], 128, 128, 8
    $region5: #{tpu_custom_call.1} parent=1 // pred_fallthru
      _
    // Predicated region
    $region6: #{tpu_custom_call.1} parent=1 // pred_check
      _
    $region7: #{tpu_custom_call.1} parent=1 // pred_check_branch
      %49 = sbr.rel (0) target = $region9
    $region8: #{tpu_custom_call.1} parent=1 // pred_region
      %s51 = ssub.s32 512, 512
      %52 = vsyncadd [#allocation6], %s51
      %s53 = sshll.u32 [#allocation5], 4
      %s54 = int_to_ptr.vmem [resolvable:$true] %s53
      %59 = dma.hbm_to_vmem [thread:$0]  %s1, 512, %s54, [#allocation6], 128, 128, 8
    $region9: #{tpu_custom_call.1} parent=1 // pred_fallthru
      _
    // Predicated region
    $region10: #{tpu_custom_call.1} parent=1 // pred_check
      _
    $region11: #{tpu_custom_call.1} parent=1 // pred_check_branch
      %61 = sbr.rel (0) target = $region13
    $region12: #{tpu_custom_call.1} parent=1 // pred_region
      %s63 = ssub.s32 256, 256
      %64 = vsyncadd [#allocation6], %s63
      %s65 = sshll.u32 [#allocation7], 4
      %s66 = int_to_ptr.vmem [resolvable:$true] %s65
      %71 = dma.hbm_to_vmem [thread:$0]  %s2, 256, %s66, [#allocation6], 128, 128, 8
    $region13: #{tpu_custom_call.1} parent=1 // pred_fallthru
      _
    // Predicated region
    $region14: #{tpu_custom_call.1} parent=1 // pred_check
      _
    $region15: #{tpu_custom_call.1} parent=1 // pred_check_branch
      %73 = sbr.rel (0) target = $region17
    $region16: #{tpu_custom_call.1} parent=1 // pred_region
      %s75 = ssub.s32 256, 256
      %76 = vsyncadd [#allocation9], %s75
      %s77 = sshll.u32 [#allocation8], 4
      %s78 = int_to_ptr.vmem [resolvable:$true] %s77
      %83 = dma.hbm_to_vmem [thread:$0]  %s3, 256, %s78, [#allocation9], 128, 128, 8
    $region17: #{tpu_custom_call.1} parent=1 // pred_fallthru
      _
    // Predicated region
    $region18: #{tpu_custom_call.1} parent=1 // pred_check
      _
    $region19: #{tpu_custom_call.1} parent=1 // pred_check_branch
      %85 = sbr.rel (0) target = $region21
    $region20: #{tpu_custom_call.1} parent=1 // pred_region
      %s87 = ssub.s32 12288, 12288
      %88 = vsyncadd [#allocation9], %s87
      %s89 = sshll.u32 [#allocation10], 4
      %s90 = int_to_ptr.vmem [resolvable:$true] %s89
      %95 = dma.hbm_to_vmem [thread:$0]  %s4, 12288, %s90, [#allocation9], 384, 384, 24
    $region21: #{tpu_custom_call.1} parent=1 // pred_fallthru
      _
    // Predicated region
    $region22: #{tpu_custom_call.1} parent=1 // pred_check
      _
    $region23: #{tpu_custom_call.1} parent=1 // pred_check_branch
      %97 = sbr.rel (0) target = $region25
    $region24: #{tpu_custom_call.1} parent=1 // pred_region
      _
    $region25: #{tpu_custom_call.1} parent=1 // pred_fallthru
      _
    // Predicated region
    $region26: #{tpu_custom_call.1} parent=1 // pred_check
      _
    $region27: #{tpu_custom_call.1} parent=1 // pred_check_branch
      %99 = sbr.rel (0) target = $region29
    $region28: #{tpu_custom_call.1} parent=1 // pred_region
      %s101 = ssub.s32 4096, 4096
      %102 = vsyncadd [#allocation12], %s101
      %s103 = sshll.u32 [#allocation11], 4
      %s104 = int_to_ptr.vmem [resolvable:$true] %s103
      %109 = dma.hbm_to_vmem [thread:$0]  %s6, 4096, %s104, [#allocation12], 128, 128, 8
    $region29: #{tpu_custom_call.1} parent=1 // pred_fallthru
      _
    // Predicated region
    $region30: #{tpu_custom_call.1} parent=1 // pred_check
      _
    $region31: #{tpu_custom_call.1} parent=1 // pred_check_branch
      %111 = sbr.rel (0) target = $region33
    $region32: #{tpu_custom_call.1} parent=1 // pred_region
      _
    $region33: #{tpu_custom_call.1} parent=1 // pred_fallthru
      _
    // Predicated region
    $region34: #{tpu_custom_call.1} parent=1 // pred_check
      _
    $region35: #{tpu_custom_call.1} parent=1 // pred_check_branch
      %113 = sbr.rel (0) target = $region37
    $region36: #{tpu_custom_call.1} parent=1 // pred_region
      %s115 = ssub.s32 4096, 4096
      %116 = vsyncadd [#allocation12], %s115
      %s117 = sshll.u32 [#allocation13], 4
      %s118 = int_to_ptr.vmem [resolvable:$true] %s117
      %123 = dma.hbm_to_vmem [thread:$0]  %s8, 4096, %s118, [#allocation12], 128, 128, 8
    $region37: #{tpu_custom_call.1} parent=1 // pred_fallthru
      _
    // Predicated region
    $region38: #{tpu_custom_call.1} parent=1 // pred_check
      _
    $region39: #{tpu_custom_call.1} parent=1 // pred_check_branch
      %125 = sbr.rel (0) target = $region41
    $region40: #{tpu_custom_call.1} parent=1 // pred_region
      _
    $region41: #{tpu_custom_call.1} parent=1 // pred_fallthru
      _
    // Predicated region
    $region42: #{tpu_custom_call.1} parent=1 // pred_check
      _
    $region43: #{tpu_custom_call.1} parent=1 // pred_check_branch
      %127 = sbr.rel (0) target = $region45
    $region44: #{tpu_custom_call.1} parent=1 // pred_region
      %s129 = ssub.s32 8192, 8192
      %130 = vsyncadd [#allocation15], %s129
      %s131 = sshll.u32 [#allocation14], 4
      %s132 = int_to_ptr.vmem [resolvable:$true] %s131
      %137 = dma.hbm_to_vmem [thread:$0]  %s10, 8192, %s132, [#allocation15], 256, 256, 16
    $region45: #{tpu_custom_call.1} parent=1 // pred_fallthru
      _
    // Predicated region
    $region46: #{tpu_custom_call.1} parent=1 // pred_check
      _
    $region47: #{tpu_custom_call.1} parent=1 // pred_check_branch
      %139 = sbr.rel (0) target = $region49
    $region48: #{tpu_custom_call.1} parent=1 // pred_region
      _
    $region49: #{tpu_custom_call.1} parent=1 // pred_fallthru
      _
    // Predicated region
    $region50: #{tpu_custom_call.1} parent=1 // pred_check
      _
    $region51: #{tpu_custom_call.1} parent=1 // pred_check_branch
      %141 = sbr.rel (0) target = $region53
    $region52: #{tpu_custom_call.1} parent=1 // pred_region
      %s143 = ssub.s32 4096, 4096
      %144 = vsyncadd [#allocation15], %s143
      %s145 = sshll.u32 [#allocation16], 4
      %s146 = int_to_ptr.vmem [resolvable:$true] %s145
      %151 = dma.hbm_to_vmem [thread:$0]  %s12, 4096, %s146, [#allocation15], 128, 128, 8
    $region53: #{tpu_custom_call.1} parent=1 // pred_fallthru
      _
    // Predicated region
    $region54: #{tpu_custom_call.1} parent=1 // pred_check
      _
    $region55: #{tpu_custom_call.1} parent=1 // pred_check_branch
      %153 = sbr.rel (0) target = $region57
    $region56: #{tpu_custom_call.1} parent=1 // pred_region
      _
    $region57: #{tpu_custom_call.1} parent=1 // pred_fallthru
      _
    // Predicated region
    $region58: #{tpu_custom_call.1} parent=1 // pred_check
      _
    $region59: #{tpu_custom_call.1} parent=1 // pred_check_branch
      %155 = sbr.rel (0) target = $region61
    $region60: #{tpu_custom_call.1} parent=1 // pred_region
      %s157 = ssub.s32 4096, 4096
      %158 = vsyncadd [#allocation18], %s157
      %s159 = sshll.u32 [#allocation17], 4
      %s160 = int_to_ptr.vmem [resolvable:$true] %s159
      %165 = dma.hbm_to_vmem [thread:$0]  %s14, 4096, %s160, [#allocation18], 128, 128, 8
    $region61: #{tpu_custom_call.1} parent=1 // pred_fallthru
      _
    // Predicated region
    $region62: #{tpu_custom_call.1} parent=1 // pred_check
      _
    $region63: #{tpu_custom_call.1} parent=1 // pred_check_branch
      %167 = sbr.rel (0) target = $region65
    $region64: #{tpu_custom_call.1} parent=1 // pred_region
      _
    $region65: #{tpu_custom_call.1} parent=1 // pred_fallthru
      _
    // Predicated region
    $region66: #{tpu_custom_call.1} parent=1 // pred_check
      _
    $region67: #{tpu_custom_call.1} parent=1 // pred_check_branch
      %169 = sbr.rel (0) target = $region69
    $region68: #{tpu_custom_call.1} parent=1 // pred_region
      %s171 = ssub.s32 4096, 4096
      %172 = vsyncadd [#allocation18], %s171
      %s173 = sshll.u32 [#allocation19], 4
      %s174 = int_to_ptr.vmem [resolvable:$true] %s173
      %179 = dma.hbm_to_vmem [thread:$0]  %s16, 4096, %s174, [#allocation18], 128, 128, 8
    $region69: #{tpu_custom_call.1} parent=1 // pred_fallthru
      _
    // Predicated region
    $region70: #{tpu_custom_call.1} parent=1 // pred_check
      _
    $region71: #{tpu_custom_call.1} parent=1 // pred_check_branch
      %181 = sbr.rel (0) target = $region73
    $region72: #{tpu_custom_call.1} parent=1 // pred_region
      _
    $region73: #{tpu_custom_call.1} parent=1 // pred_fallthru
      _
    // Predicated region
    $region74: #{tpu_custom_call.1} parent=1 // pred_check
      _
    $region75: #{tpu_custom_call.1} parent=1 // pred_check_branch
      %183 = sbr.rel (0) target = $region77
    $region76: #{tpu_custom_call.1} parent=1 // pred_region
      _
    $region77: #{tpu_custom_call.1} parent=1 // pred_fallthru
      _
    // Predicated region
    $region78: #{tpu_custom_call.1} parent=1 // pred_check
      _
    $region79: #{tpu_custom_call.1} parent=1 // pred_check_branch
      %185 = sbr.rel (0) target = $region81
    $region80: #{tpu_custom_call.1} parent=1 // pred_region
      _
    $region81: #{tpu_custom_call.1} parent=1 // pred_fallthru
      _
    // Predicated region
    $region82: #{tpu_custom_call.1} parent=1 // pred_check
      _
    $region83: #{tpu_custom_call.1} parent=1 // pred_check_branch
      %187 = sbr.rel (0) target = $region85
    $region84: #{tpu_custom_call.1} parent=1 // pred_region
      _
    $region85: #{tpu_custom_call.1} parent=1 // pred_fallthru
      _
    // Predicated region
    $region86: #{tpu_custom_call.1} parent=1 // pred_check
      _
    $region87: #{tpu_custom_call.1} parent=1 // pred_check_branch
      %189 = sbr.rel (0) target = $region89
    $region88: #{tpu_custom_call.1} parent=1 // pred_region
      _
    $region89: #{tpu_custom_call.1} parent=1 // pred_fallthru
      _
    // Predicated region
    $region90: #{tpu_custom_call.1} parent=1 // pred_check
      _
    $region91: #{tpu_custom_call.1} parent=1 // pred_check_branch
      %191 = sbr.rel (0) target = $region93
    $region92: #{tpu_custom_call.1} parent=1 // pred_region
      _
    $region93: #{tpu_custom_call.1} parent=1 // pred_fallthru
      _
    // Predicated region
    $region94: #{tpu_custom_call.1} parent=1 // pred_check
      _
    $region95: #{tpu_custom_call.1} parent=1 // pred_check_branch
      %193 = sbr.rel (0) target = $region97
    $region96: #{tpu_custom_call.1} parent=1 // pred_region
      _
    $region97: #{tpu_custom_call.1} parent=1 // pred_fallthru
      _
    // Predicated region
    $region98: #{tpu_custom_call.1} parent=1 // pred_check
      _
    $region99: #{tpu_custom_call.1} parent=1 // pred_check_branch
      %195 = sbr.rel (0) target = $region101
    $region100: #{tpu_custom_call.1} parent=1 // pred_region
      %196 = dma.done [#allocation3], 256
    $region101: #{tpu_custom_call.1} parent=1 // pred_fallthru
      _
    // Predicated region
    $region102: #{tpu_custom_call.1} parent=1 // pred_check
      _
    $region103: #{tpu_custom_call.1} parent=1 // pred_check_branch
      %198 = sbr.rel (0) target = $region105
    $region104: #{tpu_custom_call.1} parent=1 // pred_region
      %199 = dma.done [#allocation6], 512
    $region105: #{tpu_custom_call.1} parent=1 // pred_fallthru
      _
    // Predicated region
    $region106: #{tpu_custom_call.1} parent=1 // pred_check
      _
    $region107: #{tpu_custom_call.1} parent=1 // pred_check_branch
      %201 = sbr.rel (0) target = $region109
    $region108: #{tpu_custom_call.1} parent=1 // pred_region
      %202 = dma.done [#allocation6], 256
    $region109: #{tpu_custom_call.1} parent=1 // pred_fallthru
      _
    // Predicated region
    $region110: #{tpu_custom_call.1} parent=1 // pred_check
      _
    $region111: #{tpu_custom_call.1} parent=1 // pred_check_branch
      %204 = sbr.rel (0) target = $region113
    $region112: #{tpu_custom_call.1} parent=1 // pred_region
      %205 = dma.done [#allocation9], 256
    $region113: #{tpu_custom_call.1} parent=1 // pred_fallthru
      _
    // Predicated region
    $region114: #{tpu_custom_call.1} parent=1 // pred_check
      _
    $region115: #{tpu_custom_call.1} parent=1 // pred_check_branch
      %207 = sbr.rel (0) target = $region117
    $region116: #{tpu_custom_call.1} parent=1 // pred_region
      %208 = dma.done [#allocation9], 12288
    $region117: #{tpu_custom_call.1} parent=1 // pred_fallthru
      _
    // Predicated region
    $region118: #{tpu_custom_call.1} parent=1 // pred_check
      _
    $region119: #{tpu_custom_call.1} parent=1 // pred_check_branch
      %210 = sbr.rel (0) target = $region121
    $region120: #{tpu_custom_call.1} parent=1 // pred_region
      %211 = dma.done [#allocation12], 4096
    $region121: #{tpu_custom_call.1} parent=1 // pred_fallthru
      _
    // Predicated region
    $region122: #{tpu_custom_call.1} parent=1 // pred_check
      _
    $region123: #{tpu_custom_call.1} parent=1 // pred_check_branch
      %213 = sbr.rel (0) target = $region125
    $region124: #{tpu_custom_call.1} parent=1 // pred_region
      %214 = dma.done [#allocation12], 4096
    $region125: #{tpu_custom_call.1} parent=1 // pred_fallthru
      _
    // Predicated region
    $region126: #{tpu_custom_call.1} parent=1 // pred_check
      _
    $region127: #{tpu_custom_call.1} parent=1 // pred_check_branch
      %216 = sbr.rel (0) target = $region129
    $region128: #{tpu_custom_call.1} parent=1 // pred_region
      %217 = dma.done [#allocation15], 8192
    $region129: #{tpu_custom_call.1} parent=1 // pred_fallthru
      _
    // Predicated region
    $region130: #{tpu_custom_call.1} parent=1 // pred_check
      _
    $region131: #{tpu_custom_call.1} parent=1 // pred_check_branch
      %219 = sbr.rel (0) target = $region133
    $region132: #{tpu_custom_call.1} parent=1 // pred_region
      %220 = dma.done [#allocation15], 4096
    $region133: #{tpu_custom_call.1} parent=1 // pred_fallthru
      _
    // Predicated region
    $region134: #{tpu_custom_call.1} parent=1 // pred_check
      _
    $region135: #{tpu_custom_call.1} parent=1 // pred_check_branch
      %222 = sbr.rel (0) target = $region137
    $region136: #{tpu_custom_call.1} parent=1 // pred_region
      %223 = dma.done [#allocation18], 4096
    $region137: #{tpu_custom_call.1} parent=1 // pred_fallthru
      _
    // Predicated region
    $region138: #{tpu_custom_call.1} parent=1 // pred_check
      _
    $region139: #{tpu_custom_call.1} parent=1 // pred_check_branch
      %225 = sbr.rel (0) target = $region141
    $region140: #{tpu_custom_call.1} parent=1 // pred_region
      %226 = dma.done [#allocation18], 4096
    $region141: #{tpu_custom_call.1} parent=1 // pred_fallthru
      _
    %v228 = vld [vmem:[#allocation2] sm:$0xff]
    %v229 = vld [vmem:[#allocation2 + $0x8] sm:$0xff]
    %v230 = vld [vmem:[#allocation5] sm:$0xff]
    %v231 = vld [vmem:[#allocation5 + $0x8] sm:$0xff]
    %v232 = vld [vmem:[#allocation5 + $0x10] sm:$0xff]
    %v233 = vld [vmem:[#allocation5 + $0x18] sm:$0xff]
    %v234 = vld [vmem:[#allocation7] sm:$0xff]
    %v235 = vld [vmem:[#allocation7 + $0x8] sm:$0xff]
    %v236 = vmul.f32 %v234, -1e+09
    %v237 = vmul.f32 %v235, -1e+09
    %v238 = vld [vmem:[#allocation8] sm:$0xff]
    %v239 = vld [vmem:[#allocation8 + $0x8] sm:$0xff]
    %v240 = vmul.f32 %v238, -1e+09
    %v241 = vmul.f32 %v239, -1e+09
    %v242 = vld [vmem:[#allocation10] sm:$0xff]
    %v243 = vld [vmem:[#allocation10 + $0x8] sm:$0xff]
    %v244 = vld [vmem:[#allocation10 + $0x10] sm:$0xff]
    %v245 = vld [vmem:[#allocation10 + $0x18] sm:$0xff]
    %v246 = vld [vmem:[#allocation10 + $0x20] sm:$0xff]
    %v247 = vld [vmem:[#allocation10 + $0x28] sm:$0xff]
    %v248 = vld [vmem:[#allocation10 + $0x30] sm:$0xff]
    %v249 = vld [vmem:[#allocation10 + $0x38] sm:$0xff]
    %v250 = vld [vmem:[#allocation10 + $0x40] sm:$0xff]
    %v251 = vld [vmem:[#allocation10 + $0x48] sm:$0xff]
    %v252 = vld [vmem:[#allocation10 + $0x50] sm:$0xff]
    %v253 = vld [vmem:[#allocation10 + $0x58] sm:$0xff]
    %v254 = vld [vmem:[#allocation10 + $0x60] sm:$0xff]
    %v255 = vld [vmem:[#allocation10 + $0x68] sm:$0xff]
    %v256 = vld [vmem:[#allocation10 + $0x70] sm:$0xff]
    %v257 = vld [vmem:[#allocation10 + $0x78] sm:$0xff]
    %v258 = vld [vmem:[#allocation10 + $0x80] sm:$0xff]
    %v259 = vld [vmem:[#allocation10 + $0x88] sm:$0xff]
    %v260 = vld [vmem:[#allocation10 + $0x90] sm:$0xff]
    %v261 = vld [vmem:[#allocation10 + $0x98] sm:$0xff]
    %v262 = vld [vmem:[#allocation10 + $0xa0] sm:$0xff]
    %v263 = vld [vmem:[#allocation10 + $0xa8] sm:$0xff]
    %v264 = vld [vmem:[#allocation10 + $0xb0] sm:$0xff]
    %v265 = vld [vmem:[#allocation10 + $0xb8] sm:$0xff]
    %v266 = vld [vmem:[#allocation10 + $0xc0] sm:$0xff]
    %v267 = vld [vmem:[#allocation10 + $0xc8] sm:$0xff]
    %v268 = vld [vmem:[#allocation10 + $0xd0] sm:$0xff]
    %v269 = vld [vmem:[#allocation10 + $0xd8] sm:$0xff]
    %v270 = vld [vmem:[#allocation10 + $0xe0] sm:$0xff]
    %v271 = vld [vmem:[#allocation10 + $0xe8] sm:$0xff]
    %v272 = vld [vmem:[#allocation10 + $0xf0] sm:$0xff]
    %v273 = vld [vmem:[#allocation10 + $0xf8] sm:$0xff]
    %v274 = vld [vmem:[#allocation10 + $0x100] sm:$0xff]
    %v275 = vld [vmem:[#allocation10 + $0x108] sm:$0xff]
    %v276 = vld [vmem:[#allocation10 + $0x110] sm:$0xff]
    %v277 = vld [vmem:[#allocation10 + $0x118] sm:$0xff]
    %v278 = vld [vmem:[#allocation10 + $0x120] sm:$0xff]
    %v279 = vld [vmem:[#allocation10 + $0x128] sm:$0xff]
    %v280 = vld [vmem:[#allocation10 + $0x130] sm:$0xff]
    %v281 = vld [vmem:[#allocation10 + $0x138] sm:$0xff]
    %v282 = vld [vmem:[#allocation10 + $0x140] sm:$0xff]
    %v283 = vld [vmem:[#allocation10 + $0x148] sm:$0xff]
    %v284 = vld [vmem:[#allocation10 + $0x150] sm:$0xff]
    %v285 = vld [vmem:[#allocation10 + $0x158] sm:$0xff]
    %v286 = vld [vmem:[#allocation10 + $0x160] sm:$0xff]
    %v287 = vld [vmem:[#allocation10 + $0x168] sm:$0xff]
    %v288 = vld [vmem:[#allocation10 + $0x170] sm:$0xff]
    %v289 = vld [vmem:[#allocation10 + $0x178] sm:$0xff]
    %v290 = vpack.c.bf16 %v229, %v228
    %v291 = vpack.c.bf16 %v245, %v242
    %v292 = vpack.c.bf16 %v246, %v243
    %v293 = vpack.c.bf16 %v247, %v244
    %v294 = vpack.c.bf16 %v251, %v248
    %v295 = vpack.c.bf16 %v252, %v249
    %v296 = vpack.c.bf16 %v253, %v250
    %v297 = vpack.c.bf16 %v257, %v254
    %v298 = vpack.c.bf16 %v258, %v255
    %v299 = vpack.c.bf16 %v259, %v256
    %v300 = vpack.c.bf16 %v263, %v260
    %v301 = vpack.c.bf16 %v264, %v261
    %v302 = vpack.c.bf16 %v265, %v262
    %v303 = vpack.c.bf16 %v269, %v266
    %v304 = vpack.c.bf16 %v270, %v267
    %v305 = vpack.c.bf16 %v271, %v268
    %v306 = vpack.c.bf16 %v275, %v272
    %v307 = vpack.c.bf16 %v276, %v273
    %v308 = vpack.c.bf16 %v277, %v274
    %v309 = vpack.c.bf16 %v281, %v278
    %v310 = vpack.c.bf16 %v282, %v279
    %v311 = vpack.c.bf16 %v283, %v280
    %v312 = vpack.c.bf16 %v287, %v284
    %v313 = vpack.c.bf16 %v288, %v285
    %v314 = vpack.c.bf16 %v289, %v286
    %v315 = vld [vmem:[%s5] sm:$0x7]
    %v317 = vlaneseq
    %v318 = vshrl.u32 %v317, 7
    %v319 = vsub.s32 0, %v318
    %v320 = vrot.slane %v315, %v319
    %v321 = vlaneseq
    %v322 = vshrl.u32 %v321, 7
    %v323 = vsub.s32 1, %v322
    %v324 = vrot.slane %v315, %v323
    %v325 = vlaneseq
    %v326 = vshrl.u32 %v325, 7
    %v327 = vsub.s32 2, %v326
    %v328 = vrot.slane %v315, %v327
    %332 = vmatprep.subr.bf16.mxu0 %v292
    %333 = vmatpush1.bf16.msra.mxu0 %v291
    %334 = vmatprep.subr.bf16.mxu0 %v295
    %335 = vmatpush1.bf16.msra.mxu0 %v294
    %336 = vmatprep.subr.bf16.mxu0 %v298
    %337 = vmatpush1.bf16.msra.mxu0 %v297
    %338 = vmatprep.subr.bf16.mxu0 %v301
    %339 = vmatpush1.bf16.msra.mxu0 %v300
    %340 = vmatprep.subr.bf16.mxu0 %v304
    %341 = vmatpush1.bf16.msra.mxu0 %v303
    %342 = vmatprep.subr.bf16.mxu0 %v307
    %343 = vmatpush1.bf16.msra.mxu0 %v306
    %344 = vmatprep.subr.bf16.mxu0 %v310
    %345 = vmatpush1.bf16.msra.mxu0 %v309
    %346 = vmatprep.subr.bf16.mxu0 %v313
    %347 = vmatpush1.bf16.msra.mxu0 %v312
    %348 = vmatprep.subr.bf16.mxu0 0
    %349 = vmatpush1.bf16.msra.mxu0 0
    %350 = vmatprep.subr.bf16.mxu0 0
    %351 = vmatpush1.bf16.msra.mxu0 0
    %352 = vmatprep.subr.bf16.mxu0 0
    %353 = vmatpush1.bf16.msra.mxu0 0
    %354 = vmatprep.subr.bf16.mxu0 0
    %355 = vmatpush1.bf16.msra.mxu0 0
    %356 = vmatprep.subr.bf16.mxu0 0
    %357 = vmatpush1.bf16.msra.mxu0 0
    %358 = vmatprep.subr.bf16.mxu0 0
    %359 = vmatpush1.bf16.msra.mxu0 0
    %360 = vmatprep.subr.bf16.mxu0 0
    %361 = vmatpush1.bf16.msra.mxu0 0
    %362 = vmatprep.subr.bf16.mxu0 0
    %363 = vmatpush1.bf16.msra.mxu0 0
    %364 = vmatprep.mubr.bf16.mxu0 0
    %365 = vmatmul.mubr.bf16.gmra.mrb[0].mxu0 %v290
    %v366 = vpop.f32.mrb[0].mxu0
    %v367 = vadd.f32 %v320, %v366
    %v368 = vpop.f32.mrb[0].mxu0
    %v369 = vadd.f32 %v324, %v368
    %v370 = vpop.f32.mrb[0].mxu0
    %v371 = vadd.f32 %v320, %v370
    %v372 = vpop.f32.mrb[0].mxu0
    %v373 = vadd.f32 %v324, %v372
    %374 = vdwg.mxu0
    %375 = vmatprep.subr.bf16.mxu0 0
    %376 = vmatpush1.bf16.msra.mxu0 %v293
    %377 = vmatprep.subr.bf16.mxu0 0
    %378 = vmatpush1.bf16.msra.mxu0 %v296
    %379 = vmatprep.subr.bf16.mxu0 0
    %380 = vmatpush1.bf16.msra.mxu0 %v299
    %381 = vmatprep.subr.bf16.mxu0 0
    %382 = vmatpush1.bf16.msra.mxu0 %v302
    %383 = vmatprep.subr.bf16.mxu0 0
    %384 = vmatpush1.bf16.msra.mxu0 %v305
    %385 = vmatprep.subr.bf16.mxu0 0
    %386 = vmatpush1.bf16.msra.mxu0 %v308
    %387 = vmatprep.subr.bf16.mxu0 0
    %388 = vmatpush1.bf16.msra.mxu0 %v311
    %389 = vmatprep.subr.bf16.mxu0 0
    %390 = vmatpush1.bf16.msra.mxu0 %v314
    %391 = vmatprep.subr.bf16.mxu0 0
    %392 = vmatpush1.bf16.msra.mxu0 0
    %393 = vmatprep.subr.bf16.mxu0 0
    %394 = vmatpush1.bf16.msra.mxu0 0
    %395 = vmatprep.subr.bf16.mxu0 0
    %396 = vmatpush1.bf16.msra.mxu0 0
    %397 = vmatprep.subr.bf16.mxu0 0
    %398 = vmatpush1.bf16.msra.mxu0 0
    %399 = vmatprep.subr.bf16.mxu0 0
    %400 = vmatpush1.bf16.msra.mxu0 0
    %401 = vmatprep.subr.bf16.mxu0 0
    %402 = vmatpush1.bf16.msra.mxu0 0
    %403 = vmatprep.subr.bf16.mxu0 0
    %404 = vmatpush1.bf16.msra.mxu0 0
    %405 = vmatprep.subr.bf16.mxu0 0
    %406 = vmatpush1.bf16.msra.mxu0 0
    %407 = vmatprep.mubr.bf16.mxu0 0
    %408 = vmatmul.mubr.bf16.gmra.mrb[0].mxu0 %v290
    %v409 = vpop.f32.mrb[0].mxu0
    %v410 = vadd.f32 %v328, %v409
    %v411 = vpop.f32.mrb[0].mxu0
    %v412 = vpop.f32.mrb[0].mxu0
    %v413 = vadd.f32 %v328, %v412
    %v414 = vpop.f32.mrb[0].mxu0
    %415 = vdwg.mxu0
    %v416 = vld [vmem:[#allocation11] sm:$0xff]
    %v417 = vld [vmem:[#allocation11 + $0x8] sm:$0xff]
    %v418 = vld [vmem:[#allocation11 + $0x10] sm:$0xff]
    %v419 = vld [vmem:[#allocation11 + $0x18] sm:$0xff]
    %v420 = vld [vmem:[#allocation11 + $0x20] sm:$0xff]
    %v421 = vld [vmem:[#allocation11 + $0x28] sm:$0xff]
    %v422 = vld [vmem:[#allocation11 + $0x30] sm:$0xff]
    %v423 = vld [vmem:[#allocation11 + $0x38] sm:$0xff]
    %v424 = vld [vmem:[#allocation11 + $0x40] sm:$0xff]
    %v425 = vld [vmem:[#allocation11 + $0x48] sm:$0xff]
    %v426 = vld [vmem:[#allocation11 + $0x50] sm:$0xff]
    %v427 = vld [vmem:[#allocation11 + $0x58] sm:$0xff]
    %v428 = vld [vmem:[#allocation11 + $0x60] sm:$0xff]
    %v429 = vld [vmem:[#allocation11 + $0x68] sm:$0xff]
    %v430 = vld [vmem:[#allocation11 + $0x70] sm:$0xff]
    %v431 = vld [vmem:[#allocation11 + $0x78] sm:$0xff]
    %433 = vrot.lane.b32.xlu0 %v367, 96
    %v434 = vpop.permute.xlu0 %433
    %436 = vrot.lane.b32.xlu0 %v367, 64
    %v437 = vpop.permute.xlu0 %436
    %439 = vrot.lane.b32.xlu0 %v367, 32
    %v440 = vpop.permute.xlu0 %439
    %443 = vrot.lane.b32.xlu0 %v369, 96
    %v444 = vpop.permute.xlu0 %443
    %446 = vrot.lane.b32.xlu0 %v369, 64
    %v447 = vpop.permute.xlu0 %446
    %449 = vrot.lane.b32.xlu0 %v369, 32
    %v450 = vpop.permute.xlu0 %449
    %453 = vrot.lane.b32.xlu0 %v410, 96
    %v454 = vpop.permute.xlu0 %453
    %456 = vrot.lane.b32.xlu0 %v410, 64
    %v457 = vpop.permute.xlu0 %456
    %459 = vrot.lane.b32.xlu0 %v410, 32
    %v460 = vpop.permute.xlu0 %459
    %v462 = vpack.c.bf16 %v367, %v367
    %v463 = vpack.c.bf16 %v434, %v434
    %v464 = vpack.c.bf16 %v437, %v437
    %v465 = vpack.c.bf16 %v440, %v440
    %v466 = vpack.c.bf16 %v369, %v369
    %v467 = vpack.c.bf16 %v444, %v444
    %v468 = vpack.c.bf16 %v447, %v447
    %v469 = vpack.c.bf16 %v450, %v450
    %vm470 = vcmask 261120
    %v472 = vsel %vm470, %v462, 0
    %v475 = vsel %vm470, %v466, 0
    %477 = vmatprep.subr.bf16.mxu0 0
    %478 = vmatpush1.bf16.xpose.msra.mxu0 %v475
    %479 = vmatprep.subr.bf16.mxu0 0
    %480 = vmatpush1.bf16.xpose.msra.mxu0 0
    %481 = vmatprep.subr.bf16.mxu0 0
    %482 = vmatpush1.bf16.xpose.msra.mxu0 0
    %483 = vmatprep.subr.bf16.mxu0 0
    %484 = vmatpush1.bf16.xpose.msra.mxu0 0
    %485 = vmatprep.subr.bf16.mxu0 0
    %486 = vmatpush1.bf16.xpose.msra.mxu0 0
    %487 = vmatprep.subr.bf16.mxu0 0
    %488 = vmatpush1.bf16.xpose.msra.mxu0 0
    %489 = vmatprep.subr.bf16.mxu0 0
    %490 = vmatpush1.bf16.xpose.msra.mxu0 0
    %491 = vmatprep.subr.bf16.mxu0 0
    %492 = vmatpush1.bf16.xpose.msra.mxu0 0
    %493 = vmatprep.subr.bf16.mxu0 0
    %494 = vmatpush1.bf16.xpose.msra.mxu0 0
    %495 = vmatprep.subr.bf16.mxu0 0
    %496 = vmatpush1.bf16.xpose.msra.mxu0 0
    %497 = vmatprep.subr.bf16.mxu0 0
    %498 = vmatpush1.bf16.xpose.msra.mxu0 0
    %499 = vmatprep.subr.bf16.mxu0 0
    %500 = vmatpush1.bf16.xpose.msra.mxu0 0
    %501 = vmatprep.subr.bf16.mxu0 0
    %502 = vmatpush1.bf16.xpose.msra.mxu0 0
    %503 = vmatprep.subr.bf16.mxu0 0
    %504 = vmatpush1.bf16.xpose.msra.mxu0 0
    %505 = vmatprep.subr.bf16.mxu0 0
    %506 = vmatpush1.bf16.xpose.msra.mxu0 0
    %507 = vmatprep.subr.bf16.mxu0 0
    %508 = vmatpush1.bf16.xpose.msra.mxu0 0
    %509 = vmatprep.mubr.bf16.mxu0 0
    %510 = vmatmul.mubr.bf16.gmra.mrb[0].mxu0 %v472
    %v511 = vpop.f32.mrb[0].mxu0
    %v512 = vadd.f32 %v236, %v511
    %v513 = vpop.f32.mrb[0].mxu0
    %v514 = vpop.f32.mrb[0].mxu0
    %v515 = vpop.f32.mrb[0].mxu0
    %516 = vdwg.mxu0
    %v518 = vsel %vm470, %v463, 0
    %v521 = vsel %vm470, %v467, 0
    %523 = vmatprep.subr.bf16.mxu0 0
    %524 = vmatpush1.bf16.xpose.msra.mxu0 %v521
    %525 = vmatprep.subr.bf16.mxu0 0
    %526 = vmatpush1.bf16.xpose.msra.mxu0 0
    %527 = vmatprep.subr.bf16.mxu0 0
    %528 = vmatpush1.bf16.xpose.msra.mxu0 0
    %529 = vmatprep.subr.bf16.mxu0 0
    %530 = vmatpush1.bf16.xpose.msra.mxu0 0
    %531 = vmatprep.subr.bf16.mxu0 0
    %532 = vmatpush1.bf16.xpose.msra.mxu0 0
    %533 = vmatprep.subr.bf16.mxu0 0
    %534 = vmatpush1.bf16.xpose.msra.mxu0 0
    %535 = vmatprep.subr.bf16.mxu0 0
    %536 = vmatpush1.bf16.xpose.msra.mxu0 0
    %537 = vmatprep.subr.bf16.mxu0 0
    %538 = vmatpush1.bf16.xpose.msra.mxu0 0
    %539 = vmatprep.subr.bf16.mxu0 0
    %540 = vmatpush1.bf16.xpose.msra.mxu0 0
    %541 = vmatprep.subr.bf16.mxu0 0
    %542 = vmatpush1.bf16.xpose.msra.mxu0 0
    %543 = vmatprep.subr.bf16.mxu0 0
    %544 = vmatpush1.bf16.xpose.msra.mxu0 0
    %545 = vmatprep.subr.bf16.mxu0 0
    %546 = vmatpush1.bf16.xpose.msra.mxu0 0
    %547 = vmatprep.subr.bf16.mxu0 0
    %548 = vmatpush1.bf16.xpose.msra.mxu0 0
    %549 = vmatprep.subr.bf16.mxu0 0
    %550 = vmatpush1.bf16.xpose.msra.mxu0 0
    %551 = vmatprep.subr.bf16.mxu0 0
    %552 = vmatpush1.bf16.xpose.msra.mxu0 0
    %553 = vmatprep.subr.bf16.mxu0 0
    %554 = vmatpush1.bf16.xpose.msra.mxu0 0
    %555 = vmatprep.mubr.bf16.mxu0 0
    %556 = vmatmul.mubr.bf16.gmra.mrb[0].mxu0 %v518
    %v557 = vpop.f32.mrb[0].mxu0
    %v558 = vadd.f32 %v236, %v557
    %v559 = vpop.f32.mrb[0].mxu0
    %v560 = vpop.f32.mrb[0].mxu0
    %v561 = vpop.f32.mrb[0].mxu0
    %562 = vdwg.mxu0
    %v564 = vsel %vm470, %v464, 0
    %v567 = vsel %vm470, %v468, 0
    %569 = vmatprep.subr.bf16.mxu0 0
    %570 = vmatpush1.bf16.xpose.msra.mxu0 %v567
    %571 = vmatprep.subr.bf16.mxu0 0
    %572 = vmatpush1.bf16.xpose.msra.mxu0 0
    %573 = vmatprep.subr.bf16.mxu0 0
    %574 = vmatpush1.bf16.xpose.msra.mxu0 0
    %575 = vmatprep.subr.bf16.mxu0 0
    %576 = vmatpush1.bf16.xpose.msra.mxu0 0
    %577 = vmatprep.subr.bf16.mxu0 0
    %578 = vmatpush1.bf16.xpose.msra.mxu0 0
    %579 = vmatprep.subr.bf16.mxu0 0
    %580 = vmatpush1.bf16.xpose.msra.mxu0 0
    %581 = vmatprep.subr.bf16.mxu0 0
    %582 = vmatpush1.bf16.xpose.msra.mxu0 0
    %583 = vmatprep.subr.bf16.mxu0 0
    %584 = vmatpush1.bf16.xpose.msra.mxu0 0
    %585 = vmatprep.subr.bf16.mxu0 0
    %586 = vmatpush1.bf16.xpose.msra.mxu0 0
    %587 = vmatprep.subr.bf16.mxu0 0
    %588 = vmatpush1.bf16.xpose.msra.mxu0 0
    %589 = vmatprep.subr.bf16.mxu0 0
    %590 = vmatpush1.bf16.xpose.msra.mxu0 0
    %591 = vmatprep.subr.bf16.mxu0 0
    %592 = vmatpush1.bf16.xpose.msra.mxu0 0
    %593 = vmatprep.subr.bf16.mxu0 0
    %594 = vmatpush1.bf16.xpose.msra.mxu0 0
    %595 = vmatprep.subr.bf16.mxu0 0
    %596 = vmatpush1.bf16.xpose.msra.mxu0 0
    %597 = vmatprep.subr.bf16.mxu0 0
    %598 = vmatpush1.bf16.xpose.msra.mxu0 0
    %599 = vmatprep.subr.bf16.mxu0 0
    %600 = vmatpush1.bf16.xpose.msra.mxu0 0
    %601 = vmatprep.mubr.bf16.mxu0 0
    %602 = vmatmul.mubr.bf16.gmra.mrb[0].mxu0 %v564
    %v603 = vpop.f32.mrb[0].mxu0
    %v604 = vadd.f32 %v236, %v603
    %v605 = vpop.f32.mrb[0].mxu0
    %v606 = vpop.f32.mrb[0].mxu0
    %v607 = vpop.f32.mrb[0].mxu0
    %608 = vdwg.mxu0
    %v610 = vsel %vm470, %v465, 0
    %v613 = vsel %vm470, %v469, 0
    %615 = vmatprep.subr.bf16.mxu0 0
    %616 = vmatpush1.bf16.xpose.msra.mxu0 %v613
    %617 = vmatprep.subr.bf16.mxu0 0
    %618 = vmatpush1.bf16.xpose.msra.mxu0 0
    %619 = vmatprep.subr.bf16.mxu0 0
    %620 = vmatpush1.bf16.xpose.msra.mxu0 0
    %621 = vmatprep.subr.bf16.mxu0 0
    %622 = vmatpush1.bf16.xpose.msra.mxu0 0
    %623 = vmatprep.subr.bf16.mxu0 0
    %624 = vmatpush1.bf16.xpose.msra.mxu0 0
    %625 = vmatprep.subr.bf16.mxu0 0
    %626 = vmatpush1.bf16.xpose.msra.mxu0 0
    %627 = vmatprep.subr.bf16.mxu0 0
    %628 = vmatpush1.bf16.xpose.msra.mxu0 0
    %629 = vmatprep.subr.bf16.mxu0 0
    %630 = vmatpush1.bf16.xpose.msra.mxu0 0
    %631 = vmatprep.subr.bf16.mxu0 0
    %632 = vmatpush1.bf16.xpose.msra.mxu0 0
    %633 = vmatprep.subr.bf16.mxu0 0
    %634 = vmatpush1.bf16.xpose.msra.mxu0 0
    %635 = vmatprep.subr.bf16.mxu0 0
    %636 = vmatpush1.bf16.xpose.msra.mxu0 0
    %637 = vmatprep.subr.bf16.mxu0 0
    %638 = vmatpush1.bf16.xpose.msra.mxu0 0
    %639 = vmatprep.subr.bf16.mxu0 0
    %640 = vmatpush1.bf16.xpose.msra.mxu0 0
    %641 = vmatprep.subr.bf16.mxu0 0
    %642 = vmatpush1.bf16.xpose.msra.mxu0 0
    %643 = vmatprep.subr.bf16.mxu0 0
    %644 = vmatpush1.bf16.xpose.msra.mxu0 0
    %645 = vmatprep.subr.bf16.mxu0 0
    %646 = vmatpush1.bf16.xpose.msra.mxu0 0
    %647 = vmatprep.mubr.bf16.mxu0 0
    %648 = vmatmul.mubr.bf16.gmra.mrb[0].mxu0 %v610
    %v649 = vpop.f32.mrb[0].mxu0
    %v650 = vadd.f32 %v236, %v649
    %v651 = vpop.f32.mrb[0].mxu0
    %v652 = vpop.f32.mrb[0].mxu0
    %v653 = vpop.f32.mrb[0].mxu0
    %654 = vdwg.mxu0
    %vm655 = vcmask 64512
    %v656 = vsel %vm655, %v512, -inf
    %657 = vmax.xlane.f32.xlu0 %v656
    %v658 = vpop.xlane.xlu0 %657
    %v659 = vsel %vm655, %v558, -inf
    %660 = vmax.xlane.f32.xlu0 %v659
    %v661 = vpop.xlane.xlu0 %660
    %v662 = vsel %vm655, %v604, -inf
    %663 = vmax.xlane.f32.xlu0 %v662
    %v664 = vpop.xlane.xlu0 %663
    %v665 = vsel %vm655, %v650, -inf
    %666 = vmax.xlane.f32.xlu0 %v665
    %v667 = vpop.xlane.xlu0 %666
    %v668 = vsub.f32 %v512, %v658
    %v669 = vsub.f32 %v558, %v661
    %v670 = vsub.f32 %v604, %v664
    %v671 = vsub.f32 %v650, %v667
    %v672 = vmul.f32 %v668, 1.442695
    %v673 = vpow.pop %v672
    %v674 = vmul.f32 %v669, 1.442695
    %v675 = vpow.pop %v674
    %v676 = vmul.f32 %v670, 1.442695
    %v677 = vpow.pop %v676
    %v678 = vmul.f32 %v671, 1.442695
    %v679 = vpow.pop %v678
    %v680 = vsel %vm655, %v673, 0.0
    %681 = vadd.xlane.f32.xlu0 %v680
    %v682 = vpop.xlane.xlu0 %681
    %v683 = vsel %vm655, %v675, 0.0
    %684 = vadd.xlane.f32.xlu0 %v683
    %v685 = vpop.xlane.xlu0 %684
    %v686 = vsel %vm655, %v677, 0.0
    %687 = vadd.xlane.f32.xlu0 %v686
    %v688 = vpop.xlane.xlu0 %687
    %v689 = vsel %vm655, %v679, 0.0
    %690 = vadd.xlane.f32.xlu0 %v689
    %v691 = vpop.xlane.xlu0 %690
    %v692 = vrcp.pop %v682
    %v693 = vrcp.pop %v685
    %v694 = vrcp.pop %v688
    %v695 = vrcp.pop %v691
    %v696 = vmul.f32 %v673, %v692
    %v697 = vmul.f32 %v675, %v693
    %v698 = vmul.f32 %v677, %v694
    %v699 = vmul.f32 %v679, %v695
    %v700 = vpack.c.bf16 %v696, %v696
    %v701 = vpack.c.bf16 %v697, %v697
    %v702 = vpack.c.bf16 %v698, %v698
    %v703 = vpack.c.bf16 %v699, %v699
    %v704 = vpack.c.bf16 %v410, %v410
    %v705 = vpack.c.bf16 %v454, %v454
    %v706 = vpack.c.bf16 %v457, %v457
    %v707 = vpack.c.bf16 %v460, %v460
    %v709 = vsel %vm655, %v700, 0
    %vm711 = vcmask 1043456
    %v713 = vsel %vm711, %v704, 0
    %715 = vmatprep.subr.bf16.mxu0 0
    %716 = vmatpush1.bf16.msra.mxu0 %v713
    %717 = vmatprep.subr.bf16.mxu0 0
    %718 = vmatpush1.bf16.msra.mxu0 0
    %719 = vmatprep.subr.bf16.mxu0 0
    %720 = vmatpush1.bf16.msra.mxu0 0
    %721 = vmatprep.subr.bf16.mxu0 0
    %722 = vmatpush1.bf16.msra.mxu0 0
    %723 = vmatprep.subr.bf16.mxu0 0
    %724 = vmatpush1.bf16.msra.mxu0 0
    %725 = vmatprep.subr.bf16.mxu0 0
    %726 = vmatpush1.bf16.msra.mxu0 0
    %727 = vmatprep.subr.bf16.mxu0 0
    %728 = vmatpush1.bf16.msra.mxu0 0
    %729 = vmatprep.subr.bf16.mxu0 0
    %730 = vmatpush1.bf16.msra.mxu0 0
    %731 = vmatprep.subr.bf16.mxu0 0
    %732 = vmatpush1.bf16.msra.mxu0 0
    %733 = vmatprep.subr.bf16.mxu0 0
    %734 = vmatpush1.bf16.msra.mxu0 0
    %735 = vmatprep.subr.bf16.mxu0 0
    %736 = vmatpush1.bf16.msra.mxu0 0
    %737 = vmatprep.subr.bf16.mxu0 0
    %738 = vmatpush1.bf16.msra.mxu0 0
    %739 = vmatprep.subr.bf16.mxu0 0
    %740 = vmatpush1.bf16.msra.mxu0 0
    %741 = vmatprep.subr.bf16.mxu0 0
    %742 = vmatpush1.bf16.msra.mxu0 0
    %743 = vmatprep.subr.bf16.mxu0 0
    %744 = vmatpush1.bf16.msra.mxu0 0
    %745 = vmatprep.subr.bf16.mxu0 0
    %746 = vmatpush1.bf16.msra.mxu0 0
    %747 = vmatprep.mubr.bf16.mxu0 0
    %748 = vmatmul.mubr.bf16.gmra.mrb[0].mxu0 %v709
    %v749 = vpop.f32.mrb[0].mxu0
    %v750 = vadd.f32 0.0, %v749
    %v751 = vpop.f32.mrb[0].mxu0
    %v752 = vpop.f32.mrb[0].mxu0
    %v753 = vpop.f32.mrb[0].mxu0
    %754 = vdwg.mxu0
    %v756 = vsel %vm655, %v701, 0
    %v759 = vsel %vm711, %v705, 0
    %761 = vmatprep.subr.bf16.mxu0 0
    %762 = vmatpush1.bf16.msra.mxu0 %v759
    %763 = vmatprep.subr.bf16.mxu0 0
    %764 = vmatpush1.bf16.msra.mxu0 0
    %765 = vmatprep.subr.bf16.mxu0 0
    %766 = vmatpush1.bf16.msra.mxu0 0
    %767 = vmatprep.subr.bf16.mxu0 0
    %768 = vmatpush1.bf16.msra.mxu0 0
    %769 = vmatprep.subr.bf16.mxu0 0
    %770 = vmatpush1.bf16.msra.mxu0 0
    %771 = vmatprep.subr.bf16.mxu0 0
    %772 = vmatpush1.bf16.msra.mxu0 0
    %773 = vmatprep.subr.bf16.mxu0 0
    %774 = vmatpush1.bf16.msra.mxu0 0
    %775 = vmatprep.subr.bf16.mxu0 0
    %776 = vmatpush1.bf16.msra.mxu0 0
    %777 = vmatprep.subr.bf16.mxu0 0
    %778 = vmatpush1.bf16.msra.mxu0 0
    %779 = vmatprep.subr.bf16.mxu0 0
    %780 = vmatpush1.bf16.msra.mxu0 0
    %781 = vmatprep.subr.bf16.mxu0 0
    %782 = vmatpush1.bf16.msra.mxu0 0
    %783 = vmatprep.subr.bf16.mxu0 0
    %784 = vmatpush1.bf16.msra.mxu0 0
    %785 = vmatprep.subr.bf16.mxu0 0
    %786 = vmatpush1.bf16.msra.mxu0 0
    %787 = vmatprep.subr.bf16.mxu0 0
    %788 = vmatpush1.bf16.msra.mxu0 0
    %789 = vmatprep.subr.bf16.mxu0 0
    %790 = vmatpush1.bf16.msra.mxu0 0
    %791 = vmatprep.subr.bf16.mxu0 0
    %792 = vmatpush1.bf16.msra.mxu0 0
    %793 = vmatprep.mubr.bf16.mxu0 0
    %794 = vmatmul.mubr.bf16.gmra.mrb[0].mxu0 %v756
    %v795 = vpop.f32.mrb[0].mxu0
    %v796 = vadd.f32 0.0, %v795
    %v797 = vpop.f32.mrb[0].mxu0
    %v798 = vpop.f32.mrb[0].mxu0
    %v799 = vpop.f32.mrb[0].mxu0
    %800 = vdwg.mxu0
    %v802 = vsel %vm655, %v702, 0
    %v805 = vsel %vm711, %v706, 0
    %807 = vmatprep.subr.bf16.mxu0 0
    %808 = vmatpush1.bf16.msra.mxu0 %v805
    %809 = vmatprep.subr.bf16.mxu0 0
    %810 = vmatpush1.bf16.msra.mxu0 0
    %811 = vmatprep.subr.bf16.mxu0 0
    %812 = vmatpush1.bf16.msra.mxu0 0
    %813 = vmatprep.subr.bf16.mxu0 0
    %814 = vmatpush1.bf16.msra.mxu0 0
    %815 = vmatprep.subr.bf16.mxu0 0
    %816 = vmatpush1.bf16.msra.mxu0 0
    %817 = vmatprep.subr.bf16.mxu0 0
    %818 = vmatpush1.bf16.msra.mxu0 0
    %819 = vmatprep.subr.bf16.mxu0 0
    %820 = vmatpush1.bf16.msra.mxu0 0
    %821 = vmatprep.subr.bf16.mxu0 0
    %822 = vmatpush1.bf16.msra.mxu0 0
    %823 = vmatprep.subr.bf16.mxu0 0
    %824 = vmatpush1.bf16.msra.mxu0 0
    %825 = vmatprep.subr.bf16.mxu0 0
    %826 = vmatpush1.bf16.msra.mxu0 0
    %827 = vmatprep.subr.bf16.mxu0 0
    %828 = vmatpush1.bf16.msra.mxu0 0
    %829 = vmatprep.subr.bf16.mxu0 0
    %830 = vmatpush1.bf16.msra.mxu0 0
    %831 = vmatprep.subr.bf16.mxu0 0
    %832 = vmatpush1.bf16.msra.mxu0 0
    %833 = vmatprep.subr.bf16.mxu0 0
    %834 = vmatpush1.bf16.msra.mxu0 0
    %835 = vmatprep.subr.bf16.mxu0 0
    %836 = vmatpush1.bf16.msra.mxu0 0
    %837 = vmatprep.subr.bf16.mxu0 0
    %838 = vmatpush1.bf16.msra.mxu0 0
    %839 = vmatprep.mubr.bf16.mxu0 0
    %840 = vmatmul.mubr.bf16.gmra.mrb[0].mxu0 %v802
    %v841 = vpop.f32.mrb[0].mxu0
    %v842 = vadd.f32 0.0, %v841
    %v843 = vpop.f32.mrb[0].mxu0
    %v844 = vpop.f32.mrb[0].mxu0
    %v845 = vpop.f32.mrb[0].mxu0
    %846 = vdwg.mxu0
    %v848 = vsel %vm655, %v703, 0
    %v851 = vsel %vm711, %v707, 0
    %853 = vmatprep.subr.bf16.mxu0 0
    %854 = vmatpush1.bf16.msra.mxu0 %v851
    %855 = vmatprep.subr.bf16.mxu0 0
    %856 = vmatpush1.bf16.msra.mxu0 0
    %857 = vmatprep.subr.bf16.mxu0 0
    %858 = vmatpush1.bf16.msra.mxu0 0
    %859 = vmatprep.subr.bf16.mxu0 0
    %860 = vmatpush1.bf16.msra.mxu0 0
    %861 = vmatprep.subr.bf16.mxu0 0
    %862 = vmatpush1.bf16.msra.mxu0 0
    %863 = vmatprep.subr.bf16.mxu0 0
    %864 = vmatpush1.bf16.msra.mxu0 0
    %865 = vmatprep.subr.bf16.mxu0 0
    %866 = vmatpush1.bf16.msra.mxu0 0
    %867 = vmatprep.subr.bf16.mxu0 0
    %868 = vmatpush1.bf16.msra.mxu0 0
    %869 = vmatprep.subr.bf16.mxu0 0
    %870 = vmatpush1.bf16.msra.mxu0 0
    %871 = vmatprep.subr.bf16.mxu0 0
    %872 = vmatpush1.bf16.msra.mxu0 0
    %873 = vmatprep.subr.bf16.mxu0 0
    %874 = vmatpush1.bf16.msra.mxu0 0
    %875 = vmatprep.subr.bf16.mxu0 0
    %876 = vmatpush1.bf16.msra.mxu0 0
    %877 = vmatprep.subr.bf16.mxu0 0
    %878 = vmatpush1.bf16.msra.mxu0 0
    %879 = vmatprep.subr.bf16.mxu0 0
    %880 = vmatpush1.bf16.msra.mxu0 0
    %881 = vmatprep.subr.bf16.mxu0 0
    %882 = vmatpush1.bf16.msra.mxu0 0
    %883 = vmatprep.subr.bf16.mxu0 0
    %884 = vmatpush1.bf16.msra.mxu0 0
    %885 = vmatprep.mubr.bf16.mxu0 0
    %886 = vmatmul.mubr.bf16.gmra.mrb[0].mxu0 %v848
    %v887 = vpop.f32.mrb[0].mxu0
    %v888 = vadd.f32 0.0, %v887
    %v889 = vpop.f32.mrb[0].mxu0
    %v890 = vpop.f32.mrb[0].mxu0
    %v891 = vpop.f32.mrb[0].mxu0
    %892 = vdwg.mxu0
    %v893 = vpack.c.bf16 %v750, %v750
    %v894 = vpack.c.bf16 %v796, %v796
    %v895 = vpack.c.bf16 %v842, %v842
    %v896 = vpack.c.bf16 %v888, %v888
    %v897 = vpack.c.bf16 %v417, %v416
    %v898 = vpack.c.bf16 %v419, %v418
    %v899 = vpack.c.bf16 %v421, %v420
    %v900 = vpack.c.bf16 %v423, %v422
    %v901 = vpack.c.bf16 %v425, %v424
    %v902 = vpack.c.bf16 %v427, %v426
    %v903 = vpack.c.bf16 %v429, %v428
    %v904 = vpack.c.bf16 %v431, %v430
    %v906 = vsel %vm470, %v893, 0
    %908 = vmatprep.subr.bf16.mxu0 0
    %909 = vmatpush1.bf16.msra.mxu0 %v897
    %910 = vmatprep.subr.bf16.mxu0 0
    %911 = vmatpush1.bf16.msra.mxu0 %v898
    %912 = vmatprep.subr.bf16.mxu0 0
    %913 = vmatpush1.bf16.msra.mxu0 0
    %914 = vmatprep.subr.bf16.mxu0 0
    %915 = vmatpush1.bf16.msra.mxu0 0
    %916 = vmatprep.subr.bf16.mxu0 0
    %917 = vmatpush1.bf16.msra.mxu0 0
    %918 = vmatprep.subr.bf16.mxu0 0
    %919 = vmatpush1.bf16.msra.mxu0 0
    %920 = vmatprep.subr.bf16.mxu0 0
    %921 = vmatpush1.bf16.msra.mxu0 0
    %922 = vmatprep.subr.bf16.mxu0 0
    %923 = vmatpush1.bf16.msra.mxu0 0
    %924 = vmatprep.subr.bf16.mxu0 0
    %925 = vmatpush1.bf16.msra.mxu0 0
    %926 = vmatprep.subr.bf16.mxu0 0
    %927 = vmatpush1.bf16.msra.mxu0 0
    %928 = vmatprep.subr.bf16.mxu0 0
    %929 = vmatpush1.bf16.msra.mxu0 0
    %930 = vmatprep.subr.bf16.mxu0 0
    %931 = vmatpush1.bf16.msra.mxu0 0
    %932 = vmatprep.subr.bf16.mxu0 0
    %933 = vmatpush1.bf16.msra.mxu0 0
    %934 = vmatprep.subr.bf16.mxu0 0
    %935 = vmatpush1.bf16.msra.mxu0 0
    %936 = vmatprep.subr.bf16.mxu0 0
    %937 = vmatpush1.bf16.msra.mxu0 0
    %938 = vmatprep.subr.bf16.mxu0 0
    %939 = vmatpush1.bf16.msra.mxu0 0
    %940 = vmatprep.mubr.bf16.mxu0 0
    %941 = vmatmul.mubr.bf16.gmra.mrb[0].mxu0 %v906
    %v942 = vpop.f32.mrb[0].mxu0
    %v943 = vadd.f32 0.0, %v942
    %v944 = vpop.f32.mrb[0].mxu0
    %v945 = vpop.f32.mrb[0].mxu0
    %v946 = vpop.f32.mrb[0].mxu0
    %947 = vdwg.mxu0
    %v949 = vsel %vm470, %v894, 0
    %951 = vmatprep.subr.bf16.mxu0 0
    %952 = vmatpush1.bf16.msra.mxu0 %v899
    %953 = vmatprep.subr.bf16.mxu0 0
    %954 = vmatpush1.bf16.msra.mxu0 %v900
    %955 = vmatprep.subr.bf16.mxu0 0
    %956 = vmatpush1.bf16.msra.mxu0 0
    %957 = vmatprep.subr.bf16.mxu0 0
    %958 = vmatpush1.bf16.msra.mxu0 0
    %959 = vmatprep.subr.bf16.mxu0 0
    %960 = vmatpush1.bf16.msra.mxu0 0
    %961 = vmatprep.subr.bf16.mxu0 0
    %962 = vmatpush1.bf16.msra.mxu0 0
    %963 = vmatprep.subr.bf16.mxu0 0
    %964 = vmatpush1.bf16.msra.mxu0 0
    %965 = vmatprep.subr.bf16.mxu0 0
    %966 = vmatpush1.bf16.msra.mxu0 0
    %967 = vmatprep.subr.bf16.mxu0 0
    %968 = vmatpush1.bf16.msra.mxu0 0
    %969 = vmatprep.subr.bf16.mxu0 0
    %970 = vmatpush1.bf16.msra.mxu0 0
    %971 = vmatprep.subr.bf16.mxu0 0
    %972 = vmatpush1.bf16.msra.mxu0 0
    %973 = vmatprep.subr.bf16.mxu0 0
    %974 = vmatpush1.bf16.msra.mxu0 0
    %975 = vmatprep.subr.bf16.mxu0 0
    %976 = vmatpush1.bf16.msra.mxu0 0
    %977 = vmatprep.subr.bf16.mxu0 0
    %978 = vmatpush1.bf16.msra.mxu0 0
    %979 = vmatprep.subr.bf16.mxu0 0
    %980 = vmatpush1.bf16.msra.mxu0 0
    %981 = vmatprep.subr.bf16.mxu0 0
    %982 = vmatpush1.bf16.msra.mxu0 0
    %983 = vmatprep.mubr.bf16.mxu0 0
    %984 = vmatmul.mubr.bf16.gmra.mrb[0].mxu0 %v949
    %v985 = vpop.f32.mrb[0].mxu0
    %v986 = vadd.f32 0.0, %v985
    %v987 = vpop.f32.mrb[0].mxu0
    %v988 = vpop.f32.mrb[0].mxu0
    %v989 = vpop.f32.mrb[0].mxu0
    %990 = vdwg.mxu0
    %v992 = vsel %vm470, %v895, 0
    %994 = vmatprep.subr.bf16.mxu0 0
    %995 = vmatpush1.bf16.msra.mxu0 %v901
    %996 = vmatprep.subr.bf16.mxu0 0
    %997 = vmatpush1.bf16.msra.mxu0 %v902
    %998 = vmatprep.subr.bf16.mxu0 0
    %999 = vmatpush1.bf16.msra.mxu0 0
    %1000 = vmatprep.subr.bf16.mxu0 0
    %1001 = vmatpush1.bf16.msra.mxu0 0
    %1002 = vmatprep.subr.bf16.mxu0 0
    %1003 = vmatpush1.bf16.msra.mxu0 0
    %1004 = vmatprep.subr.bf16.mxu0 0
    %1005 = vmatpush1.bf16.msra.mxu0 0
    %1006 = vmatprep.subr.bf16.mxu0 0
    %1007 = vmatpush1.bf16.msra.mxu0 0
    %1008 = vmatprep.subr.bf16.mxu0 0
    %1009 = vmatpush1.bf16.msra.mxu0 0
    %1010 = vmatprep.subr.bf16.mxu0 0
    %1011 = vmatpush1.bf16.msra.mxu0 0
    %1012 = vmatprep.subr.bf16.mxu0 0
    %1013 = vmatpush1.bf16.msra.mxu0 0
    %1014 = vmatprep.subr.bf16.mxu0 0
    %1015 = vmatpush1.bf16.msra.mxu0 0
    %1016 = vmatprep.subr.bf16.mxu0 0
    %1017 = vmatpush1.bf16.msra.mxu0 0
    %1018 = vmatprep.subr.bf16.mxu0 0
    %1019 = vmatpush1.bf16.msra.mxu0 0
    %1020 = vmatprep.subr.bf16.mxu0 0
    %1021 = vmatpush1.bf16.msra.mxu0 0
    %1022 = vmatprep.subr.bf16.mxu0 0
    %1023 = vmatpush1.bf16.msra.mxu0 0
    %1024 = vmatprep.subr.bf16.mxu0 0
    %1025 = vmatpush1.bf16.msra.mxu0 0
    %1026 = vmatprep.mubr.bf16.mxu0 0
    %1027 = vmatmul.mubr.bf16.gmra.mrb[0].mxu0 %v992
    %v1028 = vpop.f32.mrb[0].mxu0
    %v1029 = vadd.f32 0.0, %v1028
    %v1030 = vpop.f32.mrb[0].mxu0
    %v1031 = vpop.f32.mrb[0].mxu0
    %v1032 = vpop.f32.mrb[0].mxu0
    %1033 = vdwg.mxu0
    %v1035 = vsel %vm470, %v896, 0
    %1037 = vmatprep.subr.bf16.mxu0 0
    %1038 = vmatpush1.bf16.msra.mxu0 %v903
    %1039 = vmatprep.subr.bf16.mxu0 0
    %1040 = vmatpush1.bf16.msra.mxu0 %v904
    %1041 = vmatprep.subr.bf16.mxu0 0
    %1042 = vmatpush1.bf16.msra.mxu0 0
    %1043 = vmatprep.subr.bf16.mxu0 0
    %1044 = vmatpush1.bf16.msra.mxu0 0
    %1045 = vmatprep.subr.bf16.mxu0 0
    %1046 = vmatpush1.bf16.msra.mxu0 0
    %1047 = vmatprep.subr.bf16.mxu0 0
    %1048 = vmatpush1.bf16.msra.mxu0 0
    %1049 = vmatprep.subr.bf16.mxu0 0
    %1050 = vmatpush1.bf16.msra.mxu0 0
    %1051 = vmatprep.subr.bf16.mxu0 0
    %1052 = vmatpush1.bf16.msra.mxu0 0
    %1053 = vmatprep.subr.bf16.mxu0 0
    %1054 = vmatpush1.bf16.msra.mxu0 0
    %1055 = vmatprep.subr.bf16.mxu0 0
    %1056 = vmatpush1.bf16.msra.mxu0 0
    %1057 = vmatprep.subr.bf16.mxu0 0
    %1058 = vmatpush1.bf16.msra.mxu0 0
    %1059 = vmatprep.subr.bf16.mxu0 0
    %1060 = vmatpush1.bf16.msra.mxu0 0
    %1061 = vmatprep.subr.bf16.mxu0 0
    %1062 = vmatpush1.bf16.msra.mxu0 0
    %1063 = vmatprep.subr.bf16.mxu0 0
    %1064 = vmatpush1.bf16.msra.mxu0 0
    %1065 = vmatprep.subr.bf16.mxu0 0
    %1066 = vmatpush1.bf16.msra.mxu0 0
    %1067 = vmatprep.subr.bf16.mxu0 0
    %1068 = vmatpush1.bf16.msra.mxu0 0
    %1069 = vmatprep.mubr.bf16.mxu0 0
    %1070 = vmatmul.mubr.bf16.gmra.mrb[0].mxu0 %v1035
    %v1071 = vpop.f32.mrb[0].mxu0
    %v1072 = vadd.f32 0.0, %v1071
    %v1073 = vpop.f32.mrb[0].mxu0
    %v1074 = vpop.f32.mrb[0].mxu0
    %v1075 = vpop.f32.mrb[0].mxu0
    %1076 = vdwg.mxu0
    %v1077 = vadd.f32 %v943, %v986
    %v1078 = vadd.f32 %v1077, %v1029
    %v1079 = vadd.f32 %v1078, %v1072
    %1081 = vrot.lane.b32.xlu0 %v371, 96
    %v1082 = vpop.permute.xlu0 %1081
    %1084 = vrot.lane.b32.xlu0 %v371, 64
    %v1085 = vpop.permute.xlu0 %1084
    %1087 = vrot.lane.b32.xlu0 %v371, 32
    %v1088 = vpop.permute.xlu0 %1087
    %1091 = vrot.lane.b32.xlu0 %v373, 96
    %v1092 = vpop.permute.xlu0 %1091
    %1094 = vrot.lane.b32.xlu0 %v373, 64
    %v1095 = vpop.permute.xlu0 %1094
    %1097 = vrot.lane.b32.xlu0 %v373, 32
    %v1098 = vpop.permute.xlu0 %1097
    %1101 = vrot.lane.b32.xlu0 %v413, 96
    %v1102 = vpop.permute.xlu0 %1101
    %1104 = vrot.lane.b32.xlu0 %v413, 64
    %v1105 = vpop.permute.xlu0 %1104
    %1107 = vrot.lane.b32.xlu0 %v413, 32
    %v1108 = vpop.permute.xlu0 %1107
    %v1110 = vpack.c.bf16 %v371, %v371
    %v1111 = vpack.c.bf16 %v1082, %v1082
    %v1112 = vpack.c.bf16 %v1085, %v1085
    %v1113 = vpack.c.bf16 %v1088, %v1088
    %v1114 = vpack.c.bf16 %v373, %v373
    %v1115 = vpack.c.bf16 %v1092, %v1092
    %v1116 = vpack.c.bf16 %v1095, %v1095
    %v1117 = vpack.c.bf16 %v1098, %v1098
    %v1119 = vsel %vm470, %v1110, 0
    %v1122 = vsel %vm470, %v1114, 0
    %1124 = vmatprep.subr.bf16.mxu0 0
    %1125 = vmatpush1.bf16.xpose.msra.mxu0 %v1122
    %1126 = vmatprep.subr.bf16.mxu0 0
    %1127 = vmatpush1.bf16.xpose.msra.mxu0 0
    %1128 = vmatprep.subr.bf16.mxu0 0
    %1129 = vmatpush1.bf16.xpose.msra.mxu0 0
    %1130 = vmatprep.subr.bf16.mxu0 0
    %1131 = vmatpush1.bf16.xpose.msra.mxu0 0
    %1132 = vmatprep.subr.bf16.mxu0 0
    %1133 = vmatpush1.bf16.xpose.msra.mxu0 0
    %1134 = vmatprep.subr.bf16.mxu0 0
    %1135 = vmatpush1.bf16.xpose.msra.mxu0 0
    %1136 = vmatprep.subr.bf16.mxu0 0
    %1137 = vmatpush1.bf16.xpose.msra.mxu0 0
    %1138 = vmatprep.subr.bf16.mxu0 0
    %1139 = vmatpush1.bf16.xpose.msra.mxu0 0
    %1140 = vmatprep.subr.bf16.mxu0 0
    %1141 = vmatpush1.bf16.xpose.msra.mxu0 0
    %1142 = vmatprep.subr.bf16.mxu0 0
    %1143 = vmatpush1.bf16.xpose.msra.mxu0 0
    %1144 = vmatprep.subr.bf16.mxu0 0
    %1145 = vmatpush1.bf16.xpose.msra.mxu0 0
    %1146 = vmatprep.subr.bf16.mxu0 0
    %1147 = vmatpush1.bf16.xpose.msra.mxu0 0
    %1148 = vmatprep.subr.bf16.mxu0 0
    %1149 = vmatpush1.bf16.xpose.msra.mxu0 0
    %1150 = vmatprep.subr.bf16.mxu0 0
    %1151 = vmatpush1.bf16.xpose.msra.mxu0 0
    %1152 = vmatprep.subr.bf16.mxu0 0
    %1153 = vmatpush1.bf16.xpose.msra.mxu0 0
    %1154 = vmatprep.subr.bf16.mxu0 0
    %1155 = vmatpush1.bf16.xpose.msra.mxu0 0
    %1156 = vmatprep.mubr.bf16.mxu0 0
    %1157 = vmatmul.mubr.bf16.gmra.mrb[0].mxu0 %v1119
    %v1158 = vpop.f32.mrb[0].mxu0
    %v1159 = vadd.f32 %v237, %v1158
    %v1160 = vpop.f32.mrb[0].mxu0
    %v1161 = vpop.f32.mrb[0].mxu0
    %v1162 = vpop.f32.mrb[0].mxu0
    %1163 = vdwg.mxu0
    %v1165 = vsel %vm470, %v1111, 0
    %v1168 = vsel %vm470, %v1115, 0
    %1170 = vmatprep.subr.bf16.mxu0 0
    %1171 = vmatpush1.bf16.xpose.msra.mxu0 %v1168
    %1172 = vmatprep.subr.bf16.mxu0 0
    %1173 = vmatpush1.bf16.xpose.msra.mxu0 0
    %1174 = vmatprep.subr.bf16.mxu0 0
    %1175 = vmatpush1.bf16.xpose.msra.mxu0 0
    %1176 = vmatprep.subr.bf16.mxu0 0
    %1177 = vmatpush1.bf16.xpose.msra.mxu0 0
    %1178 = vmatprep.subr.bf16.mxu0 0
    %1179 = vmatpush1.bf16.xpose.msra.mxu0 0
    %1180 = vmatprep.subr.bf16.mxu0 0
    %1181 = vmatpush1.bf16.xpose.msra.mxu0 0
    %1182 = vmatprep.subr.bf16.mxu0 0
    %1183 = vmatpush1.bf16.xpose.msra.mxu0 0
    %1184 = vmatprep.subr.bf16.mxu0 0
    %1185 = vmatpush1.bf16.xpose.msra.mxu0 0
    %1186 = vmatprep.subr.bf16.mxu0 0
    %1187 = vmatpush1.bf16.xpose.msra.mxu0 0
    %1188 = vmatprep.subr.bf16.mxu0 0
    %1189 = vmatpush1.bf16.xpose.msra.mxu0 0
    %1190 = vmatprep.subr.bf16.mxu0 0
    %1191 = vmatpush1.bf16.xpose.msra.mxu0 0
    %1192 = vmatprep.subr.bf16.mxu0 0
    %1193 = vmatpush1.bf16.xpose.msra.mxu0 0
    %1194 = vmatprep.subr.bf16.mxu0 0
    %1195 = vmatpush1.bf16.xpose.msra.mxu0 0
    %1196 = vmatprep.subr.bf16.mxu0 0
    %1197 = vmatpush1.bf16.xpose.msra.mxu0 0
    %1198 = vmatprep.subr.bf16.mxu0 0
    %1199 = vmatpush1.bf16.xpose.msra.mxu0 0
    %1200 = vmatprep.subr.bf16.mxu0 0
    %1201 = vmatpush1.bf16.xpose.msra.mxu0 0
    %1202 = vmatprep.mubr.bf16.mxu0 0
    %1203 = vmatmul.mubr.bf16.gmra.mrb[0].mxu0 %v1165
    %v1204 = vpop.f32.mrb[0].mxu0
    %v1205 = vadd.f32 %v237, %v1204
    %v1206 = vpop.f32.mrb[0].mxu0
    %v1207 = vpop.f32.mrb[0].mxu0
    %v1208 = vpop.f32.mrb[0].mxu0
    %1209 = vdwg.mxu0
    %v1211 = vsel %vm470, %v1112, 0
    %v1214 = vsel %vm470, %v1116, 0
    %1216 = vmatprep.subr.bf16.mxu0 0
    %1217 = vmatpush1.bf16.xpose.msra.mxu0 %v1214
    %1218 = vmatprep.subr.bf16.mxu0 0
    %1219 = vmatpush1.bf16.xpose.msra.mxu0 0
    %1220 = vmatprep.subr.bf16.mxu0 0
    %1221 = vmatpush1.bf16.xpose.msra.mxu0 0
    %1222 = vmatprep.subr.bf16.mxu0 0
    %1223 = vmatpush1.bf16.xpose.msra.mxu0 0
    %1224 = vmatprep.subr.bf16.mxu0 0
    %1225 = vmatpush1.bf16.xpose.msra.mxu0 0
    %1226 = vmatprep.subr.bf16.mxu0 0
    %1227 = vmatpush1.bf16.xpose.msra.mxu0 0
    %1228 = vmatprep.subr.bf16.mxu0 0
    %1229 = vmatpush1.bf16.xpose.msra.mxu0 0
    %1230 = vmatprep.subr.bf16.mxu0 0
    %1231 = vmatpush1.bf16.xpose.msra.mxu0 0
    %1232 = vmatprep.subr.bf16.mxu0 0
    %1233 = vmatpush1.bf16.xpose.msra.mxu0 0
    %1234 = vmatprep.subr.bf16.mxu0 0
    %1235 = vmatpush1.bf16.xpose.msra.mxu0 0
    %1236 = vmatprep.subr.bf16.mxu0 0
    %1237 = vmatpush1.bf16.xpose.msra.mxu0 0
    %1238 = vmatprep.subr.bf16.mxu0 0
    %1239 = vmatpush1.bf16.xpose.msra.mxu0 0
    %1240 = vmatprep.subr.bf16.mxu0 0
    %1241 = vmatpush1.bf16.xpose.msra.mxu0 0
    %1242 = vmatprep.subr.bf16.mxu0 0
    %1243 = vmatpush1.bf16.xpose.msra.mxu0 0
    %1244 = vmatprep.subr.bf16.mxu0 0
    %1245 = vmatpush1.bf16.xpose.msra.mxu0 0
    %1246 = vmatprep.subr.bf16.mxu0 0
    %1247 = vmatpush1.bf16.xpose.msra.mxu0 0
    %1248 = vmatprep.mubr.bf16.mxu0 0
    %1249 = vmatmul.mubr.bf16.gmra.mrb[0].mxu0 %v1211
    %v1250 = vpop.f32.mrb[0].mxu0
    %v1251 = vadd.f32 %v237, %v1250
    %v1252 = vpop.f32.mrb[0].mxu0
    %v1253 = vpop.f32.mrb[0].mxu0
    %v1254 = vpop.f32.mrb[0].mxu0
    %1255 = vdwg.mxu0
    %v1257 = vsel %vm470, %v1113, 0
    %v1260 = vsel %vm470, %v1117, 0
    %1262 = vmatprep.subr.bf16.mxu0 0
    %1263 = vmatpush1.bf16.xpose.msra.mxu0 %v1260
    %1264 = vmatprep.subr.bf16.mxu0 0
    %1265 = vmatpush1.bf16.xpose.msra.mxu0 0
    %1266 = vmatprep.subr.bf16.mxu0 0
    %1267 = vmatpush1.bf16.xpose.msra.mxu0 0
    %1268 = vmatprep.subr.bf16.mxu0 0
    %1269 = vmatpush1.bf16.xpose.msra.mxu0 0
    %1270 = vmatprep.subr.bf16.mxu0 0
    %1271 = vmatpush1.bf16.xpose.msra.mxu0 0
    %1272 = vmatprep.subr.bf16.mxu0 0
    %1273 = vmatpush1.bf16.xpose.msra.mxu0 0
    %1274 = vmatprep.subr.bf16.mxu0 0
    %1275 = vmatpush1.bf16.xpose.msra.mxu0 0
    %1276 = vmatprep.subr.bf16.mxu0 0
    %1277 = vmatpush1.bf16.xpose.msra.mxu0 0
    %1278 = vmatprep.subr.bf16.mxu0 0
    %1279 = vmatpush1.bf16.xpose.msra.mxu0 0
    %1280 = vmatprep.subr.bf16.mxu0 0
    %1281 = vmatpush1.bf16.xpose.msra.mxu0 0
    %1282 = vmatprep.subr.bf16.mxu0 0
    %1283 = vmatpush1.bf16.xpose.msra.mxu0 0
    %1284 = vmatprep.subr.bf16.mxu0 0
    %1285 = vmatpush1.bf16.xpose.msra.mxu0 0
    %1286 = vmatprep.subr.bf16.mxu0 0
    %1287 = vmatpush1.bf16.xpose.msra.mxu0 0
    %1288 = vmatprep.subr.bf16.mxu0 0
    %1289 = vmatpush1.bf16.xpose.msra.mxu0 0
    %1290 = vmatprep.subr.bf16.mxu0 0
    %1291 = vmatpush1.bf16.xpose.msra.mxu0 0
    %1292 = vmatprep.subr.bf16.mxu0 0
    %1293 = vmatpush1.bf16.xpose.msra.mxu0 0
    %1294 = vmatprep.mubr.bf16.mxu0 0
    %1295 = vmatmul.mubr.bf16.gmra.mrb[0].mxu0 %v1257
    %v1296 = vpop.f32.mrb[0].mxu0
    %v1297 = vadd.f32 %v237, %v1296
    %v1298 = vpop.f32.mrb[0].mxu0
    %v1299 = vpop.f32.mrb[0].mxu0
    %v1300 = vpop.f32.mrb[0].mxu0
    %1301 = vdwg.mxu0
    %v1302 = vsel %vm655, %v1159, -inf
    %1303 = vmax.xlane.f32.xlu0 %v1302
    %v1304 = vpop.xlane.xlu0 %1303
    %v1305 = vsel %vm655, %v1205, -inf
    %1306 = vmax.xlane.f32.xlu0 %v1305
    %v1307 = vpop.xlane.xlu0 %1306
    %v1308 = vsel %vm655, %v1251, -inf
    %1309 = vmax.xlane.f32.xlu0 %v1308
    %v1310 = vpop.xlane.xlu0 %1309
    %v1311 = vsel %vm655, %v1297, -inf
    %1312 = vmax.xlane.f32.xlu0 %v1311
    %v1313 = vpop.xlane.xlu0 %1312
    %v1314 = vsub.f32 %v1159, %v1304
    %v1315 = vsub.f32 %v1205, %v1307
    %v1316 = vsub.f32 %v1251, %v1310
    %v1317 = vsub.f32 %v1297, %v1313
    %v1318 = vmul.f32 %v1314, 1.442695
    %v1319 = vpow.pop %v1318
    %v1320 = vmul.f32 %v1315, 1.442695
    %v1321 = vpow.pop %v1320
    %v1322 = vmul.f32 %v1316, 1.442695
    %v1323 = vpow.pop %v1322
    %v1324 = vmul.f32 %v1317, 1.442695
    %v1325 = vpow.pop %v1324
    %v1326 = vsel %vm655, %v1319, 0.0
    %1327 = vadd.xlane.f32.xlu0 %v1326
    %v1328 = vpop.xlane.xlu0 %1327
    %v1329 = vsel %vm655, %v1321, 0.0
    %1330 = vadd.xlane.f32.xlu0 %v1329
    %v1331 = vpop.xlane.xlu0 %1330
    %v1332 = vsel %vm655, %v1323, 0.0
    %1333 = vadd.xlane.f32.xlu0 %v1332
    %v1334 = vpop.xlane.xlu0 %1333
    %v1335 = vsel %vm655, %v1325, 0.0
    %1336 = vadd.xlane.f32.xlu0 %v1335
    %v1337 = vpop.xlane.xlu0 %1336
    %v1338 = vrcp.pop %v1328
    %v1339 = vrcp.pop %v1331
    %v1340 = vrcp.pop %v1334
    %v1341 = vrcp.pop %v1337
    %v1342 = vmul.f32 %v1319, %v1338
    %v1343 = vmul.f32 %v1321, %v1339
    %v1344 = vmul.f32 %v1323, %v1340
    %v1345 = vmul.f32 %v1325, %v1341
    %v1346 = vpack.c.bf16 %v1342, %v1342
    %v1347 = vpack.c.bf16 %v1343, %v1343
    %v1348 = vpack.c.bf16 %v1344, %v1344
    %v1349 = vpack.c.bf16 %v1345, %v1345
    %v1350 = vpack.c.bf16 %v413, %v413
    %v1351 = vpack.c.bf16 %v1102, %v1102
    %v1352 = vpack.c.bf16 %v1105, %v1105
    %v1353 = vpack.c.bf16 %v1108, %v1108
    %v1355 = vsel %vm655, %v1346, 0
    %v1358 = vsel %vm711, %v1350, 0
    %1360 = vmatprep.subr.bf16.mxu0 0
    %1361 = vmatpush1.bf16.msra.mxu0 %v1358
    %1362 = vmatprep.subr.bf16.mxu0 0
    %1363 = vmatpush1.bf16.msra.mxu0 0
    %1364 = vmatprep.subr.bf16.mxu0 0
    %1365 = vmatpush1.bf16.msra.mxu0 0
    %1366 = vmatprep.subr.bf16.mxu0 0
    %1367 = vmatpush1.bf16.msra.mxu0 0
    %1368 = vmatprep.subr.bf16.mxu0 0
    %1369 = vmatpush1.bf16.msra.mxu0 0
    %1370 = vmatprep.subr.bf16.mxu0 0
    %1371 = vmatpush1.bf16.msra.mxu0 0
    %1372 = vmatprep.subr.bf16.mxu0 0
    %1373 = vmatpush1.bf16.msra.mxu0 0
    %1374 = vmatprep.subr.bf16.mxu0 0
    %1375 = vmatpush1.bf16.msra.mxu0 0
    %1376 = vmatprep.subr.bf16.mxu0 0
    %1377 = vmatpush1.bf16.msra.mxu0 0
    %1378 = vmatprep.subr.bf16.mxu0 0
    %1379 = vmatpush1.bf16.msra.mxu0 0
    %1380 = vmatprep.subr.bf16.mxu0 0
    %1381 = vmatpush1.bf16.msra.mxu0 0
    %1382 = vmatprep.subr.bf16.mxu0 0
    %1383 = vmatpush1.bf16.msra.mxu0 0
    %1384 = vmatprep.subr.bf16.mxu0 0
    %1385 = vmatpush1.bf16.msra.mxu0 0
    %1386 = vmatprep.subr.bf16.mxu0 0
    %1387 = vmatpush1.bf16.msra.mxu0 0
    %1388 = vmatprep.subr.bf16.mxu0 0
    %1389 = vmatpush1.bf16.msra.mxu0 0
    %1390 = vmatprep.subr.bf16.mxu0 0
    %1391 = vmatpush1.bf16.msra.mxu0 0
    %1392 = vmatprep.mubr.bf16.mxu0 0
    %1393 = vmatmul.mubr.bf16.gmra.mrb[0].mxu0 %v1355
    %v1394 = vpop.f32.mrb[0].mxu0
    %v1395 = vadd.f32 0.0, %v1394
    %v1396 = vpop.f32.mrb[0].mxu0
    %v1397 = vpop.f32.mrb[0].mxu0
    %v1398 = vpop.f32.mrb[0].mxu0
    %1399 = vdwg.mxu0
    %v1401 = vsel %vm655, %v1347, 0
    %v1404 = vsel %vm711, %v1351, 0
    %1406 = vmatprep.subr.bf16.mxu0 0
    %1407 = vmatpush1.bf16.msra.mxu0 %v1404
    %1408 = vmatprep.subr.bf16.mxu0 0
    %1409 = vmatpush1.bf16.msra.mxu0 0
    %1410 = vmatprep.subr.bf16.mxu0 0
    %1411 = vmatpush1.bf16.msra.mxu0 0
    %1412 = vmatprep.subr.bf16.mxu0 0
    %1413 = vmatpush1.bf16.msra.mxu0 0
    %1414 = vmatprep.subr.bf16.mxu0 0
    %1415 = vmatpush1.bf16.msra.mxu0 0
    %1416 = vmatprep.subr.bf16.mxu0 0
    %1417 = vmatpush1.bf16.msra.mxu0 0
    %1418 = vmatprep.subr.bf16.mxu0 0
    %1419 = vmatpush1.bf16.msra.mxu0 0
    %1420 = vmatprep.subr.bf16.mxu0 0
    %1421 = vmatpush1.bf16.msra.mxu0 0
    %1422 = vmatprep.subr.bf16.mxu0 0
    %1423 = vmatpush1.bf16.msra.mxu0 0
    %1424 = vmatprep.subr.bf16.mxu0 0
    %1425 = vmatpush1.bf16.msra.mxu0 0
    %1426 = vmatprep.subr.bf16.mxu0 0
    %1427 = vmatpush1.bf16.msra.mxu0 0
    %1428 = vmatprep.subr.bf16.mxu0 0
    %1429 = vmatpush1.bf16.msra.mxu0 0
    %1430 = vmatprep.subr.bf16.mxu0 0
    %1431 = vmatpush1.bf16.msra.mxu0 0
    %1432 = vmatprep.subr.bf16.mxu0 0
    %1433 = vmatpush1.bf16.msra.mxu0 0
    %1434 = vmatprep.subr.bf16.mxu0 0
    %1435 = vmatpush1.bf16.msra.mxu0 0
    %1436 = vmatprep.subr.bf16.mxu0 0
    %1437 = vmatpush1.bf16.msra.mxu0 0
    %1438 = vmatprep.mubr.bf16.mxu0 0
    %1439 = vmatmul.mubr.bf16.gmra.mrb[0].mxu0 %v1401
    %v1440 = vpop.f32.mrb[0].mxu0
    %v1441 = vadd.f32 0.0, %v1440
    %v1442 = vpop.f32.mrb[0].mxu0
    %v1443 = vpop.f32.mrb[0].mxu0
    %v1444 = vpop.f32.mrb[0].mxu0
    %1445 = vdwg.mxu0
    %v1447 = vsel %vm655, %v1348, 0
    %v1450 = vsel %vm711, %v1352, 0
    %1452 = vmatprep.subr.bf16.mxu0 0
    %1453 = vmatpush1.bf16.msra.mxu0 %v1450
    %1454 = vmatprep.subr.bf16.mxu0 0
    %1455 = vmatpush1.bf16.msra.mxu0 0
    %1456 = vmatprep.subr.bf16.mxu0 0
    %1457 = vmatpush1.bf16.msra.mxu0 0
    %1458 = vmatprep.subr.bf16.mxu0 0
    %1459 = vmatpush1.bf16.msra.mxu0 0
    %1460 = vmatprep.subr.bf16.mxu0 0
    %1461 = vmatpush1.bf16.msra.mxu0 0
    %1462 = vmatprep.subr.bf16.mxu0 0
    %1463 = vmatpush1.bf16.msra.mxu0 0
    %1464 = vmatprep.subr.bf16.mxu0 0
    %1465 = vmatpush1.bf16.msra.mxu0 0
    %1466 = vmatprep.subr.bf16.mxu0 0
    %1467 = vmatpush1.bf16.msra.mxu0 0
    %1468 = vmatprep.subr.bf16.mxu0 0
    %1469 = vmatpush1.bf16.msra.mxu0 0
    %1470 = vmatprep.subr.bf16.mxu0 0
    %1471 = vmatpush1.bf16.msra.mxu0 0
    %1472 = vmatprep.subr.bf16.mxu0 0
    %1473 = vmatpush1.bf16.msra.mxu0 0
    %1474 = vmatprep.subr.bf16.mxu0 0
    %1475 = vmatpush1.bf16.msra.mxu0 0
    %1476 = vmatprep.subr.bf16.mxu0 0
    %1477 = vmatpush1.bf16.msra.mxu0 0
    %1478 = vmatprep.subr.bf16.mxu0 0
    %1479 = vmatpush1.bf16.msra.mxu0 0
    %1480 = vmatprep.subr.bf16.mxu0 0
    %1481 = vmatpush1.bf16.msra.mxu0 0
    %1482 = vmatprep.subr.bf16.mxu0 0
    %1483 = vmatpush1.bf16.msra.mxu0 0
    %1484 = vmatprep.mubr.bf16.mxu0 0
    %1485 = vmatmul.mubr.bf16.gmra.mrb[0].mxu0 %v1447
    %v1486 = vpop.f32.mrb[0].mxu0
    %v1487 = vadd.f32 0.0, %v1486
    %v1488 = vpop.f32.mrb[0].mxu0
    %v1489 = vpop.f32.mrb[0].mxu0
    %v1490 = vpop.f32.mrb[0].mxu0
    %1491 = vdwg.mxu0
    %v1493 = vsel %vm655, %v1349, 0
    %v1496 = vsel %vm711, %v1353, 0
    %1498 = vmatprep.subr.bf16.mxu0 0
    %1499 = vmatpush1.bf16.msra.mxu0 %v1496
    %1500 = vmatprep.subr.bf16.mxu0 0
    %1501 = vmatpush1.bf16.msra.mxu0 0
    %1502 = vmatprep.subr.bf16.mxu0 0
    %1503 = vmatpush1.bf16.msra.mxu0 0
    %1504 = vmatprep.subr.bf16.mxu0 0
    %1505 = vmatpush1.bf16.msra.mxu0 0
    %1506 = vmatprep.subr.bf16.mxu0 0
    %1507 = vmatpush1.bf16.msra.mxu0 0
    %1508 = vmatprep.subr.bf16.mxu0 0
    %1509 = vmatpush1.bf16.msra.mxu0 0
    %1510 = vmatprep.subr.bf16.mxu0 0
    %1511 = vmatpush1.bf16.msra.mxu0 0
    %1512 = vmatprep.subr.bf16.mxu0 0
    %1513 = vmatpush1.bf16.msra.mxu0 0
    %1514 = vmatprep.subr.bf16.mxu0 0
    %1515 = vmatpush1.bf16.msra.mxu0 0
    %1516 = vmatprep.subr.bf16.mxu0 0
    %1517 = vmatpush1.bf16.msra.mxu0 0
    %1518 = vmatprep.subr.bf16.mxu0 0
    %1519 = vmatpush1.bf16.msra.mxu0 0
    %1520 = vmatprep.subr.bf16.mxu0 0
    %1521 = vmatpush1.bf16.msra.mxu0 0
    %1522 = vmatprep.subr.bf16.mxu0 0
    %1523 = vmatpush1.bf16.msra.mxu0 0
    %1524 = vmatprep.subr.bf16.mxu0 0
    %1525 = vmatpush1.bf16.msra.mxu0 0
    %1526 = vmatprep.subr.bf16.mxu0 0
    %1527 = vmatpush1.bf16.msra.mxu0 0
    %1528 = vmatprep.subr.bf16.mxu0 0
    %1529 = vmatpush1.bf16.msra.mxu0 0
    %1530 = vmatprep.mubr.bf16.mxu0 0
    %1531 = vmatmul.mubr.bf16.gmra.mrb[0].mxu0 %v1493
    %v1532 = vpop.f32.mrb[0].mxu0
    %v1533 = vadd.f32 0.0, %v1532
    %v1534 = vpop.f32.mrb[0].mxu0
    %v1535 = vpop.f32.mrb[0].mxu0
    %v1536 = vpop.f32.mrb[0].mxu0
    %1537 = vdwg.mxu0
    %v1538 = vpack.c.bf16 %v1395, %v1395
    %v1539 = vpack.c.bf16 %v1441, %v1441
    %v1540 = vpack.c.bf16 %v1487, %v1487
    %v1541 = vpack.c.bf16 %v1533, %v1533
    %v1543 = vsel %vm470, %v1538, 0
    %1545 = vmatprep.subr.bf16.mxu0 0
    %1546 = vmatpush1.bf16.msra.mxu0 %v897
    %1547 = vmatprep.subr.bf16.mxu0 0
    %1548 = vmatpush1.bf16.msra.mxu0 %v898
    %1549 = vmatprep.subr.bf16.mxu0 0
    %1550 = vmatpush1.bf16.msra.mxu0 0
    %1551 = vmatprep.subr.bf16.mxu0 0
    %1552 = vmatpush1.bf16.msra.mxu0 0
    %1553 = vmatprep.subr.bf16.mxu0 0
    %1554 = vmatpush1.bf16.msra.mxu0 0
    %1555 = vmatprep.subr.bf16.mxu0 0
    %1556 = vmatpush1.bf16.msra.mxu0 0
    %1557 = vmatprep.subr.bf16.mxu0 0
    %1558 = vmatpush1.bf16.msra.mxu0 0
    %1559 = vmatprep.subr.bf16.mxu0 0
    %1560 = vmatpush1.bf16.msra.mxu0 0
    %1561 = vmatprep.subr.bf16.mxu0 0
    %1562 = vmatpush1.bf16.msra.mxu0 0
    %1563 = vmatprep.subr.bf16.mxu0 0
    %1564 = vmatpush1.bf16.msra.mxu0 0
    %1565 = vmatprep.subr.bf16.mxu0 0
    %1566 = vmatpush1.bf16.msra.mxu0 0
    %1567 = vmatprep.subr.bf16.mxu0 0
    %1568 = vmatpush1.bf16.msra.mxu0 0
    %1569 = vmatprep.subr.bf16.mxu0 0
    %1570 = vmatpush1.bf16.msra.mxu0 0
    %1571 = vmatprep.subr.bf16.mxu0 0
    %1572 = vmatpush1.bf16.msra.mxu0 0
    %1573 = vmatprep.subr.bf16.mxu0 0
    %1574 = vmatpush1.bf16.msra.mxu0 0
    %1575 = vmatprep.subr.bf16.mxu0 0
    %1576 = vmatpush1.bf16.msra.mxu0 0
    %1577 = vmatprep.mubr.bf16.mxu0 0
    %1578 = vmatmul.mubr.bf16.gmra.mrb[0].mxu0 %v1543
    %v1579 = vpop.f32.mrb[0].mxu0
    %v1580 = vadd.f32 0.0, %v1579
    %v1581 = vpop.f32.mrb[0].mxu0
    %v1582 = vpop.f32.mrb[0].mxu0
    %v1583 = vpop.f32.mrb[0].mxu0
    %1584 = vdwg.mxu0
    %v1586 = vsel %vm470, %v1539, 0
    %1588 = vmatprep.subr.bf16.mxu0 0
    %1589 = vmatpush1.bf16.msra.mxu0 %v899
    %1590 = vmatprep.subr.bf16.mxu0 0
    %1591 = vmatpush1.bf16.msra.mxu0 %v900
    %1592 = vmatprep.subr.bf16.mxu0 0
    %1593 = vmatpush1.bf16.msra.mxu0 0
    %1594 = vmatprep.subr.bf16.mxu0 0
    %1595 = vmatpush1.bf16.msra.mxu0 0
    %1596 = vmatprep.subr.bf16.mxu0 0
    %1597 = vmatpush1.bf16.msra.mxu0 0
    %1598 = vmatprep.subr.bf16.mxu0 0
    %1599 = vmatpush1.bf16.msra.mxu0 0
    %1600 = vmatprep.subr.bf16.mxu0 0
    %1601 = vmatpush1.bf16.msra.mxu0 0
    %1602 = vmatprep.subr.bf16.mxu0 0
    %1603 = vmatpush1.bf16.msra.mxu0 0
    %1604 = vmatprep.subr.bf16.mxu0 0
    %1605 = vmatpush1.bf16.msra.mxu0 0
    %1606 = vmatprep.subr.bf16.mxu0 0
    %1607 = vmatpush1.bf16.msra.mxu0 0
    %1608 = vmatprep.subr.bf16.mxu0 0
    %1609 = vmatpush1.bf16.msra.mxu0 0
    %1610 = vmatprep.subr.bf16.mxu0 0
    %1611 = vmatpush1.bf16.msra.mxu0 0
    %1612 = vmatprep.subr.bf16.mxu0 0
    %1613 = vmatpush1.bf16.msra.mxu0 0
    %1614 = vmatprep.subr.bf16.mxu0 0
    %1615 = vmatpush1.bf16.msra.mxu0 0
    %1616 = vmatprep.subr.bf16.mxu0 0
    %1617 = vmatpush1.bf16.msra.mxu0 0
    %1618 = vmatprep.subr.bf16.mxu0 0
    %1619 = vmatpush1.bf16.msra.mxu0 0
    %1620 = vmatprep.mubr.bf16.mxu0 0
    %1621 = vmatmul.mubr.bf16.gmra.mrb[0].mxu0 %v1586
    %v1622 = vpop.f32.mrb[0].mxu0
    %v1623 = vadd.f32 0.0, %v1622
    %v1624 = vpop.f32.mrb[0].mxu0
    %v1625 = vpop.f32.mrb[0].mxu0
    %v1626 = vpop.f32.mrb[0].mxu0
    %1627 = vdwg.mxu0
    %v1629 = vsel %vm470, %v1540, 0
    %1631 = vmatprep.subr.bf16.mxu0 0
    %1632 = vmatpush1.bf16.msra.mxu0 %v901
    %1633 = vmatprep.subr.bf16.mxu0 0
    %1634 = vmatpush1.bf16.msra.mxu0 %v902
    %1635 = vmatprep.subr.bf16.mxu0 0
    %1636 = vmatpush1.bf16.msra.mxu0 0
    %1637 = vmatprep.subr.bf16.mxu0 0
    %1638 = vmatpush1.bf16.msra.mxu0 0
    %1639 = vmatprep.subr.bf16.mxu0 0
    %1640 = vmatpush1.bf16.msra.mxu0 0
    %1641 = vmatprep.subr.bf16.mxu0 0
    %1642 = vmatpush1.bf16.msra.mxu0 0
    %1643 = vmatprep.subr.bf16.mxu0 0
    %1644 = vmatpush1.bf16.msra.mxu0 0
    %1645 = vmatprep.subr.bf16.mxu0 0
    %1646 = vmatpush1.bf16.msra.mxu0 0
    %1647 = vmatprep.subr.bf16.mxu0 0
    %1648 = vmatpush1.bf16.msra.mxu0 0
    %1649 = vmatprep.subr.bf16.mxu0 0
    %1650 = vmatpush1.bf16.msra.mxu0 0
    %1651 = vmatprep.subr.bf16.mxu0 0
    %1652 = vmatpush1.bf16.msra.mxu0 0
    %1653 = vmatprep.subr.bf16.mxu0 0
    %1654 = vmatpush1.bf16.msra.mxu0 0
    %1655 = vmatprep.subr.bf16.mxu0 0
    %1656 = vmatpush1.bf16.msra.mxu0 0
    %1657 = vmatprep.subr.bf16.mxu0 0
    %1658 = vmatpush1.bf16.msra.mxu0 0
    %1659 = vmatprep.subr.bf16.mxu0 0
    %1660 = vmatpush1.bf16.msra.mxu0 0
    %1661 = vmatprep.subr.bf16.mxu0 0
    %1662 = vmatpush1.bf16.msra.mxu0 0
    %1663 = vmatprep.mubr.bf16.mxu0 0
    %1664 = vmatmul.mubr.bf16.gmra.mrb[0].mxu0 %v1629
    %v1665 = vpop.f32.mrb[0].mxu0
    %v1666 = vadd.f32 0.0, %v1665
    %v1667 = vpop.f32.mrb[0].mxu0
    %v1668 = vpop.f32.mrb[0].mxu0
    %v1669 = vpop.f32.mrb[0].mxu0
    %1670 = vdwg.mxu0
    %v1672 = vsel %vm470, %v1541, 0
    %1674 = vmatprep.subr.bf16.mxu0 0
    %1675 = vmatpush1.bf16.msra.mxu0 %v903
    %1676 = vmatprep.subr.bf16.mxu0 0
    %1677 = vmatpush1.bf16.msra.mxu0 %v904
    %1678 = vmatprep.subr.bf16.mxu0 0
    %1679 = vmatpush1.bf16.msra.mxu0 0
    %1680 = vmatprep.subr.bf16.mxu0 0
    %1681 = vmatpush1.bf16.msra.mxu0 0
    %1682 = vmatprep.subr.bf16.mxu0 0
    %1683 = vmatpush1.bf16.msra.mxu0 0
    %1684 = vmatprep.subr.bf16.mxu0 0
    %1685 = vmatpush1.bf16.msra.mxu0 0
    %1686 = vmatprep.subr.bf16.mxu0 0
    %1687 = vmatpush1.bf16.msra.mxu0 0
    %1688 = vmatprep.subr.bf16.mxu0 0
    %1689 = vmatpush1.bf16.msra.mxu0 0
    %1690 = vmatprep.subr.bf16.mxu0 0
    %1691 = vmatpush1.bf16.msra.mxu0 0
    %1692 = vmatprep.subr.bf16.mxu0 0
    %1693 = vmatpush1.bf16.msra.mxu0 0
    %1694 = vmatprep.subr.bf16.mxu0 0
    %1695 = vmatpush1.bf16.msra.mxu0 0
    %1696 = vmatprep.subr.bf16.mxu0 0
    %1697 = vmatpush1.bf16.msra.mxu0 0
    %1698 = vmatprep.subr.bf16.mxu0 0
    %1699 = vmatpush1.bf16.msra.mxu0 0
    %1700 = vmatprep.subr.bf16.mxu0 0
    %1701 = vmatpush1.bf16.msra.mxu0 0
    %1702 = vmatprep.subr.bf16.mxu0 0
    %1703 = vmatpush1.bf16.msra.mxu0 0
    %1704 = vmatprep.subr.bf16.mxu0 0
    %1705 = vmatpush1.bf16.msra.mxu0 0
    %1706 = vmatprep.mubr.bf16.mxu0 0
    %1707 = vmatmul.mubr.bf16.gmra.mrb[0].mxu0 %v1672
    %v1708 = vpop.f32.mrb[0].mxu0
    %v1709 = vadd.f32 0.0, %v1708
    %v1710 = vpop.f32.mrb[0].mxu0
    %v1711 = vpop.f32.mrb[0].mxu0
    %v1712 = vpop.f32.mrb[0].mxu0
    %1713 = vdwg.mxu0
    %v1714 = vadd.f32 %v1580, %v1623
    %v1715 = vadd.f32 %v1714, %v1666
    %v1716 = vadd.f32 %v1715, %v1709
    %v1717 = vld [vmem:[%s7] sm:$0x1]
    %v1719 = vlaneseq
    %v1720 = vshrl.u32 %v1719, 7
    %v1721 = vsub.s32 0, %v1720
    %v1722 = vrot.slane %v1717, %v1721
    %v1724 = vadd.f32 %v1079, %v1722
    %v1725 = vadd.f32 %v1716, %v1722
    %v1726 = vadd.f32 %v228, %v1724
    %v1727 = vadd.f32 %v229, %v1725
    %v1728 = vld [vmem:[%s18] sm:$0x1]
    %v1729 = vld [vmem:[%s19] sm:$0x1]
    %1730 = vadd.xlane.f32.xlu0 %v1726
    %v1731 = vpop.xlane.xlu0 %1730
    %1732 = vadd.xlane.f32.xlu0 %v1727
    %v1733 = vpop.xlane.xlu0 %1732
    %v1734 = vrcp.pop 128.0
    %v1735 = vmul.f32 %v1731, %v1734
    %v1736 = vmul.f32 %v1733, %v1734
    %v1737 = vmul.f32 %v1726, %v1726
    %v1738 = vmul.f32 %v1727, %v1727
    %1739 = vadd.xlane.f32.xlu0 %v1737
    %v1740 = vpop.xlane.xlu0 %1739
    %1741 = vadd.xlane.f32.xlu0 %v1738
    %v1742 = vpop.xlane.xlu0 %1741
    %v1743 = vmul.f32 %v1740, %v1734
    %v1744 = vmul.f32 %v1742, %v1734
    %v1745 = vmul.f32 %v1735, %v1735
    %v1746 = vmul.f32 %v1736, %v1736
    %v1747 = vsub.f32 %v1743, %v1745
    %v1748 = vsub.f32 %v1744, %v1746
    %v1749 = vsub.f32 %v1726, %v1735
    %v1750 = vsub.f32 %v1727, %v1736
    %v1751 = vadd.f32 %v1747, 1e-06
    %v1752 = vadd.f32 %v1748, 1e-06
    %v1753 = vrsqrt.pop %v1751
    %v1754 = vrsqrt.pop %v1752
    %v1755 = vmul.f32 %v1749, %v1753
    %v1756 = vmul.f32 %v1750, %v1754
    %v1758 = vlaneseq
    %v1759 = vshrl.u32 %v1758, 7
    %v1760 = vsub.s32 0, %v1759
    %v1761 = vrot.slane %v1728, %v1760
    %v1763 = vmul.f32 %v1755, %v1761
    %v1764 = vmul.f32 %v1756, %v1761
    %v1766 = vlaneseq
    %v1767 = vshrl.u32 %v1766, 7
    %v1768 = vsub.s32 0, %v1767
    %v1769 = vrot.slane %v1729, %v1768
    %v1771 = vadd.f32 %v1763, %v1769
    %v1772 = vadd.f32 %v1764, %v1769
    %v1773 = vld [vmem:[#allocation13] sm:$0xff]
    %v1774 = vld [vmem:[#allocation13 + $0x8] sm:$0xff]
    %v1775 = vld [vmem:[#allocation13 + $0x10] sm:$0xff]
    %v1776 = vld [vmem:[#allocation13 + $0x18] sm:$0xff]
    %v1777 = vld [vmem:[#allocation13 + $0x20] sm:$0xff]
    %v1778 = vld [vmem:[#allocation13 + $0x28] sm:$0xff]
    %v1779 = vld [vmem:[#allocation13 + $0x30] sm:$0xff]
    %v1780 = vld [vmem:[#allocation13 + $0x38] sm:$0xff]
    %v1781 = vld [vmem:[#allocation13 + $0x40] sm:$0xff]
    %v1782 = vld [vmem:[#allocation13 + $0x48] sm:$0xff]
    %v1783 = vld [vmem:[#allocation13 + $0x50] sm:$0xff]
    %v1784 = vld [vmem:[#allocation13 + $0x58] sm:$0xff]
    %v1785 = vld [vmem:[#allocation13 + $0x60] sm:$0xff]
    %v1786 = vld [vmem:[#allocation13 + $0x68] sm:$0xff]
    %v1787 = vld [vmem:[#allocation13 + $0x70] sm:$0xff]
    %v1788 = vld [vmem:[#allocation13 + $0x78] sm:$0xff]
    %v1789 = vpack.c.bf16 %v1772, %v1771
    %v1790 = vpack.c.bf16 %v1774, %v1773
    %v1791 = vpack.c.bf16 %v1776, %v1775
    %v1792 = vpack.c.bf16 %v1778, %v1777
    %v1793 = vpack.c.bf16 %v1780, %v1779
    %v1794 = vpack.c.bf16 %v1782, %v1781
    %v1795 = vpack.c.bf16 %v1784, %v1783
    %v1796 = vpack.c.bf16 %v1786, %v1785
    %v1797 = vpack.c.bf16 %v1788, %v1787
    %v1798 = vld [vmem:[%s9] sm:$0x1]
    %v1800 = vlaneseq
    %v1801 = vshrl.u32 %v1800, 7
    %v1802 = vsub.s32 0, %v1801
    %v1803 = vrot.slane %v1798, %v1802
    %1805 = vmatprep.subr.bf16.mxu0 0
    %1806 = vmatpush1.bf16.msra.mxu0 %v1790
    %1807 = vmatprep.subr.bf16.mxu0 0
    %1808 = vmatpush1.bf16.msra.mxu0 %v1791
    %1809 = vmatprep.subr.bf16.mxu0 0
    %1810 = vmatpush1.bf16.msra.mxu0 %v1792
    %1811 = vmatprep.subr.bf16.mxu0 0
    %1812 = vmatpush1.bf16.msra.mxu0 %v1793
    %1813 = vmatprep.subr.bf16.mxu0 0
    %1814 = vmatpush1.bf16.msra.mxu0 %v1794
    %1815 = vmatprep.subr.bf16.mxu0 0
    %1816 = vmatpush1.bf16.msra.mxu0 %v1795
    %1817 = vmatprep.subr.bf16.mxu0 0
    %1818 = vmatpush1.bf16.msra.mxu0 %v1796
    %1819 = vmatprep.subr.bf16.mxu0 0
    %1820 = vmatpush1.bf16.msra.mxu0 %v1797
    %1821 = vmatprep.subr.bf16.mxu0 0
    %1822 = vmatpush1.bf16.msra.mxu0 0
    %1823 = vmatprep.subr.bf16.mxu0 0
    %1824 = vmatpush1.bf16.msra.mxu0 0
    %1825 = vmatprep.subr.bf16.mxu0 0
    %1826 = vmatpush1.bf16.msra.mxu0 0
    %1827 = vmatprep.subr.bf16.mxu0 0
    %1828 = vmatpush1.bf16.msra.mxu0 0
    %1829 = vmatprep.subr.bf16.mxu0 0
    %1830 = vmatpush1.bf16.msra.mxu0 0
    %1831 = vmatprep.subr.bf16.mxu0 0
    %1832 = vmatpush1.bf16.msra.mxu0 0
    %1833 = vmatprep.subr.bf16.mxu0 0
    %1834 = vmatpush1.bf16.msra.mxu0 0
    %1835 = vmatprep.subr.bf16.mxu0 0
    %1836 = vmatpush1.bf16.msra.mxu0 0
    %1837 = vmatprep.mubr.bf16.mxu0 0
    %1838 = vmatmul.mubr.bf16.gmra.mrb[0].mxu0 %v1789
    %v1839 = vpop.f32.mrb[0].mxu0
    %v1840 = vadd.f32 %v1803, %v1839
    %v1841 = vpop.f32.mrb[0].mxu0
    %v1842 = vpop.f32.mrb[0].mxu0
    %v1843 = vadd.f32 %v1803, %v1842
    %v1844 = vpop.f32.mrb[0].mxu0
    %1845 = vdwg.mxu0
    %v1846 = vld [vmem:[#allocation14] sm:$0xff]
    %v1847 = vld [vmem:[#allocation14 + $0x8] sm:$0xff]
    %v1848 = vld [vmem:[#allocation14 + $0x10] sm:$0xff]
    %v1849 = vld [vmem:[#allocation14 + $0x18] sm:$0xff]
    %v1850 = vld [vmem:[#allocation14 + $0x20] sm:$0xff]
    %v1851 = vld [vmem:[#allocation14 + $0x28] sm:$0xff]
    %v1852 = vld [vmem:[#allocation14 + $0x30] sm:$0xff]
    %v1853 = vld [vmem:[#allocation14 + $0x38] sm:$0xff]
    %v1854 = vld [vmem:[#allocation14 + $0x40] sm:$0xff]
    %v1855 = vld [vmem:[#allocation14 + $0x48] sm:$0xff]
    %v1856 = vld [vmem:[#allocation14 + $0x50] sm:$0xff]
    %v1857 = vld [vmem:[#allocation14 + $0x58] sm:$0xff]
    %v1858 = vld [vmem:[#allocation14 + $0x60] sm:$0xff]
    %v1859 = vld [vmem:[#allocation14 + $0x68] sm:$0xff]
    %v1860 = vld [vmem:[#allocation14 + $0x70] sm:$0xff]
    %v1861 = vld [vmem:[#allocation14 + $0x78] sm:$0xff]
    %v1862 = vld [vmem:[#allocation14 + $0x80] sm:$0xff]
    %v1863 = vld [vmem:[#allocation14 + $0x88] sm:$0xff]
    %v1864 = vld [vmem:[#allocation14 + $0x90] sm:$0xff]
    %v1865 = vld [vmem:[#allocation14 + $0x98] sm:$0xff]
    %v1866 = vld [vmem:[#allocation14 + $0xa0] sm:$0xff]
    %v1867 = vld [vmem:[#allocation14 + $0xa8] sm:$0xff]
    %v1868 = vld [vmem:[#allocation14 + $0xb0] sm:$0xff]
    %v1869 = vld [vmem:[#allocation14 + $0xb8] sm:$0xff]
    %v1870 = vld [vmem:[#allocation14 + $0xc0] sm:$0xff]
    %v1871 = vld [vmem:[#allocation14 + $0xc8] sm:$0xff]
    %v1872 = vld [vmem:[#allocation14 + $0xd0] sm:$0xff]
    %v1873 = vld [vmem:[#allocation14 + $0xd8] sm:$0xff]
    %v1874 = vld [vmem:[#allocation14 + $0xe0] sm:$0xff]
    %v1875 = vld [vmem:[#allocation14 + $0xe8] sm:$0xff]
    %v1876 = vld [vmem:[#allocation14 + $0xf0] sm:$0xff]
    %v1877 = vld [vmem:[#allocation14 + $0xf8] sm:$0xff]
    %v1878 = vpack.c.bf16 %v231, %v230
    %v1879 = vpack.c.bf16 %v233, %v232
    %v1880 = vpack.c.bf16 %v1848, %v1846
    %v1881 = vpack.c.bf16 %v1849, %v1847
    %v1882 = vpack.c.bf16 %v1852, %v1850
    %v1883 = vpack.c.bf16 %v1853, %v1851
    %v1884 = vpack.c.bf16 %v1856, %v1854
    %v1885 = vpack.c.bf16 %v1857, %v1855
    %v1886 = vpack.c.bf16 %v1860, %v1858
    %v1887 = vpack.c.bf16 %v1861, %v1859
    %v1888 = vpack.c.bf16 %v1864, %v1862
    %v1889 = vpack.c.bf16 %v1865, %v1863
    %v1890 = vpack.c.bf16 %v1868, %v1866
    %v1891 = vpack.c.bf16 %v1869, %v1867
    %v1892 = vpack.c.bf16 %v1872, %v1870
    %v1893 = vpack.c.bf16 %v1873, %v1871
    %v1894 = vpack.c.bf16 %v1876, %v1874
    %v1895 = vpack.c.bf16 %v1877, %v1875
    %v1896 = vld [vmem:[%s11] sm:$0x3]
    %v1898 = vlaneseq
    %v1899 = vshrl.u32 %v1898, 7
    %v1900 = vsub.s32 0, %v1899
    %v1901 = vrot.slane %v1896, %v1900
    %v1902 = vlaneseq
    %v1903 = vshrl.u32 %v1902, 7
    %v1904 = vsub.s32 1, %v1903
    %v1905 = vrot.slane %v1896, %v1904
    %1908 = vmatprep.subr.bf16.mxu0 %v1881
    %1909 = vmatpush1.bf16.msra.mxu0 %v1880
    %1910 = vmatprep.subr.bf16.mxu0 %v1883
    %1911 = vmatpush1.bf16.msra.mxu0 %v1882
    %1912 = vmatprep.subr.bf16.mxu0 %v1885
    %1913 = vmatpush1.bf16.msra.mxu0 %v1884
    %1914 = vmatprep.subr.bf16.mxu0 %v1887
    %1915 = vmatpush1.bf16.msra.mxu0 %v1886
    %1916 = vmatprep.subr.bf16.mxu0 %v1889
    %1917 = vmatpush1.bf16.msra.mxu0 %v1888
    %1918 = vmatprep.subr.bf16.mxu0 %v1891
    %1919 = vmatpush1.bf16.msra.mxu0 %v1890
    %1920 = vmatprep.subr.bf16.mxu0 %v1893
    %1921 = vmatpush1.bf16.msra.mxu0 %v1892
    %1922 = vmatprep.subr.bf16.mxu0 %v1895
    %1923 = vmatpush1.bf16.msra.mxu0 %v1894
    %1924 = vmatprep.subr.bf16.mxu0 0
    %1925 = vmatpush1.bf16.msra.mxu0 0
    %1926 = vmatprep.subr.bf16.mxu0 0
    %1927 = vmatpush1.bf16.msra.mxu0 0
    %1928 = vmatprep.subr.bf16.mxu0 0
    %1929 = vmatpush1.bf16.msra.mxu0 0
    %1930 = vmatprep.subr.bf16.mxu0 0
    %1931 = vmatpush1.bf16.msra.mxu0 0
    %1932 = vmatprep.subr.bf16.mxu0 0
    %1933 = vmatpush1.bf16.msra.mxu0 0
    %1934 = vmatprep.subr.bf16.mxu0 0
    %1935 = vmatpush1.bf16.msra.mxu0 0
    %1936 = vmatprep.subr.bf16.mxu0 0
    %1937 = vmatpush1.bf16.msra.mxu0 0
    %1938 = vmatprep.subr.bf16.mxu0 0
    %1939 = vmatpush1.bf16.msra.mxu0 0
    %1940 = vmatprep.mubr.bf16.mxu0 0
    %1941 = vmatmul.mubr.bf16.gmra.mrb[0].mxu0 %v1878
    %v1942 = vpop.f32.mrb[0].mxu0
    %v1943 = vadd.f32 %v1901, %v1942
    %v1944 = vpop.f32.mrb[0].mxu0
    %v1945 = vadd.f32 %v1905, %v1944
    %v1946 = vpop.f32.mrb[0].mxu0
    %v1947 = vadd.f32 %v1901, %v1946
    %v1948 = vpop.f32.mrb[0].mxu0
    %v1949 = vadd.f32 %v1905, %v1948
    %1950 = vmatprep.mubr.bf16.mxu0 0
    %1951 = vmatmul.mubr.bf16.gmra.mrb[0].mxu0 %v1879
    %v1952 = vpop.f32.mrb[0].mxu0
    %v1953 = vadd.f32 %v1901, %v1952
    %v1954 = vpop.f32.mrb[0].mxu0
    %v1955 = vadd.f32 %v1905, %v1954
    %v1956 = vpop.f32.mrb[0].mxu0
    %v1957 = vadd.f32 %v1901, %v1956
    %v1958 = vpop.f32.mrb[0].mxu0
    %v1959 = vadd.f32 %v1905, %v1958
    %1960 = vdwg.mxu0
    %v1961 = vld [vmem:[#allocation16] sm:$0xff]
    %v1962 = vld [vmem:[#allocation16 + $0x8] sm:$0xff]
    %v1963 = vld [vmem:[#allocation16 + $0x10] sm:$0xff]
    %v1964 = vld [vmem:[#allocation16 + $0x18] sm:$0xff]
    %v1965 = vld [vmem:[#allocation16 + $0x20] sm:$0xff]
    %v1966 = vld [vmem:[#allocation16 + $0x28] sm:$0xff]
    %v1967 = vld [vmem:[#allocation16 + $0x30] sm:$0xff]
    %v1968 = vld [vmem:[#allocation16 + $0x38] sm:$0xff]
    %v1969 = vld [vmem:[#allocation16 + $0x40] sm:$0xff]
    %v1970 = vld [vmem:[#allocation16 + $0x48] sm:$0xff]
    %v1971 = vld [vmem:[#allocation16 + $0x50] sm:$0xff]
    %v1972 = vld [vmem:[#allocation16 + $0x58] sm:$0xff]
    %v1973 = vld [vmem:[#allocation16 + $0x60] sm:$0xff]
    %v1974 = vld [vmem:[#allocation16 + $0x68] sm:$0xff]
    %v1975 = vld [vmem:[#allocation16 + $0x70] sm:$0xff]
    %v1976 = vld [vmem:[#allocation16 + $0x78] sm:$0xff]
    %1978 = vrot.lane.b32.xlu0 %v1840, 96
    %v1979 = vpop.permute.xlu0 %1978
    %1981 = vrot.lane.b32.xlu0 %v1840, 64
    %v1982 = vpop.permute.xlu0 %1981
    %1984 = vrot.lane.b32.xlu0 %v1840, 32
    %v1985 = vpop.permute.xlu0 %1984
    %1989 = vrot.lane.b32.xlu0 %v1943, 96
    %v1990 = vpop.permute.xlu0 %1989
    %1991 = vrot.lane.b32.xlu0 %v1947, 96
    %v1992 = vpop.permute.xlu0 %1991
    %1995 = vrot.lane.b32.xlu0 %v1943, 64
    %v1996 = vpop.permute.xlu0 %1995
    %1997 = vrot.lane.b32.xlu0 %v1947, 64
    %v1998 = vpop.permute.xlu0 %1997
    %2001 = vrot.lane.b32.xlu0 %v1943, 32
    %v2002 = vpop.permute.xlu0 %2001
    %2003 = vrot.lane.b32.xlu0 %v1947, 32
    %v2004 = vpop.permute.xlu0 %2003
    %2009 = vrot.lane.b32.xlu0 %v1945, 96
    %v2010 = vpop.permute.xlu0 %2009
    %2011 = vrot.lane.b32.xlu0 %v1949, 96
    %v2012 = vpop.permute.xlu0 %2011
    %2015 = vrot.lane.b32.xlu0 %v1945, 64
    %v2016 = vpop.permute.xlu0 %2015
    %2017 = vrot.lane.b32.xlu0 %v1949, 64
    %v2018 = vpop.permute.xlu0 %2017
    %2021 = vrot.lane.b32.xlu0 %v1945, 32
    %v2022 = vpop.permute.xlu0 %2021
    %2023 = vrot.lane.b32.xlu0 %v1949, 32
    %v2024 = vpop.permute.xlu0 %2023
    %v2027 = vpack.c.bf16 %v1840, %v1840
    %v2028 = vpack.c.bf16 %v1979, %v1979
    %v2029 = vpack.c.bf16 %v1982, %v1982
    %v2030 = vpack.c.bf16 %v1985, %v1985
    %v2031 = vpack.c.bf16 %v1947, %v1943
    %v2032 = vpack.c.bf16 %v1992, %v1990
    %v2033 = vpack.c.bf16 %v1998, %v1996
    %v2034 = vpack.c.bf16 %v2004, %v2002
    %v2036 = vsel %vm470, %v2027, 0
    %v2039 = vsel %vm470, %v2031, 0
    %2041 = vmatprep.subr.bf16.mxu0 0
    %2042 = vmatpush1.bf16.xpose.msra.mxu0 %v2039
    %2043 = vmatprep.subr.bf16.mxu0 0
    %2044 = vmatpush1.bf16.xpose.msra.mxu0 0
    %2045 = vmatprep.subr.bf16.mxu0 0
    %2046 = vmatpush1.bf16.xpose.msra.mxu0 0
    %2047 = vmatprep.subr.bf16.mxu0 0
    %2048 = vmatpush1.bf16.xpose.msra.mxu0 0
    %2049 = vmatprep.subr.bf16.mxu0 0
    %2050 = vmatpush1.bf16.xpose.msra.mxu0 0
    %2051 = vmatprep.subr.bf16.mxu0 0
    %2052 = vmatpush1.bf16.xpose.msra.mxu0 0
    %2053 = vmatprep.subr.bf16.mxu0 0
    %2054 = vmatpush1.bf16.xpose.msra.mxu0 0
    %2055 = vmatprep.subr.bf16.mxu0 0
    %2056 = vmatpush1.bf16.xpose.msra.mxu0 0
    %2057 = vmatprep.subr.bf16.mxu0 0
    %2058 = vmatpush1.bf16.xpose.msra.mxu0 0
    %2059 = vmatprep.subr.bf16.mxu0 0
    %2060 = vmatpush1.bf16.xpose.msra.mxu0 0
    %2061 = vmatprep.subr.bf16.mxu0 0
    %2062 = vmatpush1.bf16.xpose.msra.mxu0 0
    %2063 = vmatprep.subr.bf16.mxu0 0
    %2064 = vmatpush1.bf16.xpose.msra.mxu0 0
    %2065 = vmatprep.subr.bf16.mxu0 0
    %2066 = vmatpush1.bf16.xpose.msra.mxu0 0
    %2067 = vmatprep.subr.bf16.mxu0 0
    %2068 = vmatpush1.bf16.xpose.msra.mxu0 0
    %2069 = vmatprep.subr.bf16.mxu0 0
    %2070 = vmatpush1.bf16.xpose.msra.mxu0 0
    %2071 = vmatprep.subr.bf16.mxu0 0
    %2072 = vmatpush1.bf16.xpose.msra.mxu0 0
    %2073 = vmatprep.mubr.bf16.mxu0 0
    %2074 = vmatmul.mubr.bf16.gmra.mrb[0].mxu0 %v2036
    %v2075 = vpop.f32.mrb[0].mxu0
    %v2076 = vadd.f32 %v240, %v2075
    %v2077 = vpop.f32.mrb[0].mxu0
    %v2078 = vpop.f32.mrb[0].mxu0
    %v2079 = vpop.f32.mrb[0].mxu0
    %2080 = vdwg.mxu0
    %v2082 = vsel %vm470, %v2028, 0
    %v2085 = vsel %vm470, %v2032, 0
    %2087 = vmatprep.subr.bf16.mxu0 0
    %2088 = vmatpush1.bf16.xpose.msra.mxu0 %v2085
    %2089 = vmatprep.subr.bf16.mxu0 0
    %2090 = vmatpush1.bf16.xpose.msra.mxu0 0
    %2091 = vmatprep.subr.bf16.mxu0 0
    %2092 = vmatpush1.bf16.xpose.msra.mxu0 0
    %2093 = vmatprep.subr.bf16.mxu0 0
    %2094 = vmatpush1.bf16.xpose.msra.mxu0 0
    %2095 = vmatprep.subr.bf16.mxu0 0
    %2096 = vmatpush1.bf16.xpose.msra.mxu0 0
    %2097 = vmatprep.subr.bf16.mxu0 0
    %2098 = vmatpush1.bf16.xpose.msra.mxu0 0
    %2099 = vmatprep.subr.bf16.mxu0 0
    %2100 = vmatpush1.bf16.xpose.msra.mxu0 0
    %2101 = vmatprep.subr.bf16.mxu0 0
    %2102 = vmatpush1.bf16.xpose.msra.mxu0 0
    %2103 = vmatprep.subr.bf16.mxu0 0
    %2104 = vmatpush1.bf16.xpose.msra.mxu0 0
    %2105 = vmatprep.subr.bf16.mxu0 0
    %2106 = vmatpush1.bf16.xpose.msra.mxu0 0
    %2107 = vmatprep.subr.bf16.mxu0 0
    %2108 = vmatpush1.bf16.xpose.msra.mxu0 0
    %2109 = vmatprep.subr.bf16.mxu0 0
    %2110 = vmatpush1.bf16.xpose.msra.mxu0 0
    %2111 = vmatprep.subr.bf16.mxu0 0
    %2112 = vmatpush1.bf16.xpose.msra.mxu0 0
    %2113 = vmatprep.subr.bf16.mxu0 0
    %2114 = vmatpush1.bf16.xpose.msra.mxu0 0
    %2115 = vmatprep.subr.bf16.mxu0 0
    %2116 = vmatpush1.bf16.xpose.msra.mxu0 0
    %2117 = vmatprep.subr.bf16.mxu0 0
    %2118 = vmatpush1.bf16.xpose.msra.mxu0 0
    %2119 = vmatprep.mubr.bf16.mxu0 0
    %2120 = vmatmul.mubr.bf16.gmra.mrb[0].mxu0 %v2082
    %v2121 = vpop.f32.mrb[0].mxu0
    %v2122 = vadd.f32 %v240, %v2121
    %v2123 = vpop.f32.mrb[0].mxu0
    %v2124 = vpop.f32.mrb[0].mxu0
    %v2125 = vpop.f32.mrb[0].mxu0
    %2126 = vdwg.mxu0
    %v2128 = vsel %vm470, %v2029, 0
    %v2131 = vsel %vm470, %v2033, 0
    %2133 = vmatprep.subr.bf16.mxu0 0
    %2134 = vmatpush1.bf16.xpose.msra.mxu0 %v2131
    %2135 = vmatprep.subr.bf16.mxu0 0
    %2136 = vmatpush1.bf16.xpose.msra.mxu0 0
    %2137 = vmatprep.subr.bf16.mxu0 0
    %2138 = vmatpush1.bf16.xpose.msra.mxu0 0
    %2139 = vmatprep.subr.bf16.mxu0 0
    %2140 = vmatpush1.bf16.xpose.msra.mxu0 0
    %2141 = vmatprep.subr.bf16.mxu0 0
    %2142 = vmatpush1.bf16.xpose.msra.mxu0 0
    %2143 = vmatprep.subr.bf16.mxu0 0
    %2144 = vmatpush1.bf16.xpose.msra.mxu0 0
    %2145 = vmatprep.subr.bf16.mxu0 0
    %2146 = vmatpush1.bf16.xpose.msra.mxu0 0
    %2147 = vmatprep.subr.bf16.mxu0 0
    %2148 = vmatpush1.bf16.xpose.msra.mxu0 0
    %2149 = vmatprep.subr.bf16.mxu0 0
    %2150 = vmatpush1.bf16.xpose.msra.mxu0 0
    %2151 = vmatprep.subr.bf16.mxu0 0
    %2152 = vmatpush1.bf16.xpose.msra.mxu0 0
    %2153 = vmatprep.subr.bf16.mxu0 0
    %2154 = vmatpush1.bf16.xpose.msra.mxu0 0
    %2155 = vmatprep.subr.bf16.mxu0 0
    %2156 = vmatpush1.bf16.xpose.msra.mxu0 0
    %2157 = vmatprep.subr.bf16.mxu0 0
    %2158 = vmatpush1.bf16.xpose.msra.mxu0 0
    %2159 = vmatprep.subr.bf16.mxu0 0
    %2160 = vmatpush1.bf16.xpose.msra.mxu0 0
    %2161 = vmatprep.subr.bf16.mxu0 0
    %2162 = vmatpush1.bf16.xpose.msra.mxu0 0
    %2163 = vmatprep.subr.bf16.mxu0 0
    %2164 = vmatpush1.bf16.xpose.msra.mxu0 0
    %2165 = vmatprep.mubr.bf16.mxu0 0
    %2166 = vmatmul.mubr.bf16.gmra.mrb[0].mxu0 %v2128
    %v2167 = vpop.f32.mrb[0].mxu0
    %v2168 = vadd.f32 %v240, %v2167
    %v2169 = vpop.f32.mrb[0].mxu0
    %v2170 = vpop.f32.mrb[0].mxu0
    %v2171 = vpop.f32.mrb[0].mxu0
    %2172 = vdwg.mxu0
    %v2174 = vsel %vm470, %v2030, 0
    %v2177 = vsel %vm470, %v2034, 0
    %2179 = vmatprep.subr.bf16.mxu0 0
    %2180 = vmatpush1.bf16.xpose.msra.mxu0 %v2177
    %2181 = vmatprep.subr.bf16.mxu0 0
    %2182 = vmatpush1.bf16.xpose.msra.mxu0 0
    %2183 = vmatprep.subr.bf16.mxu0 0
    %2184 = vmatpush1.bf16.xpose.msra.mxu0 0
    %2185 = vmatprep.subr.bf16.mxu0 0
    %2186 = vmatpush1.bf16.xpose.msra.mxu0 0
    %2187 = vmatprep.subr.bf16.mxu0 0
    %2188 = vmatpush1.bf16.xpose.msra.mxu0 0
    %2189 = vmatprep.subr.bf16.mxu0 0
    %2190 = vmatpush1.bf16.xpose.msra.mxu0 0
    %2191 = vmatprep.subr.bf16.mxu0 0
    %2192 = vmatpush1.bf16.xpose.msra.mxu0 0
    %2193 = vmatprep.subr.bf16.mxu0 0
    %2194 = vmatpush1.bf16.xpose.msra.mxu0 0
    %2195 = vmatprep.subr.bf16.mxu0 0
    %2196 = vmatpush1.bf16.xpose.msra.mxu0 0
    %2197 = vmatprep.subr.bf16.mxu0 0
    %2198 = vmatpush1.bf16.xpose.msra.mxu0 0
    %2199 = vmatprep.subr.bf16.mxu0 0
    %2200 = vmatpush1.bf16.xpose.msra.mxu0 0
    %2201 = vmatprep.subr.bf16.mxu0 0
    %2202 = vmatpush1.bf16.xpose.msra.mxu0 0
    %2203 = vmatprep.subr.bf16.mxu0 0
    %2204 = vmatpush1.bf16.xpose.msra.mxu0 0
    %2205 = vmatprep.subr.bf16.mxu0 0
    %2206 = vmatpush1.bf16.xpose.msra.mxu0 0
    %2207 = vmatprep.subr.bf16.mxu0 0
    %2208 = vmatpush1.bf16.xpose.msra.mxu0 0
    %2209 = vmatprep.subr.bf16.mxu0 0
    %2210 = vmatpush1.bf16.xpose.msra.mxu0 0
    %2211 = vmatprep.mubr.bf16.mxu0 0
    %2212 = vmatmul.mubr.bf16.gmra.mrb[0].mxu0 %v2174
    %v2213 = vpop.f32.mrb[0].mxu0
    %v2214 = vadd.f32 %v240, %v2213
    %v2215 = vpop.f32.mrb[0].mxu0
    %v2216 = vpop.f32.mrb[0].mxu0
    %v2217 = vpop.f32.mrb[0].mxu0
    %2218 = vdwg.mxu0
    %vm2219 = vcmask 130048
    %v2220 = vsel %vm2219, %v2076, -inf
    %2221 = vmax.xlane.f32.xlu0 %v2220
    %v2222 = vpop.xlane.xlu0 %2221
    %v2223 = vsel %vm2219, %v2122, -inf
    %2224 = vmax.xlane.f32.xlu0 %v2223
    %v2225 = vpop.xlane.xlu0 %2224
    %v2226 = vsel %vm2219, %v2168, -inf
    %2227 = vmax.xlane.f32.xlu0 %v2226
    %v2228 = vpop.xlane.xlu0 %2227
    %v2229 = vsel %vm2219, %v2214, -inf
    %2230 = vmax.xlane.f32.xlu0 %v2229
    %v2231 = vpop.xlane.xlu0 %2230
    %v2232 = vsub.f32 %v2076, %v2222
    %v2233 = vsub.f32 %v2122, %v2225
    %v2234 = vsub.f32 %v2168, %v2228
    %v2235 = vsub.f32 %v2214, %v2231
    %v2236 = vmul.f32 %v2232, 1.442695
    %v2237 = vpow.pop %v2236
    %v2238 = vmul.f32 %v2233, 1.442695
    %v2239 = vpow.pop %v2238
    %v2240 = vmul.f32 %v2234, 1.442695
    %v2241 = vpow.pop %v2240
    %v2242 = vmul.f32 %v2235, 1.442695
    %v2243 = vpow.pop %v2242
    %v2244 = vsel %vm2219, %v2237, 0.0
    %2245 = vadd.xlane.f32.xlu0 %v2244
    %v2246 = vpop.xlane.xlu0 %2245
    %v2247 = vsel %vm2219, %v2239, 0.0
    %2248 = vadd.xlane.f32.xlu0 %v2247
    %v2249 = vpop.xlane.xlu0 %2248
    %v2250 = vsel %vm2219, %v2241, 0.0
    %2251 = vadd.xlane.f32.xlu0 %v2250
    %v2252 = vpop.xlane.xlu0 %2251
    %v2253 = vsel %vm2219, %v2243, 0.0
    %2254 = vadd.xlane.f32.xlu0 %v2253
    %v2255 = vpop.xlane.xlu0 %2254
    %v2256 = vrcp.pop %v2246
    %v2257 = vrcp.pop %v2249
    %v2258 = vrcp.pop %v2252
    %v2259 = vrcp.pop %v2255
    %v2260 = vmul.f32 %v2237, %v2256
    %v2261 = vmul.f32 %v2239, %v2257
    %v2262 = vmul.f32 %v2241, %v2258
    %v2263 = vmul.f32 %v2243, %v2259
    %v2264 = vpack.c.bf16 %v2260, %v2260
    %v2265 = vpack.c.bf16 %v2261, %v2261
    %v2266 = vpack.c.bf16 %v2262, %v2262
    %v2267 = vpack.c.bf16 %v2263, %v2263
    %v2268 = vpack.c.bf16 %v1949, %v1945
    %v2269 = vpack.c.bf16 %v2012, %v2010
    %v2270 = vpack.c.bf16 %v2018, %v2016
    %v2271 = vpack.c.bf16 %v2024, %v2022
    %v2273 = vsel %vm2219, %v2264, 0
    %2275 = vmatprep.subr.bf16.mxu0 0
    %2276 = vmatpush1.bf16.msra.mxu0 %v2268
    %2277 = vmatprep.subr.bf16.mxu0 0
    %2278 = vmatpush1.bf16.msra.mxu0 0
    %2279 = vmatprep.subr.bf16.mxu0 0
    %2280 = vmatpush1.bf16.msra.mxu0 0
    %2281 = vmatprep.subr.bf16.mxu0 0
    %2282 = vmatpush1.bf16.msra.mxu0 0
    %2283 = vmatprep.subr.bf16.mxu0 0
    %2284 = vmatpush1.bf16.msra.mxu0 0
    %2285 = vmatprep.subr.bf16.mxu0 0
    %2286 = vmatpush1.bf16.msra.mxu0 0
    %2287 = vmatprep.subr.bf16.mxu0 0
    %2288 = vmatpush1.bf16.msra.mxu0 0
    %2289 = vmatprep.subr.bf16.mxu0 0
    %2290 = vmatpush1.bf16.msra.mxu0 0
    %2291 = vmatprep.subr.bf16.mxu0 0
    %2292 = vmatpush1.bf16.msra.mxu0 0
    %2293 = vmatprep.subr.bf16.mxu0 0
    %2294 = vmatpush1.bf16.msra.mxu0 0
    %2295 = vmatprep.subr.bf16.mxu0 0
    %2296 = vmatpush1.bf16.msra.mxu0 0
    %2297 = vmatprep.subr.bf16.mxu0 0
    %2298 = vmatpush1.bf16.msra.mxu0 0
    %2299 = vmatprep.subr.bf16.mxu0 0
    %2300 = vmatpush1.bf16.msra.mxu0 0
    %2301 = vmatprep.subr.bf16.mxu0 0
    %2302 = vmatpush1.bf16.msra.mxu0 0
    %2303 = vmatprep.subr.bf16.mxu0 0
    %2304 = vmatpush1.bf16.msra.mxu0 0
    %2305 = vmatprep.subr.bf16.mxu0 0
    %2306 = vmatpush1.bf16.msra.mxu0 0
    %2307 = vmatprep.mubr.bf16.mxu0 0
    %2308 = vmatmul.mubr.bf16.gmra.mrb[0].mxu0 %v2273
    %v2309 = vpop.f32.mrb[0].mxu0
    %v2310 = vadd.f32 0.0, %v2309
    %v2311 = vpop.f32.mrb[0].mxu0
    %v2312 = vpop.f32.mrb[0].mxu0
    %v2313 = vpop.f32.mrb[0].mxu0
    %2314 = vdwg.mxu0
    %v2316 = vsel %vm2219, %v2265, 0
    %2318 = vmatprep.subr.bf16.mxu0 0
    %2319 = vmatpush1.bf16.msra.mxu0 %v2269
    %2320 = vmatprep.subr.bf16.mxu0 0
    %2321 = vmatpush1.bf16.msra.mxu0 0
    %2322 = vmatprep.subr.bf16.mxu0 0
    %2323 = vmatpush1.bf16.msra.mxu0 0
    %2324 = vmatprep.subr.bf16.mxu0 0
    %2325 = vmatpush1.bf16.msra.mxu0 0
    %2326 = vmatprep.subr.bf16.mxu0 0
    %2327 = vmatpush1.bf16.msra.mxu0 0
    %2328 = vmatprep.subr.bf16.mxu0 0
    %2329 = vmatpush1.bf16.msra.mxu0 0
    %2330 = vmatprep.subr.bf16.mxu0 0
    %2331 = vmatpush1.bf16.msra.mxu0 0
    %2332 = vmatprep.subr.bf16.mxu0 0
    %2333 = vmatpush1.bf16.msra.mxu0 0
    %2334 = vmatprep.subr.bf16.mxu0 0
    %2335 = vmatpush1.bf16.msra.mxu0 0
    %2336 = vmatprep.subr.bf16.mxu0 0
    %2337 = vmatpush1.bf16.msra.mxu0 0
    %2338 = vmatprep.subr.bf16.mxu0 0
    %2339 = vmatpush1.bf16.msra.mxu0 0
    %2340 = vmatprep.subr.bf16.mxu0 0
    %2341 = vmatpush1.bf16.msra.mxu0 0
    %2342 = vmatprep.subr.bf16.mxu0 0
    %2343 = vmatpush1.bf16.msra.mxu0 0
    %2344 = vmatprep.subr.bf16.mxu0 0
    %2345 = vmatpush1.bf16.msra.mxu0 0
    %2346 = vmatprep.subr.bf16.mxu0 0
    %2347 = vmatpush1.bf16.msra.mxu0 0
    %2348 = vmatprep.subr.bf16.mxu0 0
    %2349 = vmatpush1.bf16.msra.mxu0 0
    %2350 = vmatprep.mubr.bf16.mxu0 0
    %2351 = vmatmul.mubr.bf16.gmra.mrb[0].mxu0 %v2316
    %v2352 = vpop.f32.mrb[0].mxu0
    %v2353 = vadd.f32 0.0, %v2352
    %v2354 = vpop.f32.mrb[0].mxu0
    %v2355 = vpop.f32.mrb[0].mxu0
    %v2356 = vpop.f32.mrb[0].mxu0
    %2357 = vdwg.mxu0
    %v2359 = vsel %vm2219, %v2266, 0
    %2361 = vmatprep.subr.bf16.mxu0 0
    %2362 = vmatpush1.bf16.msra.mxu0 %v2270
    %2363 = vmatprep.subr.bf16.mxu0 0
    %2364 = vmatpush1.bf16.msra.mxu0 0
    %2365 = vmatprep.subr.bf16.mxu0 0
    %2366 = vmatpush1.bf16.msra.mxu0 0
    %2367 = vmatprep.subr.bf16.mxu0 0
    %2368 = vmatpush1.bf16.msra.mxu0 0
    %2369 = vmatprep.subr.bf16.mxu0 0
    %2370 = vmatpush1.bf16.msra.mxu0 0
    %2371 = vmatprep.subr.bf16.mxu0 0
    %2372 = vmatpush1.bf16.msra.mxu0 0
    %2373 = vmatprep.subr.bf16.mxu0 0
    %2374 = vmatpush1.bf16.msra.mxu0 0
    %2375 = vmatprep.subr.bf16.mxu0 0
    %2376 = vmatpush1.bf16.msra.mxu0 0
    %2377 = vmatprep.subr.bf16.mxu0 0
    %2378 = vmatpush1.bf16.msra.mxu0 0
    %2379 = vmatprep.subr.bf16.mxu0 0
    %2380 = vmatpush1.bf16.msra.mxu0 0
    %2381 = vmatprep.subr.bf16.mxu0 0
    %2382 = vmatpush1.bf16.msra.mxu0 0
    %2383 = vmatprep.subr.bf16.mxu0 0
    %2384 = vmatpush1.bf16.msra.mxu0 0
    %2385 = vmatprep.subr.bf16.mxu0 0
    %2386 = vmatpush1.bf16.msra.mxu0 0
    %2387 = vmatprep.subr.bf16.mxu0 0
    %2388 = vmatpush1.bf16.msra.mxu0 0
    %2389 = vmatprep.subr.bf16.mxu0 0
    %2390 = vmatpush1.bf16.msra.mxu0 0
    %2391 = vmatprep.subr.bf16.mxu0 0
    %2392 = vmatpush1.bf16.msra.mxu0 0
    %2393 = vmatprep.mubr.bf16.mxu0 0
    %2394 = vmatmul.mubr.bf16.gmra.mrb[0].mxu0 %v2359
    %v2395 = vpop.f32.mrb[0].mxu0
    %v2396 = vadd.f32 0.0, %v2395
    %v2397 = vpop.f32.mrb[0].mxu0
    %v2398 = vpop.f32.mrb[0].mxu0
    %v2399 = vpop.f32.mrb[0].mxu0
    %2400 = vdwg.mxu0
    %v2402 = vsel %vm2219, %v2267, 0
    %2404 = vmatprep.subr.bf16.mxu0 0
    %2405 = vmatpush1.bf16.msra.mxu0 %v2271
    %2406 = vmatprep.subr.bf16.mxu0 0
    %2407 = vmatpush1.bf16.msra.mxu0 0
    %2408 = vmatprep.subr.bf16.mxu0 0
    %2409 = vmatpush1.bf16.msra.mxu0 0
    %2410 = vmatprep.subr.bf16.mxu0 0
    %2411 = vmatpush1.bf16.msra.mxu0 0
    %2412 = vmatprep.subr.bf16.mxu0 0
    %2413 = vmatpush1.bf16.msra.mxu0 0
    %2414 = vmatprep.subr.bf16.mxu0 0
    %2415 = vmatpush1.bf16.msra.mxu0 0
    %2416 = vmatprep.subr.bf16.mxu0 0
    %2417 = vmatpush1.bf16.msra.mxu0 0
    %2418 = vmatprep.subr.bf16.mxu0 0
    %2419 = vmatpush1.bf16.msra.mxu0 0
    %2420 = vmatprep.subr.bf16.mxu0 0
    %2421 = vmatpush1.bf16.msra.mxu0 0
    %2422 = vmatprep.subr.bf16.mxu0 0
    %2423 = vmatpush1.bf16.msra.mxu0 0
    %2424 = vmatprep.subr.bf16.mxu0 0
    %2425 = vmatpush1.bf16.msra.mxu0 0
    %2426 = vmatprep.subr.bf16.mxu0 0
    %2427 = vmatpush1.bf16.msra.mxu0 0
    %2428 = vmatprep.subr.bf16.mxu0 0
    %2429 = vmatpush1.bf16.msra.mxu0 0
    %2430 = vmatprep.subr.bf16.mxu0 0
    %2431 = vmatpush1.bf16.msra.mxu0 0
    %2432 = vmatprep.subr.bf16.mxu0 0
    %2433 = vmatpush1.bf16.msra.mxu0 0
    %2434 = vmatprep.subr.bf16.mxu0 0
    %2435 = vmatpush1.bf16.msra.mxu0 0
    %2436 = vmatprep.mubr.bf16.mxu0 0
    %2437 = vmatmul.mubr.bf16.gmra.mrb[0].mxu0 %v2402
    %v2438 = vpop.f32.mrb[0].mxu0
    %v2439 = vadd.f32 0.0, %v2438
    %v2440 = vpop.f32.mrb[0].mxu0
    %v2441 = vpop.f32.mrb[0].mxu0
    %v2442 = vpop.f32.mrb[0].mxu0
    %2443 = vdwg.mxu0
    %v2444 = vpack.c.bf16 %v2310, %v2310
    %v2445 = vpack.c.bf16 %v2353, %v2353
    %v2446 = vpack.c.bf16 %v2396, %v2396
    %v2447 = vpack.c.bf16 %v2439, %v2439
    %v2448 = vpack.c.bf16 %v1962, %v1961
    %v2449 = vpack.c.bf16 %v1964, %v1963
    %v2450 = vpack.c.bf16 %v1966, %v1965
    %v2451 = vpack.c.bf16 %v1968, %v1967
    %v2452 = vpack.c.bf16 %v1970, %v1969
    %v2453 = vpack.c.bf16 %v1972, %v1971
    %v2454 = vpack.c.bf16 %v1974, %v1973
    %v2455 = vpack.c.bf16 %v1976, %v1975
    %v2457 = vsel %vm470, %v2444, 0
    %2459 = vmatprep.subr.bf16.mxu0 0
    %2460 = vmatpush1.bf16.msra.mxu0 %v2448
    %2461 = vmatprep.subr.bf16.mxu0 0
    %2462 = vmatpush1.bf16.msra.mxu0 %v2449
    %2463 = vmatprep.subr.bf16.mxu0 0
    %2464 = vmatpush1.bf16.msra.mxu0 0
    %2465 = vmatprep.subr.bf16.mxu0 0
    %2466 = vmatpush1.bf16.msra.mxu0 0
    %2467 = vmatprep.subr.bf16.mxu0 0
    %2468 = vmatpush1.bf16.msra.mxu0 0
    %2469 = vmatprep.subr.bf16.mxu0 0
    %2470 = vmatpush1.bf16.msra.mxu0 0
    %2471 = vmatprep.subr.bf16.mxu0 0
    %2472 = vmatpush1.bf16.msra.mxu0 0
    %2473 = vmatprep.subr.bf16.mxu0 0
    %2474 = vmatpush1.bf16.msra.mxu0 0
    %2475 = vmatprep.subr.bf16.mxu0 0
    %2476 = vmatpush1.bf16.msra.mxu0 0
    %2477 = vmatprep.subr.bf16.mxu0 0
    %2478 = vmatpush1.bf16.msra.mxu0 0
    %2479 = vmatprep.subr.bf16.mxu0 0
    %2480 = vmatpush1.bf16.msra.mxu0 0
    %2481 = vmatprep.subr.bf16.mxu0 0
    %2482 = vmatpush1.bf16.msra.mxu0 0
    %2483 = vmatprep.subr.bf16.mxu0 0
    %2484 = vmatpush1.bf16.msra.mxu0 0
    %2485 = vmatprep.subr.bf16.mxu0 0
    %2486 = vmatpush1.bf16.msra.mxu0 0
    %2487 = vmatprep.subr.bf16.mxu0 0
    %2488 = vmatpush1.bf16.msra.mxu0 0
    %2489 = vmatprep.subr.bf16.mxu0 0
    %2490 = vmatpush1.bf16.msra.mxu0 0
    %2491 = vmatprep.mubr.bf16.mxu0 0
    %2492 = vmatmul.mubr.bf16.gmra.mrb[0].mxu0 %v2457
    %v2493 = vpop.f32.mrb[0].mxu0
    %v2494 = vadd.f32 0.0, %v2493
    %v2495 = vpop.f32.mrb[0].mxu0
    %v2496 = vpop.f32.mrb[0].mxu0
    %v2497 = vpop.f32.mrb[0].mxu0
    %2498 = vdwg.mxu0
    %v2500 = vsel %vm470, %v2445, 0
    %2502 = vmatprep.subr.bf16.mxu0 0
    %2503 = vmatpush1.bf16.msra.mxu0 %v2450
    %2504 = vmatprep.subr.bf16.mxu0 0
    %2505 = vmatpush1.bf16.msra.mxu0 %v2451
    %2506 = vmatprep.subr.bf16.mxu0 0
    %2507 = vmatpush1.bf16.msra.mxu0 0
    %2508 = vmatprep.subr.bf16.mxu0 0
    %2509 = vmatpush1.bf16.msra.mxu0 0
    %2510 = vmatprep.subr.bf16.mxu0 0
    %2511 = vmatpush1.bf16.msra.mxu0 0
    %2512 = vmatprep.subr.bf16.mxu0 0
    %2513 = vmatpush1.bf16.msra.mxu0 0
    %2514 = vmatprep.subr.bf16.mxu0 0
    %2515 = vmatpush1.bf16.msra.mxu0 0
    %2516 = vmatprep.subr.bf16.mxu0 0
    %2517 = vmatpush1.bf16.msra.mxu0 0
    %2518 = vmatprep.subr.bf16.mxu0 0
    %2519 = vmatpush1.bf16.msra.mxu0 0
    %2520 = vmatprep.subr.bf16.mxu0 0
    %2521 = vmatpush1.bf16.msra.mxu0 0
    %2522 = vmatprep.subr.bf16.mxu0 0
    %2523 = vmatpush1.bf16.msra.mxu0 0
    %2524 = vmatprep.subr.bf16.mxu0 0
    %2525 = vmatpush1.bf16.msra.mxu0 0
    %2526 = vmatprep.subr.bf16.mxu0 0
    %2527 = vmatpush1.bf16.msra.mxu0 0
    %2528 = vmatprep.subr.bf16.mxu0 0
    %2529 = vmatpush1.bf16.msra.mxu0 0
    %2530 = vmatprep.subr.bf16.mxu0 0
    %2531 = vmatpush1.bf16.msra.mxu0 0
    %2532 = vmatprep.subr.bf16.mxu0 0
    %2533 = vmatpush1.bf16.msra.mxu0 0
    %2534 = vmatprep.mubr.bf16.mxu0 0
    %2535 = vmatmul.mubr.bf16.gmra.mrb[0].mxu0 %v2500
    %v2536 = vpop.f32.mrb[0].mxu0
    %v2537 = vadd.f32 0.0, %v2536
    %v2538 = vpop.f32.mrb[0].mxu0
    %v2539 = vpop.f32.mrb[0].mxu0
    %v2540 = vpop.f32.mrb[0].mxu0
    %2541 = vdwg.mxu0
    %v2543 = vsel %vm470, %v2446, 0
    %2545 = vmatprep.subr.bf16.mxu0 0
    %2546 = vmatpush1.bf16.msra.mxu0 %v2452
    %2547 = vmatprep.subr.bf16.mxu0 0
    %2548 = vmatpush1.bf16.msra.mxu0 %v2453
    %2549 = vmatprep.subr.bf16.mxu0 0
    %2550 = vmatpush1.bf16.msra.mxu0 0
    %2551 = vmatprep.subr.bf16.mxu0 0
    %2552 = vmatpush1.bf16.msra.mxu0 0
    %2553 = vmatprep.subr.bf16.mxu0 0
    %2554 = vmatpush1.bf16.msra.mxu0 0
    %2555 = vmatprep.subr.bf16.mxu0 0
    %2556 = vmatpush1.bf16.msra.mxu0 0
    %2557 = vmatprep.subr.bf16.mxu0 0
    %2558 = vmatpush1.bf16.msra.mxu0 0
    %2559 = vmatprep.subr.bf16.mxu0 0
    %2560 = vmatpush1.bf16.msra.mxu0 0
    %2561 = vmatprep.subr.bf16.mxu0 0
    %2562 = vmatpush1.bf16.msra.mxu0 0
    %2563 = vmatprep.subr.bf16.mxu0 0
    %2564 = vmatpush1.bf16.msra.mxu0 0
    %2565 = vmatprep.subr.bf16.mxu0 0
    %2566 = vmatpush1.bf16.msra.mxu0 0
    %2567 = vmatprep.subr.bf16.mxu0 0
    %2568 = vmatpush1.bf16.msra.mxu0 0
    %2569 = vmatprep.subr.bf16.mxu0 0
    %2570 = vmatpush1.bf16.msra.mxu0 0
    %2571 = vmatprep.subr.bf16.mxu0 0
    %2572 = vmatpush1.bf16.msra.mxu0 0
    %2573 = vmatprep.subr.bf16.mxu0 0
    %2574 = vmatpush1.bf16.msra.mxu0 0
    %2575 = vmatprep.subr.bf16.mxu0 0
    %2576 = vmatpush1.bf16.msra.mxu0 0
    %2577 = vmatprep.mubr.bf16.mxu0 0
    %2578 = vmatmul.mubr.bf16.gmra.mrb[0].mxu0 %v2543
    %v2579 = vpop.f32.mrb[0].mxu0
    %v2580 = vadd.f32 0.0, %v2579
    %v2581 = vpop.f32.mrb[0].mxu0
    %v2582 = vpop.f32.mrb[0].mxu0
    %v2583 = vpop.f32.mrb[0].mxu0
    %2584 = vdwg.mxu0
    %v2586 = vsel %vm470, %v2447, 0
    %2588 = vmatprep.subr.bf16.mxu0 0
    %2589 = vmatpush1.bf16.msra.mxu0 %v2454
    %2590 = vmatprep.subr.bf16.mxu0 0
    %2591 = vmatpush1.bf16.msra.mxu0 %v2455
    %2592 = vmatprep.subr.bf16.mxu0 0
    %2593 = vmatpush1.bf16.msra.mxu0 0
    %2594 = vmatprep.subr.bf16.mxu0 0
    %2595 = vmatpush1.bf16.msra.mxu0 0
    %2596 = vmatprep.subr.bf16.mxu0 0
    %2597 = vmatpush1.bf16.msra.mxu0 0
    %2598 = vmatprep.subr.bf16.mxu0 0
    %2599 = vmatpush1.bf16.msra.mxu0 0
    %2600 = vmatprep.subr.bf16.mxu0 0
    %2601 = vmatpush1.bf16.msra.mxu0 0
    %2602 = vmatprep.subr.bf16.mxu0 0
    %2603 = vmatpush1.bf16.msra.mxu0 0
    %2604 = vmatprep.subr.bf16.mxu0 0
    %2605 = vmatpush1.bf16.msra.mxu0 0
    %2606 = vmatprep.subr.bf16.mxu0 0
    %2607 = vmatpush1.bf16.msra.mxu0 0
    %2608 = vmatprep.subr.bf16.mxu0 0
    %2609 = vmatpush1.bf16.msra.mxu0 0
    %2610 = vmatprep.subr.bf16.mxu0 0
    %2611 = vmatpush1.bf16.msra.mxu0 0
    %2612 = vmatprep.subr.bf16.mxu0 0
    %2613 = vmatpush1.bf16.msra.mxu0 0
    %2614 = vmatprep.subr.bf16.mxu0 0
    %2615 = vmatpush1.bf16.msra.mxu0 0
    %2616 = vmatprep.subr.bf16.mxu0 0
    %2617 = vmatpush1.bf16.msra.mxu0 0
    %2618 = vmatprep.subr.bf16.mxu0 0
    %2619 = vmatpush1.bf16.msra.mxu0 0
    %2620 = vmatprep.mubr.bf16.mxu0 0
    %2621 = vmatmul.mubr.bf16.gmra.mrb[0].mxu0 %v2586
    %v2622 = vpop.f32.mrb[0].mxu0
    %v2623 = vadd.f32 0.0, %v2622
    %v2624 = vpop.f32.mrb[0].mxu0
    %v2625 = vpop.f32.mrb[0].mxu0
    %v2626 = vpop.f32.mrb[0].mxu0
    %2627 = vdwg.mxu0
    %v2628 = vadd.f32 %v2494, %v2537
    %v2629 = vadd.f32 %v2628, %v2580
    %v2630 = vadd.f32 %v2629, %v2623
    %2632 = vrot.lane.b32.xlu0 %v1843, 96
    %v2633 = vpop.permute.xlu0 %2632
    %2635 = vrot.lane.b32.xlu0 %v1843, 64
    %v2636 = vpop.permute.xlu0 %2635
    %2638 = vrot.lane.b32.xlu0 %v1843, 32
    %v2639 = vpop.permute.xlu0 %2638
    %2643 = vrot.lane.b32.xlu0 %v1953, 96
    %v2644 = vpop.permute.xlu0 %2643
    %2645 = vrot.lane.b32.xlu0 %v1957, 96
    %v2646 = vpop.permute.xlu0 %2645
    %2649 = vrot.lane.b32.xlu0 %v1953, 64
    %v2650 = vpop.permute.xlu0 %2649
    %2651 = vrot.lane.b32.xlu0 %v1957, 64
    %v2652 = vpop.permute.xlu0 %2651
    %2655 = vrot.lane.b32.xlu0 %v1953, 32
    %v2656 = vpop.permute.xlu0 %2655
    %2657 = vrot.lane.b32.xlu0 %v1957, 32
    %v2658 = vpop.permute.xlu0 %2657
    %2663 = vrot.lane.b32.xlu0 %v1955, 96
    %v2664 = vpop.permute.xlu0 %2663
    %2665 = vrot.lane.b32.xlu0 %v1959, 96
    %v2666 = vpop.permute.xlu0 %2665
    %2669 = vrot.lane.b32.xlu0 %v1955, 64
    %v2670 = vpop.permute.xlu0 %2669
    %2671 = vrot.lane.b32.xlu0 %v1959, 64
    %v2672 = vpop.permute.xlu0 %2671
    %2675 = vrot.lane.b32.xlu0 %v1955, 32
    %v2676 = vpop.permute.xlu0 %2675
    %2677 = vrot.lane.b32.xlu0 %v1959, 32
    %v2678 = vpop.permute.xlu0 %2677
    %v2681 = vpack.c.bf16 %v1843, %v1843
    %v2682 = vpack.c.bf16 %v2633, %v2633
    %v2683 = vpack.c.bf16 %v2636, %v2636
    %v2684 = vpack.c.bf16 %v2639, %v2639
    %v2685 = vpack.c.bf16 %v1957, %v1953
    %v2686 = vpack.c.bf16 %v2646, %v2644
    %v2687 = vpack.c.bf16 %v2652, %v2650
    %v2688 = vpack.c.bf16 %v2658, %v2656
    %v2690 = vsel %vm470, %v2681, 0
    %v2693 = vsel %vm470, %v2685, 0
    %2695 = vmatprep.subr.bf16.mxu0 0
    %2696 = vmatpush1.bf16.xpose.msra.mxu0 %v2693
    %2697 = vmatprep.subr.bf16.mxu0 0
    %2698 = vmatpush1.bf16.xpose.msra.mxu0 0
    %2699 = vmatprep.subr.bf16.mxu0 0
    %2700 = vmatpush1.bf16.xpose.msra.mxu0 0
    %2701 = vmatprep.subr.bf16.mxu0 0
    %2702 = vmatpush1.bf16.xpose.msra.mxu0 0
    %2703 = vmatprep.subr.bf16.mxu0 0
    %2704 = vmatpush1.bf16.xpose.msra.mxu0 0
    %2705 = vmatprep.subr.bf16.mxu0 0
    %2706 = vmatpush1.bf16.xpose.msra.mxu0 0
    %2707 = vmatprep.subr.bf16.mxu0 0
    %2708 = vmatpush1.bf16.xpose.msra.mxu0 0
    %2709 = vmatprep.subr.bf16.mxu0 0
    %2710 = vmatpush1.bf16.xpose.msra.mxu0 0
    %2711 = vmatprep.subr.bf16.mxu0 0
    %2712 = vmatpush1.bf16.xpose.msra.mxu0 0
    %2713 = vmatprep.subr.bf16.mxu0 0
    %2714 = vmatpush1.bf16.xpose.msra.mxu0 0
    %2715 = vmatprep.subr.bf16.mxu0 0
    %2716 = vmatpush1.bf16.xpose.msra.mxu0 0
    %2717 = vmatprep.subr.bf16.mxu0 0
    %2718 = vmatpush1.bf16.xpose.msra.mxu0 0
    %2719 = vmatprep.subr.bf16.mxu0 0
    %2720 = vmatpush1.bf16.xpose.msra.mxu0 0
    %2721 = vmatprep.subr.bf16.mxu0 0
    %2722 = vmatpush1.bf16.xpose.msra.mxu0 0
    %2723 = vmatprep.subr.bf16.mxu0 0
    %2724 = vmatpush1.bf16.xpose.msra.mxu0 0
    %2725 = vmatprep.subr.bf16.mxu0 0
    %2726 = vmatpush1.bf16.xpose.msra.mxu0 0
    %2727 = vmatprep.mubr.bf16.mxu0 0
    %2728 = vmatmul.mubr.bf16.gmra.mrb[0].mxu0 %v2690
    %v2729 = vpop.f32.mrb[0].mxu0
    %v2730 = vadd.f32 %v241, %v2729
    %v2731 = vpop.f32.mrb[0].mxu0
    %v2732 = vpop.f32.mrb[0].mxu0
    %v2733 = vpop.f32.mrb[0].mxu0
    %2734 = vdwg.mxu0
    %v2736 = vsel %vm470, %v2682, 0
    %v2739 = vsel %vm470, %v2686, 0
    %2741 = vmatprep.subr.bf16.mxu0 0
    %2742 = vmatpush1.bf16.xpose.msra.mxu0 %v2739
    %2743 = vmatprep.subr.bf16.mxu0 0
    %2744 = vmatpush1.bf16.xpose.msra.mxu0 0
    %2745 = vmatprep.subr.bf16.mxu0 0
    %2746 = vmatpush1.bf16.xpose.msra.mxu0 0
    %2747 = vmatprep.subr.bf16.mxu0 0
    %2748 = vmatpush1.bf16.xpose.msra.mxu0 0
    %2749 = vmatprep.subr.bf16.mxu0 0
    %2750 = vmatpush1.bf16.xpose.msra.mxu0 0
    %2751 = vmatprep.subr.bf16.mxu0 0
    %2752 = vmatpush1.bf16.xpose.msra.mxu0 0
    %2753 = vmatprep.subr.bf16.mxu0 0
    %2754 = vmatpush1.bf16.xpose.msra.mxu0 0
    %2755 = vmatprep.subr.bf16.mxu0 0
    %2756 = vmatpush1.bf16.xpose.msra.mxu0 0
    %2757 = vmatprep.subr.bf16.mxu0 0
    %2758 = vmatpush1.bf16.xpose.msra.mxu0 0
    %2759 = vmatprep.subr.bf16.mxu0 0
    %2760 = vmatpush1.bf16.xpose.msra.mxu0 0
    %2761 = vmatprep.subr.bf16.mxu0 0
    %2762 = vmatpush1.bf16.xpose.msra.mxu0 0
    %2763 = vmatprep.subr.bf16.mxu0 0
    %2764 = vmatpush1.bf16.xpose.msra.mxu0 0
    %2765 = vmatprep.subr.bf16.mxu0 0
    %2766 = vmatpush1.bf16.xpose.msra.mxu0 0
    %2767 = vmatprep.subr.bf16.mxu0 0
    %2768 = vmatpush1.bf16.xpose.msra.mxu0 0
    %2769 = vmatprep.subr.bf16.mxu0 0
    %2770 = vmatpush1.bf16.xpose.msra.mxu0 0
    %2771 = vmatprep.subr.bf16.mxu0 0
    %2772 = vmatpush1.bf16.xpose.msra.mxu0 0
    %2773 = vmatprep.mubr.bf16.mxu0 0
    %2774 = vmatmul.mubr.bf16.gmra.mrb[0].mxu0 %v2736
    %v2775 = vpop.f32.mrb[0].mxu0
    %v2776 = vadd.f32 %v241, %v2775
    %v2777 = vpop.f32.mrb[0].mxu0
    %v2778 = vpop.f32.mrb[0].mxu0
    %v2779 = vpop.f32.mrb[0].mxu0
    %2780 = vdwg.mxu0
    %v2782 = vsel %vm470, %v2683, 0
    %v2785 = vsel %vm470, %v2687, 0
    %2787 = vmatprep.subr.bf16.mxu0 0
    %2788 = vmatpush1.bf16.xpose.msra.mxu0 %v2785
    %2789 = vmatprep.subr.bf16.mxu0 0
    %2790 = vmatpush1.bf16.xpose.msra.mxu0 0
    %2791 = vmatprep.subr.bf16.mxu0 0
    %2792 = vmatpush1.bf16.xpose.msra.mxu0 0
    %2793 = vmatprep.subr.bf16.mxu0 0
    %2794 = vmatpush1.bf16.xpose.msra.mxu0 0
    %2795 = vmatprep.subr.bf16.mxu0 0
    %2796 = vmatpush1.bf16.xpose.msra.mxu0 0
    %2797 = vmatprep.subr.bf16.mxu0 0
    %2798 = vmatpush1.bf16.xpose.msra.mxu0 0
    %2799 = vmatprep.subr.bf16.mxu0 0
    %2800 = vmatpush1.bf16.xpose.msra.mxu0 0
    %2801 = vmatprep.subr.bf16.mxu0 0
    %2802 = vmatpush1.bf16.xpose.msra.mxu0 0
    %2803 = vmatprep.subr.bf16.mxu0 0
    %2804 = vmatpush1.bf16.xpose.msra.mxu0 0
    %2805 = vmatprep.subr.bf16.mxu0 0
    %2806 = vmatpush1.bf16.xpose.msra.mxu0 0
    %2807 = vmatprep.subr.bf16.mxu0 0
    %2808 = vmatpush1.bf16.xpose.msra.mxu0 0
    %2809 = vmatprep.subr.bf16.mxu0 0
    %2810 = vmatpush1.bf16.xpose.msra.mxu0 0
    %2811 = vmatprep.subr.bf16.mxu0 0
    %2812 = vmatpush1.bf16.xpose.msra.mxu0 0
    %2813 = vmatprep.subr.bf16.mxu0 0
    %2814 = vmatpush1.bf16.xpose.msra.mxu0 0
    %2815 = vmatprep.subr.bf16.mxu0 0
    %2816 = vmatpush1.bf16.xpose.msra.mxu0 0
    %2817 = vmatprep.subr.bf16.mxu0 0
    %2818 = vmatpush1.bf16.xpose.msra.mxu0 0
    %2819 = vmatprep.mubr.bf16.mxu0 0
    %2820 = vmatmul.mubr.bf16.gmra.mrb[0].mxu0 %v2782
    %v2821 = vpop.f32.mrb[0].mxu0
    %v2822 = vadd.f32 %v241, %v2821
    %v2823 = vpop.f32.mrb[0].mxu0
    %v2824 = vpop.f32.mrb[0].mxu0
    %v2825 = vpop.f32.mrb[0].mxu0
    %2826 = vdwg.mxu0
    %v2828 = vsel %vm470, %v2684, 0
    %v2831 = vsel %vm470, %v2688, 0
    %2833 = vmatprep.subr.bf16.mxu0 0
    %2834 = vmatpush1.bf16.xpose.msra.mxu0 %v2831
    %2835 = vmatprep.subr.bf16.mxu0 0
    %2836 = vmatpush1.bf16.xpose.msra.mxu0 0
    %2837 = vmatprep.subr.bf16.mxu0 0
    %2838 = vmatpush1.bf16.xpose.msra.mxu0 0
    %2839 = vmatprep.subr.bf16.mxu0 0
    %2840 = vmatpush1.bf16.xpose.msra.mxu0 0
    %2841 = vmatprep.subr.bf16.mxu0 0
    %2842 = vmatpush1.bf16.xpose.msra.mxu0 0
    %2843 = vmatprep.subr.bf16.mxu0 0
    %2844 = vmatpush1.bf16.xpose.msra.mxu0 0
    %2845 = vmatprep.subr.bf16.mxu0 0
    %2846 = vmatpush1.bf16.xpose.msra.mxu0 0
    %2847 = vmatprep.subr.bf16.mxu0 0
    %2848 = vmatpush1.bf16.xpose.msra.mxu0 0
    %2849 = vmatprep.subr.bf16.mxu0 0
    %2850 = vmatpush1.bf16.xpose.msra.mxu0 0
    %2851 = vmatprep.subr.bf16.mxu0 0
    %2852 = vmatpush1.bf16.xpose.msra.mxu0 0
    %2853 = vmatprep.subr.bf16.mxu0 0
    %2854 = vmatpush1.bf16.xpose.msra.mxu0 0
    %2855 = vmatprep.subr.bf16.mxu0 0
    %2856 = vmatpush1.bf16.xpose.msra.mxu0 0
    %2857 = vmatprep.subr.bf16.mxu0 0
    %2858 = vmatpush1.bf16.xpose.msra.mxu0 0
    %2859 = vmatprep.subr.bf16.mxu0 0
    %2860 = vmatpush1.bf16.xpose.msra.mxu0 0
    %2861 = vmatprep.subr.bf16.mxu0 0
    %2862 = vmatpush1.bf16.xpose.msra.mxu0 0
    %2863 = vmatprep.subr.bf16.mxu0 0
    %2864 = vmatpush1.bf16.xpose.msra.mxu0 0
    %2865 = vmatprep.mubr.bf16.mxu0 0
    %2866 = vmatmul.mubr.bf16.gmra.mrb[0].mxu0 %v2828
    %v2867 = vpop.f32.mrb[0].mxu0
    %v2868 = vadd.f32 %v241, %v2867
    %v2869 = vpop.f32.mrb[0].mxu0
    %v2870 = vpop.f32.mrb[0].mxu0
    %v2871 = vpop.f32.mrb[0].mxu0
    %2872 = vdwg.mxu0
    %v2873 = vsel %vm2219, %v2730, -inf
    %2874 = vmax.xlane.f32.xlu0 %v2873
    %v2875 = vpop.xlane.xlu0 %2874
    %v2876 = vsel %vm2219, %v2776, -inf
    %2877 = vmax.xlane.f32.xlu0 %v2876
    %v2878 = vpop.xlane.xlu0 %2877
    %v2879 = vsel %vm2219, %v2822, -inf
    %2880 = vmax.xlane.f32.xlu0 %v2879
    %v2881 = vpop.xlane.xlu0 %2880
    %v2882 = vsel %vm2219, %v2868, -inf
    %2883 = vmax.xlane.f32.xlu0 %v2882
    %v2884 = vpop.xlane.xlu0 %2883
    %v2885 = vsub.f32 %v2730, %v2875
    %v2886 = vsub.f32 %v2776, %v2878
    %v2887 = vsub.f32 %v2822, %v2881
    %v2888 = vsub.f32 %v2868, %v2884
    %v2889 = vmul.f32 %v2885, 1.442695
    %v2890 = vpow.pop %v2889
    %v2891 = vmul.f32 %v2886, 1.442695
    %v2892 = vpow.pop %v2891
    %v2893 = vmul.f32 %v2887, 1.442695
    %v2894 = vpow.pop %v2893
    %v2895 = vmul.f32 %v2888, 1.442695
    %v2896 = vpow.pop %v2895
    %v2897 = vsel %vm2219, %v2890, 0.0
    %2898 = vadd.xlane.f32.xlu0 %v2897
    %v2899 = vpop.xlane.xlu0 %2898
    %v2900 = vsel %vm2219, %v2892, 0.0
    %2901 = vadd.xlane.f32.xlu0 %v2900
    %v2902 = vpop.xlane.xlu0 %2901
    %v2903 = vsel %vm2219, %v2894, 0.0
    %2904 = vadd.xlane.f32.xlu0 %v2903
    %v2905 = vpop.xlane.xlu0 %2904
    %v2906 = vsel %vm2219, %v2896, 0.0
    %2907 = vadd.xlane.f32.xlu0 %v2906
    %v2908 = vpop.xlane.xlu0 %2907
    %v2909 = vrcp.pop %v2899
    %v2910 = vrcp.pop %v2902
    %v2911 = vrcp.pop %v2905
    %v2912 = vrcp.pop %v2908
    %v2913 = vmul.f32 %v2890, %v2909
    %v2914 = vmul.f32 %v2892, %v2910
    %v2915 = vmul.f32 %v2894, %v2911
    %v2916 = vmul.f32 %v2896, %v2912
    %v2917 = vpack.c.bf16 %v2913, %v2913
    %v2918 = vpack.c.bf16 %v2914, %v2914
    %v2919 = vpack.c.bf16 %v2915, %v2915
    %v2920 = vpack.c.bf16 %v2916, %v2916
    %v2921 = vpack.c.bf16 %v1959, %v1955
    %v2922 = vpack.c.bf16 %v2666, %v2664
    %v2923 = vpack.c.bf16 %v2672, %v2670
    %v2924 = vpack.c.bf16 %v2678, %v2676
    %v2926 = vsel %vm2219, %v2917, 0
    %2928 = vmatprep.subr.bf16.mxu0 0
    %2929 = vmatpush1.bf16.msra.mxu0 %v2921
    %2930 = vmatprep.subr.bf16.mxu0 0
    %2931 = vmatpush1.bf16.msra.mxu0 0
    %2932 = vmatprep.subr.bf16.mxu0 0
    %2933 = vmatpush1.bf16.msra.mxu0 0
    %2934 = vmatprep.subr.bf16.mxu0 0
    %2935 = vmatpush1.bf16.msra.mxu0 0
    %2936 = vmatprep.subr.bf16.mxu0 0
    %2937 = vmatpush1.bf16.msra.mxu0 0
    %2938 = vmatprep.subr.bf16.mxu0 0
    %2939 = vmatpush1.bf16.msra.mxu0 0
    %2940 = vmatprep.subr.bf16.mxu0 0
    %2941 = vmatpush1.bf16.msra.mxu0 0
    %2942 = vmatprep.subr.bf16.mxu0 0
    %2943 = vmatpush1.bf16.msra.mxu0 0
    %2944 = vmatprep.subr.bf16.mxu0 0
    %2945 = vmatpush1.bf16.msra.mxu0 0
    %2946 = vmatprep.subr.bf16.mxu0 0
    %2947 = vmatpush1.bf16.msra.mxu0 0
    %2948 = vmatprep.subr.bf16.mxu0 0
    %2949 = vmatpush1.bf16.msra.mxu0 0
    %2950 = vmatprep.subr.bf16.mxu0 0
    %2951 = vmatpush1.bf16.msra.mxu0 0
    %2952 = vmatprep.subr.bf16.mxu0 0
    %2953 = vmatpush1.bf16.msra.mxu0 0
    %2954 = vmatprep.subr.bf16.mxu0 0
    %2955 = vmatpush1.bf16.msra.mxu0 0
    %2956 = vmatprep.subr.bf16.mxu0 0
    %2957 = vmatpush1.bf16.msra.mxu0 0
    %2958 = vmatprep.subr.bf16.mxu0 0
    %2959 = vmatpush1.bf16.msra.mxu0 0
    %2960 = vmatprep.mubr.bf16.mxu0 0
    %2961 = vmatmul.mubr.bf16.gmra.mrb[0].mxu0 %v2926
    %v2962 = vpop.f32.mrb[0].mxu0
    %v2963 = vadd.f32 0.0, %v2962
    %v2964 = vpop.f32.mrb[0].mxu0
    %v2965 = vpop.f32.mrb[0].mxu0
    %v2966 = vpop.f32.mrb[0].mxu0
    %2967 = vdwg.mxu0
    %v2969 = vsel %vm2219, %v2918, 0
    %2971 = vmatprep.subr.bf16.mxu0 0
    %2972 = vmatpush1.bf16.msra.mxu0 %v2922
    %2973 = vmatprep.subr.bf16.mxu0 0
    %2974 = vmatpush1.bf16.msra.mxu0 0
    %2975 = vmatprep.subr.bf16.mxu0 0
    %2976 = vmatpush1.bf16.msra.mxu0 0
    %2977 = vmatprep.subr.bf16.mxu0 0
    %2978 = vmatpush1.bf16.msra.mxu0 0
    %2979 = vmatprep.subr.bf16.mxu0 0
    %2980 = vmatpush1.bf16.msra.mxu0 0
    %2981 = vmatprep.subr.bf16.mxu0 0
    %2982 = vmatpush1.bf16.msra.mxu0 0
    %2983 = vmatprep.subr.bf16.mxu0 0
    %2984 = vmatpush1.bf16.msra.mxu0 0
    %2985 = vmatprep.subr.bf16.mxu0 0
    %2986 = vmatpush1.bf16.msra.mxu0 0
    %2987 = vmatprep.subr.bf16.mxu0 0
    %2988 = vmatpush1.bf16.msra.mxu0 0
    %2989 = vmatprep.subr.bf16.mxu0 0
    %2990 = vmatpush1.bf16.msra.mxu0 0
    %2991 = vmatprep.subr.bf16.mxu0 0
    %2992 = vmatpush1.bf16.msra.mxu0 0
    %2993 = vmatprep.subr.bf16.mxu0 0
    %2994 = vmatpush1.bf16.msra.mxu0 0
    %2995 = vmatprep.subr.bf16.mxu0 0
    %2996 = vmatpush1.bf16.msra.mxu0 0
    %2997 = vmatprep.subr.bf16.mxu0 0
    %2998 = vmatpush1.bf16.msra.mxu0 0
    %2999 = vmatprep.subr.bf16.mxu0 0
    %3000 = vmatpush1.bf16.msra.mxu0 0
    %3001 = vmatprep.subr.bf16.mxu0 0
    %3002 = vmatpush1.bf16.msra.mxu0 0
    %3003 = vmatprep.mubr.bf16.mxu0 0
    %3004 = vmatmul.mubr.bf16.gmra.mrb[0].mxu0 %v2969
    %v3005 = vpop.f32.mrb[0].mxu0
    %v3006 = vadd.f32 0.0, %v3005
    %v3007 = vpop.f32.mrb[0].mxu0
    %v3008 = vpop.f32.mrb[0].mxu0
    %v3009 = vpop.f32.mrb[0].mxu0
    %3010 = vdwg.mxu0
    %v3012 = vsel %vm2219, %v2919, 0
    %3014 = vmatprep.subr.bf16.mxu0 0
    %3015 = vmatpush1.bf16.msra.mxu0 %v2923
    %3016 = vmatprep.subr.bf16.mxu0 0
    %3017 = vmatpush1.bf16.msra.mxu0 0
    %3018 = vmatprep.subr.bf16.mxu0 0
    %3019 = vmatpush1.bf16.msra.mxu0 0
    %3020 = vmatprep.subr.bf16.mxu0 0
    %3021 = vmatpush1.bf16.msra.mxu0 0
    %3022 = vmatprep.subr.bf16.mxu0 0
    %3023 = vmatpush1.bf16.msra.mxu0 0
    %3024 = vmatprep.subr.bf16.mxu0 0
    %3025 = vmatpush1.bf16.msra.mxu0 0
    %3026 = vmatprep.subr.bf16.mxu0 0
    %3027 = vmatpush1.bf16.msra.mxu0 0
    %3028 = vmatprep.subr.bf16.mxu0 0
    %3029 = vmatpush1.bf16.msra.mxu0 0
    %3030 = vmatprep.subr.bf16.mxu0 0
    %3031 = vmatpush1.bf16.msra.mxu0 0
    %3032 = vmatprep.subr.bf16.mxu0 0
    %3033 = vmatpush1.bf16.msra.mxu0 0
    %3034 = vmatprep.subr.bf16.mxu0 0
    %3035 = vmatpush1.bf16.msra.mxu0 0
    %3036 = vmatprep.subr.bf16.mxu0 0
    %3037 = vmatpush1.bf16.msra.mxu0 0
    %3038 = vmatprep.subr.bf16.mxu0 0
    %3039 = vmatpush1.bf16.msra.mxu0 0
    %3040 = vmatprep.subr.bf16.mxu0 0
    %3041 = vmatpush1.bf16.msra.mxu0 0
    %3042 = vmatprep.subr.bf16.mxu0 0
    %3043 = vmatpush1.bf16.msra.mxu0 0
    %3044 = vmatprep.subr.bf16.mxu0 0
    %3045 = vmatpush1.bf16.msra.mxu0 0
    %3046 = vmatprep.mubr.bf16.mxu0 0
    %3047 = vmatmul.mubr.bf16.gmra.mrb[0].mxu0 %v3012
    %v3048 = vpop.f32.mrb[0].mxu0
    %v3049 = vadd.f32 0.0, %v3048
    %v3050 = vpop.f32.mrb[0].mxu0
    %v3051 = vpop.f32.mrb[0].mxu0
    %v3052 = vpop.f32.mrb[0].mxu0
    %3053 = vdwg.mxu0
    %v3055 = vsel %vm2219, %v2920, 0
    %3057 = vmatprep.subr.bf16.mxu0 0
    %3058 = vmatpush1.bf16.msra.mxu0 %v2924
    %3059 = vmatprep.subr.bf16.mxu0 0
    %3060 = vmatpush1.bf16.msra.mxu0 0
    %3061 = vmatprep.subr.bf16.mxu0 0
    %3062 = vmatpush1.bf16.msra.mxu0 0
    %3063 = vmatprep.subr.bf16.mxu0 0
    %3064 = vmatpush1.bf16.msra.mxu0 0
    %3065 = vmatprep.subr.bf16.mxu0 0
    %3066 = vmatpush1.bf16.msra.mxu0 0
    %3067 = vmatprep.subr.bf16.mxu0 0
    %3068 = vmatpush1.bf16.msra.mxu0 0
    %3069 = vmatprep.subr.bf16.mxu0 0
    %3070 = vmatpush1.bf16.msra.mxu0 0
    %3071 = vmatprep.subr.bf16.mxu0 0
    %3072 = vmatpush1.bf16.msra.mxu0 0
    %3073 = vmatprep.subr.bf16.mxu0 0
    %3074 = vmatpush1.bf16.msra.mxu0 0
    %3075 = vmatprep.subr.bf16.mxu0 0
    %3076 = vmatpush1.bf16.msra.mxu0 0
    %3077 = vmatprep.subr.bf16.mxu0 0
    %3078 = vmatpush1.bf16.msra.mxu0 0
    %3079 = vmatprep.subr.bf16.mxu0 0
    %3080 = vmatpush1.bf16.msra.mxu0 0
    %3081 = vmatprep.subr.bf16.mxu0 0
    %3082 = vmatpush1.bf16.msra.mxu0 0
    %3083 = vmatprep.subr.bf16.mxu0 0
    %3084 = vmatpush1.bf16.msra.mxu0 0
    %3085 = vmatprep.subr.bf16.mxu0 0
    %3086 = vmatpush1.bf16.msra.mxu0 0
    %3087 = vmatprep.subr.bf16.mxu0 0
    %3088 = vmatpush1.bf16.msra.mxu0 0
    %3089 = vmatprep.mubr.bf16.mxu0 0
    %3090 = vmatmul.mubr.bf16.gmra.mrb[0].mxu0 %v3055
    %v3091 = vpop.f32.mrb[0].mxu0
    %v3092 = vadd.f32 0.0, %v3091
    %v3093 = vpop.f32.mrb[0].mxu0
    %v3094 = vpop.f32.mrb[0].mxu0
    %v3095 = vpop.f32.mrb[0].mxu0
    %3096 = vdwg.mxu0
    %v3097 = vpack.c.bf16 %v2963, %v2963
    %v3098 = vpack.c.bf16 %v3006, %v3006
    %v3099 = vpack.c.bf16 %v3049, %v3049
    %v3100 = vpack.c.bf16 %v3092, %v3092
    %v3102 = vsel %vm470, %v3097, 0
    %3104 = vmatprep.subr.bf16.mxu0 0
    %3105 = vmatpush1.bf16.msra.mxu0 %v2448
    %3106 = vmatprep.subr.bf16.mxu0 0
    %3107 = vmatpush1.bf16.msra.mxu0 %v2449
    %3108 = vmatprep.subr.bf16.mxu0 0
    %3109 = vmatpush1.bf16.msra.mxu0 0
    %3110 = vmatprep.subr.bf16.mxu0 0
    %3111 = vmatpush1.bf16.msra.mxu0 0
    %3112 = vmatprep.subr.bf16.mxu0 0
    %3113 = vmatpush1.bf16.msra.mxu0 0
    %3114 = vmatprep.subr.bf16.mxu0 0
    %3115 = vmatpush1.bf16.msra.mxu0 0
    %3116 = vmatprep.subr.bf16.mxu0 0
    %3117 = vmatpush1.bf16.msra.mxu0 0
    %3118 = vmatprep.subr.bf16.mxu0 0
    %3119 = vmatpush1.bf16.msra.mxu0 0
    %3120 = vmatprep.subr.bf16.mxu0 0
    %3121 = vmatpush1.bf16.msra.mxu0 0
    %3122 = vmatprep.subr.bf16.mxu0 0
    %3123 = vmatpush1.bf16.msra.mxu0 0
    %3124 = vmatprep.subr.bf16.mxu0 0
    %3125 = vmatpush1.bf16.msra.mxu0 0
    %3126 = vmatprep.subr.bf16.mxu0 0
    %3127 = vmatpush1.bf16.msra.mxu0 0
    %3128 = vmatprep.subr.bf16.mxu0 0
    %3129 = vmatpush1.bf16.msra.mxu0 0
    %3130 = vmatprep.subr.bf16.mxu0 0
    %3131 = vmatpush1.bf16.msra.mxu0 0
    %3132 = vmatprep.subr.bf16.mxu0 0
    %3133 = vmatpush1.bf16.msra.mxu0 0
    %3134 = vmatprep.subr.bf16.mxu0 0
    %3135 = vmatpush1.bf16.msra.mxu0 0
    %3136 = vmatprep.mubr.bf16.mxu0 0
    %3137 = vmatmul.mubr.bf16.gmra.mrb[0].mxu0 %v3102
    %v3138 = vpop.f32.mrb[0].mxu0
    %v3139 = vadd.f32 0.0, %v3138
    %v3140 = vpop.f32.mrb[0].mxu0
    %v3141 = vpop.f32.mrb[0].mxu0
    %v3142 = vpop.f32.mrb[0].mxu0
    %3143 = vdwg.mxu0
    %v3145 = vsel %vm470, %v3098, 0
    %3147 = vmatprep.subr.bf16.mxu0 0
    %3148 = vmatpush1.bf16.msra.mxu0 %v2450
    %3149 = vmatprep.subr.bf16.mxu0 0
    %3150 = vmatpush1.bf16.msra.mxu0 %v2451
    %3151 = vmatprep.subr.bf16.mxu0 0
    %3152 = vmatpush1.bf16.msra.mxu0 0
    %3153 = vmatprep.subr.bf16.mxu0 0
    %3154 = vmatpush1.bf16.msra.mxu0 0
    %3155 = vmatprep.subr.bf16.mxu0 0
    %3156 = vmatpush1.bf16.msra.mxu0 0
    %3157 = vmatprep.subr.bf16.mxu0 0
    %3158 = vmatpush1.bf16.msra.mxu0 0
    %3159 = vmatprep.subr.bf16.mxu0 0
    %3160 = vmatpush1.bf16.msra.mxu0 0
    %3161 = vmatprep.subr.bf16.mxu0 0
    %3162 = vmatpush1.bf16.msra.mxu0 0
    %3163 = vmatprep.subr.bf16.mxu0 0
    %3164 = vmatpush1.bf16.msra.mxu0 0
    %3165 = vmatprep.subr.bf16.mxu0 0
    %3166 = vmatpush1.bf16.msra.mxu0 0
    %3167 = vmatprep.subr.bf16.mxu0 0
    %3168 = vmatpush1.bf16.msra.mxu0 0
    %3169 = vmatprep.subr.bf16.mxu0 0
    %3170 = vmatpush1.bf16.msra.mxu0 0
    %3171 = vmatprep.subr.bf16.mxu0 0
    %3172 = vmatpush1.bf16.msra.mxu0 0
    %3173 = vmatprep.subr.bf16.mxu0 0
    %3174 = vmatpush1.bf16.msra.mxu0 0
    %3175 = vmatprep.subr.bf16.mxu0 0
    %3176 = vmatpush1.bf16.msra.mxu0 0
    %3177 = vmatprep.subr.bf16.mxu0 0
    %3178 = vmatpush1.bf16.msra.mxu0 0
    %3179 = vmatprep.mubr.bf16.mxu0 0
    %3180 = vmatmul.mubr.bf16.gmra.mrb[0].mxu0 %v3145
    %v3181 = vpop.f32.mrb[0].mxu0
    %v3182 = vadd.f32 0.0, %v3181
    %v3183 = vpop.f32.mrb[0].mxu0
    %v3184 = vpop.f32.mrb[0].mxu0
    %v3185 = vpop.f32.mrb[0].mxu0
    %3186 = vdwg.mxu0
    %v3188 = vsel %vm470, %v3099, 0
    %3190 = vmatprep.subr.bf16.mxu0 0
    %3191 = vmatpush1.bf16.msra.mxu0 %v2452
    %3192 = vmatprep.subr.bf16.mxu0 0
    %3193 = vmatpush1.bf16.msra.mxu0 %v2453
    %3194 = vmatprep.subr.bf16.mxu0 0
    %3195 = vmatpush1.bf16.msra.mxu0 0
    %3196 = vmatprep.subr.bf16.mxu0 0
    %3197 = vmatpush1.bf16.msra.mxu0 0
    %3198 = vmatprep.subr.bf16.mxu0 0
    %3199 = vmatpush1.bf16.msra.mxu0 0
    %3200 = vmatprep.subr.bf16.mxu0 0
    %3201 = vmatpush1.bf16.msra.mxu0 0
    %3202 = vmatprep.subr.bf16.mxu0 0
    %3203 = vmatpush1.bf16.msra.mxu0 0
    %3204 = vmatprep.subr.bf16.mxu0 0
    %3205 = vmatpush1.bf16.msra.mxu0 0
    %3206 = vmatprep.subr.bf16.mxu0 0
    %3207 = vmatpush1.bf16.msra.mxu0 0
    %3208 = vmatprep.subr.bf16.mxu0 0
    %3209 = vmatpush1.bf16.msra.mxu0 0
    %3210 = vmatprep.subr.bf16.mxu0 0
    %3211 = vmatpush1.bf16.msra.mxu0 0
    %3212 = vmatprep.subr.bf16.mxu0 0
    %3213 = vmatpush1.bf16.msra.mxu0 0
    %3214 = vmatprep.subr.bf16.mxu0 0
    %3215 = vmatpush1.bf16.msra.mxu0 0
    %3216 = vmatprep.subr.bf16.mxu0 0
    %3217 = vmatpush1.bf16.msra.mxu0 0
    %3218 = vmatprep.subr.bf16.mxu0 0
    %3219 = vmatpush1.bf16.msra.mxu0 0
    %3220 = vmatprep.subr.bf16.mxu0 0
    %3221 = vmatpush1.bf16.msra.mxu0 0
    %3222 = vmatprep.mubr.bf16.mxu0 0
    %3223 = vmatmul.mubr.bf16.gmra.mrb[0].mxu0 %v3188
    %v3224 = vpop.f32.mrb[0].mxu0
    %v3225 = vadd.f32 0.0, %v3224
    %v3226 = vpop.f32.mrb[0].mxu0
    %v3227 = vpop.f32.mrb[0].mxu0
    %v3228 = vpop.f32.mrb[0].mxu0
    %3229 = vdwg.mxu0
    %v3231 = vsel %vm470, %v3100, 0
    %3233 = vmatprep.subr.bf16.mxu0 0
    %3234 = vmatpush1.bf16.msra.mxu0 %v2454
    %3235 = vmatprep.subr.bf16.mxu0 0
    %3236 = vmatpush1.bf16.msra.mxu0 %v2455
    %3237 = vmatprep.subr.bf16.mxu0 0
    %3238 = vmatpush1.bf16.msra.mxu0 0
    %3239 = vmatprep.subr.bf16.mxu0 0
    %3240 = vmatpush1.bf16.msra.mxu0 0
    %3241 = vmatprep.subr.bf16.mxu0 0
    %3242 = vmatpush1.bf16.msra.mxu0 0
    %3243 = vmatprep.subr.bf16.mxu0 0
    %3244 = vmatpush1.bf16.msra.mxu0 0
    %3245 = vmatprep.subr.bf16.mxu0 0
    %3246 = vmatpush1.bf16.msra.mxu0 0
    %3247 = vmatprep.subr.bf16.mxu0 0
    %3248 = vmatpush1.bf16.msra.mxu0 0
    %3249 = vmatprep.subr.bf16.mxu0 0
    %3250 = vmatpush1.bf16.msra.mxu0 0
    %3251 = vmatprep.subr.bf16.mxu0 0
    %3252 = vmatpush1.bf16.msra.mxu0 0
    %3253 = vmatprep.subr.bf16.mxu0 0
    %3254 = vmatpush1.bf16.msra.mxu0 0
    %3255 = vmatprep.subr.bf16.mxu0 0
    %3256 = vmatpush1.bf16.msra.mxu0 0
    %3257 = vmatprep.subr.bf16.mxu0 0
    %3258 = vmatpush1.bf16.msra.mxu0 0
    %3259 = vmatprep.subr.bf16.mxu0 0
    %3260 = vmatpush1.bf16.msra.mxu0 0
    %3261 = vmatprep.subr.bf16.mxu0 0
    %3262 = vmatpush1.bf16.msra.mxu0 0
    %3263 = vmatprep.subr.bf16.mxu0 0
    %3264 = vmatpush1.bf16.msra.mxu0 0
    %3265 = vmatprep.mubr.bf16.mxu0 0
    %3266 = vmatmul.mubr.bf16.gmra.mrb[0].mxu0 %v3231
    %v3267 = vpop.f32.mrb[0].mxu0
    %v3268 = vadd.f32 0.0, %v3267
    %v3269 = vpop.f32.mrb[0].mxu0
    %v3270 = vpop.f32.mrb[0].mxu0
    %v3271 = vpop.f32.mrb[0].mxu0
    %3272 = vdwg.mxu0
    %v3273 = vadd.f32 %v3139, %v3182
    %v3274 = vadd.f32 %v3273, %v3225
    %v3275 = vadd.f32 %v3274, %v3268
    %v3276 = vld [vmem:[%s13] sm:$0x1]
    %v3278 = vlaneseq
    %v3279 = vshrl.u32 %v3278, 7
    %v3280 = vsub.s32 0, %v3279
    %v3281 = vrot.slane %v3276, %v3280
    %v3283 = vadd.f32 %v2630, %v3281
    %v3284 = vadd.f32 %v3275, %v3281
    %v3285 = vadd.f32 %v1771, %v3283
    %v3286 = vadd.f32 %v1772, %v3284
    %v3287 = vld [vmem:[%s20] sm:$0x1]
    %v3288 = vld [vmem:[%s21] sm:$0x1]
    %3289 = vadd.xlane.f32.xlu0 %v3285
    %v3290 = vpop.xlane.xlu0 %3289
    %3291 = vadd.xlane.f32.xlu0 %v3286
    %v3292 = vpop.xlane.xlu0 %3291
    %v3293 = vmul.f32 %v3290, %v1734
    %v3294 = vmul.f32 %v3292, %v1734
    %v3295 = vmul.f32 %v3285, %v3285
    %v3296 = vmul.f32 %v3286, %v3286
    %3297 = vadd.xlane.f32.xlu0 %v3295
    %v3298 = vpop.xlane.xlu0 %3297
    %3299 = vadd.xlane.f32.xlu0 %v3296
    %v3300 = vpop.xlane.xlu0 %3299
    %v3301 = vmul.f32 %v3298, %v1734
    %v3302 = vmul.f32 %v3300, %v1734
    %v3303 = vmul.f32 %v3293, %v3293
    %v3304 = vmul.f32 %v3294, %v3294
    %v3305 = vsub.f32 %v3301, %v3303
    %v3306 = vsub.f32 %v3302, %v3304
    %v3307 = vsub.f32 %v3285, %v3293
    %v3308 = vsub.f32 %v3286, %v3294
    %v3309 = vadd.f32 %v3305, 1e-06
    %v3310 = vadd.f32 %v3306, 1e-06
    %v3311 = vrsqrt.pop %v3309
    %v3312 = vrsqrt.pop %v3310
    %v3313 = vmul.f32 %v3307, %v3311
    %v3314 = vmul.f32 %v3308, %v3312
    %v3316 = vlaneseq
    %v3317 = vshrl.u32 %v3316, 7
    %v3318 = vsub.s32 0, %v3317
    %v3319 = vrot.slane %v3287, %v3318
    %v3321 = vmul.f32 %v3313, %v3319
    %v3322 = vmul.f32 %v3314, %v3319
    %v3324 = vlaneseq
    %v3325 = vshrl.u32 %v3324, 7
    %v3326 = vsub.s32 0, %v3325
    %v3327 = vrot.slane %v3288, %v3326
    %v3329 = vadd.f32 %v3321, %v3327
    %v3330 = vadd.f32 %v3322, %v3327
    %v3331 = vld [vmem:[#allocation17] sm:$0xff]
    %v3332 = vld [vmem:[#allocation17 + $0x8] sm:$0xff]
    %v3333 = vld [vmem:[#allocation17 + $0x10] sm:$0xff]
    %v3334 = vld [vmem:[#allocation17 + $0x18] sm:$0xff]
    %v3335 = vld [vmem:[#allocation17 + $0x20] sm:$0xff]
    %v3336 = vld [vmem:[#allocation17 + $0x28] sm:$0xff]
    %v3337 = vld [vmem:[#allocation17 + $0x30] sm:$0xff]
    %v3338 = vld [vmem:[#allocation17 + $0x38] sm:$0xff]
    %v3339 = vld [vmem:[#allocation17 + $0x40] sm:$0xff]
    %v3340 = vld [vmem:[#allocation17 + $0x48] sm:$0xff]
    %v3341 = vld [vmem:[#allocation17 + $0x50] sm:$0xff]
    %v3342 = vld [vmem:[#allocation17 + $0x58] sm:$0xff]
    %v3343 = vld [vmem:[#allocation17 + $0x60] sm:$0xff]
    %v3344 = vld [vmem:[#allocation17 + $0x68] sm:$0xff]
    %v3345 = vld [vmem:[#allocation17 + $0x70] sm:$0xff]
    %v3346 = vld [vmem:[#allocation17 + $0x78] sm:$0xff]
    %v3347 = vpack.c.bf16 %v3330, %v3329
    %v3348 = vpack.c.bf16 %v3332, %v3331
    %v3349 = vpack.c.bf16 %v3334, %v3333
    %v3350 = vpack.c.bf16 %v3336, %v3335
    %v3351 = vpack.c.bf16 %v3338, %v3337
    %v3352 = vpack.c.bf16 %v3340, %v3339
    %v3353 = vpack.c.bf16 %v3342, %v3341
    %v3354 = vpack.c.bf16 %v3344, %v3343
    %v3355 = vpack.c.bf16 %v3346, %v3345
    %v3356 = vld [vmem:[%s15] sm:$0x1]
    %v3358 = vlaneseq
    %v3359 = vshrl.u32 %v3358, 7
    %v3360 = vsub.s32 0, %v3359
    %v3361 = vrot.slane %v3356, %v3360
    %3363 = vmatprep.subr.bf16.mxu0 0
    %3364 = vmatpush1.bf16.msra.mxu0 %v3348
    %3365 = vmatprep.subr.bf16.mxu0 0
    %3366 = vmatpush1.bf16.msra.mxu0 %v3349
    %3367 = vmatprep.subr.bf16.mxu0 0
    %3368 = vmatpush1.bf16.msra.mxu0 %v3350
    %3369 = vmatprep.subr.bf16.mxu0 0
    %3370 = vmatpush1.bf16.msra.mxu0 %v3351
    %3371 = vmatprep.subr.bf16.mxu0 0
    %3372 = vmatpush1.bf16.msra.mxu0 %v3352
    %3373 = vmatprep.subr.bf16.mxu0 0
    %3374 = vmatpush1.bf16.msra.mxu0 %v3353
    %3375 = vmatprep.subr.bf16.mxu0 0
    %3376 = vmatpush1.bf16.msra.mxu0 %v3354
    %3377 = vmatprep.subr.bf16.mxu0 0
    %3378 = vmatpush1.bf16.msra.mxu0 %v3355
    %3379 = vmatprep.subr.bf16.mxu0 0
    %3380 = vmatpush1.bf16.msra.mxu0 0
    %3381 = vmatprep.subr.bf16.mxu0 0
    %3382 = vmatpush1.bf16.msra.mxu0 0
    %3383 = vmatprep.subr.bf16.mxu0 0
    %3384 = vmatpush1.bf16.msra.mxu0 0
    %3385 = vmatprep.subr.bf16.mxu0 0
    %3386 = vmatpush1.bf16.msra.mxu0 0
    %3387 = vmatprep.subr.bf16.mxu0 0
    %3388 = vmatpush1.bf16.msra.mxu0 0
    %3389 = vmatprep.subr.bf16.mxu0 0
    %3390 = vmatpush1.bf16.msra.mxu0 0
    %3391 = vmatprep.subr.bf16.mxu0 0
    %3392 = vmatpush1.bf16.msra.mxu0 0
    %3393 = vmatprep.subr.bf16.mxu0 0
    %3394 = vmatpush1.bf16.msra.mxu0 0
    %3395 = vmatprep.mubr.bf16.mxu0 0
    %3396 = vmatmul.mubr.bf16.gmra.mrb[0].mxu0 %v3347
    %v3397 = vpop.f32.mrb[0].mxu0
    %v3398 = vadd.f32 %v3361, %v3397
    %v3399 = vpop.f32.mrb[0].mxu0
    %v3400 = vpop.f32.mrb[0].mxu0
    %v3401 = vadd.f32 %v3361, %v3400
    %v3402 = vpop.f32.mrb[0].mxu0
    %3403 = vdwg.mxu0
    %v3404 = vmax.f32 %v3398, 0.0
    %v3405 = vmax.f32 %v3401, 0.0
    %v3406 = vld [vmem:[#allocation19] sm:$0xff]
    %v3407 = vld [vmem:[#allocation19 + $0x8] sm:$0xff]
    %v3408 = vld [vmem:[#allocation19 + $0x10] sm:$0xff]
    %v3409 = vld [vmem:[#allocation19 + $0x18] sm:$0xff]
    %v3410 = vld [vmem:[#allocation19 + $0x20] sm:$0xff]
    %v3411 = vld [vmem:[#allocation19 + $0x28] sm:$0xff]
    %v3412 = vld [vmem:[#allocation19 + $0x30] sm:$0xff]
    %v3413 = vld [vmem:[#allocation19 + $0x38] sm:$0xff]
    %v3414 = vld [vmem:[#allocation19 + $0x40] sm:$0xff]
    %v3415 = vld [vmem:[#allocation19 + $0x48] sm:$0xff]
    %v3416 = vld [vmem:[#allocation19 + $0x50] sm:$0xff]
    %v3417 = vld [vmem:[#allocation19 + $0x58] sm:$0xff]
    %v3418 = vld [vmem:[#allocation19 + $0x60] sm:$0xff]
    %v3419 = vld [vmem:[#allocation19 + $0x68] sm:$0xff]
    %v3420 = vld [vmem:[#allocation19 + $0x70] sm:$0xff]
    %v3421 = vld [vmem:[#allocation19 + $0x78] sm:$0xff]
    %v3422 = vpack.c.bf16 %v3405, %v3404
    %v3423 = vpack.c.bf16 %v3407, %v3406
    %v3424 = vpack.c.bf16 %v3409, %v3408
    %v3425 = vpack.c.bf16 %v3411, %v3410
    %v3426 = vpack.c.bf16 %v3413, %v3412
    %v3427 = vpack.c.bf16 %v3415, %v3414
    %v3428 = vpack.c.bf16 %v3417, %v3416
    %v3429 = vpack.c.bf16 %v3419, %v3418
    %v3430 = vpack.c.bf16 %v3421, %v3420
    %v3431 = vld [vmem:[%s17] sm:$0x1]
    %v3433 = vlaneseq
    %v3434 = vshrl.u32 %v3433, 7
    %v3435 = vsub.s32 0, %v3434
    %v3436 = vrot.slane %v3431, %v3435
    %3438 = vmatprep.subr.bf16.mxu0 0
    %3439 = vmatpush1.bf16.msra.mxu0 %v3423
    %3440 = vmatprep.subr.bf16.mxu0 0
    %3441 = vmatpush1.bf16.msra.mxu0 %v3424
    %3442 = vmatprep.subr.bf16.mxu0 0
    %3443 = vmatpush1.bf16.msra.mxu0 %v3425
    %3444 = vmatprep.subr.bf16.mxu0 0
    %3445 = vmatpush1.bf16.msra.mxu0 %v3426
    %3446 = vmatprep.subr.bf16.mxu0 0
    %3447 = vmatpush1.bf16.msra.mxu0 %v3427
    %3448 = vmatprep.subr.bf16.mxu0 0
    %3449 = vmatpush1.bf16.msra.mxu0 %v3428
    %3450 = vmatprep.subr.bf16.mxu0 0
    %3451 = vmatpush1.bf16.msra.mxu0 %v3429
    %3452 = vmatprep.subr.bf16.mxu0 0
    %3453 = vmatpush1.bf16.msra.mxu0 %v3430
    %3454 = vmatprep.subr.bf16.mxu0 0
    %3455 = vmatpush1.bf16.msra.mxu0 0
    %3456 = vmatprep.subr.bf16.mxu0 0
    %3457 = vmatpush1.bf16.msra.mxu0 0
    %3458 = vmatprep.subr.bf16.mxu0 0
    %3459 = vmatpush1.bf16.msra.mxu0 0
    %3460 = vmatprep.subr.bf16.mxu0 0
    %3461 = vmatpush1.bf16.msra.mxu0 0
    %3462 = vmatprep.subr.bf16.mxu0 0
    %3463 = vmatpush1.bf16.msra.mxu0 0
    %3464 = vmatprep.subr.bf16.mxu0 0
    %3465 = vmatpush1.bf16.msra.mxu0 0
    %3466 = vmatprep.subr.bf16.mxu0 0
    %3467 = vmatpush1.bf16.msra.mxu0 0
    %3468 = vmatprep.subr.bf16.mxu0 0
    %3469 = vmatpush1.bf16.msra.mxu0 0
    %3470 = vmatprep.mubr.bf16.mxu0 0
    %3471 = vmatmul.mubr.bf16.gmra.mrb[0].mxu0 %v3422
    %v3472 = vpop.f32.mrb[0].mxu0
    %v3473 = vadd.f32 %v3436, %v3472
    %v3474 = vpop.f32.mrb[0].mxu0
    %v3475 = vpop.f32.mrb[0].mxu0
    %v3476 = vadd.f32 %v3436, %v3475
    %v3477 = vpop.f32.mrb[0].mxu0
    %3478 = vdwg.mxu0
    %v3479 = vadd.f32 %v3329, %v3473
    %v3480 = vadd.f32 %v3330, %v3476
    %v3481 = vld [vmem:[%s22] sm:$0x1]
    %v3482 = vld [vmem:[%s23] sm:$0x1]
    %3483 = vadd.xlane.f32.xlu0 %v3479
    %v3484 = vpop.xlane.xlu0 %3483
    %3485 = vadd.xlane.f32.xlu0 %v3480
    %v3486 = vpop.xlane.xlu0 %3485
    %v3487 = vmul.f32 %v3484, %v1734
    %v3488 = vmul.f32 %v3486, %v1734
    %v3489 = vmul.f32 %v3479, %v3479
    %v3490 = vmul.f32 %v3480, %v3480
    %3491 = vadd.xlane.f32.xlu0 %v3489
    %v3492 = vpop.xlane.xlu0 %3491
    %3493 = vadd.xlane.f32.xlu0 %v3490
    %v3494 = vpop.xlane.xlu0 %3493
    %v3495 = vmul.f32 %v3492, %v1734
    %v3496 = vmul.f32 %v3494, %v1734
    %v3497 = vmul.f32 %v3487, %v3487
    %v3498 = vmul.f32 %v3488, %v3488
    %v3499 = vsub.f32 %v3495, %v3497
    %v3500 = vsub.f32 %v3496, %v3498
    %v3501 = vsub.f32 %v3479, %v3487
    %v3502 = vsub.f32 %v3480, %v3488
    %v3503 = vadd.f32 %v3499, 1e-06
    %v3504 = vadd.f32 %v3500, 1e-06
    %v3505 = vrsqrt.pop %v3503
    %v3506 = vrsqrt.pop %v3504
    %v3507 = vmul.f32 %v3501, %v3505
    %v3508 = vmul.f32 %v3502, %v3506
    %v3510 = vlaneseq
    %v3511 = vshrl.u32 %v3510, 7
    %v3512 = vsub.s32 0, %v3511
    %v3513 = vrot.slane %v3481, %v3512
    %v3515 = vmul.f32 %v3507, %v3513
    %v3516 = vmul.f32 %v3508, %v3513
    %v3518 = vlaneseq
    %v3519 = vshrl.u32 %v3518, 7
    %v3520 = vsub.s32 0, %v3519
    %v3521 = vrot.slane %v3482, %v3520
    %v3523 = vadd.f32 %v3515, %v3521
    %v3524 = vadd.f32 %v3516, %v3521
    %s3525 = scalar_lea.vmem [#allocation10], 384
    %v3526 = vld [vmem:[%s3525] sm:$0xff]
    %v3527 = vld [vmem:[%s3525 + $0x8] sm:$0xff]
    %v3528 = vld [vmem:[%s3525 + $0x10] sm:$0xff]
    %v3529 = vld [vmem:[%s3525 + $0x18] sm:$0xff]
    %v3530 = vld [vmem:[%s3525 + $0x20] sm:$0xff]
    %v3531 = vld [vmem:[%s3525 + $0x28] sm:$0xff]
    %v3532 = vld [vmem:[%s3525 + $0x30] sm:$0xff]
    %v3533 = vld [vmem:[%s3525 + $0x38] sm:$0xff]
    %v3534 = vld [vmem:[%s3525 + $0x40] sm:$0xff]
    %v3535 = vld [vmem:[%s3525 + $0x48] sm:$0xff]
    %v3536 = vld [vmem:[%s3525 + $0x50] sm:$0xff]
    %v3537 = vld [vmem:[%s3525 + $0x58] sm:$0xff]
    %v3538 = vld [vmem:[%s3525 + $0x60] sm:$0xff]
    %v3539 = vld [vmem:[%s3525 + $0x68] sm:$0xff]
    %v3540 = vld [vmem:[%s3525 + $0x70] sm:$0xff]
    %v3541 = vld [vmem:[%s3525 + $0x78] sm:$0xff]
    %v3542 = vld [vmem:[%s3525 + $0x80] sm:$0xff]
    %v3543 = vld [vmem:[%s3525 + $0x88] sm:$0xff]
    %v3544 = vld [vmem:[%s3525 + $0x90] sm:$0xff]
    %v3545 = vld [vmem:[%s3525 + $0x98] sm:$0xff]
    %v3546 = vld [vmem:[%s3525 + $0xa0] sm:$0xff]
    %v3547 = vld [vmem:[%s3525 + $0xa8] sm:$0xff]
    %v3548 = vld [vmem:[%s3525 + $0xb0] sm:$0xff]
    %v3549 = vld [vmem:[%s3525 + $0xb8] sm:$0xff]
    %v3550 = vld [vmem:[%s3525 + $0xc0] sm:$0xff]
    %v3551 = vld [vmem:[%s3525 + $0xc8] sm:$0xff]
    %v3552 = vld [vmem:[%s3525 + $0xd0] sm:$0xff]
    %v3553 = vld [vmem:[%s3525 + $0xd8] sm:$0xff]
    %v3554 = vld [vmem:[%s3525 + $0xe0] sm:$0xff]
    %v3555 = vld [vmem:[%s3525 + $0xe8] sm:$0xff]
    %v3556 = vld [vmem:[%s3525 + $0xf0] sm:$0xff]
    %v3557 = vld [vmem:[%s3525 + $0xf8] sm:$0xff]
    %v3558 = vld [vmem:[%s3525 + $0x100] sm:$0xff]
    %v3559 = vld [vmem:[%s3525 + $0x108] sm:$0xff]
    %v3560 = vld [vmem:[%s3525 + $0x110] sm:$0xff]
    %v3561 = vld [vmem:[%s3525 + $0x118] sm:$0xff]
    %v3562 = vld [vmem:[%s3525 + $0x120] sm:$0xff]
    %v3563 = vld [vmem:[%s3525 + $0x128] sm:$0xff]
    %v3564 = vld [vmem:[%s3525 + $0x130] sm:$0xff]
    %v3565 = vld [vmem:[%s3525 + $0x138] sm:$0xff]
    %v3566 = vld [vmem:[%s3525 + $0x140] sm:$0xff]
    %v3567 = vld [vmem:[%s3525 + $0x148] sm:$0xff]
    %v3568 = vld [vmem:[%s3525 + $0x150] sm:$0xff]
    %v3569 = vld [vmem:[%s3525 + $0x158] sm:$0xff]
    %v3570 = vld [vmem:[%s3525 + $0x160] sm:$0xff]
    %v3571 = vld [vmem:[%s3525 + $0x168] sm:$0xff]
    %v3572 = vld [vmem:[%s3525 + $0x170] sm:$0xff]
    %v3573 = vld [vmem:[%s3525 + $0x178] sm:$0xff]
    %v3574 = vpack.c.bf16 %v3524, %v3523
    %v3575 = vpack.c.bf16 %v3529, %v3526
    %v3576 = vpack.c.bf16 %v3530, %v3527
    %v3577 = vpack.c.bf16 %v3531, %v3528
    %v3578 = vpack.c.bf16 %v3535, %v3532
    %v3579 = vpack.c.bf16 %v3536, %v3533
    %v3580 = vpack.c.bf16 %v3537, %v3534
    %v3581 = vpack.c.bf16 %v3541, %v3538
    %v3582 = vpack.c.bf16 %v3542, %v3539
    %v3583 = vpack.c.bf16 %v3543, %v3540
    %v3584 = vpack.c.bf16 %v3547, %v3544
    %v3585 = vpack.c.bf16 %v3548, %v3545
    %v3586 = vpack.c.bf16 %v3549, %v3546
    %v3587 = vpack.c.bf16 %v3553, %v3550
    %v3588 = vpack.c.bf16 %v3554, %v3551
    %v3589 = vpack.c.bf16 %v3555, %v3552
    %v3590 = vpack.c.bf16 %v3559, %v3556
    %v3591 = vpack.c.bf16 %v3560, %v3557
    %v3592 = vpack.c.bf16 %v3561, %v3558
    %v3593 = vpack.c.bf16 %v3565, %v3562
    %v3594 = vpack.c.bf16 %v3566, %v3563
    %v3595 = vpack.c.bf16 %v3567, %v3564
    %v3596 = vpack.c.bf16 %v3571, %v3568
    %v3597 = vpack.c.bf16 %v3572, %v3569
    %v3598 = vpack.c.bf16 %v3573, %v3570
    %s3599 = scalar_lea.vmem %s5, 3
    %v3600 = vld [vmem:[%s3599] sm:$0x7]
    %v3602 = vlaneseq
    %v3603 = vshrl.u32 %v3602, 7
    %v3604 = vsub.s32 0, %v3603
    %v3605 = vrot.slane %v3600, %v3604
    %v3606 = vlaneseq
    %v3607 = vshrl.u32 %v3606, 7
    %v3608 = vsub.s32 1, %v3607
    %v3609 = vrot.slane %v3600, %v3608
    %v3610 = vlaneseq
    %v3611 = vshrl.u32 %v3610, 7
    %v3612 = vsub.s32 2, %v3611
    %v3613 = vrot.slane %v3600, %v3612
    %3617 = vmatprep.subr.bf16.mxu0 %v3576
    %3618 = vmatpush1.bf16.msra.mxu0 %v3575
    %3619 = vmatprep.subr.bf16.mxu0 %v3579
    %3620 = vmatpush1.bf16.msra.mxu0 %v3578
    %3621 = vmatprep.subr.bf16.mxu0 %v3582
    %3622 = vmatpush1.bf16.msra.mxu0 %v3581
    %3623 = vmatprep.subr.bf16.mxu0 %v3585
    %3624 = vmatpush1.bf16.msra.mxu0 %v3584
    %3625 = vmatprep.subr.bf16.mxu0 %v3588
    %3626 = vmatpush1.bf16.msra.mxu0 %v3587
    %3627 = vmatprep.subr.bf16.mxu0 %v3591
    %3628 = vmatpush1.bf16.msra.mxu0 %v3590
    %3629 = vmatprep.subr.bf16.mxu0 %v3594
    %3630 = vmatpush1.bf16.msra.mxu0 %v3593
    %3631 = vmatprep.subr.bf16.mxu0 %v3597
    %3632 = vmatpush1.bf16.msra.mxu0 %v3596
    %3633 = vmatprep.subr.bf16.mxu0 0
    %3634 = vmatpush1.bf16.msra.mxu0 0
    %3635 = vmatprep.subr.bf16.mxu0 0
    %3636 = vmatpush1.bf16.msra.mxu0 0
    %3637 = vmatprep.subr.bf16.mxu0 0
    %3638 = vmatpush1.bf16.msra.mxu0 0
    %3639 = vmatprep.subr.bf16.mxu0 0
    %3640 = vmatpush1.bf16.msra.mxu0 0
    %3641 = vmatprep.subr.bf16.mxu0 0
    %3642 = vmatpush1.bf16.msra.mxu0 0
    %3643 = vmatprep.subr.bf16.mxu0 0
    %3644 = vmatpush1.bf16.msra.mxu0 0
    %3645 = vmatprep.subr.bf16.mxu0 0
    %3646 = vmatpush1.bf16.msra.mxu0 0
    %3647 = vmatprep.subr.bf16.mxu0 0
    %3648 = vmatpush1.bf16.msra.mxu0 0
    %3649 = vmatprep.mubr.bf16.mxu0 0
    %3650 = vmatmul.mubr.bf16.gmra.mrb[0].mxu0 %v3574
    %v3651 = vpop.f32.mrb[0].mxu0
    %v3652 = vadd.f32 %v3605, %v3651
    %v3653 = vpop.f32.mrb[0].mxu0
    %v3654 = vadd.f32 %v3609, %v3653
    %v3655 = vpop.f32.mrb[0].mxu0
    %v3656 = vadd.f32 %v3605, %v3655
    %v3657 = vpop.f32.mrb[0].mxu0
    %v3658 = vadd.f32 %v3609, %v3657
    %3659 = vdwg.mxu0
    %3660 = vmatprep.subr.bf16.mxu0 0
    %3661 = vmatpush1.bf16.msra.mxu0 %v3577
    %3662 = vmatprep.subr.bf16.mxu0 0
    %3663 = vmatpush1.bf16.msra.mxu0 %v3580
    %3664 = vmatprep.subr.bf16.mxu0 0
    %3665 = vmatpush1.bf16.msra.mxu0 %v3583
    %3666 = vmatprep.subr.bf16.mxu0 0
    %3667 = vmatpush1.bf16.msra.mxu0 %v3586
    %3668 = vmatprep.subr.bf16.mxu0 0
    %3669 = vmatpush1.bf16.msra.mxu0 %v3589
    %3670 = vmatprep.subr.bf16.mxu0 0
    %3671 = vmatpush1.bf16.msra.mxu0 %v3592
    %3672 = vmatprep.subr.bf16.mxu0 0
    %3673 = vmatpush1.bf16.msra.mxu0 %v3595
    %3674 = vmatprep.subr.bf16.mxu0 0
    %3675 = vmatpush1.bf16.msra.mxu0 %v3598
    %3676 = vmatprep.subr.bf16.mxu0 0
    %3677 = vmatpush1.bf16.msra.mxu0 0
    %3678 = vmatprep.subr.bf16.mxu0 0
    %3679 = vmatpush1.bf16.msra.mxu0 0
    %3680 = vmatprep.subr.bf16.mxu0 0
    %3681 = vmatpush1.bf16.msra.mxu0 0
    %3682 = vmatprep.subr.bf16.mxu0 0
    %3683 = vmatpush1.bf16.msra.mxu0 0
    %3684 = vmatprep.subr.bf16.mxu0 0
    %3685 = vmatpush1.bf16.msra.mxu0 0
    %3686 = vmatprep.subr.bf16.mxu0 0
    %3687 = vmatpush1.bf16.msra.mxu0 0
    %3688 = vmatprep.subr.bf16.mxu0 0
    %3689 = vmatpush1.bf16.msra.mxu0 0
    %3690 = vmatprep.subr.bf16.mxu0 0
    %3691 = vmatpush1.bf16.msra.mxu0 0
    %3692 = vmatprep.mubr.bf16.mxu0 0
    %3693 = vmatmul.mubr.bf16.gmra.mrb[0].mxu0 %v3574
    %v3694 = vpop.f32.mrb[0].mxu0
    %v3695 = vadd.f32 %v3613, %v3694
    %v3696 = vpop.f32.mrb[0].mxu0
    %v3697 = vpop.f32.mrb[0].mxu0
    %v3698 = vadd.f32 %v3613, %v3697
    %v3699 = vpop.f32.mrb[0].mxu0
    %3700 = vdwg.mxu0
    %s3701 = scalar_lea.vmem [#allocation11], 128
    %v3702 = vld [vmem:[%s3701] sm:$0xff]
    %v3703 = vld [vmem:[%s3701 + $0x8] sm:$0xff]
    %v3704 = vld [vmem:[%s3701 + $0x10] sm:$0xff]
    %v3705 = vld [vmem:[%s3701 + $0x18] sm:$0xff]
    %v3706 = vld [vmem:[%s3701 + $0x20] sm:$0xff]
    %v3707 = vld [vmem:[%s3701 + $0x28] sm:$0xff]
    %v3708 = vld [vmem:[%s3701 + $0x30] sm:$0xff]
    %v3709 = vld [vmem:[%s3701 + $0x38] sm:$0xff]
    %v3710 = vld [vmem:[%s3701 + $0x40] sm:$0xff]
    %v3711 = vld [vmem:[%s3701 + $0x48] sm:$0xff]
    %v3712 = vld [vmem:[%s3701 + $0x50] sm:$0xff]
    %v3713 = vld [vmem:[%s3701 + $0x58] sm:$0xff]
    %v3714 = vld [vmem:[%s3701 + $0x60] sm:$0xff]
    %v3715 = vld [vmem:[%s3701 + $0x68] sm:$0xff]
    %v3716 = vld [vmem:[%s3701 + $0x70] sm:$0xff]
    %v3717 = vld [vmem:[%s3701 + $0x78] sm:$0xff]
    %3719 = vrot.lane.b32.xlu0 %v3652, 96
    %v3720 = vpop.permute.xlu0 %3719
    %3722 = vrot.lane.b32.xlu0 %v3652, 64
    %v3723 = vpop.permute.xlu0 %3722
    %3725 = vrot.lane.b32.xlu0 %v3652, 32
    %v3726 = vpop.permute.xlu0 %3725
    %3729 = vrot.lane.b32.xlu0 %v3654, 96
    %v3730 = vpop.permute.xlu0 %3729
    %3732 = vrot.lane.b32.xlu0 %v3654, 64
    %v3733 = vpop.permute.xlu0 %3732
    %3735 = vrot.lane.b32.xlu0 %v3654, 32
    %v3736 = vpop.permute.xlu0 %3735
    %3739 = vrot.lane.b32.xlu0 %v3695, 96
    %v3740 = vpop.permute.xlu0 %3739
    %3742 = vrot.lane.b32.xlu0 %v3695, 64
    %v3743 = vpop.permute.xlu0 %3742
    %3745 = vrot.lane.b32.xlu0 %v3695, 32
    %v3746 = vpop.permute.xlu0 %3745
    %v3748 = vpack.c.bf16 %v3652, %v3652
    %v3749 = vpack.c.bf16 %v3720, %v3720
    %v3750 = vpack.c.bf16 %v3723, %v3723
    %v3751 = vpack.c.bf16 %v3726, %v3726
    %v3752 = vpack.c.bf16 %v3654, %v3654
    %v3753 = vpack.c.bf16 %v3730, %v3730
    %v3754 = vpack.c.bf16 %v3733, %v3733
    %v3755 = vpack.c.bf16 %v3736, %v3736
    %v3757 = vsel %vm470, %v3748, 0
    %v3760 = vsel %vm470, %v3752, 0
    %3762 = vmatprep.subr.bf16.mxu0 0
    %3763 = vmatpush1.bf16.xpose.msra.mxu0 %v3760
    %3764 = vmatprep.subr.bf16.mxu0 0
    %3765 = vmatpush1.bf16.xpose.msra.mxu0 0
    %3766 = vmatprep.subr.bf16.mxu0 0
    %3767 = vmatpush1.bf16.xpose.msra.mxu0 0
    %3768 = vmatprep.subr.bf16.mxu0 0
    %3769 = vmatpush1.bf16.xpose.msra.mxu0 0
    %3770 = vmatprep.subr.bf16.mxu0 0
    %3771 = vmatpush1.bf16.xpose.msra.mxu0 0
    %3772 = vmatprep.subr.bf16.mxu0 0
    %3773 = vmatpush1.bf16.xpose.msra.mxu0 0
    %3774 = vmatprep.subr.bf16.mxu0 0
    %3775 = vmatpush1.bf16.xpose.msra.mxu0 0
    %3776 = vmatprep.subr.bf16.mxu0 0
    %3777 = vmatpush1.bf16.xpose.msra.mxu0 0
    %3778 = vmatprep.subr.bf16.mxu0 0
    %3779 = vmatpush1.bf16.xpose.msra.mxu0 0
    %3780 = vmatprep.subr.bf16.mxu0 0
    %3781 = vmatpush1.bf16.xpose.msra.mxu0 0
    %3782 = vmatprep.subr.bf16.mxu0 0
    %3783 = vmatpush1.bf16.xpose.msra.mxu0 0
    %3784 = vmatprep.subr.bf16.mxu0 0
    %3785 = vmatpush1.bf16.xpose.msra.mxu0 0
    %3786 = vmatprep.subr.bf16.mxu0 0
    %3787 = vmatpush1.bf16.xpose.msra.mxu0 0
    %3788 = vmatprep.subr.bf16.mxu0 0
    %3789 = vmatpush1.bf16.xpose.msra.mxu0 0
    %3790 = vmatprep.subr.bf16.mxu0 0
    %3791 = vmatpush1.bf16.xpose.msra.mxu0 0
    %3792 = vmatprep.subr.bf16.mxu0 0
    %3793 = vmatpush1.bf16.xpose.msra.mxu0 0
    %3794 = vmatprep.mubr.bf16.mxu0 0
    %3795 = vmatmul.mubr.bf16.gmra.mrb[0].mxu0 %v3757
    %v3796 = vpop.f32.mrb[0].mxu0
    %v3797 = vadd.f32 %v236, %v3796
    %v3798 = vpop.f32.mrb[0].mxu0
    %v3799 = vpop.f32.mrb[0].mxu0
    %v3800 = vpop.f32.mrb[0].mxu0
    %3801 = vdwg.mxu0
    %v3803 = vsel %vm470, %v3749, 0
    %v3806 = vsel %vm470, %v3753, 0
    %3808 = vmatprep.subr.bf16.mxu0 0
    %3809 = vmatpush1.bf16.xpose.msra.mxu0 %v3806
    %3810 = vmatprep.subr.bf16.mxu0 0
    %3811 = vmatpush1.bf16.xpose.msra.mxu0 0
    %3812 = vmatprep.subr.bf16.mxu0 0
    %3813 = vmatpush1.bf16.xpose.msra.mxu0 0
    %3814 = vmatprep.subr.bf16.mxu0 0
    %3815 = vmatpush1.bf16.xpose.msra.mxu0 0
    %3816 = vmatprep.subr.bf16.mxu0 0
    %3817 = vmatpush1.bf16.xpose.msra.mxu0 0
    %3818 = vmatprep.subr.bf16.mxu0 0
    %3819 = vmatpush1.bf16.xpose.msra.mxu0 0
    %3820 = vmatprep.subr.bf16.mxu0 0
    %3821 = vmatpush1.bf16.xpose.msra.mxu0 0
    %3822 = vmatprep.subr.bf16.mxu0 0
    %3823 = vmatpush1.bf16.xpose.msra.mxu0 0
    %3824 = vmatprep.subr.bf16.mxu0 0
    %3825 = vmatpush1.bf16.xpose.msra.mxu0 0
    %3826 = vmatprep.subr.bf16.mxu0 0
    %3827 = vmatpush1.bf16.xpose.msra.mxu0 0
    %3828 = vmatprep.subr.bf16.mxu0 0
    %3829 = vmatpush1.bf16.xpose.msra.mxu0 0
    %3830 = vmatprep.subr.bf16.mxu0 0
    %3831 = vmatpush1.bf16.xpose.msra.mxu0 0
    %3832 = vmatprep.subr.bf16.mxu0 0
    %3833 = vmatpush1.bf16.xpose.msra.mxu0 0
    %3834 = vmatprep.subr.bf16.mxu0 0
    %3835 = vmatpush1.bf16.xpose.msra.mxu0 0
    %3836 = vmatprep.subr.bf16.mxu0 0
    %3837 = vmatpush1.bf16.xpose.msra.mxu0 0
    %3838 = vmatprep.subr.bf16.mxu0 0
    %3839 = vmatpush1.bf16.xpose.msra.mxu0 0
    %3840 = vmatprep.mubr.bf16.mxu0 0
    %3841 = vmatmul.mubr.bf16.gmra.mrb[0].mxu0 %v3803
    %v3842 = vpop.f32.mrb[0].mxu0
    %v3843 = vadd.f32 %v236, %v3842
    %v3844 = vpop.f32.mrb[0].mxu0
    %v3845 = vpop.f32.mrb[0].mxu0
    %v3846 = vpop.f32.mrb[0].mxu0
    %3847 = vdwg.mxu0
    %v3849 = vsel %vm470, %v3750, 0
    %v3852 = vsel %vm470, %v3754, 0
    %3854 = vmatprep.subr.bf16.mxu0 0
    %3855 = vmatpush1.bf16.xpose.msra.mxu0 %v3852
    %3856 = vmatprep.subr.bf16.mxu0 0
    %3857 = vmatpush1.bf16.xpose.msra.mxu0 0
    %3858 = vmatprep.subr.bf16.mxu0 0
    %3859 = vmatpush1.bf16.xpose.msra.mxu0 0
    %3860 = vmatprep.subr.bf16.mxu0 0
    %3861 = vmatpush1.bf16.xpose.msra.mxu0 0
    %3862 = vmatprep.subr.bf16.mxu0 0
    %3863 = vmatpush1.bf16.xpose.msra.mxu0 0
    %3864 = vmatprep.subr.bf16.mxu0 0
    %3865 = vmatpush1.bf16.xpose.msra.mxu0 0
    %3866 = vmatprep.subr.bf16.mxu0 0
    %3867 = vmatpush1.bf16.xpose.msra.mxu0 0
    %3868 = vmatprep.subr.bf16.mxu0 0
    %3869 = vmatpush1.bf16.xpose.msra.mxu0 0
    %3870 = vmatprep.subr.bf16.mxu0 0
    %3871 = vmatpush1.bf16.xpose.msra.mxu0 0
    %3872 = vmatprep.subr.bf16.mxu0 0
    %3873 = vmatpush1.bf16.xpose.msra.mxu0 0
    %3874 = vmatprep.subr.bf16.mxu0 0
    %3875 = vmatpush1.bf16.xpose.msra.mxu0 0
    %3876 = vmatprep.subr.bf16.mxu0 0
    %3877 = vmatpush1.bf16.xpose.msra.mxu0 0
    %3878 = vmatprep.subr.bf16.mxu0 0
    %3879 = vmatpush1.bf16.xpose.msra.mxu0 0
    %3880 = vmatprep.subr.bf16.mxu0 0
    %3881 = vmatpush1.bf16.xpose.msra.mxu0 0
    %3882 = vmatprep.subr.bf16.mxu0 0
    %3883 = vmatpush1.bf16.xpose.msra.mxu0 0
    %3884 = vmatprep.subr.bf16.mxu0 0
    %3885 = vmatpush1.bf16.xpose.msra.mxu0 0
    %3886 = vmatprep.mubr.bf16.mxu0 0
    %3887 = vmatmul.mubr.bf16.gmra.mrb[0].mxu0 %v3849
    %v3888 = vpop.f32.mrb[0].mxu0
    %v3889 = vadd.f32 %v236, %v3888
    %v3890 = vpop.f32.mrb[0].mxu0
    %v3891 = vpop.f32.mrb[0].mxu0
    %v3892 = vpop.f32.mrb[0].mxu0
    %3893 = vdwg.mxu0
    %v3895 = vsel %vm470, %v3751, 0
    %v3898 = vsel %vm470, %v3755, 0
    %3900 = vmatprep.subr.bf16.mxu0 0
    %3901 = vmatpush1.bf16.xpose.msra.mxu0 %v3898
    %3902 = vmatprep.subr.bf16.mxu0 0
    %3903 = vmatpush1.bf16.xpose.msra.mxu0 0
    %3904 = vmatprep.subr.bf16.mxu0 0
    %3905 = vmatpush1.bf16.xpose.msra.mxu0 0
    %3906 = vmatprep.subr.bf16.mxu0 0
    %3907 = vmatpush1.bf16.xpose.msra.mxu0 0
    %3908 = vmatprep.subr.bf16.mxu0 0
    %3909 = vmatpush1.bf16.xpose.msra.mxu0 0
    %3910 = vmatprep.subr.bf16.mxu0 0
    %3911 = vmatpush1.bf16.xpose.msra.mxu0 0
    %3912 = vmatprep.subr.bf16.mxu0 0
    %3913 = vmatpush1.bf16.xpose.msra.mxu0 0
    %3914 = vmatprep.subr.bf16.mxu0 0
    %3915 = vmatpush1.bf16.xpose.msra.mxu0 0
    %3916 = vmatprep.subr.bf16.mxu0 0
    %3917 = vmatpush1.bf16.xpose.msra.mxu0 0
    %3918 = vmatprep.subr.bf16.mxu0 0
    %3919 = vmatpush1.bf16.xpose.msra.mxu0 0
    %3920 = vmatprep.subr.bf16.mxu0 0
    %3921 = vmatpush1.bf16.xpose.msra.mxu0 0
    %3922 = vmatprep.subr.bf16.mxu0 0
    %3923 = vmatpush1.bf16.xpose.msra.mxu0 0
    %3924 = vmatprep.subr.bf16.mxu0 0
    %3925 = vmatpush1.bf16.xpose.msra.mxu0 0
    %3926 = vmatprep.subr.bf16.mxu0 0
    %3927 = vmatpush1.bf16.xpose.msra.mxu0 0
    %3928 = vmatprep.subr.bf16.mxu0 0
    %3929 = vmatpush1.bf16.xpose.msra.mxu0 0
    %3930 = vmatprep.subr.bf16.mxu0 0
    %3931 = vmatpush1.bf16.xpose.msra.mxu0 0
    %3932 = vmatprep.mubr.bf16.mxu0 0
    %3933 = vmatmul.mubr.bf16.gmra.mrb[0].mxu0 %v3895
    %v3934 = vpop.f32.mrb[0].mxu0
    %v3935 = vadd.f32 %v236, %v3934
    %v3936 = vpop.f32.mrb[0].mxu0
    %v3937 = vpop.f32.mrb[0].mxu0
    %v3938 = vpop.f32.mrb[0].mxu0
    %3939 = vdwg.mxu0
    %v3940 = vsel %vm655, %v3797, -inf
    %3941 = vmax.xlane.f32.xlu0 %v3940
    %v3942 = vpop.xlane.xlu0 %3941
    %v3943 = vsel %vm655, %v3843, -inf
    %3944 = vmax.xlane.f32.xlu0 %v3943
    %v3945 = vpop.xlane.xlu0 %3944
    %v3946 = vsel %vm655, %v3889, -inf
    %3947 = vmax.xlane.f32.xlu0 %v3946
    %v3948 = vpop.xlane.xlu0 %3947
    %v3949 = vsel %vm655, %v3935, -inf
    %3950 = vmax.xlane.f32.xlu0 %v3949
    %v3951 = vpop.xlane.xlu0 %3950
    %v3952 = vsub.f32 %v3797, %v3942
    %v3953 = vsub.f32 %v3843, %v3945
    %v3954 = vsub.f32 %v3889, %v3948
    %v3955 = vsub.f32 %v3935, %v3951
    %v3956 = vmul.f32 %v3952, 1.442695
    %v3957 = vpow.pop %v3956
    %v3958 = vmul.f32 %v3953, 1.442695
    %v3959 = vpow.pop %v3958
    %v3960 = vmul.f32 %v3954, 1.442695
    %v3961 = vpow.pop %v3960
    %v3962 = vmul.f32 %v3955, 1.442695
    %v3963 = vpow.pop %v3962
    %v3964 = vsel %vm655, %v3957, 0.0
    %3965 = vadd.xlane.f32.xlu0 %v3964
    %v3966 = vpop.xlane.xlu0 %3965
    %v3967 = vsel %vm655, %v3959, 0.0
    %3968 = vadd.xlane.f32.xlu0 %v3967
    %v3969 = vpop.xlane.xlu0 %3968
    %v3970 = vsel %vm655, %v3961, 0.0
    %3971 = vadd.xlane.f32.xlu0 %v3970
    %v3972 = vpop.xlane.xlu0 %3971
    %v3973 = vsel %vm655, %v3963, 0.0
    %3974 = vadd.xlane.f32.xlu0 %v3973
    %v3975 = vpop.xlane.xlu0 %3974
    %v3976 = vrcp.pop %v3966
    %v3977 = vrcp.pop %v3969
    %v3978 = vrcp.pop %v3972
    %v3979 = vrcp.pop %v3975
    %v3980 = vmul.f32 %v3957, %v3976
    %v3981 = vmul.f32 %v3959, %v3977
    %v3982 = vmul.f32 %v3961, %v3978
    %v3983 = vmul.f32 %v3963, %v3979
    %v3984 = vpack.c.bf16 %v3980, %v3980
    %v3985 = vpack.c.bf16 %v3981, %v3981
    %v3986 = vpack.c.bf16 %v3982, %v3982
    %v3987 = vpack.c.bf16 %v3983, %v3983
    %v3988 = vpack.c.bf16 %v3695, %v3695
    %v3989 = vpack.c.bf16 %v3740, %v3740
    %v3990 = vpack.c.bf16 %v3743, %v3743
    %v3991 = vpack.c.bf16 %v3746, %v3746
    %v3993 = vsel %vm655, %v3984, 0
    %v3996 = vsel %vm711, %v3988, 0
    %3998 = vmatprep.subr.bf16.mxu0 0
    %3999 = vmatpush1.bf16.msra.mxu0 %v3996
    %4000 = vmatprep.subr.bf16.mxu0 0
    %4001 = vmatpush1.bf16.msra.mxu0 0
    %4002 = vmatprep.subr.bf16.mxu0 0
    %4003 = vmatpush1.bf16.msra.mxu0 0
    %4004 = vmatprep.subr.bf16.mxu0 0
    %4005 = vmatpush1.bf16.msra.mxu0 0
    %4006 = vmatprep.subr.bf16.mxu0 0
    %4007 = vmatpush1.bf16.msra.mxu0 0
    %4008 = vmatprep.subr.bf16.mxu0 0
    %4009 = vmatpush1.bf16.msra.mxu0 0
    %4010 = vmatprep.subr.bf16.mxu0 0
    %4011 = vmatpush1.bf16.msra.mxu0 0
    %4012 = vmatprep.subr.bf16.mxu0 0
    %4013 = vmatpush1.bf16.msra.mxu0 0
    %4014 = vmatprep.subr.bf16.mxu0 0
    %4015 = vmatpush1.bf16.msra.mxu0 0
    %4016 = vmatprep.subr.bf16.mxu0 0
    %4017 = vmatpush1.bf16.msra.mxu0 0
    %4018 = vmatprep.subr.bf16.mxu0 0
    %4019 = vmatpush1.bf16.msra.mxu0 0
    %4020 = vmatprep.subr.bf16.mxu0 0
    %4021 = vmatpush1.bf16.msra.mxu0 0
    %4022 = vmatprep.subr.bf16.mxu0 0
    %4023 = vmatpush1.bf16.msra.mxu0 0
    %4024 = vmatprep.subr.bf16.mxu0 0
    %4025 = vmatpush1.bf16.msra.mxu0 0
    %4026 = vmatprep.subr.bf16.mxu0 0
    %4027 = vmatpush1.bf16.msra.mxu0 0
    %4028 = vmatprep.subr.bf16.mxu0 0
    %4029 = vmatpush1.bf16.msra.mxu0 0
    %4030 = vmatprep.mubr.bf16.mxu0 0
    %4031 = vmatmul.mubr.bf16.gmra.mrb[0].mxu0 %v3993
    %v4032 = vpop.f32.mrb[0].mxu0
    %v4033 = vadd.f32 0.0, %v4032
    %v4034 = vpop.f32.mrb[0].mxu0
    %v4035 = vpop.f32.mrb[0].mxu0
    %v4036 = vpop.f32.mrb[0].mxu0
    %4037 = vdwg.mxu0
    %v4039 = vsel %vm655, %v3985, 0
    %v4042 = vsel %vm711, %v3989, 0
    %4044 = vmatprep.subr.bf16.mxu0 0
    %4045 = vmatpush1.bf16.msra.mxu0 %v4042
    %4046 = vmatprep.subr.bf16.mxu0 0
    %4047 = vmatpush1.bf16.msra.mxu0 0
    %4048 = vmatprep.subr.bf16.mxu0 0
    %4049 = vmatpush1.bf16.msra.mxu0 0
    %4050 = vmatprep.subr.bf16.mxu0 0
    %4051 = vmatpush1.bf16.msra.mxu0 0
    %4052 = vmatprep.subr.bf16.mxu0 0
    %4053 = vmatpush1.bf16.msra.mxu0 0
    %4054 = vmatprep.subr.bf16.mxu0 0
    %4055 = vmatpush1.bf16.msra.mxu0 0
    %4056 = vmatprep.subr.bf16.mxu0 0
    %4057 = vmatpush1.bf16.msra.mxu0 0
    %4058 = vmatprep.subr.bf16.mxu0 0
    %4059 = vmatpush1.bf16.msra.mxu0 0
    %4060 = vmatprep.subr.bf16.mxu0 0
    %4061 = vmatpush1.bf16.msra.mxu0 0
    %4062 = vmatprep.subr.bf16.mxu0 0
    %4063 = vmatpush1.bf16.msra.mxu0 0
    %4064 = vmatprep.subr.bf16.mxu0 0
    %4065 = vmatpush1.bf16.msra.mxu0 0
    %4066 = vmatprep.subr.bf16.mxu0 0
    %4067 = vmatpush1.bf16.msra.mxu0 0
    %4068 = vmatprep.subr.bf16.mxu0 0
    %4069 = vmatpush1.bf16.msra.mxu0 0
    %4070 = vmatprep.subr.bf16.mxu0 0
    %4071 = vmatpush1.bf16.msra.mxu0 0
    %4072 = vmatprep.subr.bf16.mxu0 0
    %4073 = vmatpush1.bf16.msra.mxu0 0
    %4074 = vmatprep.subr.bf16.mxu0 0
    %4075 = vmatpush1.bf16.msra.mxu0 0
    %4076 = vmatprep.mubr.bf16.mxu0 0
    %4077 = vmatmul.mubr.bf16.gmra.mrb[0].mxu0 %v4039
    %v4078 = vpop.f32.mrb[0].mxu0
    %v4079 = vadd.f32 0.0, %v4078
    %v4080 = vpop.f32.mrb[0].mxu0
    %v4081 = vpop.f32.mrb[0].mxu0
    %v4082 = vpop.f32.mrb[0].mxu0
    %4083 = vdwg.mxu0
    %v4085 = vsel %vm655, %v3986, 0
    %v4088 = vsel %vm711, %v3990, 0
    %4090 = vmatprep.subr.bf16.mxu0 0
    %4091 = vmatpush1.bf16.msra.mxu0 %v4088
    %4092 = vmatprep.subr.bf16.mxu0 0
    %4093 = vmatpush1.bf16.msra.mxu0 0
    %4094 = vmatprep.subr.bf16.mxu0 0
    %4095 = vmatpush1.bf16.msra.mxu0 0
    %4096 = vmatprep.subr.bf16.mxu0 0
    %4097 = vmatpush1.bf16.msra.mxu0 0
    %4098 = vmatprep.subr.bf16.mxu0 0
    %4099 = vmatpush1.bf16.msra.mxu0 0
    %4100 = vmatprep.subr.bf16.mxu0 0
    %4101 = vmatpush1.bf16.msra.mxu0 0
    %4102 = vmatprep.subr.bf16.mxu0 0
    %4103 = vmatpush1.bf16.msra.mxu0 0
    %4104 = vmatprep.subr.bf16.mxu0 0
    %4105 = vmatpush1.bf16.msra.mxu0 0
    %4106 = vmatprep.subr.bf16.mxu0 0
    %4107 = vmatpush1.bf16.msra.mxu0 0
    %4108 = vmatprep.subr.bf16.mxu0 0
    %4109 = vmatpush1.bf16.msra.mxu0 0
    %4110 = vmatprep.subr.bf16.mxu0 0
    %4111 = vmatpush1.bf16.msra.mxu0 0
    %4112 = vmatprep.subr.bf16.mxu0 0
    %4113 = vmatpush1.bf16.msra.mxu0 0
    %4114 = vmatprep.subr.bf16.mxu0 0
    %4115 = vmatpush1.bf16.msra.mxu0 0
    %4116 = vmatprep.subr.bf16.mxu0 0
    %4117 = vmatpush1.bf16.msra.mxu0 0
    %4118 = vmatprep.subr.bf16.mxu0 0
    %4119 = vmatpush1.bf16.msra.mxu0 0
    %4120 = vmatprep.subr.bf16.mxu0 0
    %4121 = vmatpush1.bf16.msra.mxu0 0
    %4122 = vmatprep.mubr.bf16.mxu0 0
    %4123 = vmatmul.mubr.bf16.gmra.mrb[0].mxu0 %v4085
    %v4124 = vpop.f32.mrb[0].mxu0
    %v4125 = vadd.f32 0.0, %v4124
    %v4126 = vpop.f32.mrb[0].mxu0
    %v4127 = vpop.f32.mrb[0].mxu0
    %v4128 = vpop.f32.mrb[0].mxu0
    %4129 = vdwg.mxu0
    %v4131 = vsel %vm655, %v3987, 0
    %v4134 = vsel %vm711, %v3991, 0
    %4136 = vmatprep.subr.bf16.mxu0 0
    %4137 = vmatpush1.bf16.msra.mxu0 %v4134
    %4138 = vmatprep.subr.bf16.mxu0 0
    %4139 = vmatpush1.bf16.msra.mxu0 0
    %4140 = vmatprep.subr.bf16.mxu0 0
    %4141 = vmatpush1.bf16.msra.mxu0 0
    %4142 = vmatprep.subr.bf16.mxu0 0
    %4143 = vmatpush1.bf16.msra.mxu0 0
    %4144 = vmatprep.subr.bf16.mxu0 0
    %4145 = vmatpush1.bf16.msra.mxu0 0
    %4146 = vmatprep.subr.bf16.mxu0 0
    %4147 = vmatpush1.bf16.msra.mxu0 0
    %4148 = vmatprep.subr.bf16.mxu0 0
    %4149 = vmatpush1.bf16.msra.mxu0 0
    %4150 = vmatprep.subr.bf16.mxu0 0
    %4151 = vmatpush1.bf16.msra.mxu0 0
    %4152 = vmatprep.subr.bf16.mxu0 0
    %4153 = vmatpush1.bf16.msra.mxu0 0
    %4154 = vmatprep.subr.bf16.mxu0 0
    %4155 = vmatpush1.bf16.msra.mxu0 0
    %4156 = vmatprep.subr.bf16.mxu0 0
    %4157 = vmatpush1.bf16.msra.mxu0 0
    %4158 = vmatprep.subr.bf16.mxu0 0
    %4159 = vmatpush1.bf16.msra.mxu0 0
    %4160 = vmatprep.subr.bf16.mxu0 0
    %4161 = vmatpush1.bf16.msra.mxu0 0
    %4162 = vmatprep.subr.bf16.mxu0 0
    %4163 = vmatpush1.bf16.msra.mxu0 0
    %4164 = vmatprep.subr.bf16.mxu0 0
    %4165 = vmatpush1.bf16.msra.mxu0 0
    %4166 = vmatprep.subr.bf16.mxu0 0
    %4167 = vmatpush1.bf16.msra.mxu0 0
    %4168 = vmatprep.mubr.bf16.mxu0 0
    %4169 = vmatmul.mubr.bf16.gmra.mrb[0].mxu0 %v4131
    %v4170 = vpop.f32.mrb[0].mxu0
    %v4171 = vadd.f32 0.0, %v4170
    %v4172 = vpop.f32.mrb[0].mxu0
    %v4173 = vpop.f32.mrb[0].mxu0
    %v4174 = vpop.f32.mrb[0].mxu0
    %4175 = vdwg.mxu0
    %v4176 = vpack.c.bf16 %v4033, %v4033
    %v4177 = vpack.c.bf16 %v4079, %v4079
    %v4178 = vpack.c.bf16 %v4125, %v4125
    %v4179 = vpack.c.bf16 %v4171, %v4171
    %v4180 = vpack.c.bf16 %v3703, %v3702
    %v4181 = vpack.c.bf16 %v3705, %v3704
    %v4182 = vpack.c.bf16 %v3707, %v3706
    %v4183 = vpack.c.bf16 %v3709, %v3708
    %v4184 = vpack.c.bf16 %v3711, %v3710
    %v4185 = vpack.c.bf16 %v3713, %v3712
    %v4186 = vpack.c.bf16 %v3715, %v3714
    %v4187 = vpack.c.bf16 %v3717, %v3716
    %v4189 = vsel %vm470, %v4176, 0
    %4191 = vmatprep.subr.bf16.mxu0 0
    %4192 = vmatpush1.bf16.msra.mxu0 %v4180
    %4193 = vmatprep.subr.bf16.mxu0 0
    %4194 = vmatpush1.bf16.msra.mxu0 %v4181
    %4195 = vmatprep.subr.bf16.mxu0 0
    %4196 = vmatpush1.bf16.msra.mxu0 0
    %4197 = vmatprep.subr.bf16.mxu0 0
    %4198 = vmatpush1.bf16.msra.mxu0 0
    %4199 = vmatprep.subr.bf16.mxu0 0
    %4200 = vmatpush1.bf16.msra.mxu0 0
    %4201 = vmatprep.subr.bf16.mxu0 0
    %4202 = vmatpush1.bf16.msra.mxu0 0
    %4203 = vmatprep.subr.bf16.mxu0 0
    %4204 = vmatpush1.bf16.msra.mxu0 0
    %4205 = vmatprep.subr.bf16.mxu0 0
    %4206 = vmatpush1.bf16.msra.mxu0 0
    %4207 = vmatprep.subr.bf16.mxu0 0
    %4208 = vmatpush1.bf16.msra.mxu0 0
    %4209 = vmatprep.subr.bf16.mxu0 0
    %4210 = vmatpush1.bf16.msra.mxu0 0
    %4211 = vmatprep.subr.bf16.mxu0 0
    %4212 = vmatpush1.bf16.msra.mxu0 0
    %4213 = vmatprep.subr.bf16.mxu0 0
    %4214 = vmatpush1.bf16.msra.mxu0 0
    %4215 = vmatprep.subr.bf16.mxu0 0
    %4216 = vmatpush1.bf16.msra.mxu0 0
    %4217 = vmatprep.subr.bf16.mxu0 0
    %4218 = vmatpush1.bf16.msra.mxu0 0
    %4219 = vmatprep.subr.bf16.mxu0 0
    %4220 = vmatpush1.bf16.msra.mxu0 0
    %4221 = vmatprep.subr.bf16.mxu0 0
    %4222 = vmatpush1.bf16.msra.mxu0 0
    %4223 = vmatprep.mubr.bf16.mxu0 0
    %4224 = vmatmul.mubr.bf16.gmra.mrb[0].mxu0 %v4189
    %v4225 = vpop.f32.mrb[0].mxu0
    %v4226 = vadd.f32 0.0, %v4225
    %v4227 = vpop.f32.mrb[0].mxu0
    %v4228 = vpop.f32.mrb[0].mxu0
    %v4229 = vpop.f32.mrb[0].mxu0
    %4230 = vdwg.mxu0
    %v4232 = vsel %vm470, %v4177, 0
    %4234 = vmatprep.subr.bf16.mxu0 0
    %4235 = vmatpush1.bf16.msra.mxu0 %v4182
    %4236 = vmatprep.subr.bf16.mxu0 0
    %4237 = vmatpush1.bf16.msra.mxu0 %v4183
    %4238 = vmatprep.subr.bf16.mxu0 0
    %4239 = vmatpush1.bf16.msra.mxu0 0
    %4240 = vmatprep.subr.bf16.mxu0 0
    %4241 = vmatpush1.bf16.msra.mxu0 0
    %4242 = vmatprep.subr.bf16.mxu0 0
    %4243 = vmatpush1.bf16.msra.mxu0 0
    %4244 = vmatprep.subr.bf16.mxu0 0
    %4245 = vmatpush1.bf16.msra.mxu0 0
    %4246 = vmatprep.subr.bf16.mxu0 0
    %4247 = vmatpush1.bf16.msra.mxu0 0
    %4248 = vmatprep.subr.bf16.mxu0 0
    %4249 = vmatpush1.bf16.msra.mxu0 0
    %4250 = vmatprep.subr.bf16.mxu0 0
    %4251 = vmatpush1.bf16.msra.mxu0 0
    %4252 = vmatprep.subr.bf16.mxu0 0
    %4253 = vmatpush1.bf16.msra.mxu0 0
    %4254 = vmatprep.subr.bf16.mxu0 0
    %4255 = vmatpush1.bf16.msra.mxu0 0
    %4256 = vmatprep.subr.bf16.mxu0 0
    %4257 = vmatpush1.bf16.msra.mxu0 0
    %4258 = vmatprep.subr.bf16.mxu0 0
    %4259 = vmatpush1.bf16.msra.mxu0 0
    %4260 = vmatprep.subr.bf16.mxu0 0
    %4261 = vmatpush1.bf16.msra.mxu0 0
    %4262 = vmatprep.subr.bf16.mxu0 0
    %4263 = vmatpush1.bf16.msra.mxu0 0
    %4264 = vmatprep.subr.bf16.mxu0 0
    %4265 = vmatpush1.bf16.msra.mxu0 0
    %4266 = vmatprep.mubr.bf16.mxu0 0
    %4267 = vmatmul.mubr.bf16.gmra.mrb[0].mxu0 %v4232
    %v4268 = vpop.f32.mrb[0].mxu0
    %v4269 = vadd.f32 0.0, %v4268
    %v4270 = vpop.f32.mrb[0].mxu0
    %v4271 = vpop.f32.mrb[0].mxu0
    %v4272 = vpop.f32.mrb[0].mxu0
    %4273 = vdwg.mxu0
    %v4275 = vsel %vm470, %v4178, 0
    %4277 = vmatprep.subr.bf16.mxu0 0
    %4278 = vmatpush1.bf16.msra.mxu0 %v4184
    %4279 = vmatprep.subr.bf16.mxu0 0
    %4280 = vmatpush1.bf16.msra.mxu0 %v4185
    %4281 = vmatprep.subr.bf16.mxu0 0
    %4282 = vmatpush1.bf16.msra.mxu0 0
    %4283 = vmatprep.subr.bf16.mxu0 0
    %4284 = vmatpush1.bf16.msra.mxu0 0
    %4285 = vmatprep.subr.bf16.mxu0 0
    %4286 = vmatpush1.bf16.msra.mxu0 0
    %4287 = vmatprep.subr.bf16.mxu0 0
    %4288 = vmatpush1.bf16.msra.mxu0 0
    %4289 = vmatprep.subr.bf16.mxu0 0
    %4290 = vmatpush1.bf16.msra.mxu0 0
    %4291 = vmatprep.subr.bf16.mxu0 0
    %4292 = vmatpush1.bf16.msra.mxu0 0
    %4293 = vmatprep.subr.bf16.mxu0 0
    %4294 = vmatpush1.bf16.msra.mxu0 0
    %4295 = vmatprep.subr.bf16.mxu0 0
    %4296 = vmatpush1.bf16.msra.mxu0 0
    %4297 = vmatprep.subr.bf16.mxu0 0
    %4298 = vmatpush1.bf16.msra.mxu0 0
    %4299 = vmatprep.subr.bf16.mxu0 0
    %4300 = vmatpush1.bf16.msra.mxu0 0
    %4301 = vmatprep.subr.bf16.mxu0 0
    %4302 = vmatpush1.bf16.msra.mxu0 0
    %4303 = vmatprep.subr.bf16.mxu0 0
    %4304 = vmatpush1.bf16.msra.mxu0 0
    %4305 = vmatprep.subr.bf16.mxu0 0
    %4306 = vmatpush1.bf16.msra.mxu0 0
    %4307 = vmatprep.subr.bf16.mxu0 0
    %4308 = vmatpush1.bf16.msra.mxu0 0
    %4309 = vmatprep.mubr.bf16.mxu0 0
    %4310 = vmatmul.mubr.bf16.gmra.mrb[0].mxu0 %v4275
    %v4311 = vpop.f32.mrb[0].mxu0
    %v4312 = vadd.f32 0.0, %v4311
    %v4313 = vpop.f32.mrb[0].mxu0
    %v4314 = vpop.f32.mrb[0].mxu0
    %v4315 = vpop.f32.mrb[0].mxu0
    %4316 = vdwg.mxu0
    %v4318 = vsel %vm470, %v4179, 0
    %4320 = vmatprep.subr.bf16.mxu0 0
    %4321 = vmatpush1.bf16.msra.mxu0 %v4186
    %4322 = vmatprep.subr.bf16.mxu0 0
    %4323 = vmatpush1.bf16.msra.mxu0 %v4187
    %4324 = vmatprep.subr.bf16.mxu0 0
    %4325 = vmatpush1.bf16.msra.mxu0 0
    %4326 = vmatprep.subr.bf16.mxu0 0
    %4327 = vmatpush1.bf16.msra.mxu0 0
    %4328 = vmatprep.subr.bf16.mxu0 0
    %4329 = vmatpush1.bf16.msra.mxu0 0
    %4330 = vmatprep.subr.bf16.mxu0 0
    %4331 = vmatpush1.bf16.msra.mxu0 0
    %4332 = vmatprep.subr.bf16.mxu0 0
    %4333 = vmatpush1.bf16.msra.mxu0 0
    %4334 = vmatprep.subr.bf16.mxu0 0
    %4335 = vmatpush1.bf16.msra.mxu0 0
    %4336 = vmatprep.subr.bf16.mxu0 0
    %4337 = vmatpush1.bf16.msra.mxu0 0
    %4338 = vmatprep.subr.bf16.mxu0 0
    %4339 = vmatpush1.bf16.msra.mxu0 0
    %4340 = vmatprep.subr.bf16.mxu0 0
    %4341 = vmatpush1.bf16.msra.mxu0 0
    %4342 = vmatprep.subr.bf16.mxu0 0
    %4343 = vmatpush1.bf16.msra.mxu0 0
    %4344 = vmatprep.subr.bf16.mxu0 0
    %4345 = vmatpush1.bf16.msra.mxu0 0
    %4346 = vmatprep.subr.bf16.mxu0 0
    %4347 = vmatpush1.bf16.msra.mxu0 0
    %4348 = vmatprep.subr.bf16.mxu0 0
    %4349 = vmatpush1.bf16.msra.mxu0 0
    %4350 = vmatprep.subr.bf16.mxu0 0
    %4351 = vmatpush1.bf16.msra.mxu0 0
    %4352 = vmatprep.mubr.bf16.mxu0 0
    %4353 = vmatmul.mubr.bf16.gmra.mrb[0].mxu0 %v4318
    %v4354 = vpop.f32.mrb[0].mxu0
    %v4355 = vadd.f32 0.0, %v4354
    %v4356 = vpop.f32.mrb[0].mxu0
    %v4357 = vpop.f32.mrb[0].mxu0
    %v4358 = vpop.f32.mrb[0].mxu0
    %4359 = vdwg.mxu0
    %v4360 = vadd.f32 %v4226, %v4269
    %v4361 = vadd.f32 %v4360, %v4312
    %v4362 = vadd.f32 %v4361, %v4355
    %4364 = vrot.lane.b32.xlu0 %v3656, 96
    %v4365 = vpop.permute.xlu0 %4364
    %4367 = vrot.lane.b32.xlu0 %v3656, 64
    %v4368 = vpop.permute.xlu0 %4367
    %4370 = vrot.lane.b32.xlu0 %v3656, 32
    %v4371 = vpop.permute.xlu0 %4370
    %4374 = vrot.lane.b32.xlu0 %v3658, 96
    %v4375 = vpop.permute.xlu0 %4374
    %4377 = vrot.lane.b32.xlu0 %v3658, 64
    %v4378 = vpop.permute.xlu0 %4377
    %4380 = vrot.lane.b32.xlu0 %v3658, 32
    %v4381 = vpop.permute.xlu0 %4380
    %4384 = vrot.lane.b32.xlu0 %v3698, 96
    %v4385 = vpop.permute.xlu0 %4384
    %4387 = vrot.lane.b32.xlu0 %v3698, 64
    %v4388 = vpop.permute.xlu0 %4387
    %4390 = vrot.lane.b32.xlu0 %v3698, 32
    %v4391 = vpop.permute.xlu0 %4390
    %v4393 = vpack.c.bf16 %v3656, %v3656
    %v4394 = vpack.c.bf16 %v4365, %v4365
    %v4395 = vpack.c.bf16 %v4368, %v4368
    %v4396 = vpack.c.bf16 %v4371, %v4371
    %v4397 = vpack.c.bf16 %v3658, %v3658
    %v4398 = vpack.c.bf16 %v4375, %v4375
    %v4399 = vpack.c.bf16 %v4378, %v4378
    %v4400 = vpack.c.bf16 %v4381, %v4381
    %v4402 = vsel %vm470, %v4393, 0
    %v4405 = vsel %vm470, %v4397, 0
    %4407 = vmatprep.subr.bf16.mxu0 0
    %4408 = vmatpush1.bf16.xpose.msra.mxu0 %v4405
    %4409 = vmatprep.subr.bf16.mxu0 0
    %4410 = vmatpush1.bf16.xpose.msra.mxu0 0
    %4411 = vmatprep.subr.bf16.mxu0 0
    %4412 = vmatpush1.bf16.xpose.msra.mxu0 0
    %4413 = vmatprep.subr.bf16.mxu0 0
    %4414 = vmatpush1.bf16.xpose.msra.mxu0 0
    %4415 = vmatprep.subr.bf16.mxu0 0
    %4416 = vmatpush1.bf16.xpose.msra.mxu0 0
    %4417 = vmatprep.subr.bf16.mxu0 0
    %4418 = vmatpush1.bf16.xpose.msra.mxu0 0
    %4419 = vmatprep.subr.bf16.mxu0 0
    %4420 = vmatpush1.bf16.xpose.msra.mxu0 0
    %4421 = vmatprep.subr.bf16.mxu0 0
    %4422 = vmatpush1.bf16.xpose.msra.mxu0 0
    %4423 = vmatprep.subr.bf16.mxu0 0
    %4424 = vmatpush1.bf16.xpose.msra.mxu0 0
    %4425 = vmatprep.subr.bf16.mxu0 0
    %4426 = vmatpush1.bf16.xpose.msra.mxu0 0
    %4427 = vmatprep.subr.bf16.mxu0 0
    %4428 = vmatpush1.bf16.xpose.msra.mxu0 0
    %4429 = vmatprep.subr.bf16.mxu0 0
    %4430 = vmatpush1.bf16.xpose.msra.mxu0 0
    %4431 = vmatprep.subr.bf16.mxu0 0
    %4432 = vmatpush1.bf16.xpose.msra.mxu0 0
    %4433 = vmatprep.subr.bf16.mxu0 0
    %4434 = vmatpush1.bf16.xpose.msra.mxu0 0
    %4435 = vmatprep.subr.bf16.mxu0 0
    %4436 = vmatpush1.bf16.xpose.msra.mxu0 0
    %4437 = vmatprep.subr.bf16.mxu0 0
    %4438 = vmatpush1.bf16.xpose.msra.mxu0 0
    %4439 = vmatprep.mubr.bf16.mxu0 0
    %4440 = vmatmul.mubr.bf16.gmra.mrb[0].mxu0 %v4402
    %v4441 = vpop.f32.mrb[0].mxu0
    %v4442 = vadd.f32 %v237, %v4441
    %v4443 = vpop.f32.mrb[0].mxu0
    %v4444 = vpop.f32.mrb[0].mxu0
    %v4445 = vpop.f32.mrb[0].mxu0
    %4446 = vdwg.mxu0
    %v4448 = vsel %vm470, %v4394, 0
    %v4451 = vsel %vm470, %v4398, 0
    %4453 = vmatprep.subr.bf16.mxu0 0
    %4454 = vmatpush1.bf16.xpose.msra.mxu0 %v4451
    %4455 = vmatprep.subr.bf16.mxu0 0
    %4456 = vmatpush1.bf16.xpose.msra.mxu0 0
    %4457 = vmatprep.subr.bf16.mxu0 0
    %4458 = vmatpush1.bf16.xpose.msra.mxu0 0
    %4459 = vmatprep.subr.bf16.mxu0 0
    %4460 = vmatpush1.bf16.xpose.msra.mxu0 0
    %4461 = vmatprep.subr.bf16.mxu0 0
    %4462 = vmatpush1.bf16.xpose.msra.mxu0 0
    %4463 = vmatprep.subr.bf16.mxu0 0
    %4464 = vmatpush1.bf16.xpose.msra.mxu0 0
    %4465 = vmatprep.subr.bf16.mxu0 0
    %4466 = vmatpush1.bf16.xpose.msra.mxu0 0
    %4467 = vmatprep.subr.bf16.mxu0 0
    %4468 = vmatpush1.bf16.xpose.msra.mxu0 0
    %4469 = vmatprep.subr.bf16.mxu0 0
    %4470 = vmatpush1.bf16.xpose.msra.mxu0 0
    %4471 = vmatprep.subr.bf16.mxu0 0
    %4472 = vmatpush1.bf16.xpose.msra.mxu0 0
    %4473 = vmatprep.subr.bf16.mxu0 0
    %4474 = vmatpush1.bf16.xpose.msra.mxu0 0
    %4475 = vmatprep.subr.bf16.mxu0 0
    %4476 = vmatpush1.bf16.xpose.msra.mxu0 0
    %4477 = vmatprep.subr.bf16.mxu0 0
    %4478 = vmatpush1.bf16.xpose.msra.mxu0 0
    %4479 = vmatprep.subr.bf16.mxu0 0
    %4480 = vmatpush1.bf16.xpose.msra.mxu0 0
    %4481 = vmatprep.subr.bf16.mxu0 0
    %4482 = vmatpush1.bf16.xpose.msra.mxu0 0
    %4483 = vmatprep.subr.bf16.mxu0 0
    %4484 = vmatpush1.bf16.xpose.msra.mxu0 0
    %4485 = vmatprep.mubr.bf16.mxu0 0
    %4486 = vmatmul.mubr.bf16.gmra.mrb[0].mxu0 %v4448
    %v4487 = vpop.f32.mrb[0].mxu0
    %v4488 = vadd.f32 %v237, %v4487
    %v4489 = vpop.f32.mrb[0].mxu0
    %v4490 = vpop.f32.mrb[0].mxu0
    %v4491 = vpop.f32.mrb[0].mxu0
    %4492 = vdwg.mxu0
    %v4494 = vsel %vm470, %v4395, 0
    %v4497 = vsel %vm470, %v4399, 0
    %4499 = vmatprep.subr.bf16.mxu0 0
    %4500 = vmatpush1.bf16.xpose.msra.mxu0 %v4497
    %4501 = vmatprep.subr.bf16.mxu0 0
    %4502 = vmatpush1.bf16.xpose.msra.mxu0 0
    %4503 = vmatprep.subr.bf16.mxu0 0
    %4504 = vmatpush1.bf16.xpose.msra.mxu0 0
    %4505 = vmatprep.subr.bf16.mxu0 0
    %4506 = vmatpush1.bf16.xpose.msra.mxu0 0
    %4507 = vmatprep.subr.bf16.mxu0 0
    %4508 = vmatpush1.bf16.xpose.msra.mxu0 0
    %4509 = vmatprep.subr.bf16.mxu0 0
    %4510 = vmatpush1.bf16.xpose.msra.mxu0 0
    %4511 = vmatprep.subr.bf16.mxu0 0
    %4512 = vmatpush1.bf16.xpose.msra.mxu0 0
    %4513 = vmatprep.subr.bf16.mxu0 0
    %4514 = vmatpush1.bf16.xpose.msra.mxu0 0
    %4515 = vmatprep.subr.bf16.mxu0 0
    %4516 = vmatpush1.bf16.xpose.msra.mxu0 0
    %4517 = vmatprep.subr.bf16.mxu0 0
    %4518 = vmatpush1.bf16.xpose.msra.mxu0 0
    %4519 = vmatprep.subr.bf16.mxu0 0
    %4520 = vmatpush1.bf16.xpose.msra.mxu0 0
    %4521 = vmatprep.subr.bf16.mxu0 0
    %4522 = vmatpush1.bf16.xpose.msra.mxu0 0
    %4523 = vmatprep.subr.bf16.mxu0 0
    %4524 = vmatpush1.bf16.xpose.msra.mxu0 0
    %4525 = vmatprep.subr.bf16.mxu0 0
    %4526 = vmatpush1.bf16.xpose.msra.mxu0 0
    %4527 = vmatprep.subr.bf16.mxu0 0
    %4528 = vmatpush1.bf16.xpose.msra.mxu0 0
    %4529 = vmatprep.subr.bf16.mxu0 0
    %4530 = vmatpush1.bf16.xpose.msra.mxu0 0
    %4531 = vmatprep.mubr.bf16.mxu0 0
    %4532 = vmatmul.mubr.bf16.gmra.mrb[0].mxu0 %v4494
    %v4533 = vpop.f32.mrb[0].mxu0
    %v4534 = vadd.f32 %v237, %v4533
    %v4535 = vpop.f32.mrb[0].mxu0
    %v4536 = vpop.f32.mrb[0].mxu0
    %v4537 = vpop.f32.mrb[0].mxu0
    %4538 = vdwg.mxu0
    %v4540 = vsel %vm470, %v4396, 0
    %v4543 = vsel %vm470, %v4400, 0
    %4545 = vmatprep.subr.bf16.mxu0 0
    %4546 = vmatpush1.bf16.xpose.msra.mxu0 %v4543
    %4547 = vmatprep.subr.bf16.mxu0 0
    %4548 = vmatpush1.bf16.xpose.msra.mxu0 0
    %4549 = vmatprep.subr.bf16.mxu0 0
    %4550 = vmatpush1.bf16.xpose.msra.mxu0 0
    %4551 = vmatprep.subr.bf16.mxu0 0
    %4552 = vmatpush1.bf16.xpose.msra.mxu0 0
    %4553 = vmatprep.subr.bf16.mxu0 0
    %4554 = vmatpush1.bf16.xpose.msra.mxu0 0
    %4555 = vmatprep.subr.bf16.mxu0 0
    %4556 = vmatpush1.bf16.xpose.msra.mxu0 0
    %4557 = vmatprep.subr.bf16.mxu0 0
    %4558 = vmatpush1.bf16.xpose.msra.mxu0 0
    %4559 = vmatprep.subr.bf16.mxu0 0
    %4560 = vmatpush1.bf16.xpose.msra.mxu0 0
    %4561 = vmatprep.subr.bf16.mxu0 0
    %4562 = vmatpush1.bf16.xpose.msra.mxu0 0
    %4563 = vmatprep.subr.bf16.mxu0 0
    %4564 = vmatpush1.bf16.xpose.msra.mxu0 0
    %4565 = vmatprep.subr.bf16.mxu0 0
    %4566 = vmatpush1.bf16.xpose.msra.mxu0 0
    %4567 = vmatprep.subr.bf16.mxu0 0
    %4568 = vmatpush1.bf16.xpose.msra.mxu0 0
    %4569 = vmatprep.subr.bf16.mxu0 0
    %4570 = vmatpush1.bf16.xpose.msra.mxu0 0
    %4571 = vmatprep.subr.bf16.mxu0 0
    %4572 = vmatpush1.bf16.xpose.msra.mxu0 0
    %4573 = vmatprep.subr.bf16.mxu0 0
    %4574 = vmatpush1.bf16.xpose.msra.mxu0 0
    %4575 = vmatprep.subr.bf16.mxu0 0
    %4576 = vmatpush1.bf16.xpose.msra.mxu0 0
    %4577 = vmatprep.mubr.bf16.mxu0 0
    %4578 = vmatmul.mubr.bf16.gmra.mrb[0].mxu0 %v4540
    %v4579 = vpop.f32.mrb[0].mxu0
    %v4580 = vadd.f32 %v237, %v4579
    %v4581 = vpop.f32.mrb[0].mxu0
    %v4582 = vpop.f32.mrb[0].mxu0
    %v4583 = vpop.f32.mrb[0].mxu0
    %4584 = vdwg.mxu0
    %v4585 = vsel %vm655, %v4442, -inf
    %4586 = vmax.xlane.f32.xlu0 %v4585
    %v4587 = vpop.xlane.xlu0 %4586
    %v4588 = vsel %vm655, %v4488, -inf
    %4589 = vmax.xlane.f32.xlu0 %v4588
    %v4590 = vpop.xlane.xlu0 %4589
    %v4591 = vsel %vm655, %v4534, -inf
    %4592 = vmax.xlane.f32.xlu0 %v4591
    %v4593 = vpop.xlane.xlu0 %4592
    %v4594 = vsel %vm655, %v4580, -inf
    %4595 = vmax.xlane.f32.xlu0 %v4594
    %v4596 = vpop.xlane.xlu0 %4595
    %v4597 = vsub.f32 %v4442, %v4587
    %v4598 = vsub.f32 %v4488, %v4590
    %v4599 = vsub.f32 %v4534, %v4593
    %v4600 = vsub.f32 %v4580, %v4596
    %v4601 = vmul.f32 %v4597, 1.442695
    %v4602 = vpow.pop %v4601
    %v4603 = vmul.f32 %v4598, 1.442695
    %v4604 = vpow.pop %v4603
    %v4605 = vmul.f32 %v4599, 1.442695
    %v4606 = vpow.pop %v4605
    %v4607 = vmul.f32 %v4600, 1.442695
    %v4608 = vpow.pop %v4607
    %v4609 = vsel %vm655, %v4602, 0.0
    %4610 = vadd.xlane.f32.xlu0 %v4609
    %v4611 = vpop.xlane.xlu0 %4610
    %v4612 = vsel %vm655, %v4604, 0.0
    %4613 = vadd.xlane.f32.xlu0 %v4612
    %v4614 = vpop.xlane.xlu0 %4613
    %v4615 = vsel %vm655, %v4606, 0.0
    %4616 = vadd.xlane.f32.xlu0 %v4615
    %v4617 = vpop.xlane.xlu0 %4616
    %v4618 = vsel %vm655, %v4608, 0.0
    %4619 = vadd.xlane.f32.xlu0 %v4618
    %v4620 = vpop.xlane.xlu0 %4619
    %v4621 = vrcp.pop %v4611
    %v4622 = vrcp.pop %v4614
    %v4623 = vrcp.pop %v4617
    %v4624 = vrcp.pop %v4620
    %v4625 = vmul.f32 %v4602, %v4621
    %v4626 = vmul.f32 %v4604, %v4622
    %v4627 = vmul.f32 %v4606, %v4623
    %v4628 = vmul.f32 %v4608, %v4624
    %v4629 = vpack.c.bf16 %v4625, %v4625
    %v4630 = vpack.c.bf16 %v4626, %v4626
    %v4631 = vpack.c.bf16 %v4627, %v4627
    %v4632 = vpack.c.bf16 %v4628, %v4628
    %v4633 = vpack.c.bf16 %v3698, %v3698
    %v4634 = vpack.c.bf16 %v4385, %v4385
    %v4635 = vpack.c.bf16 %v4388, %v4388
    %v4636 = vpack.c.bf16 %v4391, %v4391
    %v4638 = vsel %vm655, %v4629, 0
    %v4641 = vsel %vm711, %v4633, 0
    %4643 = vmatprep.subr.bf16.mxu0 0
    %4644 = vmatpush1.bf16.msra.mxu0 %v4641
    %4645 = vmatprep.subr.bf16.mxu0 0
    %4646 = vmatpush1.bf16.msra.mxu0 0
    %4647 = vmatprep.subr.bf16.mxu0 0
    %4648 = vmatpush1.bf16.msra.mxu0 0
    %4649 = vmatprep.subr.bf16.mxu0 0
    %4650 = vmatpush1.bf16.msra.mxu0 0
    %4651 = vmatprep.subr.bf16.mxu0 0
    %4652 = vmatpush1.bf16.msra.mxu0 0
    %4653 = vmatprep.subr.bf16.mxu0 0
    %4654 = vmatpush1.bf16.msra.mxu0 0
    %4655 = vmatprep.subr.bf16.mxu0 0
    %4656 = vmatpush1.bf16.msra.mxu0 0
    %4657 = vmatprep.subr.bf16.mxu0 0
    %4658 = vmatpush1.bf16.msra.mxu0 0
    %4659 = vmatprep.subr.bf16.mxu0 0
    %4660 = vmatpush1.bf16.msra.mxu0 0
    %4661 = vmatprep.subr.bf16.mxu0 0
    %4662 = vmatpush1.bf16.msra.mxu0 0
    %4663 = vmatprep.subr.bf16.mxu0 0
    %4664 = vmatpush1.bf16.msra.mxu0 0
    %4665 = vmatprep.subr.bf16.mxu0 0
    %4666 = vmatpush1.bf16.msra.mxu0 0
    %4667 = vmatprep.subr.bf16.mxu0 0
    %4668 = vmatpush1.bf16.msra.mxu0 0
    %4669 = vmatprep.subr.bf16.mxu0 0
    %4670 = vmatpush1.bf16.msra.mxu0 0
    %4671 = vmatprep.subr.bf16.mxu0 0
    %4672 = vmatpush1.bf16.msra.mxu0 0
    %4673 = vmatprep.subr.bf16.mxu0 0
    %4674 = vmatpush1.bf16.msra.mxu0 0
    %4675 = vmatprep.mubr.bf16.mxu0 0
    %4676 = vmatmul.mubr.bf16.gmra.mrb[0].mxu0 %v4638
    %v4677 = vpop.f32.mrb[0].mxu0
    %v4678 = vadd.f32 0.0, %v4677
    %v4679 = vpop.f32.mrb[0].mxu0
    %v4680 = vpop.f32.mrb[0].mxu0
    %v4681 = vpop.f32.mrb[0].mxu0
    %4682 = vdwg.mxu0
    %v4684 = vsel %vm655, %v4630, 0
    %v4687 = vsel %vm711, %v4634, 0
    %4689 = vmatprep.subr.bf16.mxu0 0
    %4690 = vmatpush1.bf16.msra.mxu0 %v4687
    %4691 = vmatprep.subr.bf16.mxu0 0
    %4692 = vmatpush1.bf16.msra.mxu0 0
    %4693 = vmatprep.subr.bf16.mxu0 0
    %4694 = vmatpush1.bf16.msra.mxu0 0
    %4695 = vmatprep.subr.bf16.mxu0 0
    %4696 = vmatpush1.bf16.msra.mxu0 0
    %4697 = vmatprep.subr.bf16.mxu0 0
    %4698 = vmatpush1.bf16.msra.mxu0 0
    %4699 = vmatprep.subr.bf16.mxu0 0
    %4700 = vmatpush1.bf16.msra.mxu0 0
    %4701 = vmatprep.subr.bf16.mxu0 0
    %4702 = vmatpush1.bf16.msra.mxu0 0
    %4703 = vmatprep.subr.bf16.mxu0 0
    %4704 = vmatpush1.bf16.msra.mxu0 0
    %4705 = vmatprep.subr.bf16.mxu0 0
    %4706 = vmatpush1.bf16.msra.mxu0 0
    %4707 = vmatprep.subr.bf16.mxu0 0
    %4708 = vmatpush1.bf16.msra.mxu0 0
    %4709 = vmatprep.subr.bf16.mxu0 0
    %4710 = vmatpush1.bf16.msra.mxu0 0
    %4711 = vmatprep.subr.bf16.mxu0 0
    %4712 = vmatpush1.bf16.msra.mxu0 0
    %4713 = vmatprep.subr.bf16.mxu0 0
    %4714 = vmatpush1.bf16.msra.mxu0 0
    %4715 = vmatprep.subr.bf16.mxu0 0
    %4716 = vmatpush1.bf16.msra.mxu0 0
    %4717 = vmatprep.subr.bf16.mxu0 0
    %4718 = vmatpush1.bf16.msra.mxu0 0
    %4719 = vmatprep.subr.bf16.mxu0 0
    %4720 = vmatpush1.bf16.msra.mxu0 0
    %4721 = vmatprep.mubr.bf16.mxu0 0
    %4722 = vmatmul.mubr.bf16.gmra.mrb[0].mxu0 %v4684
    %v4723 = vpop.f32.mrb[0].mxu0
    %v4724 = vadd.f32 0.0, %v4723
    %v4725 = vpop.f32.mrb[0].mxu0
    %v4726 = vpop.f32.mrb[0].mxu0
    %v4727 = vpop.f32.mrb[0].mxu0
    %4728 = vdwg.mxu0
    %v4730 = vsel %vm655, %v4631, 0
    %v4733 = vsel %vm711, %v4635, 0
    %4735 = vmatprep.subr.bf16.mxu0 0
    %4736 = vmatpush1.bf16.msra.mxu0 %v4733
    %4737 = vmatprep.subr.bf16.mxu0 0
    %4738 = vmatpush1.bf16.msra.mxu0 0
    %4739 = vmatprep.subr.bf16.mxu0 0
    %4740 = vmatpush1.bf16.msra.mxu0 0
    %4741 = vmatprep.subr.bf16.mxu0 0
    %4742 = vmatpush1.bf16.msra.mxu0 0
    %4743 = vmatprep.subr.bf16.mxu0 0
    %4744 = vmatpush1.bf16.msra.mxu0 0
    %4745 = vmatprep.subr.bf16.mxu0 0
    %4746 = vmatpush1.bf16.msra.mxu0 0
    %4747 = vmatprep.subr.bf16.mxu0 0
    %4748 = vmatpush1.bf16.msra.mxu0 0
    %4749 = vmatprep.subr.bf16.mxu0 0
    %4750 = vmatpush1.bf16.msra.mxu0 0
    %4751 = vmatprep.subr.bf16.mxu0 0
    %4752 = vmatpush1.bf16.msra.mxu0 0
    %4753 = vmatprep.subr.bf16.mxu0 0
    %4754 = vmatpush1.bf16.msra.mxu0 0
    %4755 = vmatprep.subr.bf16.mxu0 0
    %4756 = vmatpush1.bf16.msra.mxu0 0
    %4757 = vmatprep.subr.bf16.mxu0 0
    %4758 = vmatpush1.bf16.msra.mxu0 0
    %4759 = vmatprep.subr.bf16.mxu0 0
    %4760 = vmatpush1.bf16.msra.mxu0 0
    %4761 = vmatprep.subr.bf16.mxu0 0
    %4762 = vmatpush1.bf16.msra.mxu0 0
    %4763 = vmatprep.subr.bf16.mxu0 0
    %4764 = vmatpush1.bf16.msra.mxu0 0
    %4765 = vmatprep.subr.bf16.mxu0 0
    %4766 = vmatpush1.bf16.msra.mxu0 0
    %4767 = vmatprep.mubr.bf16.mxu0 0
    %4768 = vmatmul.mubr.bf16.gmra.mrb[0].mxu0 %v4730
    %v4769 = vpop.f32.mrb[0].mxu0
    %v4770 = vadd.f32 0.0, %v4769
    %v4771 = vpop.f32.mrb[0].mxu0
    %v4772 = vpop.f32.mrb[0].mxu0
    %v4773 = vpop.f32.mrb[0].mxu0
    %4774 = vdwg.mxu0
    %v4776 = vsel %vm655, %v4632, 0
    %v4779 = vsel %vm711, %v4636, 0
    %4781 = vmatprep.subr.bf16.mxu0 0
    %4782 = vmatpush1.bf16.msra.mxu0 %v4779
    %4783 = vmatprep.subr.bf16.mxu0 0
    %4784 = vmatpush1.bf16.msra.mxu0 0
    %4785 = vmatprep.subr.bf16.mxu0 0
    %4786 = vmatpush1.bf16.msra.mxu0 0
    %4787 = vmatprep.subr.bf16.mxu0 0
    %4788 = vmatpush1.bf16.msra.mxu0 0
    %4789 = vmatprep.subr.bf16.mxu0 0
    %4790 = vmatpush1.bf16.msra.mxu0 0
    %4791 = vmatprep.subr.bf16.mxu0 0
    %4792 = vmatpush1.bf16.msra.mxu0 0
    %4793 = vmatprep.subr.bf16.mxu0 0
    %4794 = vmatpush1.bf16.msra.mxu0 0
    %4795 = vmatprep.subr.bf16.mxu0 0
    %4796 = vmatpush1.bf16.msra.mxu0 0
    %4797 = vmatprep.subr.bf16.mxu0 0
    %4798 = vmatpush1.bf16.msra.mxu0 0
    %4799 = vmatprep.subr.bf16.mxu0 0
    %4800 = vmatpush1.bf16.msra.mxu0 0
    %4801 = vmatprep.subr.bf16.mxu0 0
    %4802 = vmatpush1.bf16.msra.mxu0 0
    %4803 = vmatprep.subr.bf16.mxu0 0
    %4804 = vmatpush1.bf16.msra.mxu0 0
    %4805 = vmatprep.subr.bf16.mxu0 0
    %4806 = vmatpush1.bf16.msra.mxu0 0
    %4807 = vmatprep.subr.bf16.mxu0 0
    %4808 = vmatpush1.bf16.msra.mxu0 0
    %4809 = vmatprep.subr.bf16.mxu0 0
    %4810 = vmatpush1.bf16.msra.mxu0 0
    %4811 = vmatprep.subr.bf16.mxu0 0
    %4812 = vmatpush1.bf16.msra.mxu0 0
    %4813 = vmatprep.mubr.bf16.mxu0 0
    %4814 = vmatmul.mubr.bf16.gmra.mrb[0].mxu0 %v4776
    %v4815 = vpop.f32.mrb[0].mxu0
    %v4816 = vadd.f32 0.0, %v4815
    %v4817 = vpop.f32.mrb[0].mxu0
    %v4818 = vpop.f32.mrb[0].mxu0
    %v4819 = vpop.f32.mrb[0].mxu0
    %4820 = vdwg.mxu0
    %v4821 = vpack.c.bf16 %v4678, %v4678
    %v4822 = vpack.c.bf16 %v4724, %v4724
    %v4823 = vpack.c.bf16 %v4770, %v4770
    %v4824 = vpack.c.bf16 %v4816, %v4816
    %v4826 = vsel %vm470, %v4821, 0
    %4828 = vmatprep.subr.bf16.mxu0 0
    %4829 = vmatpush1.bf16.msra.mxu0 %v4180
    %4830 = vmatprep.subr.bf16.mxu0 0
    %4831 = vmatpush1.bf16.msra.mxu0 %v4181
    %4832 = vmatprep.subr.bf16.mxu0 0
    %4833 = vmatpush1.bf16.msra.mxu0 0
    %4834 = vmatprep.subr.bf16.mxu0 0
    %4835 = vmatpush1.bf16.msra.mxu0 0
    %4836 = vmatprep.subr.bf16.mxu0 0
    %4837 = vmatpush1.bf16.msra.mxu0 0
    %4838 = vmatprep.subr.bf16.mxu0 0
    %4839 = vmatpush1.bf16.msra.mxu0 0
    %4840 = vmatprep.subr.bf16.mxu0 0
    %4841 = vmatpush1.bf16.msra.mxu0 0
    %4842 = vmatprep.subr.bf16.mxu0 0
    %4843 = vmatpush1.bf16.msra.mxu0 0
    %4844 = vmatprep.subr.bf16.mxu0 0
    %4845 = vmatpush1.bf16.msra.mxu0 0
    %4846 = vmatprep.subr.bf16.mxu0 0
    %4847 = vmatpush1.bf16.msra.mxu0 0
    %4848 = vmatprep.subr.bf16.mxu0 0
    %4849 = vmatpush1.bf16.msra.mxu0 0
    %4850 = vmatprep.subr.bf16.mxu0 0
    %4851 = vmatpush1.bf16.msra.mxu0 0
    %4852 = vmatprep.subr.bf16.mxu0 0
    %4853 = vmatpush1.bf16.msra.mxu0 0
    %4854 = vmatprep.subr.bf16.mxu0 0
    %4855 = vmatpush1.bf16.msra.mxu0 0
    %4856 = vmatprep.subr.bf16.mxu0 0
    %4857 = vmatpush1.bf16.msra.mxu0 0
    %4858 = vmatprep.subr.bf16.mxu0 0
    %4859 = vmatpush1.bf16.msra.mxu0 0
    %4860 = vmatprep.mubr.bf16.mxu0 0
    %4861 = vmatmul.mubr.bf16.gmra.mrb[0].mxu0 %v4826
    %v4862 = vpop.f32.mrb[0].mxu0
    %v4863 = vadd.f32 0.0, %v4862
    %v4864 = vpop.f32.mrb[0].mxu0
    %v4865 = vpop.f32.mrb[0].mxu0
    %v4866 = vpop.f32.mrb[0].mxu0
    %4867 = vdwg.mxu0
    %v4869 = vsel %vm470, %v4822, 0
    %4871 = vmatprep.subr.bf16.mxu0 0
    %4872 = vmatpush1.bf16.msra.mxu0 %v4182
    %4873 = vmatprep.subr.bf16.mxu0 0
    %4874 = vmatpush1.bf16.msra.mxu0 %v4183
    %4875 = vmatprep.subr.bf16.mxu0 0
    %4876 = vmatpush1.bf16.msra.mxu0 0
    %4877 = vmatprep.subr.bf16.mxu0 0
    %4878 = vmatpush1.bf16.msra.mxu0 0
    %4879 = vmatprep.subr.bf16.mxu0 0
    %4880 = vmatpush1.bf16.msra.mxu0 0
    %4881 = vmatprep.subr.bf16.mxu0 0
    %4882 = vmatpush1.bf16.msra.mxu0 0
    %4883 = vmatprep.subr.bf16.mxu0 0
    %4884 = vmatpush1.bf16.msra.mxu0 0
    %4885 = vmatprep.subr.bf16.mxu0 0
    %4886 = vmatpush1.bf16.msra.mxu0 0
    %4887 = vmatprep.subr.bf16.mxu0 0
    %4888 = vmatpush1.bf16.msra.mxu0 0
    %4889 = vmatprep.subr.bf16.mxu0 0
    %4890 = vmatpush1.bf16.msra.mxu0 0
    %4891 = vmatprep.subr.bf16.mxu0 0
    %4892 = vmatpush1.bf16.msra.mxu0 0
    %4893 = vmatprep.subr.bf16.mxu0 0
    %4894 = vmatpush1.bf16.msra.mxu0 0
    %4895 = vmatprep.subr.bf16.mxu0 0
    %4896 = vmatpush1.bf16.msra.mxu0 0
    %4897 = vmatprep.subr.bf16.mxu0 0
    %4898 = vmatpush1.bf16.msra.mxu0 0
    %4899 = vmatprep.subr.bf16.mxu0 0
    %4900 = vmatpush1.bf16.msra.mxu0 0
    %4901 = vmatprep.subr.bf16.mxu0 0
    %4902 = vmatpush1.bf16.msra.mxu0 0
    %4903 = vmatprep.mubr.bf16.mxu0 0
    %4904 = vmatmul.mubr.bf16.gmra.mrb[0].mxu0 %v4869
    %v4905 = vpop.f32.mrb[0].mxu0
    %v4906 = vadd.f32 0.0, %v4905
    %v4907 = vpop.f32.mrb[0].mxu0
    %v4908 = vpop.f32.mrb[0].mxu0
    %v4909 = vpop.f32.mrb[0].mxu0
    %4910 = vdwg.mxu0
    %v4912 = vsel %vm470, %v4823, 0
    %4914 = vmatprep.subr.bf16.mxu0 0
    %4915 = vmatpush1.bf16.msra.mxu0 %v4184
    %4916 = vmatprep.subr.bf16.mxu0 0
    %4917 = vmatpush1.bf16.msra.mxu0 %v4185
    %4918 = vmatprep.subr.bf16.mxu0 0
    %4919 = vmatpush1.bf16.msra.mxu0 0
    %4920 = vmatprep.subr.bf16.mxu0 0
    %4921 = vmatpush1.bf16.msra.mxu0 0
    %4922 = vmatprep.subr.bf16.mxu0 0
    %4923 = vmatpush1.bf16.msra.mxu0 0
    %4924 = vmatprep.subr.bf16.mxu0 0
    %4925 = vmatpush1.bf16.msra.mxu0 0
    %4926 = vmatprep.subr.bf16.mxu0 0
    %4927 = vmatpush1.bf16.msra.mxu0 0
    %4928 = vmatprep.subr.bf16.mxu0 0
    %4929 = vmatpush1.bf16.msra.mxu0 0
    %4930 = vmatprep.subr.bf16.mxu0 0
    %4931 = vmatpush1.bf16.msra.mxu0 0
    %4932 = vmatprep.subr.bf16.mxu0 0
    %4933 = vmatpush1.bf16.msra.mxu0 0
    %4934 = vmatprep.subr.bf16.mxu0 0
    %4935 = vmatpush1.bf16.msra.mxu0 0
    %4936 = vmatprep.subr.bf16.mxu0 0
    %4937 = vmatpush1.bf16.msra.mxu0 0
    %4938 = vmatprep.subr.bf16.mxu0 0
    %4939 = vmatpush1.bf16.msra.mxu0 0
    %4940 = vmatprep.subr.bf16.mxu0 0
    %4941 = vmatpush1.bf16.msra.mxu0 0
    %4942 = vmatprep.subr.bf16.mxu0 0
    %4943 = vmatpush1.bf16.msra.mxu0 0
    %4944 = vmatprep.subr.bf16.mxu0 0
    %4945 = vmatpush1.bf16.msra.mxu0 0
    %4946 = vmatprep.mubr.bf16.mxu0 0
    %4947 = vmatmul.mubr.bf16.gmra.mrb[0].mxu0 %v4912
    %v4948 = vpop.f32.mrb[0].mxu0
    %v4949 = vadd.f32 0.0, %v4948
    %v4950 = vpop.f32.mrb[0].mxu0
    %v4951 = vpop.f32.mrb[0].mxu0
    %v4952 = vpop.f32.mrb[0].mxu0
    %4953 = vdwg.mxu0
    %v4955 = vsel %vm470, %v4824, 0
    %4957 = vmatprep.subr.bf16.mxu0 0
    %4958 = vmatpush1.bf16.msra.mxu0 %v4186
    %4959 = vmatprep.subr.bf16.mxu0 0
    %4960 = vmatpush1.bf16.msra.mxu0 %v4187
    %4961 = vmatprep.subr.bf16.mxu0 0
    %4962 = vmatpush1.bf16.msra.mxu0 0
    %4963 = vmatprep.subr.bf16.mxu0 0
    %4964 = vmatpush1.bf16.msra.mxu0 0
    %4965 = vmatprep.subr.bf16.mxu0 0
    %4966 = vmatpush1.bf16.msra.mxu0 0
    %4967 = vmatprep.subr.bf16.mxu0 0
    %4968 = vmatpush1.bf16.msra.mxu0 0
    %4969 = vmatprep.subr.bf16.mxu0 0
    %4970 = vmatpush1.bf16.msra.mxu0 0
    %4971 = vmatprep.subr.bf16.mxu0 0
    %4972 = vmatpush1.bf16.msra.mxu0 0
    %4973 = vmatprep.subr.bf16.mxu0 0
    %4974 = vmatpush1.bf16.msra.mxu0 0
    %4975 = vmatprep.subr.bf16.mxu0 0
    %4976 = vmatpush1.bf16.msra.mxu0 0
    %4977 = vmatprep.subr.bf16.mxu0 0
    %4978 = vmatpush1.bf16.msra.mxu0 0
    %4979 = vmatprep.subr.bf16.mxu0 0
    %4980 = vmatpush1.bf16.msra.mxu0 0
    %4981 = vmatprep.subr.bf16.mxu0 0
    %4982 = vmatpush1.bf16.msra.mxu0 0
    %4983 = vmatprep.subr.bf16.mxu0 0
    %4984 = vmatpush1.bf16.msra.mxu0 0
    %4985 = vmatprep.subr.bf16.mxu0 0
    %4986 = vmatpush1.bf16.msra.mxu0 0
    %4987 = vmatprep.subr.bf16.mxu0 0
    %4988 = vmatpush1.bf16.msra.mxu0 0
    %4989 = vmatprep.mubr.bf16.mxu0 0
    %4990 = vmatmul.mubr.bf16.gmra.mrb[0].mxu0 %v4955
    %v4991 = vpop.f32.mrb[0].mxu0
    %v4992 = vadd.f32 0.0, %v4991
    %v4993 = vpop.f32.mrb[0].mxu0
    %v4994 = vpop.f32.mrb[0].mxu0
    %v4995 = vpop.f32.mrb[0].mxu0
    %4996 = vdwg.mxu0
    %v4997 = vadd.f32 %v4863, %v4906
    %v4998 = vadd.f32 %v4997, %v4949
    %v4999 = vadd.f32 %v4998, %v4992
    %s5000 = scalar_lea.vmem %s7, 1
    %v5001 = vld [vmem:[%s5000] sm:$0x1]
    %v5003 = vlaneseq
    %v5004 = vshrl.u32 %v5003, 7
    %v5005 = vsub.s32 0, %v5004
    %v5006 = vrot.slane %v5001, %v5005
    %v5008 = vadd.f32 %v4362, %v5006
    %v5009 = vadd.f32 %v4999, %v5006
    %v5010 = vadd.f32 %v3523, %v5008
    %v5011 = vadd.f32 %v3524, %v5009
    %s5012 = scalar_lea.vmem %s18, 1
    %v5013 = vld [vmem:[%s5012] sm:$0x1]
    %s5014 = scalar_lea.vmem %s19, 1
    %v5015 = vld [vmem:[%s5014] sm:$0x1]
    %5016 = vadd.xlane.f32.xlu0 %v5010
    %v5017 = vpop.xlane.xlu0 %5016
    %5018 = vadd.xlane.f32.xlu0 %v5011
    %v5019 = vpop.xlane.xlu0 %5018
    %v5020 = vmul.f32 %v5017, %v1734
    %v5021 = vmul.f32 %v5019, %v1734
    %v5022 = vmul.f32 %v5010, %v5010
    %v5023 = vmul.f32 %v5011, %v5011
    %5024 = vadd.xlane.f32.xlu0 %v5022
    %v5025 = vpop.xlane.xlu0 %5024
    %5026 = vadd.xlane.f32.xlu0 %v5023
    %v5027 = vpop.xlane.xlu0 %5026
    %v5028 = vmul.f32 %v5025, %v1734
    %v5029 = vmul.f32 %v5027, %v1734
    %v5030 = vmul.f32 %v5020, %v5020
    %v5031 = vmul.f32 %v5021, %v5021
    %v5032 = vsub.f32 %v5028, %v5030
    %v5033 = vsub.f32 %v5029, %v5031
    %v5034 = vsub.f32 %v5010, %v5020
    %v5035 = vsub.f32 %v5011, %v5021
    %v5036 = vadd.f32 %v5032, 1e-06
    %v5037 = vadd.f32 %v5033, 1e-06
    %v5038 = vrsqrt.pop %v5036
    %v5039 = vrsqrt.pop %v5037
    %v5040 = vmul.f32 %v5034, %v5038
    %v5041 = vmul.f32 %v5035, %v5039
    %v5043 = vlaneseq
    %v5044 = vshrl.u32 %v5043, 7
    %v5045 = vsub.s32 0, %v5044
    %v5046 = vrot.slane %v5013, %v5045
    %v5048 = vmul.f32 %v5040, %v5046
    %v5049 = vmul.f32 %v5041, %v5046
    %v5051 = vlaneseq
    %v5052 = vshrl.u32 %v5051, 7
    %v5053 = vsub.s32 0, %v5052
    %v5054 = vrot.slane %v5015, %v5053
    %v5056 = vadd.f32 %v5048, %v5054
    %v5057 = vadd.f32 %v5049, %v5054
    %s5058 = scalar_lea.vmem [#allocation13], 128
    %v5059 = vld [vmem:[%s5058] sm:$0xff]
    %v5060 = vld [vmem:[%s5058 + $0x8] sm:$0xff]
    %v5061 = vld [vmem:[%s5058 + $0x10] sm:$0xff]
    %v5062 = vld [vmem:[%s5058 + $0x18] sm:$0xff]
    %v5063 = vld [vmem:[%s5058 + $0x20] sm:$0xff]
    %v5064 = vld [vmem:[%s5058 + $0x28] sm:$0xff]
    %v5065 = vld [vmem:[%s5058 + $0x30] sm:$0xff]
    %v5066 = vld [vmem:[%s5058 + $0x38] sm:$0xff]
    %v5067 = vld [vmem:[%s5058 + $0x40] sm:$0xff]
    %v5068 = vld [vmem:[%s5058 + $0x48] sm:$0xff]
    %v5069 = vld [vmem:[%s5058 + $0x50] sm:$0xff]
    %v5070 = vld [vmem:[%s5058 + $0x58] sm:$0xff]
    %v5071 = vld [vmem:[%s5058 + $0x60] sm:$0xff]
    %v5072 = vld [vmem:[%s5058 + $0x68] sm:$0xff]
    %v5073 = vld [vmem:[%s5058 + $0x70] sm:$0xff]
    %v5074 = vld [vmem:[%s5058 + $0x78] sm:$0xff]
    %v5075 = vpack.c.bf16 %v5057, %v5056
    %v5076 = vpack.c.bf16 %v5060, %v5059
    %v5077 = vpack.c.bf16 %v5062, %v5061
    %v5078 = vpack.c.bf16 %v5064, %v5063
    %v5079 = vpack.c.bf16 %v5066, %v5065
    %v5080 = vpack.c.bf16 %v5068, %v5067
    %v5081 = vpack.c.bf16 %v5070, %v5069
    %v5082 = vpack.c.bf16 %v5072, %v5071
    %v5083 = vpack.c.bf16 %v5074, %v5073
    %s5084 = scalar_lea.vmem %s9, 1
    %v5085 = vld [vmem:[%s5084] sm:$0x1]
    %v5087 = vlaneseq
    %v5088 = vshrl.u32 %v5087, 7
    %v5089 = vsub.s32 0, %v5088
    %v5090 = vrot.slane %v5085, %v5089
    %5092 = vmatprep.subr.bf16.mxu0 0
    %5093 = vmatpush1.bf16.msra.mxu0 %v5076
    %5094 = vmatprep.subr.bf16.mxu0 0
    %5095 = vmatpush1.bf16.msra.mxu0 %v5077
    %5096 = vmatprep.subr.bf16.mxu0 0
    %5097 = vmatpush1.bf16.msra.mxu0 %v5078
    %5098 = vmatprep.subr.bf16.mxu0 0
    %5099 = vmatpush1.bf16.msra.mxu0 %v5079
    %5100 = vmatprep.subr.bf16.mxu0 0
    %5101 = vmatpush1.bf16.msra.mxu0 %v5080
    %5102 = vmatprep.subr.bf16.mxu0 0
    %5103 = vmatpush1.bf16.msra.mxu0 %v5081
    %5104 = vmatprep.subr.bf16.mxu0 0
    %5105 = vmatpush1.bf16.msra.mxu0 %v5082
    %5106 = vmatprep.subr.bf16.mxu0 0
    %5107 = vmatpush1.bf16.msra.mxu0 %v5083
    %5108 = vmatprep.subr.bf16.mxu0 0
    %5109 = vmatpush1.bf16.msra.mxu0 0
    %5110 = vmatprep.subr.bf16.mxu0 0
    %5111 = vmatpush1.bf16.msra.mxu0 0
    %5112 = vmatprep.subr.bf16.mxu0 0
    %5113 = vmatpush1.bf16.msra.mxu0 0
    %5114 = vmatprep.subr.bf16.mxu0 0
    %5115 = vmatpush1.bf16.msra.mxu0 0
    %5116 = vmatprep.subr.bf16.mxu0 0
    %5117 = vmatpush1.bf16.msra.mxu0 0
    %5118 = vmatprep.subr.bf16.mxu0 0
    %5119 = vmatpush1.bf16.msra.mxu0 0
    %5120 = vmatprep.subr.bf16.mxu0 0
    %5121 = vmatpush1.bf16.msra.mxu0 0
    %5122 = vmatprep.subr.bf16.mxu0 0
    %5123 = vmatpush1.bf16.msra.mxu0 0
    %5124 = vmatprep.mubr.bf16.mxu0 0
    %5125 = vmatmul.mubr.bf16.gmra.mrb[0].mxu0 %v5075
    %v5126 = vpop.f32.mrb[0].mxu0
    %v5127 = vadd.f32 %v5090, %v5126
    %v5128 = vpop.f32.mrb[0].mxu0
    %v5129 = vpop.f32.mrb[0].mxu0
    %v5130 = vadd.f32 %v5090, %v5129
    %v5131 = vpop.f32.mrb[0].mxu0
    %5132 = vdwg.mxu0
    %s5133 = scalar_lea.vmem [#allocation14], 256
    %v5134 = vld [vmem:[%s5133] sm:$0xff]
    %v5135 = vld [vmem:[%s5133 + $0x8] sm:$0xff]
    %v5136 = vld [vmem:[%s5133 + $0x10] sm:$0xff]
    %v5137 = vld [vmem:[%s5133 + $0x18] sm:$0xff]
    %v5138 = vld [vmem:[%s5133 + $0x20] sm:$0xff]
    %v5139 = vld [vmem:[%s5133 + $0x28] sm:$0xff]
    %v5140 = vld [vmem:[%s5133 + $0x30] sm:$0xff]
    %v5141 = vld [vmem:[%s5133 + $0x38] sm:$0xff]
    %v5142 = vld [vmem:[%s5133 + $0x40] sm:$0xff]
    %v5143 = vld [vmem:[%s5133 + $0x48] sm:$0xff]
    %v5144 = vld [vmem:[%s5133 + $0x50] sm:$0xff]
    %v5145 = vld [vmem:[%s5133 + $0x58] sm:$0xff]
    %v5146 = vld [vmem:[%s5133 + $0x60] sm:$0xff]
    %v5147 = vld [vmem:[%s5133 + $0x68] sm:$0xff]
    %v5148 = vld [vmem:[%s5133 + $0x70] sm:$0xff]
    %v5149 = vld [vmem:[%s5133 + $0x78] sm:$0xff]
    %v5150 = vld [vmem:[%s5133 + $0x80] sm:$0xff]
    %v5151 = vld [vmem:[%s5133 + $0x88] sm:$0xff]
    %v5152 = vld [vmem:[%s5133 + $0x90] sm:$0xff]
    %v5153 = vld [vmem:[%s5133 + $0x98] sm:$0xff]
    %v5154 = vld [vmem:[%s5133 + $0xa0] sm:$0xff]
    %v5155 = vld [vmem:[%s5133 + $0xa8] sm:$0xff]
    %v5156 = vld [vmem:[%s5133 + $0xb0] sm:$0xff]
    %v5157 = vld [vmem:[%s5133 + $0xb8] sm:$0xff]
    %v5158 = vld [vmem:[%s5133 + $0xc0] sm:$0xff]
    %v5159 = vld [vmem:[%s5133 + $0xc8] sm:$0xff]
    %v5160 = vld [vmem:[%s5133 + $0xd0] sm:$0xff]
    %v5161 = vld [vmem:[%s5133 + $0xd8] sm:$0xff]
    %v5162 = vld [vmem:[%s5133 + $0xe0] sm:$0xff]
    %v5163 = vld [vmem:[%s5133 + $0xe8] sm:$0xff]
    %v5164 = vld [vmem:[%s5133 + $0xf0] sm:$0xff]
    %v5165 = vld [vmem:[%s5133 + $0xf8] sm:$0xff]
    %v5166 = vpack.c.bf16 %v5136, %v5134
    %v5167 = vpack.c.bf16 %v5137, %v5135
    %v5168 = vpack.c.bf16 %v5140, %v5138
    %v5169 = vpack.c.bf16 %v5141, %v5139
    %v5170 = vpack.c.bf16 %v5144, %v5142
    %v5171 = vpack.c.bf16 %v5145, %v5143
    %v5172 = vpack.c.bf16 %v5148, %v5146
    %v5173 = vpack.c.bf16 %v5149, %v5147
    %v5174 = vpack.c.bf16 %v5152, %v5150
    %v5175 = vpack.c.bf16 %v5153, %v5151
    %v5176 = vpack.c.bf16 %v5156, %v5154
    %v5177 = vpack.c.bf16 %v5157, %v5155
    %v5178 = vpack.c.bf16 %v5160, %v5158
    %v5179 = vpack.c.bf16 %v5161, %v5159
    %v5180 = vpack.c.bf16 %v5164, %v5162
    %v5181 = vpack.c.bf16 %v5165, %v5163
    %s5182 = scalar_lea.vmem %s11, 2
    %v5183 = vld [vmem:[%s5182] sm:$0x3]
    %v5185 = vlaneseq
    %v5186 = vshrl.u32 %v5185, 7
    %v5187 = vsub.s32 0, %v5186
    %v5188 = vrot.slane %v5183, %v5187
    %v5189 = vlaneseq
    %v5190 = vshrl.u32 %v5189, 7
    %v5191 = vsub.s32 1, %v5190
    %v5192 = vrot.slane %v5183, %v5191
    %5195 = vmatprep.subr.bf16.mxu0 %v5167
    %5196 = vmatpush1.bf16.msra.mxu0 %v5166
    %5197 = vmatprep.subr.bf16.mxu0 %v5169
    %5198 = vmatpush1.bf16.msra.mxu0 %v5168
    %5199 = vmatprep.subr.bf16.mxu0 %v5171
    %5200 = vmatpush1.bf16.msra.mxu0 %v5170
    %5201 = vmatprep.subr.bf16.mxu0 %v5173
    %5202 = vmatpush1.bf16.msra.mxu0 %v5172
    %5203 = vmatprep.subr.bf16.mxu0 %v5175
    %5204 = vmatpush1.bf16.msra.mxu0 %v5174
    %5205 = vmatprep.subr.bf16.mxu0 %v5177
    %5206 = vmatpush1.bf16.msra.mxu0 %v5176
    %5207 = vmatprep.subr.bf16.mxu0 %v5179
    %5208 = vmatpush1.bf16.msra.mxu0 %v5178
    %5209 = vmatprep.subr.bf16.mxu0 %v5181
    %5210 = vmatpush1.bf16.msra.mxu0 %v5180
    %5211 = vmatprep.subr.bf16.mxu0 0
    %5212 = vmatpush1.bf16.msra.mxu0 0
    %5213 = vmatprep.subr.bf16.mxu0 0
    %5214 = vmatpush1.bf16.msra.mxu0 0
    %5215 = vmatprep.subr.bf16.mxu0 0
    %5216 = vmatpush1.bf16.msra.mxu0 0
    %5217 = vmatprep.subr.bf16.mxu0 0
    %5218 = vmatpush1.bf16.msra.mxu0 0
    %5219 = vmatprep.subr.bf16.mxu0 0
    %5220 = vmatpush1.bf16.msra.mxu0 0
    %5221 = vmatprep.subr.bf16.mxu0 0
    %5222 = vmatpush1.bf16.msra.mxu0 0
    %5223 = vmatprep.subr.bf16.mxu0 0
    %5224 = vmatpush1.bf16.msra.mxu0 0
    %5225 = vmatprep.subr.bf16.mxu0 0
    %5226 = vmatpush1.bf16.msra.mxu0 0
    %5227 = vmatprep.mubr.bf16.mxu0 0
    %5228 = vmatmul.mubr.bf16.gmra.mrb[0].mxu0 %v1878
    %v5229 = vpop.f32.mrb[0].mxu0
    %v5230 = vadd.f32 %v5188, %v5229
    %v5231 = vpop.f32.mrb[0].mxu0
    %v5232 = vadd.f32 %v5192, %v5231
    %v5233 = vpop.f32.mrb[0].mxu0
    %v5234 = vadd.f32 %v5188, %v5233
    %v5235 = vpop.f32.mrb[0].mxu0
    %v5236 = vadd.f32 %v5192, %v5235
    %5237 = vmatprep.mubr.bf16.mxu0 0
    %5238 = vmatmul.mubr.bf16.gmra.mrb[0].mxu0 %v1879
    %v5239 = vpop.f32.mrb[0].mxu0
    %v5240 = vadd.f32 %v5188, %v5239
    %v5241 = vpop.f32.mrb[0].mxu0
    %v5242 = vadd.f32 %v5192, %v5241
    %v5243 = vpop.f32.mrb[0].mxu0
    %v5244 = vadd.f32 %v5188, %v5243
    %v5245 = vpop.f32.mrb[0].mxu0
    %v5246 = vadd.f32 %v5192, %v5245
    %5247 = vdwg.mxu0
    %s5248 = scalar_lea.vmem [#allocation16], 128
    %v5249 = vld [vmem:[%s5248] sm:$0xff]
    %v5250 = vld [vmem:[%s5248 + $0x8] sm:$0xff]
    %v5251 = vld [vmem:[%s5248 + $0x10] sm:$0xff]
    %v5252 = vld [vmem:[%s5248 + $0x18] sm:$0xff]
    %v5253 = vld [vmem:[%s5248 + $0x20] sm:$0xff]
    %v5254 = vld [vmem:[%s5248 + $0x28] sm:$0xff]
    %v5255 = vld [vmem:[%s5248 + $0x30] sm:$0xff]
    %v5256 = vld [vmem:[%s5248 + $0x38] sm:$0xff]
    %v5257 = vld [vmem:[%s5248 + $0x40] sm:$0xff]
    %v5258 = vld [vmem:[%s5248 + $0x48] sm:$0xff]
    %v5259 = vld [vmem:[%s5248 + $0x50] sm:$0xff]
    %v5260 = vld [vmem:[%s5248 + $0x58] sm:$0xff]
    %v5261 = vld [vmem:[%s5248 + $0x60] sm:$0xff]
    %v5262 = vld [vmem:[%s5248 + $0x68] sm:$0xff]
    %v5263 = vld [vmem:[%s5248 + $0x70] sm:$0xff]
    %v5264 = vld [vmem:[%s5248 + $0x78] sm:$0xff]
    %5266 = vrot.lane.b32.xlu0 %v5127, 96
    %v5267 = vpop.permute.xlu0 %5266
    %5269 = vrot.lane.b32.xlu0 %v5127, 64
    %v5270 = vpop.permute.xlu0 %5269
    %5272 = vrot.lane.b32.xlu0 %v5127, 32
    %v5273 = vpop.permute.xlu0 %5272
    %5277 = vrot.lane.b32.xlu0 %v5230, 96
    %v5278 = vpop.permute.xlu0 %5277
    %5279 = vrot.lane.b32.xlu0 %v5234, 96
    %v5280 = vpop.permute.xlu0 %5279
    %5283 = vrot.lane.b32.xlu0 %v5230, 64
    %v5284 = vpop.permute.xlu0 %5283
    %5285 = vrot.lane.b32.xlu0 %v5234, 64
    %v5286 = vpop.permute.xlu0 %5285
    %5289 = vrot.lane.b32.xlu0 %v5230, 32
    %v5290 = vpop.permute.xlu0 %5289
    %5291 = vrot.lane.b32.xlu0 %v5234, 32
    %v5292 = vpop.permute.xlu0 %5291
    %5297 = vrot.lane.b32.xlu0 %v5232, 96
    %v5298 = vpop.permute.xlu0 %5297
    %5299 = vrot.lane.b32.xlu0 %v5236, 96
    %v5300 = vpop.permute.xlu0 %5299
    %5303 = vrot.lane.b32.xlu0 %v5232, 64
    %v5304 = vpop.permute.xlu0 %5303
    %5305 = vrot.lane.b32.xlu0 %v5236, 64
    %v5306 = vpop.permute.xlu0 %5305
    %5309 = vrot.lane.b32.xlu0 %v5232, 32
    %v5310 = vpop.permute.xlu0 %5309
    %5311 = vrot.lane.b32.xlu0 %v5236, 32
    %v5312 = vpop.permute.xlu0 %5311
    %v5315 = vpack.c.bf16 %v5127, %v5127
    %v5316 = vpack.c.bf16 %v5267, %v5267
    %v5317 = vpack.c.bf16 %v5270, %v5270
    %v5318 = vpack.c.bf16 %v5273, %v5273
    %v5319 = vpack.c.bf16 %v5234, %v5230
    %v5320 = vpack.c.bf16 %v5280, %v5278
    %v5321 = vpack.c.bf16 %v5286, %v5284
    %v5322 = vpack.c.bf16 %v5292, %v5290
    %v5324 = vsel %vm470, %v5315, 0
    %v5327 = vsel %vm470, %v5319, 0
    %5329 = vmatprep.subr.bf16.mxu0 0
    %5330 = vmatpush1.bf16.xpose.msra.mxu0 %v5327
    %5331 = vmatprep.subr.bf16.mxu0 0
    %5332 = vmatpush1.bf16.xpose.msra.mxu0 0
    %5333 = vmatprep.subr.bf16.mxu0 0
    %5334 = vmatpush1.bf16.xpose.msra.mxu0 0
    %5335 = vmatprep.subr.bf16.mxu0 0
    %5336 = vmatpush1.bf16.xpose.msra.mxu0 0
    %5337 = vmatprep.subr.bf16.mxu0 0
    %5338 = vmatpush1.bf16.xpose.msra.mxu0 0
    %5339 = vmatprep.subr.bf16.mxu0 0
    %5340 = vmatpush1.bf16.xpose.msra.mxu0 0
    %5341 = vmatprep.subr.bf16.mxu0 0
    %5342 = vmatpush1.bf16.xpose.msra.mxu0 0
    %5343 = vmatprep.subr.bf16.mxu0 0
    %5344 = vmatpush1.bf16.xpose.msra.mxu0 0
    %5345 = vmatprep.subr.bf16.mxu0 0
    %5346 = vmatpush1.bf16.xpose.msra.mxu0 0
    %5347 = vmatprep.subr.bf16.mxu0 0
    %5348 = vmatpush1.bf16.xpose.msra.mxu0 0
    %5349 = vmatprep.subr.bf16.mxu0 0
    %5350 = vmatpush1.bf16.xpose.msra.mxu0 0
    %5351 = vmatprep.subr.bf16.mxu0 0
    %5352 = vmatpush1.bf16.xpose.msra.mxu0 0
    %5353 = vmatprep.subr.bf16.mxu0 0
    %5354 = vmatpush1.bf16.xpose.msra.mxu0 0
    %5355 = vmatprep.subr.bf16.mxu0 0
    %5356 = vmatpush1.bf16.xpose.msra.mxu0 0
    %5357 = vmatprep.subr.bf16.mxu0 0
    %5358 = vmatpush1.bf16.xpose.msra.mxu0 0
    %5359 = vmatprep.subr.bf16.mxu0 0
    %5360 = vmatpush1.bf16.xpose.msra.mxu0 0
    %5361 = vmatprep.mubr.bf16.mxu0 0
    %5362 = vmatmul.mubr.bf16.gmra.mrb[0].mxu0 %v5324
    %v5363 = vpop.f32.mrb[0].mxu0
    %v5364 = vadd.f32 %v240, %v5363
    %v5365 = vpop.f32.mrb[0].mxu0
    %v5366 = vpop.f32.mrb[0].mxu0
    %v5367 = vpop.f32.mrb[0].mxu0
    %5368 = vdwg.mxu0
    %v5370 = vsel %vm470, %v5316, 0
    %v5373 = vsel %vm470, %v5320, 0
    %5375 = vmatprep.subr.bf16.mxu0 0
    %5376 = vmatpush1.bf16.xpose.msra.mxu0 %v5373
    %5377 = vmatprep.subr.bf16.mxu0 0
    %5378 = vmatpush1.bf16.xpose.msra.mxu0 0
    %5379 = vmatprep.subr.bf16.mxu0 0
    %5380 = vmatpush1.bf16.xpose.msra.mxu0 0
    %5381 = vmatprep.subr.bf16.mxu0 0
    %5382 = vmatpush1.bf16.xpose.msra.mxu0 0
    %5383 = vmatprep.subr.bf16.mxu0 0
    %5384 = vmatpush1.bf16.xpose.msra.mxu0 0
    %5385 = vmatprep.subr.bf16.mxu0 0
    %5386 = vmatpush1.bf16.xpose.msra.mxu0 0
    %5387 = vmatprep.subr.bf16.mxu0 0
    %5388 = vmatpush1.bf16.xpose.msra.mxu0 0
    %5389 = vmatprep.subr.bf16.mxu0 0
    %5390 = vmatpush1.bf16.xpose.msra.mxu0 0
    %5391 = vmatprep.subr.bf16.mxu0 0
    %5392 = vmatpush1.bf16.xpose.msra.mxu0 0
    %5393 = vmatprep.subr.bf16.mxu0 0
    %5394 = vmatpush1.bf16.xpose.msra.mxu0 0
    %5395 = vmatprep.subr.bf16.mxu0 0
    %5396 = vmatpush1.bf16.xpose.msra.mxu0 0
    %5397 = vmatprep.subr.bf16.mxu0 0
    %5398 = vmatpush1.bf16.xpose.msra.mxu0 0
    %5399 = vmatprep.subr.bf16.mxu0 0
    %5400 = vmatpush1.bf16.xpose.msra.mxu0 0
    %5401 = vmatprep.subr.bf16.mxu0 0
    %5402 = vmatpush1.bf16.xpose.msra.mxu0 0
    %5403 = vmatprep.subr.bf16.mxu0 0
    %5404 = vmatpush1.bf16.xpose.msra.mxu0 0
    %5405 = vmatprep.subr.bf16.mxu0 0
    %5406 = vmatpush1.bf16.xpose.msra.mxu0 0
    %5407 = vmatprep.mubr.bf16.mxu0 0
    %5408 = vmatmul.mubr.bf16.gmra.mrb[0].mxu0 %v5370
    %v5409 = vpop.f32.mrb[0].mxu0
    %v5410 = vadd.f32 %v240, %v5409
    %v5411 = vpop.f32.mrb[0].mxu0
    %v5412 = vpop.f32.mrb[0].mxu0
    %v5413 = vpop.f32.mrb[0].mxu0
    %5414 = vdwg.mxu0
    %v5416 = vsel %vm470, %v5317, 0
    %v5419 = vsel %vm470, %v5321, 0
    %5421 = vmatprep.subr.bf16.mxu0 0
    %5422 = vmatpush1.bf16.xpose.msra.mxu0 %v5419
    %5423 = vmatprep.subr.bf16.mxu0 0
    %5424 = vmatpush1.bf16.xpose.msra.mxu0 0
    %5425 = vmatprep.subr.bf16.mxu0 0
    %5426 = vmatpush1.bf16.xpose.msra.mxu0 0
    %5427 = vmatprep.subr.bf16.mxu0 0
    %5428 = vmatpush1.bf16.xpose.msra.mxu0 0
    %5429 = vmatprep.subr.bf16.mxu0 0
    %5430 = vmatpush1.bf16.xpose.msra.mxu0 0
    %5431 = vmatprep.subr.bf16.mxu0 0
    %5432 = vmatpush1.bf16.xpose.msra.mxu0 0
    %5433 = vmatprep.subr.bf16.mxu0 0
    %5434 = vmatpush1.bf16.xpose.msra.mxu0 0
    %5435 = vmatprep.subr.bf16.mxu0 0
    %5436 = vmatpush1.bf16.xpose.msra.mxu0 0
    %5437 = vmatprep.subr.bf16.mxu0 0
    %5438 = vmatpush1.bf16.xpose.msra.mxu0 0
    %5439 = vmatprep.subr.bf16.mxu0 0
    %5440 = vmatpush1.bf16.xpose.msra.mxu0 0
    %5441 = vmatprep.subr.bf16.mxu0 0
    %5442 = vmatpush1.bf16.xpose.msra.mxu0 0
    %5443 = vmatprep.subr.bf16.mxu0 0
    %5444 = vmatpush1.bf16.xpose.msra.mxu0 0
    %5445 = vmatprep.subr.bf16.mxu0 0
    %5446 = vmatpush1.bf16.xpose.msra.mxu0 0
    %5447 = vmatprep.subr.bf16.mxu0 0
    %5448 = vmatpush1.bf16.xpose.msra.mxu0 0
    %5449 = vmatprep.subr.bf16.mxu0 0
    %5450 = vmatpush1.bf16.xpose.msra.mxu0 0
    %5451 = vmatprep.subr.bf16.mxu0 0
    %5452 = vmatpush1.bf16.xpose.msra.mxu0 0
    %5453 = vmatprep.mubr.bf16.mxu0 0
    %5454 = vmatmul.mubr.bf16.gmra.mrb[0].mxu0 %v5416
    %v5455 = vpop.f32.mrb[0].mxu0
    %v5456 = vadd.f32 %v240, %v5455
    %v5457 = vpop.f32.mrb[0].mxu0
    %v5458 = vpop.f32.mrb[0].mxu0
    %v5459 = vpop.f32.mrb[0].mxu0
    %5460 = vdwg.mxu0
    %v5462 = vsel %vm470, %v5318, 0
    %v5465 = vsel %vm470, %v5322, 0
    %5467 = vmatprep.subr.bf16.mxu0 0
    %5468 = vmatpush1.bf16.xpose.msra.mxu0 %v5465
    %5469 = vmatprep.subr.bf16.mxu0 0
    %5470 = vmatpush1.bf16.xpose.msra.mxu0 0
    %5471 = vmatprep.subr.bf16.mxu0 0
    %5472 = vmatpush1.bf16.xpose.msra.mxu0 0
    %5473 = vmatprep.subr.bf16.mxu0 0
    %5474 = vmatpush1.bf16.xpose.msra.mxu0 0
    %5475 = vmatprep.subr.bf16.mxu0 0
    %5476 = vmatpush1.bf16.xpose.msra.mxu0 0
    %5477 = vmatprep.subr.bf16.mxu0 0
    %5478 = vmatpush1.bf16.xpose.msra.mxu0 0
    %5479 = vmatprep.subr.bf16.mxu0 0
    %5480 = vmatpush1.bf16.xpose.msra.mxu0 0
    %5481 = vmatprep.subr.bf16.mxu0 0
    %5482 = vmatpush1.bf16.xpose.msra.mxu0 0
    %5483 = vmatprep.subr.bf16.mxu0 0
    %5484 = vmatpush1.bf16.xpose.msra.mxu0 0
    %5485 = vmatprep.subr.bf16.mxu0 0
    %5486 = vmatpush1.bf16.xpose.msra.mxu0 0
    %5487 = vmatprep.subr.bf16.mxu0 0
    %5488 = vmatpush1.bf16.xpose.msra.mxu0 0
    %5489 = vmatprep.subr.bf16.mxu0 0
    %5490 = vmatpush1.bf16.xpose.msra.mxu0 0
    %5491 = vmatprep.subr.bf16.mxu0 0
    %5492 = vmatpush1.bf16.xpose.msra.mxu0 0
    %5493 = vmatprep.subr.bf16.mxu0 0
    %5494 = vmatpush1.bf16.xpose.msra.mxu0 0
    %5495 = vmatprep.subr.bf16.mxu0 0
    %5496 = vmatpush1.bf16.xpose.msra.mxu0 0
    %5497 = vmatprep.subr.bf16.mxu0 0
    %5498 = vmatpush1.bf16.xpose.msra.mxu0 0
    %5499 = vmatprep.mubr.bf16.mxu0 0
    %5500 = vmatmul.mubr.bf16.gmra.mrb[0].mxu0 %v5462
    %v5501 = vpop.f32.mrb[0].mxu0
    %v5502 = vadd.f32 %v240, %v5501
    %v5503 = vpop.f32.mrb[0].mxu0
    %v5504 = vpop.f32.mrb[0].mxu0
    %v5505 = vpop.f32.mrb[0].mxu0
    %5506 = vdwg.mxu0
    %v5507 = vsel %vm2219, %v5364, -inf
    %5508 = vmax.xlane.f32.xlu0 %v5507
    %v5509 = vpop.xlane.xlu0 %5508
    %v5510 = vsel %vm2219, %v5410, -inf
    %5511 = vmax.xlane.f32.xlu0 %v5510
    %v5512 = vpop.xlane.xlu0 %5511
    %v5513 = vsel %vm2219, %v5456, -inf
    %5514 = vmax.xlane.f32.xlu0 %v5513
    %v5515 = vpop.xlane.xlu0 %5514
    %v5516 = vsel %vm2219, %v5502, -inf
    %5517 = vmax.xlane.f32.xlu0 %v5516
    %v5518 = vpop.xlane.xlu0 %5517
    %v5519 = vsub.f32 %v5364, %v5509
    %v5520 = vsub.f32 %v5410, %v5512
    %v5521 = vsub.f32 %v5456, %v5515
    %v5522 = vsub.f32 %v5502, %v5518
    %v5523 = vmul.f32 %v5519, 1.442695
    %v5524 = vpow.pop %v5523
    %v5525 = vmul.f32 %v5520, 1.442695
    %v5526 = vpow.pop %v5525
    %v5527 = vmul.f32 %v5521, 1.442695
    %v5528 = vpow.pop %v5527
    %v5529 = vmul.f32 %v5522, 1.442695
    %v5530 = vpow.pop %v5529
    %v5531 = vsel %vm2219, %v5524, 0.0
    %5532 = vadd.xlane.f32.xlu0 %v5531
    %v5533 = vpop.xlane.xlu0 %5532
    %v5534 = vsel %vm2219, %v5526, 0.0
    %5535 = vadd.xlane.f32.xlu0 %v5534
    %v5536 = vpop.xlane.xlu0 %5535
    %v5537 = vsel %vm2219, %v5528, 0.0
    %5538 = vadd.xlane.f32.xlu0 %v5537
    %v5539 = vpop.xlane.xlu0 %5538
    %v5540 = vsel %vm2219, %v5530, 0.0
    %5541 = vadd.xlane.f32.xlu0 %v5540
    %v5542 = vpop.xlane.xlu0 %5541
    %v5543 = vrcp.pop %v5533
    %v5544 = vrcp.pop %v5536
    %v5545 = vrcp.pop %v5539
    %v5546 = vrcp.pop %v5542
    %v5547 = vmul.f32 %v5524, %v5543
    %v5548 = vmul.f32 %v5526, %v5544
    %v5549 = vmul.f32 %v5528, %v5545
    %v5550 = vmul.f32 %v5530, %v5546
    %v5551 = vpack.c.bf16 %v5547, %v5547
    %v5552 = vpack.c.bf16 %v5548, %v5548
    %v5553 = vpack.c.bf16 %v5549, %v5549
    %v5554 = vpack.c.bf16 %v5550, %v5550
    %v5555 = vpack.c.bf16 %v5236, %v5232
    %v5556 = vpack.c.bf16 %v5300, %v5298
    %v5557 = vpack.c.bf16 %v5306, %v5304
    %v5558 = vpack.c.bf16 %v5312, %v5310
    %v5560 = vsel %vm2219, %v5551, 0
    %5562 = vmatprep.subr.bf16.mxu0 0
    %5563 = vmatpush1.bf16.msra.mxu0 %v5555
    %5564 = vmatprep.subr.bf16.mxu0 0
    %5565 = vmatpush1.bf16.msra.mxu0 0
    %5566 = vmatprep.subr.bf16.mxu0 0
    %5567 = vmatpush1.bf16.msra.mxu0 0
    %5568 = vmatprep.subr.bf16.mxu0 0
    %5569 = vmatpush1.bf16.msra.mxu0 0
    %5570 = vmatprep.subr.bf16.mxu0 0
    %5571 = vmatpush1.bf16.msra.mxu0 0
    %5572 = vmatprep.subr.bf16.mxu0 0
    %5573 = vmatpush1.bf16.msra.mxu0 0
    %5574 = vmatprep.subr.bf16.mxu0 0
    %5575 = vmatpush1.bf16.msra.mxu0 0
    %5576 = vmatprep.subr.bf16.mxu0 0
    %5577 = vmatpush1.bf16.msra.mxu0 0
    %5578 = vmatprep.subr.bf16.mxu0 0
    %5579 = vmatpush1.bf16.msra.mxu0 0
    %5580 = vmatprep.subr.bf16.mxu0 0
    %5581 = vmatpush1.bf16.msra.mxu0 0
    %5582 = vmatprep.subr.bf16.mxu0 0
    %5583 = vmatpush1.bf16.msra.mxu0 0
    %5584 = vmatprep.subr.bf16.mxu0 0
    %5585 = vmatpush1.bf16.msra.mxu0 0
    %5586 = vmatprep.subr.bf16.mxu0 0
    %5587 = vmatpush1.bf16.msra.mxu0 0
    %5588 = vmatprep.subr.bf16.mxu0 0
    %5589 = vmatpush1.bf16.msra.mxu0 0
    %5590 = vmatprep.subr.bf16.mxu0 0
    %5591 = vmatpush1.bf16.msra.mxu0 0
    %5592 = vmatprep.subr.bf16.mxu0 0
    %5593 = vmatpush1.bf16.msra.mxu0 0
    %5594 = vmatprep.mubr.bf16.mxu0 0
    %5595 = vmatmul.mubr.bf16.gmra.mrb[0].mxu0 %v5560
    %v5596 = vpop.f32.mrb[0].mxu0
    %v5597 = vadd.f32 0.0, %v5596
    %v5598 = vpop.f32.mrb[0].mxu0
    %v5599 = vpop.f32.mrb[0].mxu0
    %v5600 = vpop.f32.mrb[0].mxu0
    %5601 = vdwg.mxu0
    %v5603 = vsel %vm2219, %v5552, 0
    %5605 = vmatprep.subr.bf16.mxu0 0
    %5606 = vmatpush1.bf16.msra.mxu0 %v5556
    %5607 = vmatprep.subr.bf16.mxu0 0
    %5608 = vmatpush1.bf16.msra.mxu0 0
    %5609 = vmatprep.subr.bf16.mxu0 0
    %5610 = vmatpush1.bf16.msra.mxu0 0
    %5611 = vmatprep.subr.bf16.mxu0 0
    %5612 = vmatpush1.bf16.msra.mxu0 0
    %5613 = vmatprep.subr.bf16.mxu0 0
    %5614 = vmatpush1.bf16.msra.mxu0 0
    %5615 = vmatprep.subr.bf16.mxu0 0
    %5616 = vmatpush1.bf16.msra.mxu0 0
    %5617 = vmatprep.subr.bf16.mxu0 0
    %5618 = vmatpush1.bf16.msra.mxu0 0
    %5619 = vmatprep.subr.bf16.mxu0 0
    %5620 = vmatpush1.bf16.msra.mxu0 0
    %5621 = vmatprep.subr.bf16.mxu0 0
    %5622 = vmatpush1.bf16.msra.mxu0 0
    %5623 = vmatprep.subr.bf16.mxu0 0
    %5624 = vmatpush1.bf16.msra.mxu0 0
    %5625 = vmatprep.subr.bf16.mxu0 0
    %5626 = vmatpush1.bf16.msra.mxu0 0
    %5627 = vmatprep.subr.bf16.mxu0 0
    %5628 = vmatpush1.bf16.msra.mxu0 0
    %5629 = vmatprep.subr.bf16.mxu0 0
    %5630 = vmatpush1.bf16.msra.mxu0 0
    %5631 = vmatprep.subr.bf16.mxu0 0
    %5632 = vmatpush1.bf16.msra.mxu0 0
    %5633 = vmatprep.subr.bf16.mxu0 0
    %5634 = vmatpush1.bf16.msra.mxu0 0
    %5635 = vmatprep.subr.bf16.mxu0 0
    %5636 = vmatpush1.bf16.msra.mxu0 0
    %5637 = vmatprep.mubr.bf16.mxu0 0
    %5638 = vmatmul.mubr.bf16.gmra.mrb[0].mxu0 %v5603
    %v5639 = vpop.f32.mrb[0].mxu0
    %v5640 = vadd.f32 0.0, %v5639
    %v5641 = vpop.f32.mrb[0].mxu0
    %v5642 = vpop.f32.mrb[0].mxu0
    %v5643 = vpop.f32.mrb[0].mxu0
    %5644 = vdwg.mxu0
    %v5646 = vsel %vm2219, %v5553, 0
    %5648 = vmatprep.subr.bf16.mxu0 0
    %5649 = vmatpush1.bf16.msra.mxu0 %v5557
    %5650 = vmatprep.subr.bf16.mxu0 0
    %5651 = vmatpush1.bf16.msra.mxu0 0
    %5652 = vmatprep.subr.bf16.mxu0 0
    %5653 = vmatpush1.bf16.msra.mxu0 0
    %5654 = vmatprep.subr.bf16.mxu0 0
    %5655 = vmatpush1.bf16.msra.mxu0 0
    %5656 = vmatprep.subr.bf16.mxu0 0
    %5657 = vmatpush1.bf16.msra.mxu0 0
    %5658 = vmatprep.subr.bf16.mxu0 0
    %5659 = vmatpush1.bf16.msra.mxu0 0
    %5660 = vmatprep.subr.bf16.mxu0 0
    %5661 = vmatpush1.bf16.msra.mxu0 0
    %5662 = vmatprep.subr.bf16.mxu0 0
    %5663 = vmatpush1.bf16.msra.mxu0 0
    %5664 = vmatprep.subr.bf16.mxu0 0
    %5665 = vmatpush1.bf16.msra.mxu0 0
    %5666 = vmatprep.subr.bf16.mxu0 0
    %5667 = vmatpush1.bf16.msra.mxu0 0
    %5668 = vmatprep.subr.bf16.mxu0 0
    %5669 = vmatpush1.bf16.msra.mxu0 0
    %5670 = vmatprep.subr.bf16.mxu0 0
    %5671 = vmatpush1.bf16.msra.mxu0 0
    %5672 = vmatprep.subr.bf16.mxu0 0
    %5673 = vmatpush1.bf16.msra.mxu0 0
    %5674 = vmatprep.subr.bf16.mxu0 0
    %5675 = vmatpush1.bf16.msra.mxu0 0
    %5676 = vmatprep.subr.bf16.mxu0 0
    %5677 = vmatpush1.bf16.msra.mxu0 0
    %5678 = vmatprep.subr.bf16.mxu0 0
    %5679 = vmatpush1.bf16.msra.mxu0 0
    %5680 = vmatprep.mubr.bf16.mxu0 0
    %5681 = vmatmul.mubr.bf16.gmra.mrb[0].mxu0 %v5646
    %v5682 = vpop.f32.mrb[0].mxu0
    %v5683 = vadd.f32 0.0, %v5682
    %v5684 = vpop.f32.mrb[0].mxu0
    %v5685 = vpop.f32.mrb[0].mxu0
    %v5686 = vpop.f32.mrb[0].mxu0
    %5687 = vdwg.mxu0
    %v5689 = vsel %vm2219, %v5554, 0
    %5691 = vmatprep.subr.bf16.mxu0 0
    %5692 = vmatpush1.bf16.msra.mxu0 %v5558
    %5693 = vmatprep.subr.bf16.mxu0 0
    %5694 = vmatpush1.bf16.msra.mxu0 0
    %5695 = vmatprep.subr.bf16.mxu0 0
    %5696 = vmatpush1.bf16.msra.mxu0 0
    %5697 = vmatprep.subr.bf16.mxu0 0
    %5698 = vmatpush1.bf16.msra.mxu0 0
    %5699 = vmatprep.subr.bf16.mxu0 0
    %5700 = vmatpush1.bf16.msra.mxu0 0
    %5701 = vmatprep.subr.bf16.mxu0 0
    %5702 = vmatpush1.bf16.msra.mxu0 0
    %5703 = vmatprep.subr.bf16.mxu0 0
    %5704 = vmatpush1.bf16.msra.mxu0 0
    %5705 = vmatprep.subr.bf16.mxu0 0
    %5706 = vmatpush1.bf16.msra.mxu0 0
    %5707 = vmatprep.subr.bf16.mxu0 0
    %5708 = vmatpush1.bf16.msra.mxu0 0
    %5709 = vmatprep.subr.bf16.mxu0 0
    %5710 = vmatpush1.bf16.msra.mxu0 0
    %5711 = vmatprep.subr.bf16.mxu0 0
    %5712 = vmatpush1.bf16.msra.mxu0 0
    %5713 = vmatprep.subr.bf16.mxu0 0
    %5714 = vmatpush1.bf16.msra.mxu0 0
    %5715 = vmatprep.subr.bf16.mxu0 0
    %5716 = vmatpush1.bf16.msra.mxu0 0
    %5717 = vmatprep.subr.bf16.mxu0 0
    %5718 = vmatpush1.bf16.msra.mxu0 0
    %5719 = vmatprep.subr.bf16.mxu0 0
    %5720 = vmatpush1.bf16.msra.mxu0 0
    %5721 = vmatprep.subr.bf16.mxu0 0
    %5722 = vmatpush1.bf16.msra.mxu0 0
    %5723 = vmatprep.mubr.bf16.mxu0 0
    %5724 = vmatmul.mubr.bf16.gmra.mrb[0].mxu0 %v5689
    %v5725 = vpop.f32.mrb[0].mxu0
    %v5726 = vadd.f32 0.0, %v5725
    %v5727 = vpop.f32.mrb[0].mxu0
    %v5728 = vpop.f32.mrb[0].mxu0
    %v5729 = vpop.f32.mrb[0].mxu0
    %5730 = vdwg.mxu0
    %v5731 = vpack.c.bf16 %v5597, %v5597
    %v5732 = vpack.c.bf16 %v5640, %v5640
    %v5733 = vpack.c.bf16 %v5683, %v5683
    %v5734 = vpack.c.bf16 %v5726, %v5726
    %v5735 = vpack.c.bf16 %v5250, %v5249
    %v5736 = vpack.c.bf16 %v5252, %v5251
    %v5737 = vpack.c.bf16 %v5254, %v5253
    %v5738 = vpack.c.bf16 %v5256, %v5255
    %v5739 = vpack.c.bf16 %v5258, %v5257
    %v5740 = vpack.c.bf16 %v5260, %v5259
    %v5741 = vpack.c.bf16 %v5262, %v5261
    %v5742 = vpack.c.bf16 %v5264, %v5263
    %v5744 = vsel %vm470, %v5731, 0
    %5746 = vmatprep.subr.bf16.mxu0 0
    %5747 = vmatpush1.bf16.msra.mxu0 %v5735
    %5748 = vmatprep.subr.bf16.mxu0 0
    %5749 = vmatpush1.bf16.msra.mxu0 %v5736
    %5750 = vmatprep.subr.bf16.mxu0 0
    %5751 = vmatpush1.bf16.msra.mxu0 0
    %5752 = vmatprep.subr.bf16.mxu0 0
    %5753 = vmatpush1.bf16.msra.mxu0 0
    %5754 = vmatprep.subr.bf16.mxu0 0
    %5755 = vmatpush1.bf16.msra.mxu0 0
    %5756 = vmatprep.subr.bf16.mxu0 0
    %5757 = vmatpush1.bf16.msra.mxu0 0
    %5758 = vmatprep.subr.bf16.mxu0 0
    %5759 = vmatpush1.bf16.msra.mxu0 0
    %5760 = vmatprep.subr.bf16.mxu0 0
    %5761 = vmatpush1.bf16.msra.mxu0 0
    %5762 = vmatprep.subr.bf16.mxu0 0
    %5763 = vmatpush1.bf16.msra.mxu0 0
    %5764 = vmatprep.subr.bf16.mxu0 0
    %5765 = vmatpush1.bf16.msra.mxu0 0
    %5766 = vmatprep.subr.bf16.mxu0 0
    %5767 = vmatpush1.bf16.msra.mxu0 0
    %5768 = vmatprep.subr.bf16.mxu0 0
    %5769 = vmatpush1.bf16.msra.mxu0 0
    %5770 = vmatprep.subr.bf16.mxu0 0
    %5771 = vmatpush1.bf16.msra.mxu0 0
    %5772 = vmatprep.subr.bf16.mxu0 0
    %5773 = vmatpush1.bf16.msra.mxu0 0
    %5774 = vmatprep.subr.bf16.mxu0 0
    %5775 = vmatpush1.bf16.msra.mxu0 0
    %5776 = vmatprep.subr.bf16.mxu0 0
    %5777 = vmatpush1.bf16.msra.mxu0 0
    %5778 = vmatprep.mubr.bf16.mxu0 0
    %5779 = vmatmul.mubr.bf16.gmra.mrb[0].mxu0 %v5744
    %v5780 = vpop.f32.mrb[0].mxu0
    %v5781 = vadd.f32 0.0, %v5780
    %v5782 = vpop.f32.mrb[0].mxu0
    %v5783 = vpop.f32.mrb[0].mxu0
    %v5784 = vpop.f32.mrb[0].mxu0
    %5785 = vdwg.mxu0
    %v5787 = vsel %vm470, %v5732, 0
    %5789 = vmatprep.subr.bf16.mxu0 0
    %5790 = vmatpush1.bf16.msra.mxu0 %v5737
    %5791 = vmatprep.subr.bf16.mxu0 0
    %5792 = vmatpush1.bf16.msra.mxu0 %v5738
    %5793 = vmatprep.subr.bf16.mxu0 0
    %5794 = vmatpush1.bf16.msra.mxu0 0
    %5795 = vmatprep.subr.bf16.mxu0 0
    %5796 = vmatpush1.bf16.msra.mxu0 0
    %5797 = vmatprep.subr.bf16.mxu0 0
    %5798 = vmatpush1.bf16.msra.mxu0 0
    %5799 = vmatprep.subr.bf16.mxu0 0
    %5800 = vmatpush1.bf16.msra.mxu0 0
    %5801 = vmatprep.subr.bf16.mxu0 0
    %5802 = vmatpush1.bf16.msra.mxu0 0
    %5803 = vmatprep.subr.bf16.mxu0 0
    %5804 = vmatpush1.bf16.msra.mxu0 0
    %5805 = vmatprep.subr.bf16.mxu0 0
    %5806 = vmatpush1.bf16.msra.mxu0 0
    %5807 = vmatprep.subr.bf16.mxu0 0
    %5808 = vmatpush1.bf16.msra.mxu0 0
    %5809 = vmatprep.subr.bf16.mxu0 0
    %5810 = vmatpush1.bf16.msra.mxu0 0
    %5811 = vmatprep.subr.bf16.mxu0 0
    %5812 = vmatpush1.bf16.msra.mxu0 0
    %5813 = vmatprep.subr.bf16.mxu0 0
    %5814 = vmatpush1.bf16.msra.mxu0 0
    %5815 = vmatprep.subr.bf16.mxu0 0
    %5816 = vmatpush1.bf16.msra.mxu0 0
    %5817 = vmatprep.subr.bf16.mxu0 0
    %5818 = vmatpush1.bf16.msra.mxu0 0
    %5819 = vmatprep.subr.bf16.mxu0 0
    %5820 = vmatpush1.bf16.msra.mxu0 0
    %5821 = vmatprep.mubr.bf16.mxu0 0
    %5822 = vmatmul.mubr.bf16.gmra.mrb[0].mxu0 %v5787
    %v5823 = vpop.f32.mrb[0].mxu0
    %v5824 = vadd.f32 0.0, %v5823
    %v5825 = vpop.f32.mrb[0].mxu0
    %v5826 = vpop.f32.mrb[0].mxu0
    %v5827 = vpop.f32.mrb[0].mxu0
    %5828 = vdwg.mxu0
    %v5830 = vsel %vm470, %v5733, 0
    %5832 = vmatprep.subr.bf16.mxu0 0
    %5833 = vmatpush1.bf16.msra.mxu0 %v5739
    %5834 = vmatprep.subr.bf16.mxu0 0
    %5835 = vmatpush1.bf16.msra.mxu0 %v5740
    %5836 = vmatprep.subr.bf16.mxu0 0
    %5837 = vmatpush1.bf16.msra.mxu0 0
    %5838 = vmatprep.subr.bf16.mxu0 0
    %5839 = vmatpush1.bf16.msra.mxu0 0
    %5840 = vmatprep.subr.bf16.mxu0 0
    %5841 = vmatpush1.bf16.msra.mxu0 0
    %5842 = vmatprep.subr.bf16.mxu0 0
    %5843 = vmatpush1.bf16.msra.mxu0 0
    %5844 = vmatprep.subr.bf16.mxu0 0
    %5845 = vmatpush1.bf16.msra.mxu0 0
    %5846 = vmatprep.subr.bf16.mxu0 0
    %5847 = vmatpush1.bf16.msra.mxu0 0
    %5848 = vmatprep.subr.bf16.mxu0 0
    %5849 = vmatpush1.bf16.msra.mxu0 0
    %5850 = vmatprep.subr.bf16.mxu0 0
    %5851 = vmatpush1.bf16.msra.mxu0 0
    %5852 = vmatprep.subr.bf16.mxu0 0
    %5853 = vmatpush1.bf16.msra.mxu0 0
    %5854 = vmatprep.subr.bf16.mxu0 0
    %5855 = vmatpush1.bf16.msra.mxu0 0
    %5856 = vmatprep.subr.bf16.mxu0 0
    %5857 = vmatpush1.bf16.msra.mxu0 0
    %5858 = vmatprep.subr.bf16.mxu0 0
    %5859 = vmatpush1.bf16.msra.mxu0 0
    %5860 = vmatprep.subr.bf16.mxu0 0
    %5861 = vmatpush1.bf16.msra.mxu0 0
    %5862 = vmatprep.subr.bf16.mxu0 0
    %5863 = vmatpush1.bf16.msra.mxu0 0
    %5864 = vmatprep.mubr.bf16.mxu0 0
    %5865 = vmatmul.mubr.bf16.gmra.mrb[0].mxu0 %v5830
    %v5866 = vpop.f32.mrb[0].mxu0
    %v5867 = vadd.f32 0.0, %v5866
    %v5868 = vpop.f32.mrb[0].mxu0
    %v5869 = vpop.f32.mrb[0].mxu0
    %v5870 = vpop.f32.mrb[0].mxu0
    %5871 = vdwg.mxu0
    %v5873 = vsel %vm470, %v5734, 0
    %5875 = vmatprep.subr.bf16.mxu0 0
    %5876 = vmatpush1.bf16.msra.mxu0 %v5741
    %5877 = vmatprep.subr.bf16.mxu0 0
    %5878 = vmatpush1.bf16.msra.mxu0 %v5742
    %5879 = vmatprep.subr.bf16.mxu0 0
    %5880 = vmatpush1.bf16.msra.mxu0 0
    %5881 = vmatprep.subr.bf16.mxu0 0
    %5882 = vmatpush1.bf16.msra.mxu0 0
    %5883 = vmatprep.subr.bf16.mxu0 0
    %5884 = vmatpush1.bf16.msra.mxu0 0
    %5885 = vmatprep.subr.bf16.mxu0 0
    %5886 = vmatpush1.bf16.msra.mxu0 0
    %5887 = vmatprep.subr.bf16.mxu0 0
    %5888 = vmatpush1.bf16.msra.mxu0 0
    %5889 = vmatprep.subr.bf16.mxu0 0
    %5890 = vmatpush1.bf16.msra.mxu0 0
    %5891 = vmatprep.subr.bf16.mxu0 0
    %5892 = vmatpush1.bf16.msra.mxu0 0
    %5893 = vmatprep.subr.bf16.mxu0 0
    %5894 = vmatpush1.bf16.msra.mxu0 0
    %5895 = vmatprep.subr.bf16.mxu0 0
    %5896 = vmatpush1.bf16.msra.mxu0 0
    %5897 = vmatprep.subr.bf16.mxu0 0
    %5898 = vmatpush1.bf16.msra.mxu0 0
    %5899 = vmatprep.subr.bf16.mxu0 0
    %5900 = vmatpush1.bf16.msra.mxu0 0
    %5901 = vmatprep.subr.bf16.mxu0 0
    %5902 = vmatpush1.bf16.msra.mxu0 0
    %5903 = vmatprep.subr.bf16.mxu0 0
    %5904 = vmatpush1.bf16.msra.mxu0 0
    %5905 = vmatprep.subr.bf16.mxu0 0
    %5906 = vmatpush1.bf16.msra.mxu0 0
    %5907 = vmatprep.mubr.bf16.mxu0 0
    %5908 = vmatmul.mubr.bf16.gmra.mrb[0].mxu0 %v5873
    %v5909 = vpop.f32.mrb[0].mxu0
    %v5910 = vadd.f32 0.0, %v5909
    %v5911 = vpop.f32.mrb[0].mxu0
    %v5912 = vpop.f32.mrb[0].mxu0
    %v5913 = vpop.f32.mrb[0].mxu0
    %5914 = vdwg.mxu0
    %v5915 = vadd.f32 %v5781, %v5824
    %v5916 = vadd.f32 %v5915, %v5867
    %v5917 = vadd.f32 %v5916, %v5910
    %5919 = vrot.lane.b32.xlu0 %v5130, 96
    %v5920 = vpop.permute.xlu0 %5919
    %5922 = vrot.lane.b32.xlu0 %v5130, 64
    %v5923 = vpop.permute.xlu0 %5922
    %5925 = vrot.lane.b32.xlu0 %v5130, 32
    %v5926 = vpop.permute.xlu0 %5925
    %5930 = vrot.lane.b32.xlu0 %v5240, 96
    %v5931 = vpop.permute.xlu0 %5930
    %5932 = vrot.lane.b32.xlu0 %v5244, 96
    %v5933 = vpop.permute.xlu0 %5932
    %5936 = vrot.lane.b32.xlu0 %v5240, 64
    %v5937 = vpop.permute.xlu0 %5936
    %5938 = vrot.lane.b32.xlu0 %v5244, 64
    %v5939 = vpop.permute.xlu0 %5938
    %5942 = vrot.lane.b32.xlu0 %v5240, 32
    %v5943 = vpop.permute.xlu0 %5942
    %5944 = vrot.lane.b32.xlu0 %v5244, 32
    %v5945 = vpop.permute.xlu0 %5944
    %5950 = vrot.lane.b32.xlu0 %v5242, 96
    %v5951 = vpop.permute.xlu0 %5950
    %5952 = vrot.lane.b32.xlu0 %v5246, 96
    %v5953 = vpop.permute.xlu0 %5952
    %5956 = vrot.lane.b32.xlu0 %v5242, 64
    %v5957 = vpop.permute.xlu0 %5956
    %5958 = vrot.lane.b32.xlu0 %v5246, 64
    %v5959 = vpop.permute.xlu0 %5958
    %5962 = vrot.lane.b32.xlu0 %v5242, 32
    %v5963 = vpop.permute.xlu0 %5962
    %5964 = vrot.lane.b32.xlu0 %v5246, 32
    %v5965 = vpop.permute.xlu0 %5964
    %v5968 = vpack.c.bf16 %v5130, %v5130
    %v5969 = vpack.c.bf16 %v5920, %v5920
    %v5970 = vpack.c.bf16 %v5923, %v5923
    %v5971 = vpack.c.bf16 %v5926, %v5926
    %v5972 = vpack.c.bf16 %v5244, %v5240
    %v5973 = vpack.c.bf16 %v5933, %v5931
    %v5974 = vpack.c.bf16 %v5939, %v5937
    %v5975 = vpack.c.bf16 %v5945, %v5943
    %v5977 = vsel %vm470, %v5968, 0
    %v5980 = vsel %vm470, %v5972, 0
    %5982 = vmatprep.subr.bf16.mxu0 0
    %5983 = vmatpush1.bf16.xpose.msra.mxu0 %v5980
    %5984 = vmatprep.subr.bf16.mxu0 0
    %5985 = vmatpush1.bf16.xpose.msra.mxu0 0
    %5986 = vmatprep.subr.bf16.mxu0 0
    %5987 = vmatpush1.bf16.xpose.msra.mxu0 0
    %5988 = vmatprep.subr.bf16.mxu0 0
    %5989 = vmatpush1.bf16.xpose.msra.mxu0 0
    %5990 = vmatprep.subr.bf16.mxu0 0
    %5991 = vmatpush1.bf16.xpose.msra.mxu0 0
    %5992 = vmatprep.subr.bf16.mxu0 0
    %5993 = vmatpush1.bf16.xpose.msra.mxu0 0
    %5994 = vmatprep.subr.bf16.mxu0 0
    %5995 = vmatpush1.bf16.xpose.msra.mxu0 0
    %5996 = vmatprep.subr.bf16.mxu0 0
    %5997 = vmatpush1.bf16.xpose.msra.mxu0 0
    %5998 = vmatprep.subr.bf16.mxu0 0
    %5999 = vmatpush1.bf16.xpose.msra.mxu0 0
    %6000 = vmatprep.subr.bf16.mxu0 0
    %6001 = vmatpush1.bf16.xpose.msra.mxu0 0
    %6002 = vmatprep.subr.bf16.mxu0 0
    %6003 = vmatpush1.bf16.xpose.msra.mxu0 0
    %6004 = vmatprep.subr.bf16.mxu0 0
    %6005 = vmatpush1.bf16.xpose.msra.mxu0 0
    %6006 = vmatprep.subr.bf16.mxu0 0
    %6007 = vmatpush1.bf16.xpose.msra.mxu0 0
    %6008 = vmatprep.subr.bf16.mxu0 0
    %6009 = vmatpush1.bf16.xpose.msra.mxu0 0
    %6010 = vmatprep.subr.bf16.mxu0 0
    %6011 = vmatpush1.bf16.xpose.msra.mxu0 0
    %6012 = vmatprep.subr.bf16.mxu0 0
    %6013 = vmatpush1.bf16.xpose.msra.mxu0 0
    %6014 = vmatprep.mubr.bf16.mxu0 0
    %6015 = vmatmul.mubr.bf16.gmra.mrb[0].mxu0 %v5977
    %v6016 = vpop.f32.mrb[0].mxu0
    %v6017 = vadd.f32 %v241, %v6016
    %v6018 = vpop.f32.mrb[0].mxu0
    %v6019 = vpop.f32.mrb[0].mxu0
    %v6020 = vpop.f32.mrb[0].mxu0
    %6021 = vdwg.mxu0
    %v6023 = vsel %vm470, %v5969, 0
    %v6026 = vsel %vm470, %v5973, 0
    %6028 = vmatprep.subr.bf16.mxu0 0
    %6029 = vmatpush1.bf16.xpose.msra.mxu0 %v6026
    %6030 = vmatprep.subr.bf16.mxu0 0
    %6031 = vmatpush1.bf16.xpose.msra.mxu0 0
    %6032 = vmatprep.subr.bf16.mxu0 0
    %6033 = vmatpush1.bf16.xpose.msra.mxu0 0
    %6034 = vmatprep.subr.bf16.mxu0 0
    %6035 = vmatpush1.bf16.xpose.msra.mxu0 0
    %6036 = vmatprep.subr.bf16.mxu0 0
    %6037 = vmatpush1.bf16.xpose.msra.mxu0 0
    %6038 = vmatprep.subr.bf16.mxu0 0
    %6039 = vmatpush1.bf16.xpose.msra.mxu0 0
    %6040 = vmatprep.subr.bf16.mxu0 0
    %6041 = vmatpush1.bf16.xpose.msra.mxu0 0
    %6042 = vmatprep.subr.bf16.mxu0 0
    %6043 = vmatpush1.bf16.xpose.msra.mxu0 0
    %6044 = vmatprep.subr.bf16.mxu0 0
    %6045 = vmatpush1.bf16.xpose.msra.mxu0 0
    %6046 = vmatprep.subr.bf16.mxu0 0
    %6047 = vmatpush1.bf16.xpose.msra.mxu0 0
    %6048 = vmatprep.subr.bf16.mxu0 0
    %6049 = vmatpush1.bf16.xpose.msra.mxu0 0
    %6050 = vmatprep.subr.bf16.mxu0 0
    %6051 = vmatpush1.bf16.xpose.msra.mxu0 0
    %6052 = vmatprep.subr.bf16.mxu0 0
    %6053 = vmatpush1.bf16.xpose.msra.mxu0 0
    %6054 = vmatprep.subr.bf16.mxu0 0
    %6055 = vmatpush1.bf16.xpose.msra.mxu0 0
    %6056 = vmatprep.subr.bf16.mxu0 0
    %6057 = vmatpush1.bf16.xpose.msra.mxu0 0
    %6058 = vmatprep.subr.bf16.mxu0 0
    %6059 = vmatpush1.bf16.xpose.msra.mxu0 0
    %6060 = vmatprep.mubr.bf16.mxu0 0
    %6061 = vmatmul.mubr.bf16.gmra.mrb[0].mxu0 %v6023
    %v6062 = vpop.f32.mrb[0].mxu0
    %v6063 = vadd.f32 %v241, %v6062
    %v6064 = vpop.f32.mrb[0].mxu0
    %v6065 = vpop.f32.mrb[0].mxu0
    %v6066 = vpop.f32.mrb[0].mxu0
    %6067 = vdwg.mxu0
    %v6069 = vsel %vm470, %v5970, 0
    %v6072 = vsel %vm470, %v5974, 0
    %6074 = vmatprep.subr.bf16.mxu0 0
    %6075 = vmatpush1.bf16.xpose.msra.mxu0 %v6072
    %6076 = vmatprep.subr.bf16.mxu0 0
    %6077 = vmatpush1.bf16.xpose.msra.mxu0 0
    %6078 = vmatprep.subr.bf16.mxu0 0
    %6079 = vmatpush1.bf16.xpose.msra.mxu0 0
    %6080 = vmatprep.subr.bf16.mxu0 0
    %6081 = vmatpush1.bf16.xpose.msra.mxu0 0
    %6082 = vmatprep.subr.bf16.mxu0 0
    %6083 = vmatpush1.bf16.xpose.msra.mxu0 0
    %6084 = vmatprep.subr.bf16.mxu0 0
    %6085 = vmatpush1.bf16.xpose.msra.mxu0 0
    %6086 = vmatprep.subr.bf16.mxu0 0
    %6087 = vmatpush1.bf16.xpose.msra.mxu0 0
    %6088 = vmatprep.subr.bf16.mxu0 0
    %6089 = vmatpush1.bf16.xpose.msra.mxu0 0
    %6090 = vmatprep.subr.bf16.mxu0 0
    %6091 = vmatpush1.bf16.xpose.msra.mxu0 0
    %6092 = vmatprep.subr.bf16.mxu0 0
    %6093 = vmatpush1.bf16.xpose.msra.mxu0 0
    %6094 = vmatprep.subr.bf16.mxu0 0
    %6095 = vmatpush1.bf16.xpose.msra.mxu0 0
    %6096 = vmatprep.subr.bf16.mxu0 0
    %6097 = vmatpush1.bf16.xpose.msra.mxu0 0
    %6098 = vmatprep.subr.bf16.mxu0 0
    %6099 = vmatpush1.bf16.xpose.msra.mxu0 0
    %6100 = vmatprep.subr.bf16.mxu0 0
    %6101 = vmatpush1.bf16.xpose.msra.mxu0 0
    %6102 = vmatprep.subr.bf16.mxu0 0
    %6103 = vmatpush1.bf16.xpose.msra.mxu0 0
    %6104 = vmatprep.subr.bf16.mxu0 0
    %6105 = vmatpush1.bf16.xpose.msra.mxu0 0
    %6106 = vmatprep.mubr.bf16.mxu0 0
    %6107 = vmatmul.mubr.bf16.gmra.mrb[0].mxu0 %v6069
    %v6108 = vpop.f32.mrb[0].mxu0
    %v6109 = vadd.f32 %v241, %v6108
    %v6110 = vpop.f32.mrb[0].mxu0
    %v6111 = vpop.f32.mrb[0].mxu0
    %v6112 = vpop.f32.mrb[0].mxu0
    %6113 = vdwg.mxu0
    %v6115 = vsel %vm470, %v5971, 0
    %v6118 = vsel %vm470, %v5975, 0
    %6120 = vmatprep.subr.bf16.mxu0 0
    %6121 = vmatpush1.bf16.xpose.msra.mxu0 %v6118
    %6122 = vmatprep.subr.bf16.mxu0 0
    %6123 = vmatpush1.bf16.xpose.msra.mxu0 0
    %6124 = vmatprep.subr.bf16.mxu0 0
    %6125 = vmatpush1.bf16.xpose.msra.mxu0 0
    %6126 = vmatprep.subr.bf16.mxu0 0
    %6127 = vmatpush1.bf16.xpose.msra.mxu0 0
    %6128 = vmatprep.subr.bf16.mxu0 0
    %6129 = vmatpush1.bf16.xpose.msra.mxu0 0
    %6130 = vmatprep.subr.bf16.mxu0 0
    %6131 = vmatpush1.bf16.xpose.msra.mxu0 0
    %6132 = vmatprep.subr.bf16.mxu0 0
    %6133 = vmatpush1.bf16.xpose.msra.mxu0 0
    %6134 = vmatprep.subr.bf16.mxu0 0
    %6135 = vmatpush1.bf16.xpose.msra.mxu0 0
    %6136 = vmatprep.subr.bf16.mxu0 0
    %6137 = vmatpush1.bf16.xpose.msra.mxu0 0
    %6138 = vmatprep.subr.bf16.mxu0 0
    %6139 = vmatpush1.bf16.xpose.msra.mxu0 0
    %6140 = vmatprep.subr.bf16.mxu0 0
    %6141 = vmatpush1.bf16.xpose.msra.mxu0 0
    %6142 = vmatprep.subr.bf16.mxu0 0
    %6143 = vmatpush1.bf16.xpose.msra.mxu0 0
    %6144 = vmatprep.subr.bf16.mxu0 0
    %6145 = vmatpush1.bf16.xpose.msra.mxu0 0
    %6146 = vmatprep.subr.bf16.mxu0 0
    %6147 = vmatpush1.bf16.xpose.msra.mxu0 0
    %6148 = vmatprep.subr.bf16.mxu0 0
    %6149 = vmatpush1.bf16.xpose.msra.mxu0 0
    %6150 = vmatprep.subr.bf16.mxu0 0
    %6151 = vmatpush1.bf16.xpose.msra.mxu0 0
    %6152 = vmatprep.mubr.bf16.mxu0 0
    %6153 = vmatmul.mubr.bf16.gmra.mrb[0].mxu0 %v6115
    %v6154 = vpop.f32.mrb[0].mxu0
    %v6155 = vadd.f32 %v241, %v6154
    %v6156 = vpop.f32.mrb[0].mxu0
    %v6157 = vpop.f32.mrb[0].mxu0
    %v6158 = vpop.f32.mrb[0].mxu0
    %6159 = vdwg.mxu0
    %v6160 = vsel %vm2219, %v6017, -inf
    %6161 = vmax.xlane.f32.xlu0 %v6160
    %v6162 = vpop.xlane.xlu0 %6161
    %v6163 = vsel %vm2219, %v6063, -inf
    %6164 = vmax.xlane.f32.xlu0 %v6163
    %v6165 = vpop.xlane.xlu0 %6164
    %v6166 = vsel %vm2219, %v6109, -inf
    %6167 = vmax.xlane.f32.xlu0 %v6166
    %v6168 = vpop.xlane.xlu0 %6167
    %v6169 = vsel %vm2219, %v6155, -inf
    %6170 = vmax.xlane.f32.xlu0 %v6169
    %v6171 = vpop.xlane.xlu0 %6170
    %v6172 = vsub.f32 %v6017, %v6162
    %v6173 = vsub.f32 %v6063, %v6165
    %v6174 = vsub.f32 %v6109, %v6168
    %v6175 = vsub.f32 %v6155, %v6171
    %v6176 = vmul.f32 %v6172, 1.442695
    %v6177 = vpow.pop %v6176
    %v6178 = vmul.f32 %v6173, 1.442695
    %v6179 = vpow.pop %v6178
    %v6180 = vmul.f32 %v6174, 1.442695
    %v6181 = vpow.pop %v6180
    %v6182 = vmul.f32 %v6175, 1.442695
    %v6183 = vpow.pop %v6182
    %v6184 = vsel %vm2219, %v6177, 0.0
    %6185 = vadd.xlane.f32.xlu0 %v6184
    %v6186 = vpop.xlane.xlu0 %6185
    %v6187 = vsel %vm2219, %v6179, 0.0
    %6188 = vadd.xlane.f32.xlu0 %v6187
    %v6189 = vpop.xlane.xlu0 %6188
    %v6190 = vsel %vm2219, %v6181, 0.0
    %6191 = vadd.xlane.f32.xlu0 %v6190
    %v6192 = vpop.xlane.xlu0 %6191
    %v6193 = vsel %vm2219, %v6183, 0.0
    %6194 = vadd.xlane.f32.xlu0 %v6193
    %v6195 = vpop.xlane.xlu0 %6194
    %v6196 = vrcp.pop %v6186
    %v6197 = vrcp.pop %v6189
    %v6198 = vrcp.pop %v6192
    %v6199 = vrcp.pop %v6195
    %v6200 = vmul.f32 %v6177, %v6196
    %v6201 = vmul.f32 %v6179, %v6197
    %v6202 = vmul.f32 %v6181, %v6198
    %v6203 = vmul.f32 %v6183, %v6199
    %v6204 = vpack.c.bf16 %v6200, %v6200
    %v6205 = vpack.c.bf16 %v6201, %v6201
    %v6206 = vpack.c.bf16 %v6202, %v6202
    %v6207 = vpack.c.bf16 %v6203, %v6203
    %v6208 = vpack.c.bf16 %v5246, %v5242
    %v6209 = vpack.c.bf16 %v5953, %v5951
    %v6210 = vpack.c.bf16 %v5959, %v5957
    %v6211 = vpack.c.bf16 %v5965, %v5963
    %v6213 = vsel %vm2219, %v6204, 0
    %6215 = vmatprep.subr.bf16.mxu0 0
    %6216 = vmatpush1.bf16.msra.mxu0 %v6208
    %6217 = vmatprep.subr.bf16.mxu0 0
    %6218 = vmatpush1.bf16.msra.mxu0 0
    %6219 = vmatprep.subr.bf16.mxu0 0
    %6220 = vmatpush1.bf16.msra.mxu0 0
    %6221 = vmatprep.subr.bf16.mxu0 0
    %6222 = vmatpush1.bf16.msra.mxu0 0
    %6223 = vmatprep.subr.bf16.mxu0 0
    %6224 = vmatpush1.bf16.msra.mxu0 0
    %6225 = vmatprep.subr.bf16.mxu0 0
    %6226 = vmatpush1.bf16.msra.mxu0 0
    %6227 = vmatprep.subr.bf16.mxu0 0
    %6228 = vmatpush1.bf16.msra.mxu0 0
    %6229 = vmatprep.subr.bf16.mxu0 0
    %6230 = vmatpush1.bf16.msra.mxu0 0
    %6231 = vmatprep.subr.bf16.mxu0 0
    %6232 = vmatpush1.bf16.msra.mxu0 0
    %6233 = vmatprep.subr.bf16.mxu0 0
    %6234 = vmatpush1.bf16.msra.mxu0 0
    %6235 = vmatprep.subr.bf16.mxu0 0
    %6236 = vmatpush1.bf16.msra.mxu0 0
    %6237 = vmatprep.subr.bf16.mxu0 0
    %6238 = vmatpush1.bf16.msra.mxu0 0
    %6239 = vmatprep.subr.bf16.mxu0 0
    %6240 = vmatpush1.bf16.msra.mxu0 0
    %6241 = vmatprep.subr.bf16.mxu0 0
    %6242 = vmatpush1.bf16.msra.mxu0 0
    %6243 = vmatprep.subr.bf16.mxu0 0
    %6244 = vmatpush1.bf16.msra.mxu0 0
    %6245 = vmatprep.subr.bf16.mxu0 0
    %6246 = vmatpush1.bf16.msra.mxu0 0
    %6247 = vmatprep.mubr.bf16.mxu0 0
    %6248 = vmatmul.mubr.bf16.gmra.mrb[0].mxu0 %v6213
    %v6249 = vpop.f32.mrb[0].mxu0
    %v6250 = vadd.f32 0.0, %v6249
    %v6251 = vpop.f32.mrb[0].mxu0
    %v6252 = vpop.f32.mrb[0].mxu0
    %v6253 = vpop.f32.mrb[0].mxu0
    %6254 = vdwg.mxu0
    %v6256 = vsel %vm2219, %v6205, 0
    %6258 = vmatprep.subr.bf16.mxu0 0
    %6259 = vmatpush1.bf16.msra.mxu0 %v6209
    %6260 = vmatprep.subr.bf16.mxu0 0
    %6261 = vmatpush1.bf16.msra.mxu0 0
    %6262 = vmatprep.subr.bf16.mxu0 0
    %6263 = vmatpush1.bf16.msra.mxu0 0
    %6264 = vmatprep.subr.bf16.mxu0 0
    %6265 = vmatpush1.bf16.msra.mxu0 0
    %6266 = vmatprep.subr.bf16.mxu0 0
    %6267 = vmatpush1.bf16.msra.mxu0 0
    %6268 = vmatprep.subr.bf16.mxu0 0
    %6269 = vmatpush1.bf16.msra.mxu0 0
    %6270 = vmatprep.subr.bf16.mxu0 0
    %6271 = vmatpush1.bf16.msra.mxu0 0
    %6272 = vmatprep.subr.bf16.mxu0 0
    %6273 = vmatpush1.bf16.msra.mxu0 0
    %6274 = vmatprep.subr.bf16.mxu0 0
    %6275 = vmatpush1.bf16.msra.mxu0 0
    %6276 = vmatprep.subr.bf16.mxu0 0
    %6277 = vmatpush1.bf16.msra.mxu0 0
    %6278 = vmatprep.subr.bf16.mxu0 0
    %6279 = vmatpush1.bf16.msra.mxu0 0
    %6280 = vmatprep.subr.bf16.mxu0 0
    %6281 = vmatpush1.bf16.msra.mxu0 0
    %6282 = vmatprep.subr.bf16.mxu0 0
    %6283 = vmatpush1.bf16.msra.mxu0 0
    %6284 = vmatprep.subr.bf16.mxu0 0
    %6285 = vmatpush1.bf16.msra.mxu0 0
    %6286 = vmatprep.subr.bf16.mxu0 0
    %6287 = vmatpush1.bf16.msra.mxu0 0
    %6288 = vmatprep.subr.bf16.mxu0 0
    %6289 = vmatpush1.bf16.msra.mxu0 0
    %6290 = vmatprep.mubr.bf16.mxu0 0
    %6291 = vmatmul.mubr.bf16.gmra.mrb[0].mxu0 %v6256
    %v6292 = vpop.f32.mrb[0].mxu0
    %v6293 = vadd.f32 0.0, %v6292
    %v6294 = vpop.f32.mrb[0].mxu0
    %v6295 = vpop.f32.mrb[0].mxu0
    %v6296 = vpop.f32.mrb[0].mxu0
    %6297 = vdwg.mxu0
    %v6299 = vsel %vm2219, %v6206, 0
    %6301 = vmatprep.subr.bf16.mxu0 0
    %6302 = vmatpush1.bf16.msra.mxu0 %v6210
    %6303 = vmatprep.subr.bf16.mxu0 0
    %6304 = vmatpush1.bf16.msra.mxu0 0
    %6305 = vmatprep.subr.bf16.mxu0 0
    %6306 = vmatpush1.bf16.msra.mxu0 0
    %6307 = vmatprep.subr.bf16.mxu0 0
    %6308 = vmatpush1.bf16.msra.mxu0 0
    %6309 = vmatprep.subr.bf16.mxu0 0
    %6310 = vmatpush1.bf16.msra.mxu0 0
    %6311 = vmatprep.subr.bf16.mxu0 0
    %6312 = vmatpush1.bf16.msra.mxu0 0
    %6313 = vmatprep.subr.bf16.mxu0 0
    %6314 = vmatpush1.bf16.msra.mxu0 0
    %6315 = vmatprep.subr.bf16.mxu0 0
    %6316 = vmatpush1.bf16.msra.mxu0 0
    %6317 = vmatprep.subr.bf16.mxu0 0
    %6318 = vmatpush1.bf16.msra.mxu0 0
    %6319 = vmatprep.subr.bf16.mxu0 0
    %6320 = vmatpush1.bf16.msra.mxu0 0
    %6321 = vmatprep.subr.bf16.mxu0 0
    %6322 = vmatpush1.bf16.msra.mxu0 0
    %6323 = vmatprep.subr.bf16.mxu0 0
    %6324 = vmatpush1.bf16.msra.mxu0 0
    %6325 = vmatprep.subr.bf16.mxu0 0
    %6326 = vmatpush1.bf16.msra.mxu0 0
    %6327 = vmatprep.subr.bf16.mxu0 0
    %6328 = vmatpush1.bf16.msra.mxu0 0
    %6329 = vmatprep.subr.bf16.mxu0 0
    %6330 = vmatpush1.bf16.msra.mxu0 0
    %6331 = vmatprep.subr.bf16.mxu0 0
    %6332 = vmatpush1.bf16.msra.mxu0 0
    %6333 = vmatprep.mubr.bf16.mxu0 0
    %6334 = vmatmul.mubr.bf16.gmra.mrb[0].mxu0 %v6299
    %v6335 = vpop.f32.mrb[0].mxu0
    %v6336 = vadd.f32 0.0, %v6335
    %v6337 = vpop.f32.mrb[0].mxu0
    %v6338 = vpop.f32.mrb[0].mxu0
    %v6339 = vpop.f32.mrb[0].mxu0
    %6340 = vdwg.mxu0
    %v6342 = vsel %vm2219, %v6207, 0
    %6344 = vmatprep.subr.bf16.mxu0 0
    %6345 = vmatpush1.bf16.msra.mxu0 %v6211
    %6346 = vmatprep.subr.bf16.mxu0 0
    %6347 = vmatpush1.bf16.msra.mxu0 0
    %6348 = vmatprep.subr.bf16.mxu0 0
    %6349 = vmatpush1.bf16.msra.mxu0 0
    %6350 = vmatprep.subr.bf16.mxu0 0
    %6351 = vmatpush1.bf16.msra.mxu0 0
    %6352 = vmatprep.subr.bf16.mxu0 0
    %6353 = vmatpush1.bf16.msra.mxu0 0
    %6354 = vmatprep.subr.bf16.mxu0 0
    %6355 = vmatpush1.bf16.msra.mxu0 0
    %6356 = vmatprep.subr.bf16.mxu0 0
    %6357 = vmatpush1.bf16.msra.mxu0 0
    %6358 = vmatprep.subr.bf16.mxu0 0
    %6359 = vmatpush1.bf16.msra.mxu0 0
    %6360 = vmatprep.subr.bf16.mxu0 0
    %6361 = vmatpush1.bf16.msra.mxu0 0
    %6362 = vmatprep.subr.bf16.mxu0 0
    %6363 = vmatpush1.bf16.msra.mxu0 0
    %6364 = vmatprep.subr.bf16.mxu0 0
    %6365 = vmatpush1.bf16.msra.mxu0 0
    %6366 = vmatprep.subr.bf16.mxu0 0
    %6367 = vmatpush1.bf16.msra.mxu0 0
    %6368 = vmatprep.subr.bf16.mxu0 0
    %6369 = vmatpush1.bf16.msra.mxu0 0
    %6370 = vmatprep.subr.bf16.mxu0 0
    %6371 = vmatpush1.bf16.msra.mxu0 0
    %6372 = vmatprep.subr.bf16.mxu0 0
    %6373 = vmatpush1.bf16.msra.mxu0 0
    %6374 = vmatprep.subr.bf16.mxu0 0
    %6375 = vmatpush1.bf16.msra.mxu0 0
    %6376 = vmatprep.mubr.bf16.mxu0 0
    %6377 = vmatmul.mubr.bf16.gmra.mrb[0].mxu0 %v6342
    %v6378 = vpop.f32.mrb[0].mxu0
    %v6379 = vadd.f32 0.0, %v6378
    %v6380 = vpop.f32.mrb[0].mxu0
    %v6381 = vpop.f32.mrb[0].mxu0
    %v6382 = vpop.f32.mrb[0].mxu0
    %6383 = vdwg.mxu0
    %v6384 = vpack.c.bf16 %v6250, %v6250
    %v6385 = vpack.c.bf16 %v6293, %v6293
    %v6386 = vpack.c.bf16 %v6336, %v6336
    %v6387 = vpack.c.bf16 %v6379, %v6379
    %v6389 = vsel %vm470, %v6384, 0
    %6391 = vmatprep.subr.bf16.mxu0 0
    %6392 = vmatpush1.bf16.msra.mxu0 %v5735
    %6393 = vmatprep.subr.bf16.mxu0 0
    %6394 = vmatpush1.bf16.msra.mxu0 %v5736
    %6395 = vmatprep.subr.bf16.mxu0 0
    %6396 = vmatpush1.bf16.msra.mxu0 0
    %6397 = vmatprep.subr.bf16.mxu0 0
    %6398 = vmatpush1.bf16.msra.mxu0 0
    %6399 = vmatprep.subr.bf16.mxu0 0
    %6400 = vmatpush1.bf16.msra.mxu0 0
    %6401 = vmatprep.subr.bf16.mxu0 0
    %6402 = vmatpush1.bf16.msra.mxu0 0
    %6403 = vmatprep.subr.bf16.mxu0 0
    %6404 = vmatpush1.bf16.msra.mxu0 0
    %6405 = vmatprep.subr.bf16.mxu0 0
    %6406 = vmatpush1.bf16.msra.mxu0 0
    %6407 = vmatprep.subr.bf16.mxu0 0
    %6408 = vmatpush1.bf16.msra.mxu0 0
    %6409 = vmatprep.subr.bf16.mxu0 0
    %6410 = vmatpush1.bf16.msra.mxu0 0
    %6411 = vmatprep.subr.bf16.mxu0 0
    %6412 = vmatpush1.bf16.msra.mxu0 0
    %6413 = vmatprep.subr.bf16.mxu0 0
    %6414 = vmatpush1.bf16.msra.mxu0 0
    %6415 = vmatprep.subr.bf16.mxu0 0
    %6416 = vmatpush1.bf16.msra.mxu0 0
    %6417 = vmatprep.subr.bf16.mxu0 0
    %6418 = vmatpush1.bf16.msra.mxu0 0
    %6419 = vmatprep.subr.bf16.mxu0 0
    %6420 = vmatpush1.bf16.msra.mxu0 0
    %6421 = vmatprep.subr.bf16.mxu0 0
    %6422 = vmatpush1.bf16.msra.mxu0 0
    %6423 = vmatprep.mubr.bf16.mxu0 0
    %6424 = vmatmul.mubr.bf16.gmra.mrb[0].mxu0 %v6389
    %v6425 = vpop.f32.mrb[0].mxu0
    %v6426 = vadd.f32 0.0, %v6425
    %v6427 = vpop.f32.mrb[0].mxu0
    %v6428 = vpop.f32.mrb[0].mxu0
    %v6429 = vpop.f32.mrb[0].mxu0
    %6430 = vdwg.mxu0
    %v6432 = vsel %vm470, %v6385, 0
    %6434 = vmatprep.subr.bf16.mxu0 0
    %6435 = vmatpush1.bf16.msra.mxu0 %v5737
    %6436 = vmatprep.subr.bf16.mxu0 0
    %6437 = vmatpush1.bf16.msra.mxu0 %v5738
    %6438 = vmatprep.subr.bf16.mxu0 0
    %6439 = vmatpush1.bf16.msra.mxu0 0
    %6440 = vmatprep.subr.bf16.mxu0 0
    %6441 = vmatpush1.bf16.msra.mxu0 0
    %6442 = vmatprep.subr.bf16.mxu0 0
    %6443 = vmatpush1.bf16.msra.mxu0 0
    %6444 = vmatprep.subr.bf16.mxu0 0
    %6445 = vmatpush1.bf16.msra.mxu0 0
    %6446 = vmatprep.subr.bf16.mxu0 0
    %6447 = vmatpush1.bf16.msra.mxu0 0
    %6448 = vmatprep.subr.bf16.mxu0 0
    %6449 = vmatpush1.bf16.msra.mxu0 0
    %6450 = vmatprep.subr.bf16.mxu0 0
    %6451 = vmatpush1.bf16.msra.mxu0 0
    %6452 = vmatprep.subr.bf16.mxu0 0
    %6453 = vmatpush1.bf16.msra.mxu0 0
    %6454 = vmatprep.subr.bf16.mxu0 0
    %6455 = vmatpush1.bf16.msra.mxu0 0
    %6456 = vmatprep.subr.bf16.mxu0 0
    %6457 = vmatpush1.bf16.msra.mxu0 0
    %6458 = vmatprep.subr.bf16.mxu0 0
    %6459 = vmatpush1.bf16.msra.mxu0 0
    %6460 = vmatprep.subr.bf16.mxu0 0
    %6461 = vmatpush1.bf16.msra.mxu0 0
    %6462 = vmatprep.subr.bf16.mxu0 0
    %6463 = vmatpush1.bf16.msra.mxu0 0
    %6464 = vmatprep.subr.bf16.mxu0 0
    %6465 = vmatpush1.bf16.msra.mxu0 0
    %6466 = vmatprep.mubr.bf16.mxu0 0
    %6467 = vmatmul.mubr.bf16.gmra.mrb[0].mxu0 %v6432
    %v6468 = vpop.f32.mrb[0].mxu0
    %v6469 = vadd.f32 0.0, %v6468
    %v6470 = vpop.f32.mrb[0].mxu0
    %v6471 = vpop.f32.mrb[0].mxu0
    %v6472 = vpop.f32.mrb[0].mxu0
    %6473 = vdwg.mxu0
    %v6475 = vsel %vm470, %v6386, 0
    %6477 = vmatprep.subr.bf16.mxu0 0
    %6478 = vmatpush1.bf16.msra.mxu0 %v5739
    %6479 = vmatprep.subr.bf16.mxu0 0
    %6480 = vmatpush1.bf16.msra.mxu0 %v5740
    %6481 = vmatprep.subr.bf16.mxu0 0
    %6482 = vmatpush1.bf16.msra.mxu0 0
    %6483 = vmatprep.subr.bf16.mxu0 0
    %6484 = vmatpush1.bf16.msra.mxu0 0
    %6485 = vmatprep.subr.bf16.mxu0 0
    %6486 = vmatpush1.bf16.msra.mxu0 0
    %6487 = vmatprep.subr.bf16.mxu0 0
    %6488 = vmatpush1.bf16.msra.mxu0 0
    %6489 = vmatprep.subr.bf16.mxu0 0
    %6490 = vmatpush1.bf16.msra.mxu0 0
    %6491 = vmatprep.subr.bf16.mxu0 0
    %6492 = vmatpush1.bf16.msra.mxu0 0
    %6493 = vmatprep.subr.bf16.mxu0 0
    %6494 = vmatpush1.bf16.msra.mxu0 0
    %6495 = vmatprep.subr.bf16.mxu0 0
    %6496 = vmatpush1.bf16.msra.mxu0 0
    %6497 = vmatprep.subr.bf16.mxu0 0
    %6498 = vmatpush1.bf16.msra.mxu0 0
    %6499 = vmatprep.subr.bf16.mxu0 0
    %6500 = vmatpush1.bf16.msra.mxu0 0
    %6501 = vmatprep.subr.bf16.mxu0 0
    %6502 = vmatpush1.bf16.msra.mxu0 0
    %6503 = vmatprep.subr.bf16.mxu0 0
    %6504 = vmatpush1.bf16.msra.mxu0 0
    %6505 = vmatprep.subr.bf16.mxu0 0
    %6506 = vmatpush1.bf16.msra.mxu0 0
    %6507 = vmatprep.subr.bf16.mxu0 0
    %6508 = vmatpush1.bf16.msra.mxu0 0
    %6509 = vmatprep.mubr.bf16.mxu0 0
    %6510 = vmatmul.mubr.bf16.gmra.mrb[0].mxu0 %v6475
    %v6511 = vpop.f32.mrb[0].mxu0
    %v6512 = vadd.f32 0.0, %v6511
    %v6513 = vpop.f32.mrb[0].mxu0
    %v6514 = vpop.f32.mrb[0].mxu0
    %v6515 = vpop.f32.mrb[0].mxu0
    %6516 = vdwg.mxu0
    %v6518 = vsel %vm470, %v6387, 0
    %6520 = vmatprep.subr.bf16.mxu0 0
    %6521 = vmatpush1.bf16.msra.mxu0 %v5741
    %6522 = vmatprep.subr.bf16.mxu0 0
    %6523 = vmatpush1.bf16.msra.mxu0 %v5742
    %6524 = vmatprep.subr.bf16.mxu0 0
    %6525 = vmatpush1.bf16.msra.mxu0 0
    %6526 = vmatprep.subr.bf16.mxu0 0
    %6527 = vmatpush1.bf16.msra.mxu0 0
    %6528 = vmatprep.subr.bf16.mxu0 0
    %6529 = vmatpush1.bf16.msra.mxu0 0
    %6530 = vmatprep.subr.bf16.mxu0 0
    %6531 = vmatpush1.bf16.msra.mxu0 0
    %6532 = vmatprep.subr.bf16.mxu0 0
    %6533 = vmatpush1.bf16.msra.mxu0 0
    %6534 = vmatprep.subr.bf16.mxu0 0
    %6535 = vmatpush1.bf16.msra.mxu0 0
    %6536 = vmatprep.subr.bf16.mxu0 0
    %6537 = vmatpush1.bf16.msra.mxu0 0
    %6538 = vmatprep.subr.bf16.mxu0 0
    %6539 = vmatpush1.bf16.msra.mxu0 0
    %6540 = vmatprep.subr.bf16.mxu0 0
    %6541 = vmatpush1.bf16.msra.mxu0 0
    %6542 = vmatprep.subr.bf16.mxu0 0
    %6543 = vmatpush1.bf16.msra.mxu0 0
    %6544 = vmatprep.subr.bf16.mxu0 0
    %6545 = vmatpush1.bf16.msra.mxu0 0
    %6546 = vmatprep.subr.bf16.mxu0 0
    %6547 = vmatpush1.bf16.msra.mxu0 0
    %6548 = vmatprep.subr.bf16.mxu0 0
    %6549 = vmatpush1.bf16.msra.mxu0 0
    %6550 = vmatprep.subr.bf16.mxu0 0
    %6551 = vmatpush1.bf16.msra.mxu0 0
    %6552 = vmatprep.mubr.bf16.mxu0 0
    %6553 = vmatmul.mubr.bf16.gmra.mrb[0].mxu0 %v6518
    %v6554 = vpop.f32.mrb[0].mxu0
    %v6555 = vadd.f32 0.0, %v6554
    %v6556 = vpop.f32.mrb[0].mxu0
    %v6557 = vpop.f32.mrb[0].mxu0
    %v6558 = vpop.f32.mrb[0].mxu0
    %6559 = vdwg.mxu0
    %v6560 = vadd.f32 %v6426, %v6469
    %v6561 = vadd.f32 %v6560, %v6512
    %v6562 = vadd.f32 %v6561, %v6555
    %s6563 = scalar_lea.vmem %s13, 1
    %v6564 = vld [vmem:[%s6563] sm:$0x1]
    %v6566 = vlaneseq
    %v6567 = vshrl.u32 %v6566, 7
    %v6568 = vsub.s32 0, %v6567
    %v6569 = vrot.slane %v6564, %v6568
    %v6571 = vadd.f32 %v5917, %v6569
    %v6572 = vadd.f32 %v6562, %v6569
    %v6573 = vadd.f32 %v5056, %v6571
    %v6574 = vadd.f32 %v5057, %v6572
    %s6575 = scalar_lea.vmem %s20, 1
    %v6576 = vld [vmem:[%s6575] sm:$0x1]
    %s6577 = scalar_lea.vmem %s21, 1
    %v6578 = vld [vmem:[%s6577] sm:$0x1]
    %6579 = vadd.xlane.f32.xlu0 %v6573
    %v6580 = vpop.xlane.xlu0 %6579
    %6581 = vadd.xlane.f32.xlu0 %v6574
    %v6582 = vpop.xlane.xlu0 %6581
    %v6583 = vmul.f32 %v6580, %v1734
    %v6584 = vmul.f32 %v6582, %v1734
    %v6585 = vmul.f32 %v6573, %v6573
    %v6586 = vmul.f32 %v6574, %v6574
    %6587 = vadd.xlane.f32.xlu0 %v6585
    %v6588 = vpop.xlane.xlu0 %6587
    %6589 = vadd.xlane.f32.xlu0 %v6586
    %v6590 = vpop.xlane.xlu0 %6589
    %v6591 = vmul.f32 %v6588, %v1734
    %v6592 = vmul.f32 %v6590, %v1734
    %v6593 = vmul.f32 %v6583, %v6583
    %v6594 = vmul.f32 %v6584, %v6584
    %v6595 = vsub.f32 %v6591, %v6593
    %v6596 = vsub.f32 %v6592, %v6594
    %v6597 = vsub.f32 %v6573, %v6583
    %v6598 = vsub.f32 %v6574, %v6584
    %v6599 = vadd.f32 %v6595, 1e-06
    %v6600 = vadd.f32 %v6596, 1e-06
    %v6601 = vrsqrt.pop %v6599
    %v6602 = vrsqrt.pop %v6600
    %v6603 = vmul.f32 %v6597, %v6601
    %v6604 = vmul.f32 %v6598, %v6602
    %v6606 = vlaneseq
    %v6607 = vshrl.u32 %v6606, 7
    %v6608 = vsub.s32 0, %v6607
    %v6609 = vrot.slane %v6576, %v6608
    %v6611 = vmul.f32 %v6603, %v6609
    %v6612 = vmul.f32 %v6604, %v6609
    %v6614 = vlaneseq
    %v6615 = vshrl.u32 %v6614, 7
    %v6616 = vsub.s32 0, %v6615
    %v6617 = vrot.slane %v6578, %v6616
    %v6619 = vadd.f32 %v6611, %v6617
    %v6620 = vadd.f32 %v6612, %v6617
    %s6621 = scalar_lea.vmem [#allocation17], 128
    %v6622 = vld [vmem:[%s6621] sm:$0xff]
    %v6623 = vld [vmem:[%s6621 + $0x8] sm:$0xff]
    %v6624 = vld [vmem:[%s6621 + $0x10] sm:$0xff]
    %v6625 = vld [vmem:[%s6621 + $0x18] sm:$0xff]
    %v6626 = vld [vmem:[%s6621 + $0x20] sm:$0xff]
    %v6627 = vld [vmem:[%s6621 + $0x28] sm:$0xff]
    %v6628 = vld [vmem:[%s6621 + $0x30] sm:$0xff]
    %v6629 = vld [vmem:[%s6621 + $0x38] sm:$0xff]
    %v6630 = vld [vmem:[%s6621 + $0x40] sm:$0xff]
    %v6631 = vld [vmem:[%s6621 + $0x48] sm:$0xff]
    %v6632 = vld [vmem:[%s6621 + $0x50] sm:$0xff]
    %v6633 = vld [vmem:[%s6621 + $0x58] sm:$0xff]
    %v6634 = vld [vmem:[%s6621 + $0x60] sm:$0xff]
    %v6635 = vld [vmem:[%s6621 + $0x68] sm:$0xff]
    %v6636 = vld [vmem:[%s6621 + $0x70] sm:$0xff]
    %v6637 = vld [vmem:[%s6621 + $0x78] sm:$0xff]
    %v6638 = vpack.c.bf16 %v6620, %v6619
    %v6639 = vpack.c.bf16 %v6623, %v6622
    %v6640 = vpack.c.bf16 %v6625, %v6624
    %v6641 = vpack.c.bf16 %v6627, %v6626
    %v6642 = vpack.c.bf16 %v6629, %v6628
    %v6643 = vpack.c.bf16 %v6631, %v6630
    %v6644 = vpack.c.bf16 %v6633, %v6632
    %v6645 = vpack.c.bf16 %v6635, %v6634
    %v6646 = vpack.c.bf16 %v6637, %v6636
    %s6647 = scalar_lea.vmem %s15, 1
    %v6648 = vld [vmem:[%s6647] sm:$0x1]
    %v6650 = vlaneseq
    %v6651 = vshrl.u32 %v6650, 7
    %v6652 = vsub.s32 0, %v6651
    %v6653 = vrot.slane %v6648, %v6652
    %6655 = vmatprep.subr.bf16.mxu0 0
    %6656 = vmatpush1.bf16.msra.mxu0 %v6639
    %6657 = vmatprep.subr.bf16.mxu0 0
    %6658 = vmatpush1.bf16.msra.mxu0 %v6640
    %6659 = vmatprep.subr.bf16.mxu0 0
    %6660 = vmatpush1.bf16.msra.mxu0 %v6641
    %6661 = vmatprep.subr.bf16.mxu0 0
    %6662 = vmatpush1.bf16.msra.mxu0 %v6642
    %6663 = vmatprep.subr.bf16.mxu0 0
    %6664 = vmatpush1.bf16.msra.mxu0 %v6643
    %6665 = vmatprep.subr.bf16.mxu0 0
    %6666 = vmatpush1.bf16.msra.mxu0 %v6644
    %6667 = vmatprep.subr.bf16.mxu0 0
    %6668 = vmatpush1.bf16.msra.mxu0 %v6645
    %6669 = vmatprep.subr.bf16.mxu0 0
    %6670 = vmatpush1.bf16.msra.mxu0 %v6646
    %6671 = vmatprep.subr.bf16.mxu0 0
    %6672 = vmatpush1.bf16.msra.mxu0 0
    %6673 = vmatprep.subr.bf16.mxu0 0
    %6674 = vmatpush1.bf16.msra.mxu0 0
    %6675 = vmatprep.subr.bf16.mxu0 0
    %6676 = vmatpush1.bf16.msra.mxu0 0
    %6677 = vmatprep.subr.bf16.mxu0 0
    %6678 = vmatpush1.bf16.msra.mxu0 0
    %6679 = vmatprep.subr.bf16.mxu0 0
    %6680 = vmatpush1.bf16.msra.mxu0 0
    %6681 = vmatprep.subr.bf16.mxu0 0
    %6682 = vmatpush1.bf16.msra.mxu0 0
    %6683 = vmatprep.subr.bf16.mxu0 0
    %6684 = vmatpush1.bf16.msra.mxu0 0
    %6685 = vmatprep.subr.bf16.mxu0 0
    %6686 = vmatpush1.bf16.msra.mxu0 0
    %6687 = vmatprep.mubr.bf16.mxu0 0
    %6688 = vmatmul.mubr.bf16.gmra.mrb[0].mxu0 %v6638
    %v6689 = vpop.f32.mrb[0].mxu0
    %v6690 = vadd.f32 %v6653, %v6689
    %v6691 = vpop.f32.mrb[0].mxu0
    %v6692 = vpop.f32.mrb[0].mxu0
    %v6693 = vadd.f32 %v6653, %v6692
    %v6694 = vpop.f32.mrb[0].mxu0
    %6695 = vdwg.mxu0
    %v6696 = vmax.f32 %v6690, 0.0
    %v6697 = vmax.f32 %v6693, 0.0
    %s6698 = scalar_lea.vmem [#allocation19], 128
    %v6699 = vld [vmem:[%s6698] sm:$0xff]
    %v6700 = vld [vmem:[%s6698 + $0x8] sm:$0xff]
    %v6701 = vld [vmem:[%s6698 + $0x10] sm:$0xff]
    %v6702 = vld [vmem:[%s6698 + $0x18] sm:$0xff]
    %v6703 = vld [vmem:[%s6698 + $0x20] sm:$0xff]
    %v6704 = vld [vmem:[%s6698 + $0x28] sm:$0xff]
    %v6705 = vld [vmem:[%s6698 + $0x30] sm:$0xff]
    %v6706 = vld [vmem:[%s6698 + $0x38] sm:$0xff]
    %v6707 = vld [vmem:[%s6698 + $0x40] sm:$0xff]
    %v6708 = vld [vmem:[%s6698 + $0x48] sm:$0xff]
    %v6709 = vld [vmem:[%s6698 + $0x50] sm:$0xff]
    %v6710 = vld [vmem:[%s6698 + $0x58] sm:$0xff]
    %v6711 = vld [vmem:[%s6698 + $0x60] sm:$0xff]
    %v6712 = vld [vmem:[%s6698 + $0x68] sm:$0xff]
    %v6713 = vld [vmem:[%s6698 + $0x70] sm:$0xff]
    %v6714 = vld [vmem:[%s6698 + $0x78] sm:$0xff]
    %v6715 = vpack.c.bf16 %v6697, %v6696
    %v6716 = vpack.c.bf16 %v6700, %v6699
    %v6717 = vpack.c.bf16 %v6702, %v6701
    %v6718 = vpack.c.bf16 %v6704, %v6703
    %v6719 = vpack.c.bf16 %v6706, %v6705
    %v6720 = vpack.c.bf16 %v6708, %v6707
    %v6721 = vpack.c.bf16 %v6710, %v6709
    %v6722 = vpack.c.bf16 %v6712, %v6711
    %v6723 = vpack.c.bf16 %v6714, %v6713
    %s6724 = scalar_lea.vmem %s17, 1
    %v6725 = vld [vmem:[%s6724] sm:$0x1]
    %v6727 = vlaneseq
    %v6728 = vshrl.u32 %v6727, 7
    %v6729 = vsub.s32 0, %v6728
    %v6730 = vrot.slane %v6725, %v6729
    %6732 = vmatprep.subr.bf16.mxu0 0
    %6733 = vmatpush1.bf16.msra.mxu0 %v6716
    %6734 = vmatprep.subr.bf16.mxu0 0
    %6735 = vmatpush1.bf16.msra.mxu0 %v6717
    %6736 = vmatprep.subr.bf16.mxu0 0
    %6737 = vmatpush1.bf16.msra.mxu0 %v6718
    %6738 = vmatprep.subr.bf16.mxu0 0
    %6739 = vmatpush1.bf16.msra.mxu0 %v6719
    %6740 = vmatprep.subr.bf16.mxu0 0
    %6741 = vmatpush1.bf16.msra.mxu0 %v6720
    %6742 = vmatprep.subr.bf16.mxu0 0
    %6743 = vmatpush1.bf16.msra.mxu0 %v6721
    %6744 = vmatprep.subr.bf16.mxu0 0
    %6745 = vmatpush1.bf16.msra.mxu0 %v6722
    %6746 = vmatprep.subr.bf16.mxu0 0
    %6747 = vmatpush1.bf16.msra.mxu0 %v6723
    %6748 = vmatprep.subr.bf16.mxu0 0
    %6749 = vmatpush1.bf16.msra.mxu0 0
    %6750 = vmatprep.subr.bf16.mxu0 0
    %6751 = vmatpush1.bf16.msra.mxu0 0
    %6752 = vmatprep.subr.bf16.mxu0 0
    %6753 = vmatpush1.bf16.msra.mxu0 0
    %6754 = vmatprep.subr.bf16.mxu0 0
    %6755 = vmatpush1.bf16.msra.mxu0 0
    %6756 = vmatprep.subr.bf16.mxu0 0
    %6757 = vmatpush1.bf16.msra.mxu0 0
    %6758 = vmatprep.subr.bf16.mxu0 0
    %6759 = vmatpush1.bf16.msra.mxu0 0
    %6760 = vmatprep.subr.bf16.mxu0 0
    %6761 = vmatpush1.bf16.msra.mxu0 0
    %6762 = vmatprep.subr.bf16.mxu0 0
    %6763 = vmatpush1.bf16.msra.mxu0 0
    %6764 = vmatprep.mubr.bf16.mxu0 0
    %6765 = vmatmul.mubr.bf16.gmra.mrb[0].mxu0 %v6715
    %v6766 = vpop.f32.mrb[0].mxu0
    %v6767 = vadd.f32 %v6730, %v6766
    %v6768 = vpop.f32.mrb[0].mxu0
    %v6769 = vpop.f32.mrb[0].mxu0
    %v6770 = vadd.f32 %v6730, %v6769
    %v6771 = vpop.f32.mrb[0].mxu0
    %6772 = vdwg.mxu0
    %v6773 = vadd.f32 %v6619, %v6767
    %v6774 = vadd.f32 %v6620, %v6770
    %s6775 = scalar_lea.vmem %s22, 1
    %v6776 = vld [vmem:[%s6775] sm:$0x1]
    %s6777 = scalar_lea.vmem %s23, 1
    %v6778 = vld [vmem:[%s6777] sm:$0x1]
    %6779 = vadd.xlane.f32.xlu0 %v6773
    %v6780 = vpop.xlane.xlu0 %6779
    %6781 = vadd.xlane.f32.xlu0 %v6774
    %v6782 = vpop.xlane.xlu0 %6781
    %v6783 = vmul.f32 %v6780, %v1734
    %v6784 = vmul.f32 %v6782, %v1734
    %v6785 = vmul.f32 %v6773, %v6773
    %v6786 = vmul.f32 %v6774, %v6774
    %6787 = vadd.xlane.f32.xlu0 %v6785
    %v6788 = vpop.xlane.xlu0 %6787
    %6789 = vadd.xlane.f32.xlu0 %v6786
    %v6790 = vpop.xlane.xlu0 %6789
    %v6791 = vmul.f32 %v6788, %v1734
    %v6792 = vmul.f32 %v6790, %v1734
    %v6793 = vmul.f32 %v6783, %v6783
    %v6794 = vmul.f32 %v6784, %v6784
    %v6795 = vsub.f32 %v6791, %v6793
    %v6796 = vsub.f32 %v6792, %v6794
    %v6797 = vsub.f32 %v6773, %v6783
    %v6798 = vsub.f32 %v6774, %v6784
    %v6799 = vadd.f32 %v6795, 1e-06
    %v6800 = vadd.f32 %v6796, 1e-06
    %v6801 = vrsqrt.pop %v6799
    %v6802 = vrsqrt.pop %v6800
    %v6803 = vmul.f32 %v6797, %v6801
    %v6804 = vmul.f32 %v6798, %v6802
    %v6806 = vlaneseq
    %v6807 = vshrl.u32 %v6806, 7
    %v6808 = vsub.s32 0, %v6807
    %v6809 = vrot.slane %v6776, %v6808
    %v6811 = vmul.f32 %v6803, %v6809
    %v6812 = vmul.f32 %v6804, %v6809
    %v6814 = vlaneseq
    %v6815 = vshrl.u32 %v6814, 7
    %v6816 = vsub.s32 0, %v6815
    %v6817 = vrot.slane %v6778, %v6816
    %v6819 = vadd.f32 %v6811, %v6817
    %v6820 = vadd.f32 %v6812, %v6817
    %6821 = vst [vmem:[#allocation20] sm:$0xff] %v6819
    %6822 = vst [vmem:[#allocation20 + $0x8] sm:$0xff] %v6820
    // Predicated region
    $region142: #{tpu_custom_call.1} parent=1 // pred_check
      _
    $region143: #{tpu_custom_call.1} parent=1 // pred_check_branch
      %6824 = sbr.rel (0) target = $region145
    $region144: #{tpu_custom_call.1} parent=1 // pred_region
      %s6826 = ssub.s32 256, 256
      %6827 = vsyncadd [#allocation4], %s6826
      %s6828 = sshll.u32 [#allocation20], 4
      %s6829 = int_to_ptr.vmem [resolvable:$true] %s6828
      %6834 = dma.vmem_to_hbm [thread:$0]  %s6829, 256, %s24, [#allocation4], 128, 128, 8
    $region145: #{tpu_custom_call.1} parent=1 // pred_fallthru
      _
    // Predicated region
    $region146: #{tpu_custom_call.1} parent=1 // pred_check
      _
    $region147: #{tpu_custom_call.1} parent=1 // pred_check_branch
      %6836 = sbr.rel (0) target = $region149
    $region148: #{tpu_custom_call.1} parent=1 // pred_region
      %6837 = dma.done [#allocation4], 256
    $region149: #{tpu_custom_call.1} parent=1 // pred_fallthru
      _
    %6838 = vsyncpa [#allocation3], 1
    %6839 = vsyncpa [#allocation6], 1
    %6840 = vsyncpa [#allocation9], 1
    %6841 = vsyncpa [#allocation12], 1
    %6842 = vsyncpa [#allocation15], 1
    %6843 = vsyncpa [#allocation18], 1
    %6844 = vsyncpa [#allocation4], 1

</llo_original>
